<compile_context>
chip_gen: v6e
topology: v6e:2x2x1
jax: 0.10.0
libtpu: 0.0.40
codegen_flags: <defaults>
</compile_context>

<pallas_src>
import functools

import jax
import jax.numpy as jnp
from jax.experimental import pallas as pl
from jax.experimental.pallas import tpu as pltpu

EPS = 1e-5
LANE = 128


def _rup(x, m):
    return ((x + m - 1) // m) * m


def _pick_tn(c_pad):
    # output-channel tile: 256 where possible (v6e/v7x MXU friendly), else 128
    return 256 if c_pad % 256 == 0 else 128


def _pick_tm(hw):
    # row tile for the GEMM / merge kernels: <=512 rows, must divide HW
    if hw <= 512 or hw % 8 != 0:
        return hw
    for tm in range(512, 0, -8):
        if hw % tm == 0:
            return tm
    return hw


def _pack_stats(y):
    """(rows, C) f32 -> (8, C) stats tile: row0=sum, row1=sum(y*y), rest 0.
    Assembled as one value so it is written with a single store."""
    s = jnp.sum(y, axis=0, keepdims=True)
    ss = jnp.sum(y * y, axis=0, keepdims=True)
    row = jax.lax.broadcasted_iota(jnp.int32, (8, y.shape[-1]), 0)
    return jnp.where(row == 0, s, jnp.where(row == 1, ss, 0.0))


# ----------------------------------------------------------------------------
# Kernels
# ----------------------------------------------------------------------------
def _gemm_stats_kernel(*refs, apply_prologue):
    """1x1-conv GEMM over one (image, row-tile, channel-tile) block with
    per-block BatchNorm partial statistics.  Optional fused BN-affine+ReLU
    prologue of the previous layer; the activated block is cached in VMEM and
    rebuilt only when the (innermost, "arbitrary") channel-tile index is 0.

    refs (prologue):    x, scale, shift, w, out, stats, a_scratch
    refs (no prologue): x, w, out, stats
      x     : (TM, K)  bf16
      scale : (1, K)   f32      folded BN scale of the previous layer
      shift : (1, K)   f32
      w     : (K, TN)  bf16
      out   : (TM, TN) bf16     linear (pre-BN) output
      stats : (8, TN)  f32      row 0 = sum, row 1 = sum of squares
    """
    if apply_prologue:
        x_ref, scale_ref, shift_ref, w_ref, out_ref, stats_ref, a_ref = refs

        @pl.when(pl.program_id(2) == 0)
        def _():
            a_ref[...] = jnp.maximum(
                x_ref[...].astype(jnp.float32) * scale_ref[...] + shift_ref[...],
                0.0).astype(a_ref.dtype)

        a = a_ref[...]
    else:
        x_ref, w_ref, out_ref, stats_ref = refs
        a = x_ref[...]

    y = jnp.dot(a, w_ref[...], preferred_element_type=jnp.float32)
    yb = y.astype(out_ref.dtype)
    out_ref[...] = yb
    # NOTE: stats are taken from the bf16-rounded stored activation so the
    # folded affine applied downstream is consistent with its own statistics.
    stats_ref[...] = _pack_stats(yb.astype(jnp.float32))


def _conv3x3_stats_kernel(x_ref, scale_ref, shift_ref, w_ref, out_ref,
                          stats_ref, xbuf_ref, acc_ref, *, Ho, Wo, P0):
    """Fused: bn1-affine+ReLU -> 3x3 conv (pad=1) as 9 shifted matmuls on a
    flat, vertically zero-padded image -> bn2 partial stats.  No HBM im2col,
    no per-row loops, Cout tiled.

      x     : (Ho*Wo, Cin)   bf16   conv1 linear output for this image
      scale : (1, Cin)       f32
      shift : (1, Cin)       f32
      w     : (9, Cin, TN)   bf16   taps, t = kh*3 + kw
      out   : (Ho*Wo, TN)    bf16
      stats : (8, TN)        f32
      xbuf  : (P0+HW+Wo+1, Cin) bf16 VMEM (zero top/bottom pads + flat image)
      acc   : (HW, TN)       f32  VMEM accumulator
    """
    cin = x_ref.shape[-1]
    HW = Ho * Wo
    R = xbuf_ref.shape[0]

    # Build the activated image once per image (channel-tile index 0): two
    # zero-pad stores + one aligned slab store; no full-scratch zero pass.
    @pl.when(pl.program_id(1) == 0)
    def _():
        a = jnp.maximum(
            x_ref[...].astype(jnp.float32) * scale_ref[...] + shift_ref[...],
            0.0).astype(xbuf_ref.dtype)
        xbuf_ref[0:P0, :] = jnp.zeros((P0, cin), xbuf_ref.dtype)
        xbuf_ref[P0:P0 + HW, :] = a
        xbuf_ref[P0 + HW:R, :] = jnp.zeros((R - P0 - HW, cin), xbuf_ref.dtype)

    # Horizontal-validity masks (vertical out-of-range taps hit the zero pads).
    col = jax.lax.broadcasted_iota(jnp.int32, (HW, 1), 0) % Wo
    m_left = col >= 1            # kw == 0 taps
    m_right = col <= Wo - 2      # kw == 2 taps

    # 9 shifted matmuls accumulated into the VMEM f32 scratch (one tap live).
    for t in range(9):
        kh, kw = divmod(t, 3)
        d = (kh - 1) * Wo + (kw - 1)
        a_t = xbuf_ref[P0 + d:P0 + d + HW, :]
        if kw == 0:
            a_t = jnp.where(m_left, a_t, jnp.zeros_like(a_t))
        elif kw == 2:
            a_t = jnp.where(m_right, a_t, jnp.zeros_like(a_t))
        contrib = jnp.dot(a_t, w_ref[t], preferred_element_type=jnp.float32)
        if t == 0:
            acc_ref[...] = contrib
        else:
            acc_ref[...] += contrib

    yb = acc_ref[...].astype(out_ref.dtype)
    out_ref[...] = yb
    stats_ref[...] = _pack_stats(yb.astype(jnp.float32))


def _merge_bn_bn_relu_kernel(y_ref, sy_ref, by_ref, r_ref, sr_ref, br_ref,
                             out_ref):
    """relu(bn3(y3) + bn_r(r))  -- projection residual."""
    y = y_ref[...].astype(jnp.float32) * sy_ref[...] + by_ref[...]
    r = r_ref[...].astype(jnp.float32) * sr_ref[...] + br_ref[...]
    out_ref[...] = jnp.maximum(y + r, 0.0).astype(out_ref.dtype)


def _merge_bn_add_relu_kernel(y_ref, sy_ref, by_ref, r_ref, out_ref):
    """relu(bn3(y3) + x)  -- identity residual (no ones/zeros affine)."""
    y = y_ref[...].astype(jnp.float32) * sy_ref[...] + by_ref[...]
    out_ref[...] = jnp.maximum(
        y + r_ref[...].astype(jnp.float32), 0.0).astype(out_ref.dtype)


# ----------------------------------------------------------------------------
# Pallas wrappers
# ----------------------------------------------------------------------------
def gemm_bn_stats(x, w, scale=None, shift=None):
    """x: (N, HW, K) bf16, w: (K, C) bf16, optional folded-BN scale/shift (1,K).
    Returns out (N, HW, C) bf16 and stats (N, MT, 8, C) f32 (rows 0/1)."""
    N, HW, K = x.shape
    C = w.shape[1]
    tn = _pick_tn(C)
    tm = _pick_tm(HW)
    nct = C // tn
    nmt = HW // tm
    prologue = scale is not None
    kernel = functools.partial(_gemm_stats_kernel, apply_prologue=prologue)

    in_specs = [pl.BlockSpec((None, tm, K), lambda n, m, j: (n, m, 0))]
    args = [x]
    if prologue:
        in_specs += [pl.BlockSpec((1, K), lambda n, m, j: (0, 0)),
                     pl.BlockSpec((1, K), lambda n, m, j: (0, 0))]
        args += [scale, shift]
    in_specs += [pl.BlockSpec((K, tn), lambda n, m, j: (0, j))]
    args += [w]

    scratch = [pltpu.VMEM((tm, K), jnp.bfloat16)] if prologue else []

    out, stats = pl.pallas_call(
        kernel,
        out_shape=(jax.ShapeDtypeStruct((N, HW, C), jnp.bfloat16),
                   jax.ShapeDtypeStruct((N, nmt, 8, C), jnp.float32)),
        grid=(N, nmt, nct),
        in_specs=in_specs,
        out_specs=(pl.BlockSpec((None, tm, tn), lambda n, m, j: (n, m, j)),
                   pl.BlockSpec((None, None, 8, tn),
                                lambda n, m, j: (n, m, 0, j))),
        scratch_shapes=scratch,
        compiler_params=pltpu.CompilerParams(
            dimension_semantics=("parallel", "parallel", "arbitrary")),
    )(*args)
    return out, stats


def conv3x3_bn_stats(x, scale, shift, w_taps, Ho, Wo):
    """Fused bn1+relu + 3x3 conv.  x: (N, Ho*Wo, Cin) bf16 (conv1 linear),
    w_taps: (9, Cin, Cout) bf16.  Returns out (N,HW,Cout) bf16, stats (N,8,Cout)."""
    N, HW, Cin = x.shape
    Cout = w_taps.shape[-1]
    tn = _pick_tn(Cout)
    nct = Cout // tn
    P0 = _rup(Wo + 1, 16)          # aligned top zero-pad rows (bf16 tile = 16)
    R = P0 + HW + Wo + 1           # + bottom zero-pad rows
    kernel = functools.partial(_conv3x3_stats_kernel, Ho=Ho, Wo=Wo, P0=P0)
    out, stats = pl.pallas_call(
        kernel,
        out_shape=(jax.ShapeDtypeStruct((N, HW, Cout), jnp.bfloat16),
                   jax.ShapeDtypeStruct((N, 8, Cout), jnp.float32)),
        grid=(N, nct),
        in_specs=[
            pl.BlockSpec((None, HW, Cin), lambda n, j: (n, 0, 0)),
            pl.BlockSpec((1, Cin), lambda n, j: (0, 0)),
            pl.BlockSpec((1, Cin), lambda n, j: (0, 0)),
            pl.BlockSpec((9, Cin, tn), lambda n, j: (0, 0, j)),
        ],
        out_specs=(pl.BlockSpec((None, HW, tn), lambda n, j: (n, 0, j)),
                   pl.BlockSpec((None, 8, tn), lambda n, j: (n, 0, j))),
        scratch_shapes=[pltpu.VMEM((R, Cin), jnp.bfloat16),
                        pltpu.VMEM((HW, tn), jnp.float32)],
        compiler_params=pltpu.CompilerParams(
            dimension_semantics=("parallel", "arbitrary")),
    )(x, scale, shift, w_taps)
    return out, stats


def merge_relu(y3, s3, b3, r, sr=None, br=None):
    """Final merge (bf16 output).  Projection residual if sr/br given."""
    N, HW, C = y3.shape
    tn = _pick_tn(C)
    tm = _pick_tm(HW)
    nct = C // tn
    nmt = HW // tm
    vec = pl.BlockSpec((1, tn), lambda n, m, j: (0, j))
    act = pl.BlockSpec((None, tm, tn), lambda n, m, j: (n, m, j))
    if sr is not None:
        kernel = _merge_bn_bn_relu_kernel
        in_specs = [act, vec, vec, act, vec, vec]
        args = (y3, s3, b3, r, sr, br)
    else:
        kernel = _merge_bn_add_relu_kernel
        in_specs = [act, vec, vec, act]
        args = (y3, s3, b3, r)
    return pl.pallas_call(
        kernel,
        out_shape=jax.ShapeDtypeStruct((N, HW, C), jnp.bfloat16),
        grid=(N, nmt, nct),
        in_specs=in_specs,
        out_specs=pl.BlockSpec((None, tm, tn), lambda n, m, j: (n, m, j)),
        compiler_params=pltpu.CompilerParams(
            dimension_semantics=("parallel", "parallel", "parallel")),
    )(*args)


# ----------------------------------------------------------------------------
# Glue: layout transforms, BN folding (tiny XLA ops)
# ----------------------------------------------------------------------------
def _pad_to(a, shape):
    return jnp.pad(a, [(0, t - s) for s, t in zip(a.shape, shape)])


def _fold_bn(stats, count, gamma, beta, c_pad):
    """Reduce partial stats (leading axes) and fold training-mode BN into a
    per-channel (scale, shift) pair (padded channels fold to (0, 0))."""
    red_s = stats[..., 0, :]
    red_q = stats[..., 1, :]
    lead = tuple(range(red_s.ndim - 1))
    s = jnp.sum(red_s, axis=lead)
    ss = jnp.sum(red_q, axis=lead)
    mean = s / count
    # NOTE: E[x^2]-E[x]^2 in f32; fine at these scales (values are O(1..10)).
    var = jnp.maximum(ss / count - mean * mean, 0.0)   # biased variance
    g = _pad_to(gamma.astype(jnp.float32), (c_pad,))
    b = _pad_to(beta.astype(jnp.float32), (c_pad,))
    scale = g * jax.lax.rsqrt(var + EPS)
    shift = b - mean * scale
    return scale.reshape(1, c_pad), shift.reshape(1, c_pad)


def bottleneck_forward(x_nchw, params, stride):
    N, Cin, H, W = x_nchw.shape
    Cmid = params["w1"].shape[0]
    C4 = 4 * Cmid
    cin_p = _rup(Cin, LANE)
    cmid_p = _rup(Cmid, LANE)
    c4_p = _rup(C4, LANE)

    # Stride + bf16 cast in NCHW (halves transpose traffic), then NHWC,
    # channel-pad and flatten per image.
    xs = x_nchw[:, :, ::stride, ::stride].astype(jnp.bfloat16)
    Ho, Wo = xs.shape[2], xs.shape[3]
    HW = Ho * Wo
    count = N * HW
    a0 = jnp.transpose(xs, (0, 2, 3, 1))
    a0 = _pad_to(a0, (N, Ho, Wo, cin_p)).reshape(N, HW, cin_p)

    # Weights in GEMM layout, channel-padded, bf16.
    w1 = _pad_to(params["w1"].reshape(Cmid, Cin).T, (cin_p, cmid_p)).astype(jnp.bfloat16)
    w2 = jnp.transpose(params["w2"], (2, 3, 1, 0)).reshape(9, Cmid, Cmid)
    w2 = _pad_to(w2, (9, cmid_p, cmid_p)).astype(jnp.bfloat16)
    w3 = _pad_to(params["w3"].reshape(C4, Cmid).T, (cmid_p, c4_p)).astype(jnp.bfloat16)

    # conv1 (1x1, stride) + bn1 stats
    y1, st1 = gemm_bn_stats(a0, w1)
    sc1, sh1 = _fold_bn(st1, count, params["g1"], params["b1"], cmid_p)

    # conv2 (3x3, pad 1) with fused bn1+relu prologue, + bn2 stats
    y2, st2 = conv3x3_bn_stats(y1, sc1, sh1, w2, Ho, Wo)
    sc2, sh2 = _fold_bn(st2, count, params["g2"], params["b2"], cmid_p)

    # conv3 (1x1) with fused bn2+relu prologue, + bn3 stats
    y3, st3 = gemm_bn_stats(y2, w3, sc2, sh2)
    sc3, sh3 = _fold_bn(st3, count, params["g3"], params["b3"], c4_p)

    # residual branch + final merge
    if stride != 1 or Cin != C4:
        wr = _pad_to(params["wr"].reshape(C4, Cin).T, (cin_p, c4_p)).astype(jnp.bfloat16)
        r, str_ = gemm_bn_stats(a0, wr)
        scr, shr = _fold_bn(str_, count, params["gr"], params["br"], c4_p)
        out = merge_relu(y3, sc3, sh3, r, scr, shr)
    else:
        out = merge_relu(y3, sc3, sh3, a0)      # identity residual (cin_p == c4_p)

    out = out[:, :, :C4].reshape(N, Ho, Wo, C4)
    return jnp.transpose(out, (0, 3, 1, 2)).astype(jnp.float32)   # back to NCHW f32


# ----------------------------------------------------------------------------
# Plain-JAX reference (training-mode BatchNorm, matches the PyTorch module)
# ----------------------------------------------------------------------------
def _ref_bottleneck(x, p, stride):
    def conv(x, w, s, pad):
        return jax.lax.conv_general_dilated(
            x, w, (s, s), pad, dimension_numbers=("NCHW", "OIHW", "NCHW"))

    def bn(x, g, b):
        mean = x.mean(axis=(0, 2, 3), keepdims=True)
        var = x.var(axis=(0, 2, 3), keepdims=True)
        xh = (x - mean) / jnp.sqrt(var + EPS)
        return xh * g.reshape(1, -1, 1, 1) + b.reshape(1, -1, 1, 1)

    Cin = x.shape[1]
    Cmid = p["w1"].shape[0]
    C4 = 4 * Cmid
    out = jax.nn.relu(bn(conv(x, p["w1"], stride, "VALID"), p["g1"], p["b1"]))
    out = jax.nn.relu(bn(conv(out, p["w2"], 1, ((1, 1), (1, 1))), p["g2"], p["b2"]))
    out = bn(conv(out, p["w3"], 1, "VALID"), p["g3"], p["b3"])
    if stride != 1 or Cin != C4:
        res = bn(conv(x, p["wr"], stride, "VALID"), p["gr"], p["br"])
    else:
        res = x
    return jax.nn.relu(out + res)


def _make_params(key, cin, cmid):
    c4 = 4 * cmid
    ks = jax.random.split(key, 12)
    return {
        "w1": jax.random.normal(ks[0], (cmid, cin, 1, 1), jnp.float32) * 0.2,
        "g1": 1.0 + 0.1 * jax.random.normal(ks[1], (cmid,), jnp.float32),
        "b1": 0.1 * jax.random.normal(ks[2], (cmid,), jnp.float32),
        "w2": jax.random.normal(ks[3], (cmid, cmid, 3, 3), jnp.float32) * 0.1,
        "g2": 1.0 + 0.1 * jax.random.normal(ks[4], (cmid,), jnp.float32),
        "b2": 0.1 * jax.random.normal(ks[5], (cmid,), jnp.float32),
        "w3": jax.random.normal(ks[6], (c4, cmid, 1, 1), jnp.float32) * 0.2,
        "g3": 1.0 + 0.1 * jax.random.normal(ks[7], (c4,), jnp.float32),
        "b3": 0.1 * jax.random.normal(ks[8], (c4,), jnp.float32),
        "wr": jax.random.normal(ks[9], (c4, cin, 1, 1), jnp.float32) * 0.2,
        "gr": 1.0 + 0.1 * jax.random.normal(ks[10], (c4,), jnp.float32),
        "br": 0.1 * jax.random.normal(ks[11], (c4,), jnp.float32),
    }


# ----------------------------------------------------------------------------
if __name__ == "__main__":
    key = jax.random.PRNGKey(0)
    configs = [
        # (N, Cin, H, W, Cmid, stride)
        (2, 4, 16, 16, 4, 1),    # projection residual
        (2, 4, 16, 16, 4, 2),    # strided, projection residual
        (2, 16, 8, 8, 4, 1),     # identity residual (Cin == 4*Cmid)
    ]
    for idx, (n, cin, h, w, cmid, stride) in enumerate(configs):
        kp, kx = jax.random.split(jax.random.fold_in(key, idx))
        params = _make_params(kp, cin, cmid)
        x = jax.random.normal(kx, (n, cin, h, w), jnp.float32)

        fwd = jax.jit(functools.partial(bottleneck_forward, stride=stride))
        out = jax.block_until_ready(fwd(x, params))

        ref = _ref_bottleneck(x, params, stride)
        ho = (h - 1) // stride + 1
        wo = (w - 1) // stride + 1
        assert out.shape == (n, 4 * cmid, ho, wo), out.shape
        max_err = float(jnp.max(jnp.abs(out - ref)))
        # bf16 matmul inputs / bf16 inter-stage + output -> loose tolerance
        assert jnp.allclose(out, ref, rtol=5e-2, atol=5e-2), (
            f"config {idx}: max abs err {max_err}")

    print("KERNEL_OK")
</pallas_src>

<mosaic_0001>
module attributes {stable_mosaic.version = 11 : i64} {
  func.func @_gemm_stats_kernel(%arg0: i32, %arg1: i32, %arg2: i32, %arg3: memref<1x256x128xbf16, #tpu.memory_space<vmem>>, %arg4: memref<128x128xbf16, #tpu.memory_space<vmem>>, %arg5: memref<1x256x128xbf16, #tpu.memory_space<vmem>>, %arg6: memref<1x1x8x128xf32, #tpu.memory_space<vmem>>) attributes {dimension_semantics = [#tpu.dimension_semantics<parallel>, #tpu.dimension_semantics<parallel>, #tpu.dimension_semantics<arbitrary>], iteration_bounds = array<i64: 2, 1, 1>, scalar_prefetch = 0 : i64, scratch_operands = 0 : i64, tpu.core_type = #tpu.core_type<tc>, window_params = [{transform_indices = @transform_0, window_bounds = array<i64: 1, 256, 128>}, {transform_indices = @transform_1, window_bounds = array<i64: 128, 128>}, {transform_indices = @transform_2, window_bounds = array<i64: 1, 256, 128>}, {transform_indices = @transform_3, window_bounds = array<i64: 1, 1, 8, 128>}]} {
    %c0 = arith.constant 0 : index
    %c0_0 = arith.constant 0 : index
    %c0_1 = arith.constant 0 : index
    %0 = vector.load %arg3[%c0, %c0_0, %c0_1] : memref<1x256x128xbf16, #tpu.memory_space<vmem>>, vector<1x256x128xbf16>
    %1 = vector.shape_cast %0 : vector<1x256x128xbf16> to vector<256x128xbf16>
    %c0_2 = arith.constant 0 : index
    %c0_3 = arith.constant 0 : index
    %2 = vector.load %arg4[%c0_2, %c0_3] : memref<128x128xbf16, #tpu.memory_space<vmem>>, vector<128x128xbf16>
    %cst = arith.constant dense<0.000000e+00> : vector<256x128xf32>
    %3 = tpu.matmul %1, %2, %cst {dimension_numbers = #tpu.dot_dimension_numbers<[1], [0], [0], [1], [0, 0, 1, 1], [], []>} : vector<256x128xbf16>, vector<128x128xbf16>, vector<256x128xf32> -> vector<256x128xf32>
    %4 = arith.truncf %3 : vector<256x128xf32> to vector<256x128xbf16>
    %c0_4 = arith.constant 0 : index
    %c0_5 = arith.constant 0 : index
    %c0_6 = arith.constant 0 : index
    %5 = vector.load %arg5[%c0_4, %c0_5, %c0_6] : memref<1x256x128xbf16, #tpu.memory_space<vmem>>, vector<1x256x128xbf16>
    %6 = vector.shape_cast %5 : vector<1x256x128xbf16> to vector<256x128xbf16>
    %7 = vector.shape_cast %4 : vector<256x128xbf16> to vector<1x256x128xbf16>
    tpu.vector_store %arg5[%c0_4, %c0_5, %c0_6], %7 {strides = array<i32>} : memref<1x256x128xbf16, #tpu.memory_space<vmem>>, vector<1x256x128xbf16>,
    %8 = arith.extf %4 : vector<256x128xbf16> to vector<256x128xf32>
    %cst_7 = arith.constant dense<0.000000e+00> : vector<128xf32>
    %9 = vector.multi_reduction <add>, %8, %cst_7 [0] : vector<256x128xf32> to vector<128xf32>
    %10 = vector.shape_cast %9 : vector<128xf32> to vector<1x128xf32>
    %11 = arith.mulf %8, %8 : vector<256x128xf32>
    %cst_8 = arith.constant dense<0.000000e+00> : vector<128xf32>
    %12 = vector.multi_reduction <add>, %11, %cst_8 [0] : vector<256x128xf32> to vector<128xf32>
    %13 = vector.shape_cast %12 : vector<128xf32> to vector<1x128xf32>
    %14 = tpu.iota {dimensions = array<i32: 0>} : vector<8x128xi32>
    %c0_i32 = arith.constant 0 : i32
    %15 = vector.broadcast %c0_i32 : i32 to vector<8x128xi32>
    %16 = arith.cmpi eq, %14, %15 : vector<8x128xi32>
    %c1_i32 = arith.constant 1 : i32
    %17 = vector.broadcast %c1_i32 : i32 to vector<8x128xi32>
    %18 = arith.cmpi eq, %14, %17 : vector<8x128xi32>
    %cst_9 = arith.constant 0.000000e+00 : f32
    %19 = vector.shape_cast %13 : vector<1x128xf32> to vector<1x128xf32>
    %20 = vector.broadcast %19 : vector<1x128xf32> to vector<8x128xf32>
    %21 = vector.broadcast %cst_9 : f32 to vector<8x128xf32>
    %22 = arith.select %18, %20, %21 : vector<8x128xi1>, vector<8x128xf32>
    %23 = vector.shape_cast %10 : vector<1x128xf32> to vector<1x128xf32>
    %24 = vector.broadcast %23 : vector<1x128xf32> to vector<8x128xf32>
    %25 = arith.select %16, %24, %22 : vector<8x128xi1>, vector<8x128xf32>
    %c0_10 = arith.constant 0 : index
    %c0_11 = arith.constant 0 : index
    %c0_12 = arith.constant 0 : index
    %c0_13 = arith.constant 0 : index
    %26 = vector.load %arg6[%c0_10, %c0_11, %c0_12, %c0_13] : memref<1x1x8x128xf32, #tpu.memory_space<vmem>>, vector<1x1x8x128xf32>
    %27 = vector.shape_cast %26 : vector<1x1x8x128xf32> to vector<8x128xf32>
    %28 = vector.shape_cast %25 : vector<8x128xf32> to vector<1x1x8x128xf32>
    tpu.vector_store %arg6[%c0_10, %c0_11, %c0_12, %c0_13], %28 {strides = array<i32>} : memref<1x1x8x128xf32, #tpu.memory_space<vmem>>, vector<1x1x8x128xf32>,
    return
  }
  func.func @transform_0(%arg0: i32, %arg1: i32, %arg2: i32) -> (i32, i32, i32) {
    %c0_i32 = arith.constant 0 : i32
    %c0_i32_0 = arith.constant 0 : i32
    return %arg0, %arg1, %c0_i32 : i32, i32, i32
  }
  func.func @transform_1(%arg0: i32, %arg1: i32, %arg2: i32) -> (i32, i32) {
    %c0_i32 = arith.constant 0 : i32
    %c0_i32_0 = arith.constant 0 : i32
    return %c0_i32, %arg2 : i32, i32
  }
  func.func @transform_2(%arg0: i32, %arg1: i32, %arg2: i32) -> (i32, i32, i32) {
    %c0_i32 = arith.constant 0 : i32
    return %arg0, %arg1, %arg2 : i32, i32, i32
  }
  func.func @transform_3(%arg0: i32, %arg1: i32, %arg2: i32) -> (i32, i32, i32, i32) {
    %c0_i32 = arith.constant 0 : i32
    %c0_i32_0 = arith.constant 0 : i32
    return %arg0, %arg1, %c0_i32, %arg2 : i32, i32, i32, i32
  }
}

module attributes {stable_mosaic.version = 11 : i64} {
  func.func @_conv3x3_stats_kernel(%arg0: i32, %arg1: i32, %arg2: memref<1x256x128xbf16, #tpu.memory_space<vmem>>, %arg3: memref<1x128xf32, #tpu.memory_space<vmem>>, %arg4: memref<1x128xf32, #tpu.memory_space<vmem>>, %arg5: memref<9x128x128xbf16, #tpu.memory_space<vmem>>, %arg6: memref<1x256x128xbf16, #tpu.memory_space<vmem>>, %arg7: memref<1x8x128xf32, #tpu.memory_space<vmem>>, %arg8: memref<305x128xbf16, #tpu.memory_space<vmem>>, %arg9: memref<256x128xf32, #tpu.memory_space<vmem>>) attributes {dimension_semantics = [#tpu.dimension_semantics<parallel>, #tpu.dimension_semantics<arbitrary>], iteration_bounds = array<i64: 2, 1>, scalar_prefetch = 0 : i64, scratch_operands = 2 : i64, tpu.core_type = #tpu.core_type<tc>, window_params = [{transform_indices = @transform_0, window_bounds = array<i64: 1, 256, 128>}, {pipeline_mode = #tpu.pipeline_mode<synchronous>, transform_indices = @transform_1, window_bounds = array<i64: 1, 128>}, {pipeline_mode = #tpu.pipeline_mode<synchronous>, transform_indices = @transform_2, window_bounds = array<i64: 1, 128>}, {transform_indices = @transform_3, window_bounds = array<i64: 9, 128, 128>}, {transform_indices = @transform_4, window_bounds = array<i64: 1, 256, 128>}, {transform_indices = @transform_5, window_bounds = array<i64: 1, 8, 128>}]} {
    %c0_i32 = arith.constant 0 : i32
    %0 = arith.cmpi eq, %arg1, %c0_i32 : i32
    %1 = arith.extui %0 : i1 to i32
    %c0_i32_0 = arith.constant 0 : i32
    %2 = arith.cmpi ne, %1, %c0_i32_0 : i32
    scf.if %2 {
      %c0_94 = arith.constant 0 : index
      %c0_95 = arith.constant 0 : index
      %c0_96 = arith.constant 0 : index
      %135 = vector.load %arg2[%c0_94, %c0_95, %c0_96] : memref<1x256x128xbf16, #tpu.memory_space<vmem>>, vector<1x256x128xbf16>
      %136 = vector.shape_cast %135 : vector<1x256x128xbf16> to vector<256x128xbf16>
      %137 = arith.extf %136 : vector<256x128xbf16> to vector<256x128xf32>
      %c0_97 = arith.constant 0 : index
      %c0_98 = arith.constant 0 : index
      %138 = vector.load %arg3[%c0_97, %c0_98] : memref<1x128xf32, #tpu.memory_space<vmem>>, vector<1x128xf32>
      %139 = vector.broadcast %138 : vector<1x128xf32> to vector<256x128xf32>
      %140 = arith.mulf %137, %139 : vector<256x128xf32>
      %c0_99 = arith.constant 0 : index
      %c0_100 = arith.constant 0 : index
      %141 = vector.load %arg4[%c0_99, %c0_100] : memref<1x128xf32, #tpu.memory_space<vmem>>, vector<1x128xf32>
      %142 = vector.broadcast %141 : vector<1x128xf32> to vector<256x128xf32>
      %143 = arith.addf %140, %142 : vector<256x128xf32>
      %cst_101 = arith.constant 0.000000e+00 : f32
      %144 = vector.broadcast %cst_101 : f32 to vector<256x128xf32>
      %145 = arith.maximumf %143, %144 : vector<256x128xf32>
      %146 = arith.truncf %145 : vector<256x128xf32> to vector<256x128xbf16>
      %cst_102 = arith.constant 0.000000e+00 : bf16
      %147 = vector.broadcast %cst_102 : bf16 to vector<32x128xbf16>
      %c0_103 = arith.constant 0 : index
      %c0_104 = arith.constant 0 : index
      %148 = vector.load %arg8[%c0_103, %c0_104] : memref<305x128xbf16, #tpu.memory_space<vmem>>, vector<32x128xbf16>
      tpu.vector_store %arg8[%c0_103, %c0_104], %147 {strides = array<i32>} : memref<305x128xbf16, #tpu.memory_space<vmem>>, vector<32x128xbf16>,
      %c32_105 = arith.constant 32 : index
      %c0_106 = arith.constant 0 : index
      %149 = vector.load %arg8[%c32_105, %c0_106] : memref<305x128xbf16, #tpu.memory_space<vmem>>, vector<256x128xbf16>
      tpu.vector_store %arg8[%c32_105, %c0_106], %146 {strides = array<i32>} : memref<305x128xbf16, #tpu.memory_space<vmem>>, vector<256x128xbf16>,
      %cst_107 = arith.constant 0.000000e+00 : bf16
      %150 = vector.broadcast %cst_107 : bf16 to vector<17x128xbf16>
      %c288 = arith.constant 288 : index
      %c0_108 = arith.constant 0 : index
      %151 = vector.load %arg8[%c288, %c0_108] : memref<305x128xbf16, #tpu.memory_space<vmem>>, vector<17x128xbf16>
      tpu.vector_store %arg8[%c288, %c0_108], %150 {strides = array<i32>} : memref<305x128xbf16, #tpu.memory_space<vmem>>, vector<17x128xbf16>,
    } else {
    }
    %3 = tpu.iota {dimensions = array<i32: 0>} : vector<256x1xi32>
    %c16_i32 = arith.constant 16 : i32
    %c0_i32_1 = arith.constant 0 : i32
    %4 = arith.cmpi eq, %c16_i32, %c0_i32_1 : i32
    %c1_i32 = arith.constant 1 : i32
    %5 = arith.select %4, %c1_i32, %c16_i32 : i32
    %6 = vector.broadcast %5 : i32 to vector<256x1xi32>
    %7 = arith.remsi %3, %6 : vector<256x1xi32>
    %c0_i32_2 = arith.constant 0 : i32
    %8 = vector.broadcast %c0_i32_2 : i32 to vector<256x1xi32>
    %9 = arith.cmpi ne, %7, %8 : vector<256x1xi32>
    %c0_i32_3 = arith.constant 0 : i32
    %10 = vector.broadcast %c0_i32_3 : i32 to vector<256x1xi32>
    %11 = arith.cmpi slt, %7, %10 : vector<256x1xi32>
    %c0_i32_4 = arith.constant 0 : i32
    %12 = arith.cmpi slt, %5, %c0_i32_4 : i32
    %13 = vector.broadcast %12 : i1 to vector<256x1xi1>
    %14 = vector.broadcast %13 : vector<256x1xi1> to vector<256x1xi1>
    %15 = arith.xori %11, %14 : vector<256x1xi1>
    %16 = arith.andi %15, %9 : vector<256x1xi1>
    %17 = vector.broadcast %5 : i32 to vector<256x1xi32>
    %18 = arith.addi %7, %17 : vector<256x1xi32>
    %19 = arith.select %16, %18, %7 : vector<256x1xi1>, vector<256x1xi32>
    %c1_i32_5 = arith.constant 1 : i32
    %20 = vector.broadcast %c1_i32_5 : i32 to vector<256x1xi32>
    %21 = arith.cmpi sge, %19, %20 : vector<256x1xi32>
    %c14_i32 = arith.constant 14 : i32
    %22 = vector.broadcast %c14_i32 : i32 to vector<256x1xi32>
    %23 = arith.cmpi sle, %19, %22 : vector<256x1xi32>
    %c15 = arith.constant 15 : index
    %c0 = arith.constant 0 : index
    %24 = vector.load %arg8[%c15, %c0] : memref<305x128xbf16, #tpu.memory_space<vmem>>, vector<256x128xbf16>
    %cst = arith.constant 0.000000e+00 : bf16
    %25 = vector.broadcast %cst : bf16 to vector<256x128xbf16>
    %26 = vector.shape_cast %21 : vector<256x1xi1> to vector<256x1xi1>
    %27 = vector.broadcast %26 : vector<256x1xi1> to vector<256x128xi1>
    %28 = arith.select %27, %24, %25 : vector<256x128xi1>, vector<256x128xbf16>
    %c0_6 = arith.constant 0 : index
    %c0_7 = arith.constant 0 : index
    %c0_8 = arith.constant 0 : index
    %29 = vector.load %arg5[%c0_6, %c0_7, %c0_8] : memref<9x128x128xbf16, #tpu.memory_space<vmem>>, vector<1x128x128xbf16>
    %30 = vector.shape_cast %29 : vector<1x128x128xbf16> to vector<128x128xbf16>
    %cst_9 = arith.constant dense<0.000000e+00> : vector<256x128xf32>
    %31 = tpu.matmul %28, %30, %cst_9 {dimension_numbers = #tpu.dot_dimension_numbers<[1], [0], [0], [1], [0, 0, 1, 1], [], []>} : vector<256x128xbf16>, vector<128x128xbf16>, vector<256x128xf32> -> vector<256x128xf32>
    %c0_10 = arith.constant 0 : index
    %c0_11 = arith.constant 0 : index
    %32 = vector.load %arg9[%c0_10, %c0_11] : memref<256x128xf32, #tpu.memory_space<vmem>>, vector<256x128xf32>
    tpu.vector_store %arg9[%c0_10, %c0_11], %31 {strides = array<i32>} : memref<256x128xf32, #tpu.memory_space<vmem>>, vector<256x128xf32>,
    %c16 = arith.constant 16 : index
    %c0_12 = arith.constant 0 : index
    %33 = vector.load %arg8[%c16, %c0_12] : memref<305x128xbf16, #tpu.memory_space<vmem>>, vector<256x128xbf16>
    %c1 = arith.constant 1 : index
    %c0_13 = arith.constant 0 : index
    %c0_14 = arith.constant 0 : index
    %34 = vector.load %arg5[%c1, %c0_13, %c0_14] : memref<9x128x128xbf16, #tpu.memory_space<vmem>>, vector<1x128x128xbf16>
    %35 = vector.shape_cast %34 : vector<1x128x128xbf16> to vector<128x128xbf16>
    %cst_15 = arith.constant dense<0.000000e+00> : vector<256x128xf32>
    %36 = tpu.matmul %33, %35, %cst_15 {dimension_numbers = #tpu.dot_dimension_numbers<[1], [0], [0], [1], [0, 0, 1, 1], [], []>} : vector<256x128xbf16>, vector<128x128xbf16>, vector<256x128xf32> -> vector<256x128xf32>
    %c0_16 = arith.constant 0 : index
    %c0_17 = arith.constant 0 : index
    %37 = vector.load %arg9[%c0_16, %c0_17] : memref<256x128xf32, #tpu.memory_space<vmem>>, vector<256x128xf32>
    %38 = arith.addf %37, %36 : vector<256x128xf32>
    %c0_18 = arith.constant 0 : index
    %c0_19 = arith.constant 0 : index
    %39 = vector.load %arg9[%c0_18, %c0_19] : memref<256x128xf32, #tpu.memory_space<vmem>>, vector<256x128xf32>
    tpu.vector_store %arg9[%c0_18, %c0_19], %38 {strides = array<i32>} : memref<256x128xf32, #tpu.memory_space<vmem>>, vector<256x128xf32>,
    %c17 = arith.constant 17 : index
    %c0_20 = arith.constant 0 : index
    %40 = vector.load %arg8[%c17, %c0_20] : memref<305x128xbf16, #tpu.memory_space<vmem>>, vector<256x128xbf16>
    %cst_21 = arith.constant 0.000000e+00 : bf16
    %41 = vector.broadcast %cst_21 : bf16 to vector<256x128xbf16>
    %42 = vector.shape_cast %23 : vector<256x1xi1> to vector<256x1xi1>
    %43 = vector.broadcast %42 : vector<256x1xi1> to vector<256x128xi1>
    %44 = arith.select %43, %40, %41 : vector<256x128xi1>, vector<256x128xbf16>
    %c2 = arith.constant 2 : index
    %c0_22 = arith.constant 0 : index
    %c0_23 = arith.constant 0 : index
    %45 = vector.load %arg5[%c2, %c0_22, %c0_23] : memref<9x128x128xbf16, #tpu.memory_space<vmem>>, vector<1x128x128xbf16>
    %46 = vector.shape_cast %45 : vector<1x128x128xbf16> to vector<128x128xbf16>
    %cst_24 = arith.constant dense<0.000000e+00> : vector<256x128xf32>
    %47 = tpu.matmul %44, %46, %cst_24 {dimension_numbers = #tpu.dot_dimension_numbers<[1], [0], [0], [1], [0, 0, 1, 1], [], []>} : vector<256x128xbf16>, vector<128x128xbf16>, vector<256x128xf32> -> vector<256x128xf32>
    %c0_25 = arith.constant 0 : index
    %c0_26 = arith.constant 0 : index
    %48 = vector.load %arg9[%c0_25, %c0_26] : memref<256x128xf32, #tpu.memory_space<vmem>>, vector<256x128xf32>
    %49 = arith.addf %48, %47 : vector<256x128xf32>
    %c0_27 = arith.constant 0 : index
    %c0_28 = arith.constant 0 : index
    %50 = vector.load %arg9[%c0_27, %c0_28] : memref<256x128xf32, #tpu.memory_space<vmem>>, vector<256x128xf32>
    tpu.vector_store %arg9[%c0_27, %c0_28], %49 {strides = array<i32>} : memref<256x128xf32, #tpu.memory_space<vmem>>, vector<256x128xf32>,
    %c31 = arith.constant 31 : index
    %c0_29 = arith.constant 0 : index
    %51 = vector.load %arg8[%c31, %c0_29] : memref<305x128xbf16, #tpu.memory_space<vmem>>, vector<256x128xbf16>
    %cst_30 = arith.constant 0.000000e+00 : bf16
    %52 = vector.broadcast %cst_30 : bf16 to vector<256x128xbf16>
    %53 = vector.shape_cast %21 : vector<256x1xi1> to vector<256x1xi1>
    %54 = vector.broadcast %53 : vector<256x1xi1> to vector<256x128xi1>
    %55 = arith.select %54, %51, %52 : vector<256x128xi1>, vector<256x128xbf16>
    %c3 = arith.constant 3 : index
    %c0_31 = arith.constant 0 : index
    %c0_32 = arith.constant 0 : index
    %56 = vector.load %arg5[%c3, %c0_31, %c0_32] : memref<9x128x128xbf16, #tpu.memory_space<vmem>>, vector<1x128x128xbf16>
    %57 = vector.shape_cast %56 : vector<1x128x128xbf16> to vector<128x128xbf16>
    %cst_33 = arith.constant dense<0.000000e+00> : vector<256x128xf32>
    %58 = tpu.matmul %55, %57, %cst_33 {dimension_numbers = #tpu.dot_dimension_numbers<[1], [0], [0], [1], [0, 0, 1, 1], [], []>} : vector<256x128xbf16>, vector<128x128xbf16>, vector<256x128xf32> -> vector<256x128xf32>
    %c0_34 = arith.constant 0 : index
    %c0_35 = arith.constant 0 : index
    %59 = vector.load %arg9[%c0_34, %c0_35] : memref<256x128xf32, #tpu.memory_space<vmem>>, vector<256x128xf32>
    %60 = arith.addf %59, %58 : vector<256x128xf32>
    %c0_36 = arith.constant 0 : index
    %c0_37 = arith.constant 0 : index
    %61 = vector.load %arg9[%c0_36, %c0_37] : memref<256x128xf32, #tpu.memory_space<vmem>>, vector<256x128xf32>
    tpu.vector_store %arg9[%c0_36, %c0_37], %60 {strides = array<i32>} : memref<256x128xf32, #tpu.memory_space<vmem>>, vector<256x128xf32>,
    %c32 = arith.constant 32 : index
    %c0_38 = arith.constant 0 : index
    %62 = vector.load %arg8[%c32, %c0_38] : memref<305x128xbf16, #tpu.memory_space<vmem>>, vector<256x128xbf16>
    %c4 = arith.constant 4 : index
    %c0_39 = arith.constant 0 : index
    %c0_40 = arith.constant 0 : index
    %63 = vector.load %arg5[%c4, %c0_39, %c0_40] : memref<9x128x128xbf16, #tpu.memory_space<vmem>>, vector<1x128x128xbf16>
    %64 = vector.shape_cast %63 : vector<1x128x128xbf16> to vector<128x128xbf16>
    %cst_41 = arith.constant dense<0.000000e+00> : vector<256x128xf32>
    %65 = tpu.matmul %62, %64, %cst_41 {dimension_numbers = #tpu.dot_dimension_numbers<[1], [0], [0], [1], [0, 0, 1, 1], [], []>} : vector<256x128xbf16>, vector<128x128xbf16>, vector<256x128xf32> -> vector<256x128xf32>
    %c0_42 = arith.constant 0 : index
    %c0_43 = arith.constant 0 : index
    %66 = vector.load %arg9[%c0_42, %c0_43] : memref<256x128xf32, #tpu.memory_space<vmem>>, vector<256x128xf32>
    %67 = arith.addf %66, %65 : vector<256x128xf32>
    %c0_44 = arith.constant 0 : index
    %c0_45 = arith.constant 0 : index
    %68 = vector.load %arg9[%c0_44, %c0_45] : memref<256x128xf32, #tpu.memory_space<vmem>>, vector<256x128xf32>
    tpu.vector_store %arg9[%c0_44, %c0_45], %67 {strides = array<i32>} : memref<256x128xf32, #tpu.memory_space<vmem>>, vector<256x128xf32>,
    %c33 = arith.constant 33 : index
    %c0_46 = arith.constant 0 : index
    %69 = vector.load %arg8[%c33, %c0_46] : memref<305x128xbf16, #tpu.memory_space<vmem>>, vector<256x128xbf16>
    %cst_47 = arith.constant 0.000000e+00 : bf16
    %70 = vector.broadcast %cst_47 : bf16 to vector<256x128xbf16>
    %71 = vector.shape_cast %23 : vector<256x1xi1> to vector<256x1xi1>
    %72 = vector.broadcast %71 : vector<256x1xi1> to vector<256x128xi1>
    %73 = arith.select %72, %69, %70 : vector<256x128xi1>, vector<256x128xbf16>
    %c5 = arith.constant 5 : index
    %c0_48 = arith.constant 0 : index
    %c0_49 = arith.constant 0 : index
    %74 = vector.load %arg5[%c5, %c0_48, %c0_49] : memref<9x128x128xbf16, #tpu.memory_space<vmem>>, vector<1x128x128xbf16>
    %75 = vector.shape_cast %74 : vector<1x128x128xbf16> to vector<128x128xbf16>
    %cst_50 = arith.constant dense<0.000000e+00> : vector<256x128xf32>
    %76 = tpu.matmul %73, %75, %cst_50 {dimension_numbers = #tpu.dot_dimension_numbers<[1], [0], [0], [1], [0, 0, 1, 1], [], []>} : vector<256x128xbf16>, vector<128x128xbf16>, vector<256x128xf32> -> vector<256x128xf32>
    %c0_51 = arith.constant 0 : index
    %c0_52 = arith.constant 0 : index
    %77 = vector.load %arg9[%c0_51, %c0_52] : memref<256x128xf32, #tpu.memory_space<vmem>>, vector<256x128xf32>
    %78 = arith.addf %77, %76 : vector<256x128xf32>
    %c0_53 = arith.constant 0 : index
    %c0_54 = arith.constant 0 : index
    %79 = vector.load %arg9[%c0_53, %c0_54] : memref<256x128xf32, #tpu.memory_space<vmem>>, vector<256x128xf32>
    tpu.vector_store %arg9[%c0_53, %c0_54], %78 {strides = array<i32>} : memref<256x128xf32, #tpu.memory_space<vmem>>, vector<256x128xf32>,
    %c47 = arith.constant 47 : index
    %c0_55 = arith.constant 0 : index
    %80 = vector.load %arg8[%c47, %c0_55] : memref<305x128xbf16, #tpu.memory_space<vmem>>, vector<256x128xbf16>
    %cst_56 = arith.constant 0.000000e+00 : bf16
    %81 = vector.broadcast %cst_56 : bf16 to vector<256x128xbf16>
    %82 = vector.shape_cast %21 : vector<256x1xi1> to vector<256x1xi1>
    %83 = vector.broadcast %82 : vector<256x1xi1> to vector<256x128xi1>
    %84 = arith.select %83, %80, %81 : vector<256x128xi1>, vector<256x128xbf16>
    %c6 = arith.constant 6 : index
    %c0_57 = arith.constant 0 : index
    %c0_58 = arith.constant 0 : index
    %85 = vector.load %arg5[%c6, %c0_57, %c0_58] : memref<9x128x128xbf16, #tpu.memory_space<vmem>>, vector<1x128x128xbf16>
    %86 = vector.shape_cast %85 : vector<1x128x128xbf16> to vector<128x128xbf16>
    %cst_59 = arith.constant dense<0.000000e+00> : vector<256x128xf32>
    %87 = tpu.matmul %84, %86, %cst_59 {dimension_numbers = #tpu.dot_dimension_numbers<[1], [0], [0], [1], [0, 0, 1, 1], [], []>} : vector<256x128xbf16>, vector<128x128xbf16>, vector<256x128xf32> -> vector<256x128xf32>
    %c0_60 = arith.constant 0 : index
    %c0_61 = arith.constant 0 : index
    %88 = vector.load %arg9[%c0_60, %c0_61] : memref<256x128xf32, #tpu.memory_space<vmem>>, vector<256x128xf32>
    %89 = arith.addf %88, %87 : vector<256x128xf32>
    %c0_62 = arith.constant 0 : index
    %c0_63 = arith.constant 0 : index
    %90 = vector.load %arg9[%c0_62, %c0_63] : memref<256x128xf32, #tpu.memory_space<vmem>>, vector<256x128xf32>
    tpu.vector_store %arg9[%c0_62, %c0_63], %89 {strides = array<i32>} : memref<256x128xf32, #tpu.memory_space<vmem>>, vector<256x128xf32>,
    %c48 = arith.constant 48 : index
    %c0_64 = arith.constant 0 : index
    %91 = vector.load %arg8[%c48, %c0_64] : memref<305x128xbf16, #tpu.memory_space<vmem>>, vector<256x128xbf16>
    %c7 = arith.constant 7 : index
    %c0_65 = arith.constant 0 : index
    %c0_66 = arith.constant 0 : index
    %92 = vector.load %arg5[%c7, %c0_65, %c0_66] : memref<9x128x128xbf16, #tpu.memory_space<vmem>>, vector<1x128x128xbf16>
    %93 = vector.shape_cast %92 : vector<1x128x128xbf16> to vector<128x128xbf16>
    %cst_67 = arith.constant dense<0.000000e+00> : vector<256x128xf32>
    %94 = tpu.matmul %91, %93, %cst_67 {dimension_numbers = #tpu.dot_dimension_numbers<[1], [0], [0], [1], [0, 0, 1, 1], [], []>} : vector<256x128xbf16>, vector<128x128xbf16>, vector<256x128xf32> -> vector<256x128xf32>
    %c0_68 = arith.constant 0 : index
    %c0_69 = arith.constant 0 : index
    %95 = vector.load %arg9[%c0_68, %c0_69] : memref<256x128xf32, #tpu.memory_space<vmem>>, vector<256x128xf32>
    %96 = arith.addf %95, %94 : vector<256x128xf32>
    %c0_70 = arith.constant 0 : index
    %c0_71 = arith.constant 0 : index
    %97 = vector.load %arg9[%c0_70, %c0_71] : memref<256x128xf32, #tpu.memory_space<vmem>>, vector<256x128xf32>
    tpu.vector_store %arg9[%c0_70, %c0_71], %96 {strides = array<i32>} : memref<256x128xf32, #tpu.memory_space<vmem>>, vector<256x128xf32>,
    %c49 = arith.constant 49 : index
    %c0_72 = arith.constant 0 : index
    %98 = vector.load %arg8[%c49, %c0_72] : memref<305x128xbf16, #tpu.memory_space<vmem>>, vector<256x128xbf16>
    %cst_73 = arith.constant 0.000000e+00 : bf16
    %99 = vector.broadcast %cst_73 : bf16 to vector<256x128xbf16>
    %100 = vector.shape_cast %23 : vector<256x1xi1> to vector<256x1xi1>
    %101 = vector.broadcast %100 : vector<256x1xi1> to vector<256x128xi1>
    %102 = arith.select %101, %98, %99 : vector<256x128xi1>, vector<256x128xbf16>
    %c8 = arith.constant 8 : index
    %c0_74 = arith.constant 0 : index
    %c0_75 = arith.constant 0 : index
    %103 = vector.load %arg5[%c8, %c0_74, %c0_75] : memref<9x128x128xbf16, #tpu.memory_space<vmem>>, vector<1x128x128xbf16>
    %104 = vector.shape_cast %103 : vector<1x128x128xbf16> to vector<128x128xbf16>
    %cst_76 = arith.constant dense<0.000000e+00> : vector<256x128xf32>
    %105 = tpu.matmul %102, %104, %cst_76 {dimension_numbers = #tpu.dot_dimension_numbers<[1], [0], [0], [1], [0, 0, 1, 1], [], []>} : vector<256x128xbf16>, vector<128x128xbf16>, vector<256x128xf32> -> vector<256x128xf32>
    %c0_77 = arith.constant 0 : index
    %c0_78 = arith.constant 0 : index
    %106 = vector.load %arg9[%c0_77, %c0_78] : memref<256x128xf32, #tpu.memory_space<vmem>>, vector<256x128xf32>
    %107 = arith.addf %106, %105 : vector<256x128xf32>
    %c0_79 = arith.constant 0 : index
    %c0_80 = arith.constant 0 : index
    %108 = vector.load %arg9[%c0_79, %c0_80] : memref<256x128xf32, #tpu.memory_space<vmem>>, vector<256x128xf32>
    tpu.vector_store %arg9[%c0_79, %c0_80], %107 {strides = array<i32>} : memref<256x128xf32, #tpu.memory_space<vmem>>, vector<256x128xf32>,
    %c0_81 = arith.constant 0 : index
    %c0_82 = arith.constant 0 : index
    %109 = vector.load %arg9[%c0_81, %c0_82] : memref<256x128xf32, #tpu.memory_space<vmem>>, vector<256x128xf32>
    %110 = arith.truncf %109 : vector<256x128xf32> to vector<256x128xbf16>
    %c0_83 = arith.constant 0 : index
    %c0_84 = arith.constant 0 : index
    %c0_85 = arith.constant 0 : index
    %111 = vector.load %arg6[%c0_83, %c0_84, %c0_85] : memref<1x256x128xbf16, #tpu.memory_space<vmem>>, vector<1x256x128xbf16>
    %112 = vector.shape_cast %111 : vector<1x256x128xbf16> to vector<256x128xbf16>
    %113 = vector.shape_cast %110 : vector<256x128xbf16> to vector<1x256x128xbf16>
    tpu.vector_store %arg6[%c0_83, %c0_84, %c0_85], %113 {strides = array<i32>} : memref<1x256x128xbf16, #tpu.memory_space<vmem>>, vector<1x256x128xbf16>,
    %114 = arith.extf %110 : vector<256x128xbf16> to vector<256x128xf32>
    %cst_86 = arith.constant dense<0.000000e+00> : vector<128xf32>
    %115 = vector.multi_reduction <add>, %114, %cst_86 [0] : vector<256x128xf32> to vector<128xf32>
    %116 = vector.shape_cast %115 : vector<128xf32> to vector<1x128xf32>
    %117 = arith.mulf %114, %114 : vector<256x128xf32>
    %cst_87 = arith.constant dense<0.000000e+00> : vector<128xf32>
    %118 = vector.multi_reduction <add>, %117, %cst_87 [0] : vector<256x128xf32> to vector<128xf32>
    %119 = vector.shape_cast %118 : vector<128xf32> to vector<1x128xf32>
    %120 = tpu.iota {dimensions = array<i32: 0>} : vector<8x128xi32>
    %c0_i32_88 = arith.constant 0 : i32
    %121 = vector.broadcast %c0_i32_88 : i32 to vector<8x128xi32>
    %122 = arith.cmpi eq, %120, %121 : vector<8x128xi32>
    %c1_i32_89 = arith.constant 1 : i32
    %123 = vector.broadcast %c1_i32_89 : i32 to vector<8x128xi32>
    %124 = arith.cmpi eq, %120, %123 : vector<8x128xi32>
    %cst_90 = arith.constant 0.000000e+00 : f32
    %125 = vector.shape_cast %119 : vector<1x128xf32> to vector<1x128xf32>
    %126 = vector.broadcast %125 : vector<1x128xf32> to vector<8x128xf32>
    %127 = vector.broadcast %cst_90 : f32 to vector<8x128xf32>
    %128 = arith.select %124, %126, %127 : vector<8x128xi1>, vector<8x128xf32>
    %129 = vector.shape_cast %116 : vector<1x128xf32> to vector<1x128xf32>
    %130 = vector.broadcast %129 : vector<1x128xf32> to vector<8x128xf32>
    %131 = arith.select %122, %130, %128 : vector<8x128xi1>, vector<8x128xf32>
    %c0_91 = arith.constant 0 : index
    %c0_92 = arith.constant 0 : index
    %c0_93 = arith.constant 0 : index
    %132 = vector.load %arg7[%c0_91, %c0_92, %c0_93] : memref<1x8x128xf32, #tpu.memory_space<vmem>>, vector<1x8x128xf32>
    %133 = vector.shape_cast %132 : vector<1x8x128xf32> to vector<8x128xf32>
    %134 = vector.shape_cast %131 : vector<8x128xf32> to vector<1x8x128xf32>
    tpu.vector_store %arg7[%c0_91, %c0_92, %c0_93], %134 {strides = array<i32>} : memref<1x8x128xf32, #tpu.memory_space<vmem>>, vector<1x8x128xf32>,
    return
  }
  func.func @transform_0(%arg0: i32, %arg1: i32) -> (i32, i32, i32) {
    %c0_i32 = arith.constant 0 : i32
    %c0_i32_0 = arith.constant 0 : i32
    %c0_i32_1 = arith.constant 0 : i32
    return %arg0, %c0_i32, %c0_i32_0 : i32, i32, i32
  }
  func.func @transform_1(%arg0: i32, %arg1: i32) -> (i32, i32) {
    %c0_i32 = arith.constant 0 : i32
    %c0_i32_0 = arith.constant 0 : i32
    %c0_i32_1 = arith.constant 0 : i32
    return %c0_i32, %c0_i32_0 : i32, i32
  }
  func.func @transform_2(%arg0: i32, %arg1: i32) -> (i32, i32) {
    %c0_i32 = arith.constant 0 : i32
    %c0_i32_0 = arith.constant 0 : i32
    %c0_i32_1 = arith.constant 0 : i32
    return %c0_i32, %c0_i32_0 : i32, i32
  }
  func.func @transform_3(%arg0: i32, %arg1: i32) -> (i32, i32, i32) {
    %c0_i32 = arith.constant 0 : i32
    %c0_i32_0 = arith.constant 0 : i32
    %c0_i32_1 = arith.constant 0 : i32
    return %c0_i32, %c0_i32_0, %arg1 : i32, i32, i32
  }
  func.func @transform_4(%arg0: i32, %arg1: i32) -> (i32, i32, i32) {
    %c0_i32 = arith.constant 0 : i32
    %c0_i32_0 = arith.constant 0 : i32
    return %arg0, %c0_i32, %arg1 : i32, i32, i32
  }
  func.func @transform_5(%arg0: i32, %arg1: i32) -> (i32, i32, i32) {
    %c0_i32 = arith.constant 0 : i32
    %c0_i32_0 = arith.constant 0 : i32
    return %arg0, %c0_i32, %arg1 : i32, i32, i32
  }
}

module attributes {stable_mosaic.version = 11 : i64} {
  func.func @_gemm_stats_kernel(%arg0: i32, %arg1: i32, %arg2: i32, %arg3: memref<1x256x128xbf16, #tpu.memory_space<vmem>>, %arg4: memref<1x128xf32, #tpu.memory_space<vmem>>, %arg5: memref<1x128xf32, #tpu.memory_space<vmem>>, %arg6: memref<128x128xbf16, #tpu.memory_space<vmem>>, %arg7: memref<1x256x128xbf16, #tpu.memory_space<vmem>>, %arg8: memref<1x1x8x128xf32, #tpu.memory_space<vmem>>, %arg9: memref<256x128xbf16, #tpu.memory_space<vmem>>) attributes {dimension_semantics = [#tpu.dimension_semantics<parallel>, #tpu.dimension_semantics<parallel>, #tpu.dimension_semantics<arbitrary>], iteration_bounds = array<i64: 2, 1, 1>, scalar_prefetch = 0 : i64, scratch_operands = 1 : i64, tpu.core_type = #tpu.core_type<tc>, window_params = [{transform_indices = @transform_0, window_bounds = array<i64: 1, 256, 128>}, {pipeline_mode = #tpu.pipeline_mode<synchronous>, transform_indices = @transform_1, window_bounds = array<i64: 1, 128>}, {pipeline_mode = #tpu.pipeline_mode<synchronous>, transform_indices = @transform_2, window_bounds = array<i64: 1, 128>}, {transform_indices = @transform_3, window_bounds = array<i64: 128, 128>}, {transform_indices = @transform_4, window_bounds = array<i64: 1, 256, 128>}, {transform_indices = @transform_5, window_bounds = array<i64: 1, 1, 8, 128>}]} {
    %c0_i32 = arith.constant 0 : i32
    %0 = arith.cmpi eq, %arg2, %c0_i32 : i32
    %1 = arith.extui %0 : i1 to i32
    %c0_i32_0 = arith.constant 0 : i32
    %2 = arith.cmpi ne, %1, %c0_i32_0 : i32
    scf.if %2 {
      %c0_15 = arith.constant 0 : index
      %c0_16 = arith.constant 0 : index
      %c0_17 = arith.constant 0 : index
      %31 = vector.load %arg3[%c0_15, %c0_16, %c0_17] : memref<1x256x128xbf16, #tpu.memory_space<vmem>>, vector<1x256x128xbf16>
      %32 = vector.shape_cast %31 : vector<1x256x128xbf16> to vector<256x128xbf16>
      %33 = arith.extf %32 : vector<256x128xbf16> to vector<256x128xf32>
      %c0_18 = arith.constant 0 : index
      %c0_19 = arith.constant 0 : index
      %34 = vector.load %arg4[%c0_18, %c0_19] : memref<1x128xf32, #tpu.memory_space<vmem>>, vector<1x128xf32>
      %35 = vector.broadcast %34 : vector<1x128xf32> to vector<256x128xf32>
      %36 = arith.mulf %33, %35 : vector<256x128xf32>
      %c0_20 = arith.constant 0 : index
      %c0_21 = arith.constant 0 : index
      %37 = vector.load %arg5[%c0_20, %c0_21] : memref<1x128xf32, #tpu.memory_space<vmem>>, vector<1x128xf32>
      %38 = vector.broadcast %37 : vector<1x128xf32> to vector<256x128xf32>
      %39 = arith.addf %36, %38 : vector<256x128xf32>
      %cst_22 = arith.constant 0.000000e+00 : f32
      %40 = vector.broadcast %cst_22 : f32 to vector<256x128xf32>
      %41 = arith.maximumf %39, %40 : vector<256x128xf32>
      %42 = arith.truncf %41 : vector<256x128xf32> to vector<256x128xbf16>
      %c0_23 = arith.constant 0 : index
      %c0_24 = arith.constant 0 : index
      %43 = vector.load %arg9[%c0_23, %c0_24] : memref<256x128xbf16, #tpu.memory_space<vmem>>, vector<256x128xbf16>
      tpu.vector_store %arg9[%c0_23, %c0_24], %42 {strides = array<i32>} : memref<256x128xbf16, #tpu.memory_space<vmem>>, vector<256x128xbf16>,
    } else {
    }
    %c0 = arith.constant 0 : index
    %c0_1 = arith.constant 0 : index
    %3 = vector.load %arg9[%c0, %c0_1] : memref<256x128xbf16, #tpu.memory_space<vmem>>, vector<256x128xbf16>
    %c0_2 = arith.constant 0 : index
    %c0_3 = arith.constant 0 : index
    %4 = vector.load %arg6[%c0_2, %c0_3] : memref<128x128xbf16, #tpu.memory_space<vmem>>, vector<128x128xbf16>
    %cst = arith.constant dense<0.000000e+00> : vector<256x128xf32>
    %5 = tpu.matmul %3, %4, %cst {dimension_numbers = #tpu.dot_dimension_numbers<[1], [0], [0], [1], [0, 0, 1, 1], [], []>} : vector<256x128xbf16>, vector<128x128xbf16>, vector<256x128xf32> -> vector<256x128xf32>
    %6 = arith.truncf %5 : vector<256x128xf32> to vector<256x128xbf16>
    %c0_4 = arith.constant 0 : index
    %c0_5 = arith.constant 0 : index
    %c0_6 = arith.constant 0 : index
    %7 = vector.load %arg7[%c0_4, %c0_5, %c0_6] : memref<1x256x128xbf16, #tpu.memory_space<vmem>>, vector<1x256x128xbf16>
    %8 = vector.shape_cast %7 : vector<1x256x128xbf16> to vector<256x128xbf16>
    %9 = vector.shape_cast %6 : vector<256x128xbf16> to vector<1x256x128xbf16>
    tpu.vector_store %arg7[%c0_4, %c0_5, %c0_6], %9 {strides = array<i32>} : memref<1x256x128xbf16, #tpu.memory_space<vmem>>, vector<1x256x128xbf16>,
    %10 = arith.extf %6 : vector<256x128xbf16> to vector<256x128xf32>
    %cst_7 = arith.constant dense<0.000000e+00> : vector<128xf32>
    %11 = vector.multi_reduction <add>, %10, %cst_7 [0] : vector<256x128xf32> to vector<128xf32>
    %12 = vector.shape_cast %11 : vector<128xf32> to vector<1x128xf32>
    %13 = arith.mulf %10, %10 : vector<256x128xf32>
    %cst_8 = arith.constant dense<0.000000e+00> : vector<128xf32>
    %14 = vector.multi_reduction <add>, %13, %cst_8 [0] : vector<256x128xf32> to vector<128xf32>
    %15 = vector.shape_cast %14 : vector<128xf32> to vector<1x128xf32>
    %16 = tpu.iota {dimensions = array<i32: 0>} : vector<8x128xi32>
    %c0_i32_9 = arith.constant 0 : i32
    %17 = vector.broadcast %c0_i32_9 : i32 to vector<8x128xi32>
    %18 = arith.cmpi eq, %16, %17 : vector<8x128xi32>
    %c1_i32 = arith.constant 1 : i32
    %19 = vector.broadcast %c1_i32 : i32 to vector<8x128xi32>
    %20 = arith.cmpi eq, %16, %19 : vector<8x128xi32>
    %cst_10 = arith.constant 0.000000e+00 : f32
    %21 = vector.shape_cast %15 : vector<1x128xf32> to vector<1x128xf32>
    %22 = vector.broadcast %21 : vector<1x128xf32> to vector<8x128xf32>
    %23 = vector.broadcast %cst_10 : f32 to vector<8x128xf32>
    %24 = arith.select %20, %22, %23 : vector<8x128xi1>, vector<8x128xf32>
    %25 = vector.shape_cast %12 : vector<1x128xf32> to vector<1x128xf32>
    %26 = vector.broadcast %25 : vector<1x128xf32> to vector<8x128xf32>
    %27 = arith.select %18, %26, %24 : vector<8x128xi1>, vector<8x128xf32>
    %c0_11 = arith.constant 0 : index
    %c0_12 = arith.constant 0 : index
    %c0_13 = arith.constant 0 : index
    %c0_14 = arith.constant 0 : index
    %28 = vector.load %arg8[%c0_11, %c0_12, %c0_13, %c0_14] : memref<1x1x8x128xf32, #tpu.memory_space<vmem>>, vector<1x1x8x128xf32>
    %29 = vector.shape_cast %28 : vector<1x1x8x128xf32> to vector<8x128xf32>
    %30 = vector.shape_cast %27 : vector<8x128xf32> to vector<1x1x8x128xf32>
    tpu.vector_store %arg8[%c0_11, %c0_12, %c0_13, %c0_14], %30 {strides = array<i32>} : memref<1x1x8x128xf32, #tpu.memory_space<vmem>>, vector<1x1x8x128xf32>,
    return
  }
  func.func @transform_0(%arg0: i32, %arg1: i32, %arg2: i32) -> (i32, i32, i32) {
    %c0_i32 = arith.constant 0 : i32
    %c0_i32_0 = arith.constant 0 : i32
    return %arg0, %arg1, %c0_i32 : i32, i32, i32
  }
  func.func @transform_1(%arg0: i32, %arg1: i32, %arg2: i32) -> (i32, i32) {
    %c0_i32 = arith.constant 0 : i32
    %c0_i32_0 = arith.constant 0 : i32
    %c0_i32_1 = arith.constant 0 : i32
    return %c0_i32, %c0_i32_0 : i32, i32
  }
  func.func @transform_2(%arg0: i32, %arg1: i32, %arg2: i32) -> (i32, i32) {
    %c0_i32 = arith.constant 0 : i32
    %c0_i32_0 = arith.constant 0 : i32
    %c0_i32_1 = arith.constant 0 : i32
    return %c0_i32, %c0_i32_0 : i32, i32
  }
  func.func @transform_3(%arg0: i32, %arg1: i32, %arg2: i32) -> (i32, i32) {
    %c0_i32 = arith.constant 0 : i32
    %c0_i32_0 = arith.constant 0 : i32
    return %c0_i32, %arg2 : i32, i32
  }
  func.func @transform_4(%arg0: i32, %arg1: i32, %arg2: i32) -> (i32, i32, i32) {
    %c0_i32 = arith.constant 0 : i32
    return %arg0, %arg1, %arg2 : i32, i32, i32
  }
  func.func @transform_5(%arg0: i32, %arg1: i32, %arg2: i32) -> (i32, i32, i32, i32) {
    %c0_i32 = arith.constant 0 : i32
    %c0_i32_0 = arith.constant 0 : i32
    return %arg0, %arg1, %c0_i32, %arg2 : i32, i32, i32, i32
  }
}

module attributes {stable_mosaic.version = 11 : i64} {
  func.func @_merge_bn_bn_relu_kernel(%arg0: i32, %arg1: i32, %arg2: i32, %arg3: memref<1x256x128xbf16, #tpu.memory_space<vmem>>, %arg4: memref<1x128xf32, #tpu.memory_space<vmem>>, %arg5: memref<1x128xf32, #tpu.memory_space<vmem>>, %arg6: memref<1x256x128xbf16, #tpu.memory_space<vmem>>, %arg7: memref<1x128xf32, #tpu.memory_space<vmem>>, %arg8: memref<1x128xf32, #tpu.memory_space<vmem>>, %arg9: memref<1x256x128xbf16, #tpu.memory_space<vmem>>) attributes {dimension_semantics = [#tpu.dimension_semantics<parallel>, #tpu.dimension_semantics<parallel>, #tpu.dimension_semantics<parallel>], iteration_bounds = array<i64: 2, 1, 1>, scalar_prefetch = 0 : i64, scratch_operands = 0 : i64, tpu.core_type = #tpu.core_type<tc>, window_params = [{transform_indices = @transform_0, window_bounds = array<i64: 1, 256, 128>}, {transform_indices = @transform_1, window_bounds = array<i64: 1, 128>}, {transform_indices = @transform_2, window_bounds = array<i64: 1, 128>}, {transform_indices = @transform_3, window_bounds = array<i64: 1, 256, 128>}, {transform_indices = @transform_4, window_bounds = array<i64: 1, 128>}, {transform_indices = @transform_5, window_bounds = array<i64: 1, 128>}, {transform_indices = @transform_6, window_bounds = array<i64: 1, 256, 128>}]} {
    %c0 = arith.constant 0 : index
    %c0_0 = arith.constant 0 : index
    %c0_1 = arith.constant 0 : index
    %0 = vector.load %arg3[%c0, %c0_0, %c0_1] : memref<1x256x128xbf16, #tpu.memory_space<vmem>>, vector<1x256x128xbf16>
    %1 = vector.shape_cast %0 : vector<1x256x128xbf16> to vector<256x128xbf16>
    %2 = arith.extf %1 : vector<256x128xbf16> to vector<256x128xf32>
    %c0_2 = arith.constant 0 : index
    %c0_3 = arith.constant 0 : index
    %3 = vector.load %arg4[%c0_2, %c0_3] : memref<1x128xf32, #tpu.memory_space<vmem>>, vector<1x128xf32>
    %4 = vector.broadcast %3 : vector<1x128xf32> to vector<256x128xf32>
    %5 = arith.mulf %2, %4 : vector<256x128xf32>
    %c0_4 = arith.constant 0 : index
    %c0_5 = arith.constant 0 : index
    %6 = vector.load %arg5[%c0_4, %c0_5] : memref<1x128xf32, #tpu.memory_space<vmem>>, vector<1x128xf32>
    %7 = vector.broadcast %6 : vector<1x128xf32> to vector<256x128xf32>
    %8 = arith.addf %5, %7 : vector<256x128xf32>
    %c0_6 = arith.constant 0 : index
    %c0_7 = arith.constant 0 : index
    %c0_8 = arith.constant 0 : index
    %9 = vector.load %arg6[%c0_6, %c0_7, %c0_8] : memref<1x256x128xbf16, #tpu.memory_space<vmem>>, vector<1x256x128xbf16>
    %10 = vector.shape_cast %9 : vector<1x256x128xbf16> to vector<256x128xbf16>
    %11 = arith.extf %10 : vector<256x128xbf16> to vector<256x128xf32>
    %c0_9 = arith.constant 0 : index
    %c0_10 = arith.constant 0 : index
    %12 = vector.load %arg7[%c0_9, %c0_10] : memref<1x128xf32, #tpu.memory_space<vmem>>, vector<1x128xf32>
    %13 = vector.broadcast %12 : vector<1x128xf32> to vector<256x128xf32>
    %14 = arith.mulf %11, %13 : vector<256x128xf32>
    %c0_11 = arith.constant 0 : index
    %c0_12 = arith.constant 0 : index
    %15 = vector.load %arg8[%c0_11, %c0_12] : memref<1x128xf32, #tpu.memory_space<vmem>>, vector<1x128xf32>
    %16 = vector.broadcast %15 : vector<1x128xf32> to vector<256x128xf32>
    %17 = arith.addf %14, %16 : vector<256x128xf32>
    %18 = arith.addf %8, %17 : vector<256x128xf32>
    %cst = arith.constant 0.000000e+00 : f32
    %19 = vector.broadcast %cst : f32 to vector<256x128xf32>
    %20 = arith.maximumf %18, %19 : vector<256x128xf32>
    %21 = arith.truncf %20 : vector<256x128xf32> to vector<256x128xbf16>
    %c0_13 = arith.constant 0 : index
    %c0_14 = arith.constant 0 : index
    %c0_15 = arith.constant 0 : index
    %22 = vector.load %arg9[%c0_13, %c0_14, %c0_15] : memref<1x256x128xbf16, #tpu.memory_space<vmem>>, vector<1x256x128xbf16>
    %23 = vector.shape_cast %22 : vector<1x256x128xbf16> to vector<256x128xbf16>
    %24 = vector.shape_cast %21 : vector<256x128xbf16> to vector<1x256x128xbf16>
    tpu.vector_store %arg9[%c0_13, %c0_14, %c0_15], %24 {strides = array<i32>} : memref<1x256x128xbf16, #tpu.memory_space<vmem>>, vector<1x256x128xbf16>,
    return
  }
  func.func @transform_0(%arg0: i32, %arg1: i32, %arg2: i32) -> (i32, i32, i32) {
    %c0_i32 = arith.constant 0 : i32
    return %arg0, %arg1, %arg2 : i32, i32, i32
  }
  func.func @transform_1(%arg0: i32, %arg1: i32, %arg2: i32) -> (i32, i32) {
    %c0_i32 = arith.constant 0 : i32
    %c0_i32_0 = arith.constant 0 : i32
    return %c0_i32, %arg2 : i32, i32
  }
  func.func @transform_2(%arg0: i32, %arg1: i32, %arg2: i32) -> (i32, i32) {
    %c0_i32 = arith.constant 0 : i32
    %c0_i32_0 = arith.constant 0 : i32
    return %c0_i32, %arg2 : i32, i32
  }
  func.func @transform_3(%arg0: i32, %arg1: i32, %arg2: i32) -> (i32, i32, i32) {
    %c0_i32 = arith.constant 0 : i32
    return %arg0, %arg1, %arg2 : i32, i32, i32
  }
  func.func @transform_4(%arg0: i32, %arg1: i32, %arg2: i32) -> (i32, i32) {
    %c0_i32 = arith.constant 0 : i32
    %c0_i32_0 = arith.constant 0 : i32
    return %c0_i32, %arg2 : i32, i32
  }
  func.func @transform_5(%arg0: i32, %arg1: i32, %arg2: i32) -> (i32, i32) {
    %c0_i32 = arith.constant 0 : i32
    %c0_i32_0 = arith.constant 0 : i32
    return %c0_i32, %arg2 : i32, i32
  }
  func.func @transform_6(%arg0: i32, %arg1: i32, %arg2: i32) -> (i32, i32, i32) {
    %c0_i32 = arith.constant 0 : i32
    return %arg0, %arg1, %arg2 : i32, i32, i32
  }
}

</mosaic_0001>

<llo_original>
// kernel: bottleneck_forward.5
$region0: #{bottleneck_forward.5}
  #allocation0 [shape = 'u32[]', space=smem, size = 0x4, offset = 0x4, fixed_abs, tag = 'smem constant byte address 0x4 - core index']
  #allocation1 [shape = 'u32[144,128]{1,0:T(1,128)}', space=vmem, size = 0x12000, scoped, tag = 'internal scratch']
  %s0 = inlined_call_operand.vmem [shape: bf16[2,256,128], index: 0, kind: input, shape index: {}]
  %s1 = inlined_call_operand.vmem [shape: bf16[128,128], index: 1, kind: input, shape index: {}]
  %s2 = inlined_call_operand.vmem [shape: bf16[2,256,128], index: 2, kind: output, shape index: {0}]
  %s3 = inlined_call_operand.vmem [shape: f32[2,1,8,128], index: 3, kind: output, shape index: {1}]
  %4 = xla_tuple %s2, %s3
  %s5 = sld [smem:[#allocation0]]
  $region49: #{bottleneck_forward.5} parent=0
    _
  %s7 = ssub.s32 1, %s5
  %s8 = scalar_select 0, %s7, %s5
  loop: start=0, step=1, limit=4
  $region2: #{bottleneck_forward.5} parent=0 // loop_pre_header
    _
  $region3: #{bottleneck_forward.5} parent=0 // loop_header
    %s10 = sphi 0, %s14
    %p11 = scmp.ge.s32.totalorder %s10, 4
    %s17 = sphi 0, %s36
    %s18 = sphi 0, %s32
    %s19 = sphi 0, %s28
    %s20 = sphi 0, %s17
    %s21 = sphi 0, %s18
    %s22 = sphi 0, %s19
    %s23 = sphi 0, %s20
    %s24 = sphi 0, %s21
    %s25 = sphi 0, %s22
    %s41 = sphi 0, %s43
    %s44 = sphi 0, %s41
    %s45 = sphi 0, %s44
    %s61 = sphi 0, %s45
    %s67 = sphi 0, %s69
    %s70 = sphi 0, %s67
    %s71 = sphi 0, %s70
    %s87 = sphi 0, %s71
    %s97 = sphi 0, %s99
    %s100 = sphi 0, %s97
    %s101 = sphi 0, %s100
    %s117 = sphi 0, %s101
    %s127 = sphi 0, %s129
    %s130 = sphi 0, %s127
    %s131 = sphi 0, %s130
    %s147 = sphi 0, %s131
  $region4: #{bottleneck_forward.5} parent=0 // loop_header_branch
    %13 = sbr.rel (%p11) target = $region8
  $region5: #{bottleneck_forward.5} parent=0 // loop_body
    %s15 = ssub.s32 %s10, 1
    %s16 = ssub.s32 %s10, 2
    %s26 = sadd.s32 1, %s19
    %p27 = scmp.ge.s32.totalorder %s26, 1
    %s28 = scalar_select %p27, 0, %s26
    %s29 = sadd.s32 1, %s18
    %s30 = scalar_select %p27, %s29, %s18
    %p31 = scmp.ge.s32.totalorder %s30, 1
    %s32 = scalar_select %p31, 0, %s30
    %s33 = sadd.s32 1, %s17
    %s34 = scalar_select %p31, %s33, %s17
    %p35 = scmp.ge.s32.totalorder %s34, 2
    %s36 = scalar_select %p35, 0, %s34
    %s37 = ssub.s32 %s17, %s36
    %s38 = ssub.s32 %s18, %s32
    %s39 = sor.u32 %s37, %s38
    %p40 = scmp.eq.s32.totalorder %s39, 0
    %s42 = sadd.s32 %s41, 1
    %s43 = scalar_select %p40, %s41, %s42
    %p46 = pneg %p40
    %p47 = scmp.eq.s32.totalorder %s10, 1
    %p48 = por %p46, %p47
    %p49 = scmp.ne.s32.totalorder %s41, %s44
    %p50 = scmp.eq.s32.totalorder %s10, 0
    %p51 = por %p49, %p50
    %p52 = scmp.ne.s32.totalorder %s41, %s44
    %p53 = scmp.eq.s32.totalorder %s15, 1
    %p54 = por %p52, %p53
    %p55 = scmp.ne.s32.totalorder %s44, %s45
    %p56 = scmp.eq.s32.totalorder %s15, 0
    %p57 = por %p55, %p56
    %p58 = scmp.ne.s32.totalorder %s44, %s45
    %p59 = scmp.eq.s32.totalorder %s16, 1
    %p60 = por %p58, %p59
    %p62 = scmp.ne.s32.totalorder %s45, %s61
    %p63 = scmp.eq.s32.totalorder %s16, 0
    %p64 = por %p62, %p63
    %s65 = ssub.s32 %s19, %s28
    %p66 = scmp.eq.s32.totalorder %s65, 0
    %s68 = sadd.s32 %s67, 1
    %s69 = scalar_select %p66, %s67, %s68
    %p72 = pneg %p66
    %p73 = scmp.eq.s32.totalorder %s10, 1
    %p74 = por %p72, %p73
    %p75 = scmp.ne.s32.totalorder %s67, %s70
    %p76 = scmp.eq.s32.totalorder %s10, 0
    %p77 = por %p75, %p76
    %p78 = scmp.ne.s32.totalorder %s67, %s70
    %p79 = scmp.eq.s32.totalorder %s15, 1
    %p80 = por %p78, %p79
    %p81 = scmp.ne.s32.totalorder %s70, %s71
    %p82 = scmp.eq.s32.totalorder %s15, 0
    %p83 = por %p81, %p82
    %p84 = scmp.ne.s32.totalorder %s70, %s71
    %p85 = scmp.eq.s32.totalorder %s16, 1
    %p86 = por %p84, %p85
    %p88 = scmp.ne.s32.totalorder %s71, %s87
    %p89 = scmp.eq.s32.totalorder %s16, 0
    %p90 = por %p88, %p89
    %s91 = ssub.s32 %s17, %s36
    %s92 = ssub.s32 %s18, %s32
    %s93 = sor.u32 %s91, %s92
    %s94 = ssub.s32 %s19, %s28
    %s95 = sor.u32 %s93, %s94
    %p96 = scmp.eq.s32.totalorder %s95, 0
    %s98 = sadd.s32 %s97, 1
    %s99 = scalar_select %p96, %s97, %s98
    %p102 = pneg %p96
    %p103 = scmp.eq.s32.totalorder %s10, 1
    %p104 = por %p102, %p103
    %p105 = scmp.ne.s32.totalorder %s97, %s100
    %p106 = scmp.eq.s32.totalorder %s10, 0
    %p107 = por %p105, %p106
    %p108 = scmp.ne.s32.totalorder %s97, %s100
    %p109 = scmp.eq.s32.totalorder %s15, 1
    %p110 = por %p108, %p109
    %p111 = scmp.ne.s32.totalorder %s100, %s101
    %p112 = scmp.eq.s32.totalorder %s15, 0
    %p113 = por %p111, %p112
    %p114 = scmp.ne.s32.totalorder %s100, %s101
    %p115 = scmp.eq.s32.totalorder %s16, 1
    %p116 = por %p114, %p115
    %p118 = scmp.ne.s32.totalorder %s101, %s117
    %p119 = scmp.eq.s32.totalorder %s16, 0
    %p120 = por %p118, %p119
    %s121 = ssub.s32 %s17, %s36
    %s122 = ssub.s32 %s18, %s32
    %s123 = sor.u32 %s121, %s122
    %s124 = ssub.s32 %s19, %s28
    %s125 = sor.u32 %s123, %s124
    %p126 = scmp.eq.s32.totalorder %s125, 0
    %s128 = sadd.s32 %s127, 1
    %s129 = scalar_select %p126, %s127, %s128
    %p132 = pneg %p126
    %p133 = scmp.eq.s32.totalorder %s10, 1
    %p134 = por %p132, %p133
    %p135 = scmp.ne.s32.totalorder %s127, %s130
    %p136 = scmp.eq.s32.totalorder %s10, 0
    %p137 = por %p135, %p136
    %p138 = scmp.ne.s32.totalorder %s127, %s130
    %p139 = scmp.eq.s32.totalorder %s15, 1
    %p140 = por %p138, %p139
    %p141 = scmp.ne.s32.totalorder %s130, %s131
    %p142 = scmp.eq.s32.totalorder %s15, 0
    %p143 = por %p141, %p142
    %p144 = scmp.ne.s32.totalorder %s130, %s131
    %p145 = scmp.eq.s32.totalorder %s16, 1
    %p146 = por %p144, %p145
    %p148 = scmp.ne.s32.totalorder %s131, %s147
    %p149 = scmp.eq.s32.totalorder %s16, 0
    %p150 = por %p148, %p149
    %p151 = scmp.le.s32.totalorder 1, %s10
    %p152 = scmp.lt.s32.totalorder %s10, 3
    %p153 = pnand %p151, %p152
    %p154 = pneg %p153
    // Predicated region
    $region9: #{bottleneck_forward.5} parent=5 // pred_check
      _
    $region10: #{bottleneck_forward.5} parent=5 // pred_check_branch
      %156 = sbr.rel (%p153) target = $region12
    $region11: #{bottleneck_forward.5} parent=5 // pred_region
      %s157 = ssub.s32 %s10, 1
      // Predicated region
      $region13: #{bottleneck_forward.5} parent=11 // pred_check
        %p158 = pneg %p83
      $region14: #{bottleneck_forward.5} parent=11 // pred_check_branch
        %160 = sbr.rel (%p158) target = $region16
      $region15: #{bottleneck_forward.5} parent=11 // pred_region
        %p161 = scmp.lt.s32.totalorder %s22, 0
        %s162 = scalar_select %p161, %s22, 0
        %s163 = smul.addr %s162, 4
        %s164 = scalar_lea.vmem %s1, %s163
      $region16: #{bottleneck_forward.5} parent=11 // pred_fallthru
        _
    $region12: #{bottleneck_forward.5} parent=5 // pred_fallthru
      _
    %p165 = scmp.lt.s32.totalorder %s10, 2
    // Predicated region
    $region17: #{bottleneck_forward.5} parent=5 // pred_check
      %p166 = pneg %p165
    $region18: #{bottleneck_forward.5} parent=5 // pred_check_branch
      %168 = sbr.rel (%p166) target = $region20
    $region19: #{bottleneck_forward.5} parent=5 // pred_region
      // Predicated region
      $region21: #{bottleneck_forward.5} parent=19 // pred_check
        %p169 = pneg %p51
      $region22: #{bottleneck_forward.5} parent=19 // pred_check_branch
        %171 = sbr.rel (%p169) target = $region24
      $region23: #{bottleneck_forward.5} parent=19 // pred_region
        %s172 = smul.u32 32, %s18
        %p173 = scmp.lt.s32.totalorder %s17, 1
        %s174 = scalar_select %p173, %s17, 1
        %p175 = scmp.lt.s32.totalorder %s172, 31
        %s176 = scalar_select %p175, %s172, 31
        %s177 = smul.addr %s174, 32
        %s178 = sadd.s32 %s176, %s177
        %s179 = smul.addr %s178, 4
        %s180 = scalar_lea.vmem %s0, %s179
        %s181 = smul.u32 32, %s18
      $region24: #{bottleneck_forward.5} parent=19 // pred_fallthru
        _
    $region20: #{bottleneck_forward.5} parent=5 // pred_fallthru
      _
    %p182 = scmp.le.s32.totalorder 1, %s10
    %p183 = scmp.lt.s32.totalorder %s10, 3
    %p184 = pnand %p182, %p183
    %p185 = pneg %p184
    // Predicated region
    $region25: #{bottleneck_forward.5} parent=5 // pred_check
      _
    $region26: #{bottleneck_forward.5} parent=5 // pred_check_branch
      %187 = sbr.rel (%p184) target = $region28
    $region27: #{bottleneck_forward.5} parent=5 // pred_region
      %s188 = ssub.s32 %s10, 1
      %s189 = smul.u32 32, %s21
      %p190 = scmp.lt.s32.totalorder %s20, 1
      %s191 = scalar_select %p190, %s20, 1
      %p192 = scmp.lt.s32.totalorder %s189, 31
      %s193 = scalar_select %p192, %s189, 31
      %s194 = smul.addr %s191, 32
      %s195 = sadd.s32 %s193, %s194
      %s196 = smul.addr %s195, 4
      %s197 = scalar_lea.vmem %s0, %s196
      %p198 = pneg %p57
      %p199 = pneg %p54
      %p200 = scmp.lt.s32.totalorder %s22, 0
      %s201 = scalar_select %p200, %s22, 0
      %s202 = smul.addr %s201, 4
      %s203 = scalar_lea.vmem %s1, %s202
      %p204 = pneg %p83
      %p205 = pneg %p80
      %p206 = pneg %p113
      %p207 = pneg %p110
      %s208 = smul.u32 32, %s21
      %p209 = scmp.lt.s32.totalorder %s20, 1
      %s210 = scalar_select %p209, %s20, 1
      %p211 = scmp.lt.s32.totalorder %s208, 31
      %s212 = scalar_select %p211, %s208, 31
      %p213 = scmp.lt.s32.totalorder %s22, 0
      %s214 = scalar_select %p213, %s22, 0
      %s215 = sadd.s32 %s214, %s212
      %s216 = smul.addr %s210, 32
      %s217 = sadd.s32 %s215, %s216
      %s218 = smul.addr %s217, 4
      %s219 = scalar_lea.vmem %s2, %s218
      %p220 = pneg %p143
      %p221 = pneg %p140
      %p222 = scmp.lt.s32.totalorder %s20, 1
      %s223 = scalar_select %p222, %s20, 1
      %p224 = scmp.lt.s32.totalorder %s21, 0
      %s225 = scalar_select %p224, %s21, 0
      %p226 = scmp.lt.s32.totalorder %s22, 0
      %s227 = scalar_select %p226, %s22, 0
      %s228 = sadd.s32 %s227, %s225
      %s229 = sadd.s32 %s228, %s223
      %s230 = smul.addr %s229, 8
      %s231 = scalar_lea.vmem %s3, %s230
      %s232 = smul.u32 32, %s21
      %p233 = scmp.lt.s32.totalorder %s20, 1
      %s234 = scalar_select %p233, %s20, 1
      %p235 = scmp.lt.s32.totalorder %s232, 31
      %s236 = scalar_select %p235, %s232, 31
      %s237 = smul.addr %s234, 32
      %s238 = sadd.s32 %s236, %s237
      %s239 = smul.addr %s238, 4
      %s240 = scalar_lea.vmem %s0, %s239
      %s241 = smul.u32 32, %s21
      %p242 = scmp.lt.s32.totalorder %s22, 0
      %s243 = scalar_select %p242, %s22, 0
      %s244 = smul.addr %s243, 4
      %s245 = scalar_lea.vmem %s1, %s244
      %s246 = smul.u32 32, %s21
      %p247 = scmp.lt.s32.totalorder %s20, 1
      %s248 = scalar_select %p247, %s20, 1
      %p249 = scmp.lt.s32.totalorder %s246, 31
      %s250 = scalar_select %p249, %s246, 31
      %p251 = scmp.lt.s32.totalorder %s22, 0
      %s252 = scalar_select %p251, %s22, 0
      %s253 = sadd.s32 %s252, %s250
      %s254 = smul.addr %s248, 32
      %s255 = sadd.s32 %s253, %s254
      %s256 = smul.addr %s255, 4
      %s257 = scalar_lea.vmem %s2, %s256
      %s258 = smul.u32 32, %s21
      %p259 = scmp.lt.s32.totalorder %s20, 1
      %s260 = scalar_select %p259, %s20, 1
      %p261 = scmp.lt.s32.totalorder %s21, 0
      %s262 = scalar_select %p261, %s21, 0
      %p263 = scmp.lt.s32.totalorder %s22, 0
      %s264 = scalar_select %p263, %s22, 0
      %s265 = sadd.s32 %s264, %s262
      %s266 = sadd.s32 %s265, %s260
      %s267 = smul.addr %s266, 8
      %s268 = scalar_lea.vmem %s3, %s267
      %v270 = vld [vmem:[%s240] sm:$0xf]
      %v271 = vld [vmem:[%s240 + $0x4] sm:$0xf]
      %v272 = vld [vmem:[%s240 + $0x8] sm:$0xf]
      %v273 = vld [vmem:[%s240 + $0xc] sm:$0xf]
      %v274 = vld [vmem:[%s240 + $0x10] sm:$0xf]
      %v275 = vld [vmem:[%s240 + $0x14] sm:$0xf]
      %v276 = vld [vmem:[%s240 + $0x18] sm:$0xf]
      %v277 = vld [vmem:[%s240 + $0x1c] sm:$0xf]
      %v278 = vld [vmem:[%s240 + $0x20] sm:$0xf]
      %v279 = vld [vmem:[%s240 + $0x24] sm:$0xf]
      %v280 = vld [vmem:[%s240 + $0x28] sm:$0xf]
      %v281 = vld [vmem:[%s240 + $0x2c] sm:$0xf]
      %v282 = vld [vmem:[%s240 + $0x30] sm:$0xf]
      %v283 = vld [vmem:[%s240 + $0x34] sm:$0xf]
      %v284 = vld [vmem:[%s240 + $0x38] sm:$0xf]
      %v285 = vld [vmem:[%s240 + $0x3c] sm:$0xf]
      %v286 = vld [vmem:[%s240 + $0x40] sm:$0xf]
      %v287 = vld [vmem:[%s240 + $0x44] sm:$0xf]
      %v288 = vld [vmem:[%s240 + $0x48] sm:$0xf]
      %v289 = vld [vmem:[%s240 + $0x4c] sm:$0xf]
      %v290 = vld [vmem:[%s240 + $0x50] sm:$0xf]
      %v291 = vld [vmem:[%s240 + $0x54] sm:$0xf]
      %v292 = vld [vmem:[%s240 + $0x58] sm:$0xf]
      %v293 = vld [vmem:[%s240 + $0x5c] sm:$0xf]
      %v294 = vld [vmem:[%s240 + $0x60] sm:$0xf]
      %v295 = vld [vmem:[%s240 + $0x64] sm:$0xf]
      %v296 = vld [vmem:[%s240 + $0x68] sm:$0xf]
      %v297 = vld [vmem:[%s240 + $0x6c] sm:$0xf]
      %v298 = vld [vmem:[%s240 + $0x70] sm:$0xf]
      %v299 = vld [vmem:[%s240 + $0x74] sm:$0xf]
      %v300 = vld [vmem:[%s240 + $0x78] sm:$0xf]
      %v301 = vld [vmem:[%s240 + $0x7c] sm:$0xf]
      %v302 = vld [vmem:[%s245] sm:$0xf]
      %v303 = vld [vmem:[%s245 + $0x4] sm:$0xf]
      %v304 = vld [vmem:[%s245 + $0x8] sm:$0xf]
      %v305 = vld [vmem:[%s245 + $0xc] sm:$0xf]
      %v306 = vld [vmem:[%s245 + $0x10] sm:$0xf]
      %v307 = vld [vmem:[%s245 + $0x14] sm:$0xf]
      %v308 = vld [vmem:[%s245 + $0x18] sm:$0xf]
      %v309 = vld [vmem:[%s245 + $0x1c] sm:$0xf]
      %v310 = vld [vmem:[%s245 + $0x20] sm:$0xf]
      %v311 = vld [vmem:[%s245 + $0x24] sm:$0xf]
      %v312 = vld [vmem:[%s245 + $0x28] sm:$0xf]
      %v313 = vld [vmem:[%s245 + $0x2c] sm:$0xf]
      %v314 = vld [vmem:[%s245 + $0x30] sm:$0xf]
      %v315 = vld [vmem:[%s245 + $0x34] sm:$0xf]
      %v316 = vld [vmem:[%s245 + $0x38] sm:$0xf]
      %v317 = vld [vmem:[%s245 + $0x3c] sm:$0xf]
      %v350 = vunpack.c.l.b16 %v270
      %v351 = vunpack.c.l.b16 %v271
      %v352 = vunpack.c.l.b16 %v272
      %v353 = vunpack.c.l.b16 %v273
      %v354 = vunpack.c.l.b16 %v274
      %v355 = vunpack.c.l.b16 %v275
      %v356 = vunpack.c.l.b16 %v276
      %v357 = vunpack.c.l.b16 %v277
      %v358 = vunpack.c.l.b16 %v278
      %v359 = vunpack.c.l.b16 %v279
      %v360 = vunpack.c.l.b16 %v280
      %v361 = vunpack.c.l.b16 %v281
      %v362 = vunpack.c.l.b16 %v282
      %v363 = vunpack.c.l.b16 %v283
      %v364 = vunpack.c.l.b16 %v284
      %v365 = vunpack.c.l.b16 %v285
      %v366 = vunpack.c.l.b16 %v286
      %v367 = vunpack.c.l.b16 %v287
      %v368 = vunpack.c.l.b16 %v288
      %v369 = vunpack.c.l.b16 %v289
      %v370 = vunpack.c.l.b16 %v290
      %v371 = vunpack.c.l.b16 %v291
      %v372 = vunpack.c.l.b16 %v292
      %v373 = vunpack.c.l.b16 %v293
      %v374 = vunpack.c.l.b16 %v294
      %v375 = vunpack.c.l.b16 %v295
      %v376 = vunpack.c.l.b16 %v296
      %v377 = vunpack.c.l.b16 %v297
      %v378 = vunpack.c.l.b16 %v298
      %v379 = vunpack.c.l.b16 %v299
      %v380 = vunpack.c.l.b16 %v300
      %v381 = vunpack.c.l.b16 %v301
      %v382 = vpack.c.b16 %v351, %v350
      %v383 = vpack.c.b16 %v353, %v352
      %v384 = vpack.c.b16 %v355, %v354
      %v385 = vpack.c.b16 %v357, %v356
      %v386 = vpack.c.b16 %v359, %v358
      %v387 = vpack.c.b16 %v361, %v360
      %v388 = vpack.c.b16 %v363, %v362
      %v389 = vpack.c.b16 %v365, %v364
      %v390 = vpack.c.b16 %v367, %v366
      %v391 = vpack.c.b16 %v369, %v368
      %v392 = vpack.c.b16 %v371, %v370
      %v393 = vpack.c.b16 %v373, %v372
      %v394 = vpack.c.b16 %v375, %v374
      %v395 = vpack.c.b16 %v377, %v376
      %v396 = vpack.c.b16 %v379, %v378
      %v397 = vpack.c.b16 %v381, %v380
      %v430 = vunpack.c.l.b16 %v302
      %v431 = vunpack.c.l.b16 %v303
      %v432 = vunpack.c.l.b16 %v304
      %v433 = vunpack.c.l.b16 %v305
      %v434 = vunpack.c.l.b16 %v306
      %v435 = vunpack.c.l.b16 %v307
      %v436 = vunpack.c.l.b16 %v308
      %v437 = vunpack.c.l.b16 %v309
      %v438 = vunpack.c.l.b16 %v310
      %v439 = vunpack.c.l.b16 %v311
      %v440 = vunpack.c.l.b16 %v312
      %v441 = vunpack.c.l.b16 %v313
      %v442 = vunpack.c.l.b16 %v314
      %v443 = vunpack.c.l.b16 %v315
      %v444 = vunpack.c.l.b16 %v316
      %v445 = vunpack.c.l.b16 %v317
      %v446 = vpack.c.b16 %v431, %v430
      %v447 = vpack.c.b16 %v433, %v432
      %v448 = vpack.c.b16 %v435, %v434
      %v449 = vpack.c.b16 %v437, %v436
      %v450 = vpack.c.b16 %v439, %v438
      %v451 = vpack.c.b16 %v441, %v440
      %v452 = vpack.c.b16 %v443, %v442
      %v453 = vpack.c.b16 %v445, %v444
      %462 = vmatprep.subr.bf16.mxu0 0
      %463 = vmatpush1.bf16.msra.mxu0 %v453
      %464 = vmatprep.subr.bf16.mxu0 0
      %465 = vmatpush1.bf16.msra.mxu0 %v452
      %466 = vmatprep.subr.bf16.mxu0 0
      %467 = vmatpush1.bf16.msra.mxu0 %v451
      %468 = vmatprep.subr.bf16.mxu0 0
      %469 = vmatpush1.bf16.msra.mxu0 %v450
      %470 = vmatprep.subr.bf16.mxu0 0
      %471 = vmatpush1.bf16.msra.mxu0 %v449
      %472 = vmatprep.subr.bf16.mxu0 0
      %473 = vmatpush1.bf16.msra.mxu0 %v448
      %474 = vmatprep.subr.bf16.mxu0 0
      %475 = vmatpush1.bf16.msra.mxu0 %v447
      %476 = vmatprep.subr.bf16.mxu0 0
      %477 = vmatpush1.bf16.msra.mxu0 %v446
      %478 = vmatprep.subr.bf16.mxu0 0
      %479 = vmatpush2.bf16.msra.mxu0 0
      %480 = vmatprep.subr.bf16.mxu0 0
      %481 = vmatpush2.bf16.msra.mxu0 0
      %482 = vmatprep.subr.bf16.mxu0 0
      %483 = vmatpush2.bf16.msra.mxu0 0
      %484 = vmatprep.subr.bf16.mxu0 0
      %485 = vmatpush2.bf16.msra.mxu0 0
      %486 = vmatprep.subr.bf16.mxu0 0
      %487 = vmatpush2.bf16.msra.mxu0 0
      %488 = vmatprep.subr.bf16.mxu0 0
      %489 = vmatpush2.bf16.msra.mxu0 0
      %490 = vmatprep.subr.bf16.mxu0 0
      %491 = vmatpush2.bf16.msra.mxu0 0
      %492 = vmatprep.subr.bf16.mxu0 0
      %493 = vmatpush2.bf16.msra.mxu0 0
      %494 = vmatprep.mubr.bf16.mxu0 0
      %495 = vmatmul.mubr.bf16.gmra.mxu0 %v382
      %v496 = vpop.f32.mrf.mxu0
      %v497 = vadd.f32 0.0, %v496
      %v498 = vpop.f32.mrf.mxu0
      %v499 = vpop.f32.mrf.mxu0
      %v500 = vadd.f32 0.0, %v499
      %v501 = vpop.f32.mrf.mxu0
      %502 = vmatprep.mubr.bf16.mxu0 0
      %503 = vmatmul.mubr.bf16.gmra.mxu0 %v383
      %v504 = vpop.f32.mrf.mxu0
      %v505 = vadd.f32 0.0, %v504
      %v506 = vpop.f32.mrf.mxu0
      %v507 = vpop.f32.mrf.mxu0
      %v508 = vadd.f32 0.0, %v507
      %v509 = vpop.f32.mrf.mxu0
      %510 = vmatprep.mubr.bf16.mxu0 0
      %511 = vmatmul.mubr.bf16.gmra.mxu0 %v384
      %v512 = vpop.f32.mrf.mxu0
      %v513 = vadd.f32 0.0, %v512
      %v514 = vpop.f32.mrf.mxu0
      %v515 = vpop.f32.mrf.mxu0
      %v516 = vadd.f32 0.0, %v515
      %v517 = vpop.f32.mrf.mxu0
      %518 = vmatprep.mubr.bf16.mxu0 0
      %519 = vmatmul.mubr.bf16.gmra.mxu0 %v385
      %v520 = vpop.f32.mrf.mxu0
      %v521 = vadd.f32 0.0, %v520
      %v522 = vpop.f32.mrf.mxu0
      %v523 = vpop.f32.mrf.mxu0
      %v524 = vadd.f32 0.0, %v523
      %v525 = vpop.f32.mrf.mxu0
      %526 = vmatprep.mubr.bf16.mxu0 0
      %527 = vmatmul.mubr.bf16.gmra.mxu0 %v386
      %v528 = vpop.f32.mrf.mxu0
      %v529 = vadd.f32 0.0, %v528
      %v530 = vpop.f32.mrf.mxu0
      %v531 = vpop.f32.mrf.mxu0
      %v532 = vadd.f32 0.0, %v531
      %v533 = vpop.f32.mrf.mxu0
      %534 = vmatprep.mubr.bf16.mxu0 0
      %535 = vmatmul.mubr.bf16.gmra.mxu0 %v387
      %v536 = vpop.f32.mrf.mxu0
      %v537 = vadd.f32 0.0, %v536
      %v538 = vpop.f32.mrf.mxu0
      %v539 = vpop.f32.mrf.mxu0
      %v540 = vadd.f32 0.0, %v539
      %v541 = vpop.f32.mrf.mxu0
      %542 = vmatprep.mubr.bf16.mxu0 0
      %543 = vmatmul.mubr.bf16.gmra.mxu0 %v388
      %v544 = vpop.f32.mrf.mxu0
      %v545 = vadd.f32 0.0, %v544
      %v546 = vpop.f32.mrf.mxu0
      %v547 = vpop.f32.mrf.mxu0
      %v548 = vadd.f32 0.0, %v547
      %v549 = vpop.f32.mrf.mxu0
      %550 = vmatprep.mubr.bf16.mxu0 0
      %551 = vmatmul.mubr.bf16.gmra.mxu0 %v389
      %v552 = vpop.f32.mrf.mxu0
      %v553 = vadd.f32 0.0, %v552
      %v554 = vpop.f32.mrf.mxu0
      %v555 = vpop.f32.mrf.mxu0
      %v556 = vadd.f32 0.0, %v555
      %v557 = vpop.f32.mrf.mxu0
      %558 = vmatprep.mubr.bf16.mxu0 0
      %559 = vmatmul.mubr.bf16.gmra.mxu0 %v390
      %v560 = vpop.f32.mrf.mxu0
      %v561 = vadd.f32 0.0, %v560
      %v562 = vpop.f32.mrf.mxu0
      %v563 = vpop.f32.mrf.mxu0
      %v564 = vadd.f32 0.0, %v563
      %v565 = vpop.f32.mrf.mxu0
      %566 = vmatprep.mubr.bf16.mxu0 0
      %567 = vmatmul.mubr.bf16.gmra.mxu0 %v391
      %v568 = vpop.f32.mrf.mxu0
      %v569 = vadd.f32 0.0, %v568
      %v570 = vpop.f32.mrf.mxu0
      %v571 = vpop.f32.mrf.mxu0
      %v572 = vadd.f32 0.0, %v571
      %v573 = vpop.f32.mrf.mxu0
      %574 = vmatprep.mubr.bf16.mxu0 0
      %575 = vmatmul.mubr.bf16.gmra.mxu0 %v392
      %v576 = vpop.f32.mrf.mxu0
      %v577 = vadd.f32 0.0, %v576
      %v578 = vpop.f32.mrf.mxu0
      %v579 = vpop.f32.mrf.mxu0
      %v580 = vadd.f32 0.0, %v579
      %v581 = vpop.f32.mrf.mxu0
      %582 = vmatprep.mubr.bf16.mxu0 0
      %583 = vmatmul.mubr.bf16.gmra.mxu0 %v393
      %v584 = vpop.f32.mrf.mxu0
      %v585 = vadd.f32 0.0, %v584
      %v586 = vpop.f32.mrf.mxu0
      %v587 = vpop.f32.mrf.mxu0
      %v588 = vadd.f32 0.0, %v587
      %v589 = vpop.f32.mrf.mxu0
      %590 = vmatprep.mubr.bf16.mxu0 0
      %591 = vmatmul.mubr.bf16.gmra.mxu0 %v394
      %v592 = vpop.f32.mrf.mxu0
      %v593 = vadd.f32 0.0, %v592
      %v594 = vpop.f32.mrf.mxu0
      %v595 = vpop.f32.mrf.mxu0
      %v596 = vadd.f32 0.0, %v595
      %v597 = vpop.f32.mrf.mxu0
      %598 = vmatprep.mubr.bf16.mxu0 0
      %599 = vmatmul.mubr.bf16.gmra.mxu0 %v395
      %v600 = vpop.f32.mrf.mxu0
      %v601 = vadd.f32 0.0, %v600
      %v602 = vpop.f32.mrf.mxu0
      %v603 = vpop.f32.mrf.mxu0
      %v604 = vadd.f32 0.0, %v603
      %v605 = vpop.f32.mrf.mxu0
      %606 = vmatprep.mubr.bf16.mxu0 0
      %607 = vmatmul.mubr.bf16.gmra.mxu0 %v396
      %v608 = vpop.f32.mrf.mxu0
      %v609 = vadd.f32 0.0, %v608
      %v610 = vpop.f32.mrf.mxu0
      %v611 = vpop.f32.mrf.mxu0
      %v612 = vadd.f32 0.0, %v611
      %v613 = vpop.f32.mrf.mxu0
      %614 = vmatprep.mubr.bf16.mxu0 0
      %615 = vmatmul.mubr.bf16.gmra.mxu0 %v397
      %v616 = vpop.f32.mrf.mxu0
      %v617 = vadd.f32 0.0, %v616
      %v618 = vpop.f32.mrf.mxu0
      %v619 = vpop.f32.mrf.mxu0
      %v620 = vadd.f32 0.0, %v619
      %v621 = vpop.f32.mrf.mxu0
      %622 = vdwg.mxu0
      %v623 = vpack.c.bf16 %v500, %v497
      %v624 = vpack.c.bf16 %v508, %v505
      %v625 = vpack.c.bf16 %v516, %v513
      %v626 = vpack.c.bf16 %v524, %v521
      %v627 = vpack.c.bf16 %v532, %v529
      %v628 = vpack.c.bf16 %v540, %v537
      %v629 = vpack.c.bf16 %v548, %v545
      %v630 = vpack.c.bf16 %v556, %v553
      %v631 = vpack.c.bf16 %v564, %v561
      %v632 = vpack.c.bf16 %v572, %v569
      %v633 = vpack.c.bf16 %v580, %v577
      %v634 = vpack.c.bf16 %v588, %v585
      %v635 = vpack.c.bf16 %v596, %v593
      %v636 = vpack.c.bf16 %v604, %v601
      %v637 = vpack.c.bf16 %v612, %v609
      %v638 = vpack.c.bf16 %v620, %v617
      %v655 = vunpack.c.l.b16 %v623
      %v656 = vunpack.c.h.b16 %v623
      %v657 = vunpack.c.l.b16 %v624
      %v658 = vunpack.c.h.b16 %v624
      %v659 = vunpack.c.l.b16 %v625
      %v660 = vunpack.c.h.b16 %v625
      %v661 = vunpack.c.l.b16 %v626
      %v662 = vunpack.c.h.b16 %v626
      %v663 = vunpack.c.l.b16 %v627
      %v664 = vunpack.c.h.b16 %v627
      %v665 = vunpack.c.l.b16 %v628
      %v666 = vunpack.c.h.b16 %v628
      %v667 = vunpack.c.l.b16 %v629
      %v668 = vunpack.c.h.b16 %v629
      %v669 = vunpack.c.l.b16 %v630
      %v670 = vunpack.c.h.b16 %v630
      %v671 = vunpack.c.l.b16 %v631
      %v672 = vunpack.c.h.b16 %v631
      %v673 = vunpack.c.l.b16 %v632
      %v674 = vunpack.c.h.b16 %v632
      %v675 = vunpack.c.l.b16 %v633
      %v676 = vunpack.c.h.b16 %v633
      %v677 = vunpack.c.l.b16 %v634
      %v678 = vunpack.c.h.b16 %v634
      %v679 = vunpack.c.l.b16 %v635
      %v680 = vunpack.c.h.b16 %v635
      %v681 = vunpack.c.l.b16 %v636
      %v682 = vunpack.c.h.b16 %v636
      %v683 = vunpack.c.l.b16 %v637
      %v684 = vunpack.c.h.b16 %v637
      %v685 = vunpack.c.l.b16 %v638
      %v686 = vunpack.c.h.b16 %v638
      %v687 = vpack.c.b16 %v655, %v655
      %v688 = vpack.c.b16 %v656, %v656
      %v689 = vpack.c.b16 %v657, %v657
      %v690 = vpack.c.b16 %v658, %v658
      %v691 = vpack.c.b16 %v659, %v659
      %v692 = vpack.c.b16 %v660, %v660
      %v693 = vpack.c.b16 %v661, %v661
      %v694 = vpack.c.b16 %v662, %v662
      %v695 = vpack.c.b16 %v663, %v663
      %v696 = vpack.c.b16 %v664, %v664
      %v697 = vpack.c.b16 %v665, %v665
      %v698 = vpack.c.b16 %v666, %v666
      %v699 = vpack.c.b16 %v667, %v667
      %v700 = vpack.c.b16 %v668, %v668
      %v701 = vpack.c.b16 %v669, %v669
      %v702 = vpack.c.b16 %v670, %v670
      %v703 = vpack.c.b16 %v671, %v671
      %v704 = vpack.c.b16 %v672, %v672
      %v705 = vpack.c.b16 %v673, %v673
      %v706 = vpack.c.b16 %v674, %v674
      %v707 = vpack.c.b16 %v675, %v675
      %v708 = vpack.c.b16 %v676, %v676
      %v709 = vpack.c.b16 %v677, %v677
      %v710 = vpack.c.b16 %v678, %v678
      %v711 = vpack.c.b16 %v679, %v679
      %v712 = vpack.c.b16 %v680, %v680
      %v713 = vpack.c.b16 %v681, %v681
      %v714 = vpack.c.b16 %v682, %v682
      %v715 = vpack.c.b16 %v683, %v683
      %v716 = vpack.c.b16 %v684, %v684
      %v717 = vpack.c.b16 %v685, %v685
      %v718 = vpack.c.b16 %v686, %v686
      %751 = vst [vmem:[%s257] sm:$0xf] %v687
      %752 = vst [vmem:[%s257 + $0x4] sm:$0xf] %v688
      %753 = vst [vmem:[%s257 + $0x8] sm:$0xf] %v689
      %754 = vst [vmem:[%s257 + $0xc] sm:$0xf] %v690
      %755 = vst [vmem:[%s257 + $0x10] sm:$0xf] %v691
      %756 = vst [vmem:[%s257 + $0x14] sm:$0xf] %v692
      %757 = vst [vmem:[%s257 + $0x18] sm:$0xf] %v693
      %758 = vst [vmem:[%s257 + $0x1c] sm:$0xf] %v694
      %759 = vst [vmem:[%s257 + $0x20] sm:$0xf] %v695
      %760 = vst [vmem:[%s257 + $0x24] sm:$0xf] %v696
      %761 = vst [vmem:[%s257 + $0x28] sm:$0xf] %v697
      %762 = vst [vmem:[%s257 + $0x2c] sm:$0xf] %v698
      %763 = vst [vmem:[%s257 + $0x30] sm:$0xf] %v699
      %764 = vst [vmem:[%s257 + $0x34] sm:$0xf] %v700
      %765 = vst [vmem:[%s257 + $0x38] sm:$0xf] %v701
      %766 = vst [vmem:[%s257 + $0x3c] sm:$0xf] %v702
      %767 = vst [vmem:[%s257 + $0x40] sm:$0xf] %v703
      %768 = vst [vmem:[%s257 + $0x44] sm:$0xf] %v704
      %769 = vst [vmem:[%s257 + $0x48] sm:$0xf] %v705
      %770 = vst [vmem:[%s257 + $0x4c] sm:$0xf] %v706
      %771 = vst [vmem:[%s257 + $0x50] sm:$0xf] %v707
      %772 = vst [vmem:[%s257 + $0x54] sm:$0xf] %v708
      %773 = vst [vmem:[%s257 + $0x58] sm:$0xf] %v709
      %774 = vst [vmem:[%s257 + $0x5c] sm:$0xf] %v710
      %775 = vst [vmem:[%s257 + $0x60] sm:$0xf] %v711
      %776 = vst [vmem:[%s257 + $0x64] sm:$0xf] %v712
      %777 = vst [vmem:[%s257 + $0x68] sm:$0xf] %v713
      %778 = vst [vmem:[%s257 + $0x6c] sm:$0xf] %v714
      %779 = vst [vmem:[%s257 + $0x70] sm:$0xf] %v715
      %780 = vst [vmem:[%s257 + $0x74] sm:$0xf] %v716
      %781 = vst [vmem:[%s257 + $0x78] sm:$0xf] %v717
      %782 = vst [vmem:[%s257 + $0x7c] sm:$0xf] %v718
      %v783 = vunpack.c.l.bf16 %v623
      %v784 = vunpack.c.h.bf16 %v623
      %v785 = vunpack.c.l.bf16 %v624
      %v786 = vunpack.c.h.bf16 %v624
      %v787 = vunpack.c.l.bf16 %v625
      %v788 = vunpack.c.h.bf16 %v625
      %v789 = vunpack.c.l.bf16 %v626
      %v790 = vunpack.c.h.bf16 %v626
      %v791 = vunpack.c.l.bf16 %v627
      %v792 = vunpack.c.h.bf16 %v627
      %v793 = vunpack.c.l.bf16 %v628
      %v794 = vunpack.c.h.bf16 %v628
      %v795 = vunpack.c.l.bf16 %v629
      %v796 = vunpack.c.h.bf16 %v629
      %v797 = vunpack.c.l.bf16 %v630
      %v798 = vunpack.c.h.bf16 %v630
      %v799 = vunpack.c.l.bf16 %v631
      %v800 = vunpack.c.h.bf16 %v631
      %v801 = vunpack.c.l.bf16 %v632
      %v802 = vunpack.c.h.bf16 %v632
      %v803 = vunpack.c.l.bf16 %v633
      %v804 = vunpack.c.h.bf16 %v633
      %v805 = vunpack.c.l.bf16 %v634
      %v806 = vunpack.c.h.bf16 %v634
      %v807 = vunpack.c.l.bf16 %v635
      %v808 = vunpack.c.h.bf16 %v635
      %v809 = vunpack.c.l.bf16 %v636
      %v810 = vunpack.c.h.bf16 %v636
      %v811 = vunpack.c.l.bf16 %v637
      %v812 = vunpack.c.h.bf16 %v637
      %v813 = vunpack.c.l.bf16 %v638
      %v814 = vunpack.c.h.bf16 %v638
      %v815 = vadd.f32 %v783, %v784
      %v816 = vadd.f32 %v815, %v785
      %v817 = vadd.f32 %v816, %v786
      %v818 = vadd.f32 %v817, %v787
      %v819 = vadd.f32 %v818, %v788
      %v820 = vadd.f32 %v819, %v789
      %v821 = vadd.f32 %v820, %v790
      %v822 = vadd.f32 %v821, %v791
      %v823 = vadd.f32 %v822, %v792
      %v824 = vadd.f32 %v823, %v793
      %v825 = vadd.f32 %v824, %v794
      %v826 = vadd.f32 %v825, %v795
      %v827 = vadd.f32 %v826, %v796
      %v828 = vadd.f32 %v827, %v797
      %v829 = vadd.f32 %v828, %v798
      %v830 = vadd.f32 %v829, %v799
      %v831 = vadd.f32 %v830, %v800
      %v832 = vadd.f32 %v831, %v801
      %v833 = vadd.f32 %v832, %v802
      %v834 = vadd.f32 %v833, %v803
      %v835 = vadd.f32 %v834, %v804
      %v836 = vadd.f32 %v835, %v805
      %v837 = vadd.f32 %v836, %v806
      %v838 = vadd.f32 %v837, %v807
      %v839 = vadd.f32 %v838, %v808
      %v840 = vadd.f32 %v839, %v809
      %v841 = vadd.f32 %v840, %v810
      %v842 = vadd.f32 %v841, %v811
      %v843 = vadd.f32 %v842, %v812
      %v844 = vadd.f32 %v843, %v813
      %v845 = vadd.f32 %v844, %v814
      %v846 = vrot.slane %v845, 4
      %v847 = vadd.f32 %v845, %v846
      %v848 = vrot.slane %v847, 2
      %v849 = vadd.f32 %v847, %v848
      %v850 = vrot.slane %v849, 1
      %v851 = vadd.f32 %v849, %v850
      %v852 = vmul.f32 %v783, %v783
      %v853 = vmul.f32 %v784, %v784
      %v854 = vmul.f32 %v785, %v785
      %v855 = vmul.f32 %v786, %v786
      %v856 = vmul.f32 %v787, %v787
      %v857 = vmul.f32 %v788, %v788
      %v858 = vmul.f32 %v789, %v789
      %v859 = vmul.f32 %v790, %v790
      %v860 = vmul.f32 %v791, %v791
      %v861 = vmul.f32 %v792, %v792
      %v862 = vmul.f32 %v793, %v793
      %v863 = vmul.f32 %v794, %v794
      %v864 = vmul.f32 %v795, %v795
      %v865 = vmul.f32 %v796, %v796
      %v866 = vmul.f32 %v797, %v797
      %v867 = vmul.f32 %v798, %v798
      %v868 = vmul.f32 %v799, %v799
      %v869 = vmul.f32 %v800, %v800
      %v870 = vmul.f32 %v801, %v801
      %v871 = vmul.f32 %v802, %v802
      %v872 = vmul.f32 %v803, %v803
      %v873 = vmul.f32 %v804, %v804
      %v874 = vmul.f32 %v805, %v805
      %v875 = vmul.f32 %v806, %v806
      %v876 = vmul.f32 %v807, %v807
      %v877 = vmul.f32 %v808, %v808
      %v878 = vmul.f32 %v809, %v809
      %v879 = vmul.f32 %v810, %v810
      %v880 = vmul.f32 %v811, %v811
      %v881 = vmul.f32 %v812, %v812
      %v882 = vmul.f32 %v813, %v813
      %v883 = vmul.f32 %v814, %v814
      %v884 = vadd.f32 %v852, %v853
      %v885 = vadd.f32 %v884, %v854
      %v886 = vadd.f32 %v885, %v855
      %v887 = vadd.f32 %v886, %v856
      %v888 = vadd.f32 %v887, %v857
      %v889 = vadd.f32 %v888, %v858
      %v890 = vadd.f32 %v889, %v859
      %v891 = vadd.f32 %v890, %v860
      %v892 = vadd.f32 %v891, %v861
      %v893 = vadd.f32 %v892, %v862
      %v894 = vadd.f32 %v893, %v863
      %v895 = vadd.f32 %v894, %v864
      %v896 = vadd.f32 %v895, %v865
      %v897 = vadd.f32 %v896, %v866
      %v898 = vadd.f32 %v897, %v867
      %v899 = vadd.f32 %v898, %v868
      %v900 = vadd.f32 %v899, %v869
      %v901 = vadd.f32 %v900, %v870
      %v902 = vadd.f32 %v901, %v871
      %v903 = vadd.f32 %v902, %v872
      %v904 = vadd.f32 %v903, %v873
      %v905 = vadd.f32 %v904, %v874
      %v906 = vadd.f32 %v905, %v875
      %v907 = vadd.f32 %v906, %v876
      %v908 = vadd.f32 %v907, %v877
      %v909 = vadd.f32 %v908, %v878
      %v910 = vadd.f32 %v909, %v879
      %v911 = vadd.f32 %v910, %v880
      %v912 = vadd.f32 %v911, %v881
      %v913 = vadd.f32 %v912, %v882
      %v914 = vadd.f32 %v913, %v883
      %v915 = vrot.slane %v914, 4
      %v916 = vadd.f32 %v914, %v915
      %v917 = vrot.slane %v916, 2
      %v918 = vadd.f32 %v916, %v917
      %v919 = vrot.slane %v918, 1
      %v920 = vadd.f32 %v918, %v919
      %v921 = vlaneseq
      %v922 = vshrl.u32 %v921, 7
      %vm923 = vcmp.eq.s32.totalorder %v922, 0
      %vm924 = vcmp.eq.s32.totalorder %v922, 1
      %v925 = vsel %vm924, %v920, 0.0
      %v926 = vsel %vm923, %v851, %v925
      %927 = vst [vmem:[%s268] sm:$0xff] %v926
      %s928 = smul.u32 32, %s21
      %p929 = scmp.lt.s32.totalorder %s20, 1
      %s930 = scalar_select %p929, %s20, 1
      %p931 = scmp.lt.s32.totalorder %s928, 31
      %s932 = scalar_select %p931, %s928, 31
      %p933 = scmp.lt.s32.totalorder %s22, 0
      %s934 = scalar_select %p933, %s22, 0
      %s935 = sadd.s32 %s934, %s932
      %s936 = smul.addr %s930, 32
      %s937 = sadd.s32 %s935, %s936
      %s938 = smul.addr %s937, 4
      %s939 = scalar_lea.vmem %s2, %s938
      %p940 = scmp.lt.s32.totalorder %s20, 1
      %s941 = scalar_select %p940, %s20, 1
      %p942 = scmp.lt.s32.totalorder %s21, 0
      %s943 = scalar_select %p942, %s21, 0
      %p944 = scmp.lt.s32.totalorder %s22, 0
      %s945 = scalar_select %p944, %s22, 0
      %s946 = sadd.s32 %s945, %s943
      %s947 = sadd.s32 %s946, %s941
      %s948 = smul.addr %s947, 8
      %s949 = scalar_lea.vmem %s3, %s948
      // Predicated region
      $region29: #{bottleneck_forward.5} parent=27 // pred_check
        %p950 = pneg %p110
      $region30: #{bottleneck_forward.5} parent=27 // pred_check_branch
        %952 = sbr.rel (%p950) target = $region32
      $region31: #{bottleneck_forward.5} parent=27 // pred_region
        %s953 = smul.u32 32, %s21
      $region32: #{bottleneck_forward.5} parent=27 // pred_fallthru
        _
      // Predicated region
      $region33: #{bottleneck_forward.5} parent=27 // pred_check
        %p954 = pneg %p140
      $region34: #{bottleneck_forward.5} parent=27 // pred_check_branch
        %956 = sbr.rel (%p954) target = $region36
      $region35: #{bottleneck_forward.5} parent=27 // pred_region
        _
      $region36: #{bottleneck_forward.5} parent=27 // pred_fallthru
        _
    $region28: #{bottleneck_forward.5} parent=5 // pred_fallthru
      _
    %p957 = scmp.le.s32.totalorder 2, %s10
    // Predicated region
    $region37: #{bottleneck_forward.5} parent=5 // pred_check
      %p958 = pneg %p957
    $region38: #{bottleneck_forward.5} parent=5 // pred_check_branch
      %960 = sbr.rel (%p958) target = $region40
    $region39: #{bottleneck_forward.5} parent=5 // pred_region
      %s961 = ssub.s32 %s10, 2
      // Predicated region
      $region41: #{bottleneck_forward.5} parent=39 // pred_check
        %p962 = pneg %p116
      $region42: #{bottleneck_forward.5} parent=39 // pred_check_branch
        %964 = sbr.rel (%p962) target = $region44
      $region43: #{bottleneck_forward.5} parent=39 // pred_region
        %s965 = smul.u32 32, %s24
        %p966 = scmp.lt.s32.totalorder %s23, 1
        %s967 = scalar_select %p966, %s23, 1
        %p968 = scmp.lt.s32.totalorder %s965, 31
        %s969 = scalar_select %p968, %s965, 31
        %p970 = scmp.lt.s32.totalorder %s25, 0
        %s971 = scalar_select %p970, %s25, 0
        %s972 = sadd.s32 %s971, %s969
        %s973 = smul.addr %s967, 32
        %s974 = sadd.s32 %s972, %s973
        %s975 = smul.addr %s974, 4
        %s976 = scalar_lea.vmem %s2, %s975
      $region44: #{bottleneck_forward.5} parent=39 // pred_fallthru
        _
      // Predicated region
      $region45: #{bottleneck_forward.5} parent=39 // pred_check
        %p977 = pneg %p146
      $region46: #{bottleneck_forward.5} parent=39 // pred_check_branch
        %979 = sbr.rel (%p977) target = $region48
      $region47: #{bottleneck_forward.5} parent=39 // pred_region
        %p980 = scmp.lt.s32.totalorder %s23, 1
        %s981 = scalar_select %p980, %s23, 1
        %p982 = scmp.lt.s32.totalorder %s24, 0
        %s983 = scalar_select %p982, %s24, 0
        %p984 = scmp.lt.s32.totalorder %s25, 0
        %s985 = scalar_select %p984, %s25, 0
        %s986 = sadd.s32 %s985, %s983
        %s987 = sadd.s32 %s986, %s981
        %s988 = smul.addr %s987, 8
        %s989 = scalar_lea.vmem %s3, %s988
      $region48: #{bottleneck_forward.5} parent=39 // pred_fallthru
        _
    $region40: #{bottleneck_forward.5} parent=5 // pred_fallthru
      _
  $region6: #{bottleneck_forward.5} parent=0 // loop_footer
    %s14 = sadd.s32 1, %s10
  $region7: #{bottleneck_forward.5} parent=0 // loop_footer_branch
    %9 = sbr.rel target = $region3
  $region8: #{bottleneck_forward.5} parent=0 // loop_exit
    _

// kernel: bottleneck_forward.9
$region0: #{bottleneck_forward.9}
  #allocation0 [shape = 'u32[]', space=smem, size = 0x4, offset = 0x4, fixed_abs, tag = 'smem constant byte address 0x4 - core index']
  #allocation1 [shape = 'u32[144,128]{1,0:T(1,128)}', space=vmem, size = 0x12000, scoped, tag = 'internal scratch']
  %s0 = inlined_call_operand.vmem [shape: bf16[2,256,128], index: 0, kind: input, shape index: {}]
  %s1 = inlined_call_operand.vmem [shape: f32[1,128], index: 1, kind: input, shape index: {}]
  %s2 = inlined_call_operand.vmem [shape: f32[1,128], index: 2, kind: input, shape index: {}]
  %s3 = inlined_call_operand.vmem [shape: bf16[2,256,128], index: 3, kind: input, shape index: {}]
  %s4 = inlined_call_operand.vmem [shape: f32[1,128], index: 4, kind: input, shape index: {}]
  %s5 = inlined_call_operand.vmem [shape: f32[1,128], index: 5, kind: input, shape index: {}]
  %s6 = inlined_call_operand.vmem [shape: bf16[2,256,128], index: 6, kind: output, shape index: {}]
  %s7 = sld [smem:[#allocation0]]
  $region57: #{bottleneck_forward.9} parent=0
    _
  %s9 = ssub.s32 1, %s7
  %s10 = scalar_select 0, %s9, %s7
  loop: start=0, step=1, limit=4
  $region2: #{bottleneck_forward.9} parent=0 // loop_pre_header
    _
  $region3: #{bottleneck_forward.9} parent=0 // loop_header
    %s12 = sphi 0, %s16
    %p13 = scmp.ge.s32.totalorder %s12, 4
    %s19 = sphi 0, %s38
    %s20 = sphi 0, %s34
    %s21 = sphi 0, %s30
    %s22 = sphi 0, %s19
    %s23 = sphi 0, %s20
    %s24 = sphi 0, %s21
    %s25 = sphi 0, %s22
    %s26 = sphi 0, %s23
    %s27 = sphi 0, %s24
    %s45 = sphi 0, %s47
    %s48 = sphi 0, %s45
    %s49 = sphi 0, %s48
    %s65 = sphi 0, %s49
    %s71 = sphi 0, %s73
    %s74 = sphi 0, %s71
    %s75 = sphi 0, %s74
    %s91 = sphi 0, %s75
    %s97 = sphi 0, %s99
    %s100 = sphi 0, %s97
    %s101 = sphi 0, %s100
    %s117 = sphi 0, %s101
    %s127 = sphi 0, %s129
    %s130 = sphi 0, %s127
    %s131 = sphi 0, %s130
    %s147 = sphi 0, %s131
    %s153 = sphi 0, %s155
    %s156 = sphi 0, %s153
    %s157 = sphi 0, %s156
    %s173 = sphi 0, %s157
    %s179 = sphi 0, %s181
    %s182 = sphi 0, %s179
    %s183 = sphi 0, %s182
    %s199 = sphi 0, %s183
    %s209 = sphi 0, %s211
    %s212 = sphi 0, %s209
    %s213 = sphi 0, %s212
    %s229 = sphi 0, %s213
  $region4: #{bottleneck_forward.9} parent=0 // loop_header_branch
    %15 = sbr.rel (%p13) target = $region8
  $region5: #{bottleneck_forward.9} parent=0 // loop_body
    %s17 = ssub.s32 %s12, 1
    %s18 = ssub.s32 %s12, 2
    %s28 = sadd.s32 1, %s21
    %p29 = scmp.ge.s32.totalorder %s28, 1
    %s30 = scalar_select %p29, 0, %s28
    %s31 = sadd.s32 1, %s20
    %s32 = scalar_select %p29, %s31, %s20
    %p33 = scmp.ge.s32.totalorder %s32, 1
    %s34 = scalar_select %p33, 0, %s32
    %s35 = sadd.s32 1, %s19
    %s36 = scalar_select %p33, %s35, %s19
    %p37 = scmp.ge.s32.totalorder %s36, 2
    %s38 = scalar_select %p37, 0, %s36
    %s39 = ssub.s32 %s19, %s38
    %s40 = ssub.s32 %s20, %s34
    %s41 = sor.u32 %s39, %s40
    %s42 = ssub.s32 %s21, %s30
    %s43 = sor.u32 %s41, %s42
    %p44 = scmp.eq.s32.totalorder %s43, 0
    %s46 = sadd.s32 %s45, 1
    %s47 = scalar_select %p44, %s45, %s46
    %p50 = pneg %p44
    %p51 = scmp.eq.s32.totalorder %s12, 1
    %p52 = por %p50, %p51
    %p53 = scmp.ne.s32.totalorder %s45, %s48
    %p54 = scmp.eq.s32.totalorder %s12, 0
    %p55 = por %p53, %p54
    %p56 = scmp.ne.s32.totalorder %s45, %s48
    %p57 = scmp.eq.s32.totalorder %s17, 1
    %p58 = por %p56, %p57
    %p59 = scmp.ne.s32.totalorder %s48, %s49
    %p60 = scmp.eq.s32.totalorder %s17, 0
    %p61 = por %p59, %p60
    %p62 = scmp.ne.s32.totalorder %s48, %s49
    %p63 = scmp.eq.s32.totalorder %s18, 1
    %p64 = por %p62, %p63
    %p66 = scmp.ne.s32.totalorder %s49, %s65
    %p67 = scmp.eq.s32.totalorder %s18, 0
    %p68 = por %p66, %p67
    %s69 = ssub.s32 %s21, %s30
    %p70 = scmp.eq.s32.totalorder %s69, 0
    %s72 = sadd.s32 %s71, 1
    %s73 = scalar_select %p70, %s71, %s72
    %p76 = pneg %p70
    %p77 = scmp.eq.s32.totalorder %s12, 1
    %p78 = por %p76, %p77
    %p79 = scmp.ne.s32.totalorder %s71, %s74
    %p80 = scmp.eq.s32.totalorder %s12, 0
    %p81 = por %p79, %p80
    %p82 = scmp.ne.s32.totalorder %s71, %s74
    %p83 = scmp.eq.s32.totalorder %s17, 1
    %p84 = por %p82, %p83
    %p85 = scmp.ne.s32.totalorder %s74, %s75
    %p86 = scmp.eq.s32.totalorder %s17, 0
    %p87 = por %p85, %p86
    %p88 = scmp.ne.s32.totalorder %s74, %s75
    %p89 = scmp.eq.s32.totalorder %s18, 1
    %p90 = por %p88, %p89
    %p92 = scmp.ne.s32.totalorder %s75, %s91
    %p93 = scmp.eq.s32.totalorder %s18, 0
    %p94 = por %p92, %p93
    %s95 = ssub.s32 %s21, %s30
    %p96 = scmp.eq.s32.totalorder %s95, 0
    %s98 = sadd.s32 %s97, 1
    %s99 = scalar_select %p96, %s97, %s98
    %p102 = pneg %p96
    %p103 = scmp.eq.s32.totalorder %s12, 1
    %p104 = por %p102, %p103
    %p105 = scmp.ne.s32.totalorder %s97, %s100
    %p106 = scmp.eq.s32.totalorder %s12, 0
    %p107 = por %p105, %p106
    %p108 = scmp.ne.s32.totalorder %s97, %s100
    %p109 = scmp.eq.s32.totalorder %s17, 1
    %p110 = por %p108, %p109
    %p111 = scmp.ne.s32.totalorder %s100, %s101
    %p112 = scmp.eq.s32.totalorder %s17, 0
    %p113 = por %p111, %p112
    %p114 = scmp.ne.s32.totalorder %s100, %s101
    %p115 = scmp.eq.s32.totalorder %s18, 1
    %p116 = por %p114, %p115
    %p118 = scmp.ne.s32.totalorder %s101, %s117
    %p119 = scmp.eq.s32.totalorder %s18, 0
    %p120 = por %p118, %p119
    %s121 = ssub.s32 %s19, %s38
    %s122 = ssub.s32 %s20, %s34
    %s123 = sor.u32 %s121, %s122
    %s124 = ssub.s32 %s21, %s30
    %s125 = sor.u32 %s123, %s124
    %p126 = scmp.eq.s32.totalorder %s125, 0
    %s128 = sadd.s32 %s127, 1
    %s129 = scalar_select %p126, %s127, %s128
    %p132 = pneg %p126
    %p133 = scmp.eq.s32.totalorder %s12, 1
    %p134 = por %p132, %p133
    %p135 = scmp.ne.s32.totalorder %s127, %s130
    %p136 = scmp.eq.s32.totalorder %s12, 0
    %p137 = por %p135, %p136
    %p138 = scmp.ne.s32.totalorder %s127, %s130
    %p139 = scmp.eq.s32.totalorder %s17, 1
    %p140 = por %p138, %p139
    %p141 = scmp.ne.s32.totalorder %s130, %s131
    %p142 = scmp.eq.s32.totalorder %s17, 0
    %p143 = por %p141, %p142
    %p144 = scmp.ne.s32.totalorder %s130, %s131
    %p145 = scmp.eq.s32.totalorder %s18, 1
    %p146 = por %p144, %p145
    %p148 = scmp.ne.s32.totalorder %s131, %s147
    %p149 = scmp.eq.s32.totalorder %s18, 0
    %p150 = por %p148, %p149
    %s151 = ssub.s32 %s21, %s30
    %p152 = scmp.eq.s32.totalorder %s151, 0
    %s154 = sadd.s32 %s153, 1
    %s155 = scalar_select %p152, %s153, %s154
    %p158 = pneg %p152
    %p159 = scmp.eq.s32.totalorder %s12, 1
    %p160 = por %p158, %p159
    %p161 = scmp.ne.s32.totalorder %s153, %s156
    %p162 = scmp.eq.s32.totalorder %s12, 0
    %p163 = por %p161, %p162
    %p164 = scmp.ne.s32.totalorder %s153, %s156
    %p165 = scmp.eq.s32.totalorder %s17, 1
    %p166 = por %p164, %p165
    %p167 = scmp.ne.s32.totalorder %s156, %s157
    %p168 = scmp.eq.s32.totalorder %s17, 0
    %p169 = por %p167, %p168
    %p170 = scmp.ne.s32.totalorder %s156, %s157
    %p171 = scmp.eq.s32.totalorder %s18, 1
    %p172 = por %p170, %p171
    %p174 = scmp.ne.s32.totalorder %s157, %s173
    %p175 = scmp.eq.s32.totalorder %s18, 0
    %p176 = por %p174, %p175
    %s177 = ssub.s32 %s21, %s30
    %p178 = scmp.eq.s32.totalorder %s177, 0
    %s180 = sadd.s32 %s179, 1
    %s181 = scalar_select %p178, %s179, %s180
    %p184 = pneg %p178
    %p185 = scmp.eq.s32.totalorder %s12, 1
    %p186 = por %p184, %p185
    %p187 = scmp.ne.s32.totalorder %s179, %s182
    %p188 = scmp.eq.s32.totalorder %s12, 0
    %p189 = por %p187, %p188
    %p190 = scmp.ne.s32.totalorder %s179, %s182
    %p191 = scmp.eq.s32.totalorder %s17, 1
    %p192 = por %p190, %p191
    %p193 = scmp.ne.s32.totalorder %s182, %s183
    %p194 = scmp.eq.s32.totalorder %s17, 0
    %p195 = por %p193, %p194
    %p196 = scmp.ne.s32.totalorder %s182, %s183
    %p197 = scmp.eq.s32.totalorder %s18, 1
    %p198 = por %p196, %p197
    %p200 = scmp.ne.s32.totalorder %s183, %s199
    %p201 = scmp.eq.s32.totalorder %s18, 0
    %p202 = por %p200, %p201
    %s203 = ssub.s32 %s19, %s38
    %s204 = ssub.s32 %s20, %s34
    %s205 = sor.u32 %s203, %s204
    %s206 = ssub.s32 %s21, %s30
    %s207 = sor.u32 %s205, %s206
    %p208 = scmp.eq.s32.totalorder %s207, 0
    %s210 = sadd.s32 %s209, 1
    %s211 = scalar_select %p208, %s209, %s210
    %p214 = pneg %p208
    %p215 = scmp.eq.s32.totalorder %s12, 1
    %p216 = por %p214, %p215
    %p217 = scmp.ne.s32.totalorder %s209, %s212
    %p218 = scmp.eq.s32.totalorder %s12, 0
    %p219 = por %p217, %p218
    %p220 = scmp.ne.s32.totalorder %s209, %s212
    %p221 = scmp.eq.s32.totalorder %s17, 1
    %p222 = por %p220, %p221
    %p223 = scmp.ne.s32.totalorder %s212, %s213
    %p224 = scmp.eq.s32.totalorder %s17, 0
    %p225 = por %p223, %p224
    %p226 = scmp.ne.s32.totalorder %s212, %s213
    %p227 = scmp.eq.s32.totalorder %s18, 1
    %p228 = por %p226, %p227
    %p230 = scmp.ne.s32.totalorder %s213, %s229
    %p231 = scmp.eq.s32.totalorder %s18, 0
    %p232 = por %p230, %p231
    %p233 = scmp.le.s32.totalorder 1, %s12
    %p234 = scmp.lt.s32.totalorder %s12, 3
    %p235 = pnand %p233, %p234
    %p236 = pneg %p235
    // Predicated region
    $region9: #{bottleneck_forward.9} parent=5 // pred_check
      _
    $region10: #{bottleneck_forward.9} parent=5 // pred_check_branch
      %238 = sbr.rel (%p235) target = $region12
    $region11: #{bottleneck_forward.9} parent=5 // pred_region
      %s239 = ssub.s32 %s12, 1
      // Predicated region
      $region13: #{bottleneck_forward.9} parent=11 // pred_check
        %p240 = pneg %p87
      $region14: #{bottleneck_forward.9} parent=11 // pred_check_branch
        %242 = sbr.rel (%p240) target = $region16
      $region15: #{bottleneck_forward.9} parent=11 // pred_region
        %p243 = scmp.lt.s32.totalorder %s24, 0
        %s244 = scalar_select %p243, %s24, 0
        %s245 = scalar_lea.vmem %s1, %s244
      $region16: #{bottleneck_forward.9} parent=11 // pred_fallthru
        _
      // Predicated region
      $region17: #{bottleneck_forward.9} parent=11 // pred_check
        %p246 = pneg %p113
      $region18: #{bottleneck_forward.9} parent=11 // pred_check_branch
        %248 = sbr.rel (%p246) target = $region20
      $region19: #{bottleneck_forward.9} parent=11 // pred_region
        %p249 = scmp.lt.s32.totalorder %s24, 0
        %s250 = scalar_select %p249, %s24, 0
        %s251 = scalar_lea.vmem %s2, %s250
      $region20: #{bottleneck_forward.9} parent=11 // pred_fallthru
        _
      // Predicated region
      $region21: #{bottleneck_forward.9} parent=11 // pred_check
        %p252 = pneg %p169
      $region22: #{bottleneck_forward.9} parent=11 // pred_check_branch
        %254 = sbr.rel (%p252) target = $region24
      $region23: #{bottleneck_forward.9} parent=11 // pred_region
        %p255 = scmp.lt.s32.totalorder %s24, 0
        %s256 = scalar_select %p255, %s24, 0
        %s257 = scalar_lea.vmem %s4, %s256
      $region24: #{bottleneck_forward.9} parent=11 // pred_fallthru
        _
      // Predicated region
      $region25: #{bottleneck_forward.9} parent=11 // pred_check
        %p258 = pneg %p195
      $region26: #{bottleneck_forward.9} parent=11 // pred_check_branch
        %260 = sbr.rel (%p258) target = $region28
      $region27: #{bottleneck_forward.9} parent=11 // pred_region
        %p261 = scmp.lt.s32.totalorder %s24, 0
        %s262 = scalar_select %p261, %s24, 0
        %s263 = scalar_lea.vmem %s5, %s262
      $region28: #{bottleneck_forward.9} parent=11 // pred_fallthru
        _
    $region12: #{bottleneck_forward.9} parent=5 // pred_fallthru
      _
    %p264 = scmp.lt.s32.totalorder %s12, 2
    // Predicated region
    $region29: #{bottleneck_forward.9} parent=5 // pred_check
      %p265 = pneg %p264
    $region30: #{bottleneck_forward.9} parent=5 // pred_check_branch
      %267 = sbr.rel (%p265) target = $region32
    $region31: #{bottleneck_forward.9} parent=5 // pred_region
      // Predicated region
      $region33: #{bottleneck_forward.9} parent=31 // pred_check
        %p268 = pneg %p55
      $region34: #{bottleneck_forward.9} parent=31 // pred_check_branch
        %270 = sbr.rel (%p268) target = $region36
      $region35: #{bottleneck_forward.9} parent=31 // pred_region
        %s271 = smul.u32 32, %s20
        %p272 = scmp.lt.s32.totalorder %s19, 1
        %s273 = scalar_select %p272, %s19, 1
        %p274 = scmp.lt.s32.totalorder %s271, 31
        %s275 = scalar_select %p274, %s271, 31
        %p276 = scmp.lt.s32.totalorder %s21, 0
        %s277 = scalar_select %p276, %s21, 0
        %s278 = sadd.s32 %s277, %s275
        %s279 = smul.addr %s273, 32
        %s280 = sadd.s32 %s278, %s279
        %s281 = smul.addr %s280, 4
        %s282 = scalar_lea.vmem %s0, %s281
        %s283 = smul.u32 32, %s20
      $region36: #{bottleneck_forward.9} parent=31 // pred_fallthru
        _
      // Predicated region
      $region37: #{bottleneck_forward.9} parent=31 // pred_check
        %p284 = pneg %p137
      $region38: #{bottleneck_forward.9} parent=31 // pred_check_branch
        %286 = sbr.rel (%p284) target = $region40
      $region39: #{bottleneck_forward.9} parent=31 // pred_region
        %s287 = smul.u32 32, %s20
        %p288 = scmp.lt.s32.totalorder %s19, 1
        %s289 = scalar_select %p288, %s19, 1
        %p290 = scmp.lt.s32.totalorder %s287, 31
        %s291 = scalar_select %p290, %s287, 31
        %p292 = scmp.lt.s32.totalorder %s21, 0
        %s293 = scalar_select %p292, %s21, 0
        %s294 = sadd.s32 %s293, %s291
        %s295 = smul.addr %s289, 32
        %s296 = sadd.s32 %s294, %s295
        %s297 = smul.addr %s296, 4
        %s298 = scalar_lea.vmem %s3, %s297
        %s299 = smul.u32 32, %s20
      $region40: #{bottleneck_forward.9} parent=31 // pred_fallthru
        _
    $region32: #{bottleneck_forward.9} parent=5 // pred_fallthru
      _
    %p300 = scmp.le.s32.totalorder 1, %s12
    %p301 = scmp.lt.s32.totalorder %s12, 3
    %p302 = pnand %p300, %p301
    %p303 = pneg %p302
    // Predicated region
    $region41: #{bottleneck_forward.9} parent=5 // pred_check
      _
    $region42: #{bottleneck_forward.9} parent=5 // pred_check_branch
      %305 = sbr.rel (%p302) target = $region44
    $region43: #{bottleneck_forward.9} parent=5 // pred_region
      %s306 = ssub.s32 %s12, 1
      %s307 = smul.u32 32, %s23
      %p308 = scmp.lt.s32.totalorder %s22, 1
      %s309 = scalar_select %p308, %s22, 1
      %p310 = scmp.lt.s32.totalorder %s307, 31
      %s311 = scalar_select %p310, %s307, 31
      %p312 = scmp.lt.s32.totalorder %s24, 0
      %s313 = scalar_select %p312, %s24, 0
      %s314 = sadd.s32 %s313, %s311
      %s315 = smul.addr %s309, 32
      %s316 = sadd.s32 %s314, %s315
      %s317 = smul.addr %s316, 4
      %s318 = scalar_lea.vmem %s0, %s317
      %p319 = pneg %p61
      %p320 = pneg %p58
      %p321 = scmp.lt.s32.totalorder %s24, 0
      %s322 = scalar_select %p321, %s24, 0
      %s323 = scalar_lea.vmem %s1, %s322
      %p324 = pneg %p87
      %p325 = pneg %p84
      %p326 = scmp.lt.s32.totalorder %s24, 0
      %s327 = scalar_select %p326, %s24, 0
      %s328 = scalar_lea.vmem %s2, %s327
      %p329 = pneg %p113
      %p330 = pneg %p110
      %s331 = smul.u32 32, %s23
      %p332 = scmp.lt.s32.totalorder %s22, 1
      %s333 = scalar_select %p332, %s22, 1
      %p334 = scmp.lt.s32.totalorder %s331, 31
      %s335 = scalar_select %p334, %s331, 31
      %p336 = scmp.lt.s32.totalorder %s24, 0
      %s337 = scalar_select %p336, %s24, 0
      %s338 = sadd.s32 %s337, %s335
      %s339 = smul.addr %s333, 32
      %s340 = sadd.s32 %s338, %s339
      %s341 = smul.addr %s340, 4
      %s342 = scalar_lea.vmem %s3, %s341
      %p343 = pneg %p143
      %p344 = pneg %p140
      %p345 = scmp.lt.s32.totalorder %s24, 0
      %s346 = scalar_select %p345, %s24, 0
      %s347 = scalar_lea.vmem %s4, %s346
      %p348 = pneg %p169
      %p349 = pneg %p166
      %p350 = scmp.lt.s32.totalorder %s24, 0
      %s351 = scalar_select %p350, %s24, 0
      %s352 = scalar_lea.vmem %s5, %s351
      %p353 = pneg %p195
      %p354 = pneg %p192
      %p355 = pneg %p225
      %p356 = pneg %p222
      %s357 = smul.u32 32, %s23
      %p358 = scmp.lt.s32.totalorder %s22, 1
      %s359 = scalar_select %p358, %s22, 1
      %p360 = scmp.lt.s32.totalorder %s357, 31
      %s361 = scalar_select %p360, %s357, 31
      %p362 = scmp.lt.s32.totalorder %s24, 0
      %s363 = scalar_select %p362, %s24, 0
      %s364 = sadd.s32 %s363, %s361
      %s365 = smul.addr %s359, 32
      %s366 = sadd.s32 %s364, %s365
      %s367 = smul.addr %s366, 4
      %s368 = scalar_lea.vmem %s6, %s367
      %s369 = smul.u32 32, %s23
      %p370 = scmp.lt.s32.totalorder %s22, 1
      %s371 = scalar_select %p370, %s22, 1
      %p372 = scmp.lt.s32.totalorder %s369, 31
      %s373 = scalar_select %p372, %s369, 31
      %p374 = scmp.lt.s32.totalorder %s24, 0
      %s375 = scalar_select %p374, %s24, 0
      %s376 = sadd.s32 %s375, %s373
      %s377 = smul.addr %s371, 32
      %s378 = sadd.s32 %s376, %s377
      %s379 = smul.addr %s378, 4
      %s380 = scalar_lea.vmem %s0, %s379
      %s381 = smul.u32 32, %s23
      %p382 = scmp.lt.s32.totalorder %s24, 0
      %s383 = scalar_select %p382, %s24, 0
      %s384 = scalar_lea.vmem %s1, %s383
      %p385 = scmp.lt.s32.totalorder %s24, 0
      %s386 = scalar_select %p385, %s24, 0
      %s387 = scalar_lea.vmem %s2, %s386
      %s388 = smul.u32 32, %s23
      %p389 = scmp.lt.s32.totalorder %s22, 1
      %s390 = scalar_select %p389, %s22, 1
      %p391 = scmp.lt.s32.totalorder %s388, 31
      %s392 = scalar_select %p391, %s388, 31
      %p393 = scmp.lt.s32.totalorder %s24, 0
      %s394 = scalar_select %p393, %s24, 0
      %s395 = sadd.s32 %s394, %s392
      %s396 = smul.addr %s390, 32
      %s397 = sadd.s32 %s395, %s396
      %s398 = smul.addr %s397, 4
      %s399 = scalar_lea.vmem %s3, %s398
      %s400 = smul.u32 32, %s23
      %p401 = scmp.lt.s32.totalorder %s24, 0
      %s402 = scalar_select %p401, %s24, 0
      %s403 = scalar_lea.vmem %s4, %s402
      %p404 = scmp.lt.s32.totalorder %s24, 0
      %s405 = scalar_select %p404, %s24, 0
      %s406 = scalar_lea.vmem %s5, %s405
      %s407 = smul.u32 32, %s23
      %p408 = scmp.lt.s32.totalorder %s22, 1
      %s409 = scalar_select %p408, %s22, 1
      %p410 = scmp.lt.s32.totalorder %s407, 31
      %s411 = scalar_select %p410, %s407, 31
      %p412 = scmp.lt.s32.totalorder %s24, 0
      %s413 = scalar_select %p412, %s24, 0
      %s414 = sadd.s32 %s413, %s411
      %s415 = smul.addr %s409, 32
      %s416 = sadd.s32 %s414, %s415
      %s417 = smul.addr %s416, 4
      %s418 = scalar_lea.vmem %s6, %s417
      %s419 = smul.u32 32, %s23
      %v420 = vld [vmem:[%s380] sm:$0xf]
      %v421 = vld [vmem:[%s380 + $0x4] sm:$0xf]
      %v422 = vld [vmem:[%s380 + $0x8] sm:$0xf]
      %v423 = vld [vmem:[%s380 + $0xc] sm:$0xf]
      %v424 = vld [vmem:[%s380 + $0x10] sm:$0xf]
      %v425 = vld [vmem:[%s380 + $0x14] sm:$0xf]
      %v426 = vld [vmem:[%s380 + $0x18] sm:$0xf]
      %v427 = vld [vmem:[%s380 + $0x1c] sm:$0xf]
      %v428 = vld [vmem:[%s380 + $0x20] sm:$0xf]
      %v429 = vld [vmem:[%s380 + $0x24] sm:$0xf]
      %v430 = vld [vmem:[%s380 + $0x28] sm:$0xf]
      %v431 = vld [vmem:[%s380 + $0x2c] sm:$0xf]
      %v432 = vld [vmem:[%s380 + $0x30] sm:$0xf]
      %v433 = vld [vmem:[%s380 + $0x34] sm:$0xf]
      %v434 = vld [vmem:[%s380 + $0x38] sm:$0xf]
      %v435 = vld [vmem:[%s380 + $0x3c] sm:$0xf]
      %v436 = vld [vmem:[%s380 + $0x40] sm:$0xf]
      %v437 = vld [vmem:[%s380 + $0x44] sm:$0xf]
      %v438 = vld [vmem:[%s380 + $0x48] sm:$0xf]
      %v439 = vld [vmem:[%s380 + $0x4c] sm:$0xf]
      %v440 = vld [vmem:[%s380 + $0x50] sm:$0xf]
      %v441 = vld [vmem:[%s380 + $0x54] sm:$0xf]
      %v442 = vld [vmem:[%s380 + $0x58] sm:$0xf]
      %v443 = vld [vmem:[%s380 + $0x5c] sm:$0xf]
      %v444 = vld [vmem:[%s380 + $0x60] sm:$0xf]
      %v445 = vld [vmem:[%s380 + $0x64] sm:$0xf]
      %v446 = vld [vmem:[%s380 + $0x68] sm:$0xf]
      %v447 = vld [vmem:[%s380 + $0x6c] sm:$0xf]
      %v448 = vld [vmem:[%s380 + $0x70] sm:$0xf]
      %v449 = vld [vmem:[%s380 + $0x74] sm:$0xf]
      %v450 = vld [vmem:[%s380 + $0x78] sm:$0xf]
      %v451 = vld [vmem:[%s380 + $0x7c] sm:$0xf]
      %v452 = vunpack.c.l.bf16 %v420
      %v453 = vunpack.c.l.bf16 %v421
      %v454 = vunpack.c.l.bf16 %v422
      %v455 = vunpack.c.l.bf16 %v423
      %v456 = vunpack.c.l.bf16 %v424
      %v457 = vunpack.c.l.bf16 %v425
      %v458 = vunpack.c.l.bf16 %v426
      %v459 = vunpack.c.l.bf16 %v427
      %v460 = vunpack.c.l.bf16 %v428
      %v461 = vunpack.c.l.bf16 %v429
      %v462 = vunpack.c.l.bf16 %v430
      %v463 = vunpack.c.l.bf16 %v431
      %v464 = vunpack.c.l.bf16 %v432
      %v465 = vunpack.c.l.bf16 %v433
      %v466 = vunpack.c.l.bf16 %v434
      %v467 = vunpack.c.l.bf16 %v435
      %v468 = vunpack.c.l.bf16 %v436
      %v469 = vunpack.c.l.bf16 %v437
      %v470 = vunpack.c.l.bf16 %v438
      %v471 = vunpack.c.l.bf16 %v439
      %v472 = vunpack.c.l.bf16 %v440
      %v473 = vunpack.c.l.bf16 %v441
      %v474 = vunpack.c.l.bf16 %v442
      %v475 = vunpack.c.l.bf16 %v443
      %v476 = vunpack.c.l.bf16 %v444
      %v477 = vunpack.c.l.bf16 %v445
      %v478 = vunpack.c.l.bf16 %v446
      %v479 = vunpack.c.l.bf16 %v447
      %v480 = vunpack.c.l.bf16 %v448
      %v481 = vunpack.c.l.bf16 %v449
      %v482 = vunpack.c.l.bf16 %v450
      %v483 = vunpack.c.l.bf16 %v451
      %v484 = vld [vmem:[%s384] sm:$0x1]
      %v486 = vlaneseq
      %v487 = vshrl.u32 %v486, 7
      %v488 = vsub.s32 0, %v487
      %v489 = vrot.slane %v484, %v488
      %v491 = vmul.f32 %v452, %v489
      %v492 = vmul.f32 %v453, %v489
      %v493 = vmul.f32 %v454, %v489
      %v494 = vmul.f32 %v455, %v489
      %v495 = vmul.f32 %v456, %v489
      %v496 = vmul.f32 %v457, %v489
      %v497 = vmul.f32 %v458, %v489
      %v498 = vmul.f32 %v459, %v489
      %v499 = vmul.f32 %v460, %v489
      %v500 = vmul.f32 %v461, %v489
      %v501 = vmul.f32 %v462, %v489
      %v502 = vmul.f32 %v463, %v489
      %v503 = vmul.f32 %v464, %v489
      %v504 = vmul.f32 %v465, %v489
      %v505 = vmul.f32 %v466, %v489
      %v506 = vmul.f32 %v467, %v489
      %v507 = vmul.f32 %v468, %v489
      %v508 = vmul.f32 %v469, %v489
      %v509 = vmul.f32 %v470, %v489
      %v510 = vmul.f32 %v471, %v489
      %v511 = vmul.f32 %v472, %v489
      %v512 = vmul.f32 %v473, %v489
      %v513 = vmul.f32 %v474, %v489
      %v514 = vmul.f32 %v475, %v489
      %v515 = vmul.f32 %v476, %v489
      %v516 = vmul.f32 %v477, %v489
      %v517 = vmul.f32 %v478, %v489
      %v518 = vmul.f32 %v479, %v489
      %v519 = vmul.f32 %v480, %v489
      %v520 = vmul.f32 %v481, %v489
      %v521 = vmul.f32 %v482, %v489
      %v522 = vmul.f32 %v483, %v489
      %v523 = vld [vmem:[%s387] sm:$0x1]
      %v525 = vlaneseq
      %v526 = vshrl.u32 %v525, 7
      %v527 = vsub.s32 0, %v526
      %v528 = vrot.slane %v523, %v527
      %v530 = vadd.f32 %v491, %v528
      %v531 = vadd.f32 %v492, %v528
      %v532 = vadd.f32 %v493, %v528
      %v533 = vadd.f32 %v494, %v528
      %v534 = vadd.f32 %v495, %v528
      %v535 = vadd.f32 %v496, %v528
      %v536 = vadd.f32 %v497, %v528
      %v537 = vadd.f32 %v498, %v528
      %v538 = vadd.f32 %v499, %v528
      %v539 = vadd.f32 %v500, %v528
      %v540 = vadd.f32 %v501, %v528
      %v541 = vadd.f32 %v502, %v528
      %v542 = vadd.f32 %v503, %v528
      %v543 = vadd.f32 %v504, %v528
      %v544 = vadd.f32 %v505, %v528
      %v545 = vadd.f32 %v506, %v528
      %v546 = vadd.f32 %v507, %v528
      %v547 = vadd.f32 %v508, %v528
      %v548 = vadd.f32 %v509, %v528
      %v549 = vadd.f32 %v510, %v528
      %v550 = vadd.f32 %v511, %v528
      %v551 = vadd.f32 %v512, %v528
      %v552 = vadd.f32 %v513, %v528
      %v553 = vadd.f32 %v514, %v528
      %v554 = vadd.f32 %v515, %v528
      %v555 = vadd.f32 %v516, %v528
      %v556 = vadd.f32 %v517, %v528
      %v557 = vadd.f32 %v518, %v528
      %v558 = vadd.f32 %v519, %v528
      %v559 = vadd.f32 %v520, %v528
      %v560 = vadd.f32 %v521, %v528
      %v561 = vadd.f32 %v522, %v528
      %v562 = vld [vmem:[%s399] sm:$0xf]
      %v563 = vld [vmem:[%s399 + $0x4] sm:$0xf]
      %v564 = vld [vmem:[%s399 + $0x8] sm:$0xf]
      %v565 = vld [vmem:[%s399 + $0xc] sm:$0xf]
      %v566 = vld [vmem:[%s399 + $0x10] sm:$0xf]
      %v567 = vld [vmem:[%s399 + $0x14] sm:$0xf]
      %v568 = vld [vmem:[%s399 + $0x18] sm:$0xf]
      %v569 = vld [vmem:[%s399 + $0x1c] sm:$0xf]
      %v570 = vld [vmem:[%s399 + $0x20] sm:$0xf]
      %v571 = vld [vmem:[%s399 + $0x24] sm:$0xf]
      %v572 = vld [vmem:[%s399 + $0x28] sm:$0xf]
      %v573 = vld [vmem:[%s399 + $0x2c] sm:$0xf]
      %v574 = vld [vmem:[%s399 + $0x30] sm:$0xf]
      %v575 = vld [vmem:[%s399 + $0x34] sm:$0xf]
      %v576 = vld [vmem:[%s399 + $0x38] sm:$0xf]
      %v577 = vld [vmem:[%s399 + $0x3c] sm:$0xf]
      %v578 = vld [vmem:[%s399 + $0x40] sm:$0xf]
      %v579 = vld [vmem:[%s399 + $0x44] sm:$0xf]
      %v580 = vld [vmem:[%s399 + $0x48] sm:$0xf]
      %v581 = vld [vmem:[%s399 + $0x4c] sm:$0xf]
      %v582 = vld [vmem:[%s399 + $0x50] sm:$0xf]
      %v583 = vld [vmem:[%s399 + $0x54] sm:$0xf]
      %v584 = vld [vmem:[%s399 + $0x58] sm:$0xf]
      %v585 = vld [vmem:[%s399 + $0x5c] sm:$0xf]
      %v586 = vld [vmem:[%s399 + $0x60] sm:$0xf]
      %v587 = vld [vmem:[%s399 + $0x64] sm:$0xf]
      %v588 = vld [vmem:[%s399 + $0x68] sm:$0xf]
      %v589 = vld [vmem:[%s399 + $0x6c] sm:$0xf]
      %v590 = vld [vmem:[%s399 + $0x70] sm:$0xf]
      %v591 = vld [vmem:[%s399 + $0x74] sm:$0xf]
      %v592 = vld [vmem:[%s399 + $0x78] sm:$0xf]
      %v593 = vld [vmem:[%s399 + $0x7c] sm:$0xf]
      %v594 = vunpack.c.l.bf16 %v562
      %v595 = vunpack.c.l.bf16 %v563
      %v596 = vunpack.c.l.bf16 %v564
      %v597 = vunpack.c.l.bf16 %v565
      %v598 = vunpack.c.l.bf16 %v566
      %v599 = vunpack.c.l.bf16 %v567
      %v600 = vunpack.c.l.bf16 %v568
      %v601 = vunpack.c.l.bf16 %v569
      %v602 = vunpack.c.l.bf16 %v570
      %v603 = vunpack.c.l.bf16 %v571
      %v604 = vunpack.c.l.bf16 %v572
      %v605 = vunpack.c.l.bf16 %v573
      %v606 = vunpack.c.l.bf16 %v574
      %v607 = vunpack.c.l.bf16 %v575
      %v608 = vunpack.c.l.bf16 %v576
      %v609 = vunpack.c.l.bf16 %v577
      %v610 = vunpack.c.l.bf16 %v578
      %v611 = vunpack.c.l.bf16 %v579
      %v612 = vunpack.c.l.bf16 %v580
      %v613 = vunpack.c.l.bf16 %v581
      %v614 = vunpack.c.l.bf16 %v582
      %v615 = vunpack.c.l.bf16 %v583
      %v616 = vunpack.c.l.bf16 %v584
      %v617 = vunpack.c.l.bf16 %v585
      %v618 = vunpack.c.l.bf16 %v586
      %v619 = vunpack.c.l.bf16 %v587
      %v620 = vunpack.c.l.bf16 %v588
      %v621 = vunpack.c.l.bf16 %v589
      %v622 = vunpack.c.l.bf16 %v590
      %v623 = vunpack.c.l.bf16 %v591
      %v624 = vunpack.c.l.bf16 %v592
      %v625 = vunpack.c.l.bf16 %v593
      %v626 = vld [vmem:[%s403] sm:$0x1]
      %v628 = vlaneseq
      %v629 = vshrl.u32 %v628, 7
      %v630 = vsub.s32 0, %v629
      %v631 = vrot.slane %v626, %v630
      %v633 = vmul.f32 %v594, %v631
      %v634 = vmul.f32 %v595, %v631
      %v635 = vmul.f32 %v596, %v631
      %v636 = vmul.f32 %v597, %v631
      %v637 = vmul.f32 %v598, %v631
      %v638 = vmul.f32 %v599, %v631
      %v639 = vmul.f32 %v600, %v631
      %v640 = vmul.f32 %v601, %v631
      %v641 = vmul.f32 %v602, %v631
      %v642 = vmul.f32 %v603, %v631
      %v643 = vmul.f32 %v604, %v631
      %v644 = vmul.f32 %v605, %v631
      %v645 = vmul.f32 %v606, %v631
      %v646 = vmul.f32 %v607, %v631
      %v647 = vmul.f32 %v608, %v631
      %v648 = vmul.f32 %v609, %v631
      %v649 = vmul.f32 %v610, %v631
      %v650 = vmul.f32 %v611, %v631
      %v651 = vmul.f32 %v612, %v631
      %v652 = vmul.f32 %v613, %v631
      %v653 = vmul.f32 %v614, %v631
      %v654 = vmul.f32 %v615, %v631
      %v655 = vmul.f32 %v616, %v631
      %v656 = vmul.f32 %v617, %v631
      %v657 = vmul.f32 %v618, %v631
      %v658 = vmul.f32 %v619, %v631
      %v659 = vmul.f32 %v620, %v631
      %v660 = vmul.f32 %v621, %v631
      %v661 = vmul.f32 %v622, %v631
      %v662 = vmul.f32 %v623, %v631
      %v663 = vmul.f32 %v624, %v631
      %v664 = vmul.f32 %v625, %v631
      %v665 = vld [vmem:[%s406] sm:$0x1]
      %v667 = vlaneseq
      %v668 = vshrl.u32 %v667, 7
      %v669 = vsub.s32 0, %v668
      %v670 = vrot.slane %v665, %v669
      %v672 = vadd.f32 %v633, %v670
      %v673 = vadd.f32 %v634, %v670
      %v674 = vadd.f32 %v635, %v670
      %v675 = vadd.f32 %v636, %v670
      %v676 = vadd.f32 %v637, %v670
      %v677 = vadd.f32 %v638, %v670
      %v678 = vadd.f32 %v639, %v670
      %v679 = vadd.f32 %v640, %v670
      %v680 = vadd.f32 %v641, %v670
      %v681 = vadd.f32 %v642, %v670
      %v682 = vadd.f32 %v643, %v670
      %v683 = vadd.f32 %v644, %v670
      %v684 = vadd.f32 %v645, %v670
      %v685 = vadd.f32 %v646, %v670
      %v686 = vadd.f32 %v647, %v670
      %v687 = vadd.f32 %v648, %v670
      %v688 = vadd.f32 %v649, %v670
      %v689 = vadd.f32 %v650, %v670
      %v690 = vadd.f32 %v651, %v670
      %v691 = vadd.f32 %v652, %v670
      %v692 = vadd.f32 %v653, %v670
      %v693 = vadd.f32 %v654, %v670
      %v694 = vadd.f32 %v655, %v670
      %v695 = vadd.f32 %v656, %v670
      %v696 = vadd.f32 %v657, %v670
      %v697 = vadd.f32 %v658, %v670
      %v698 = vadd.f32 %v659, %v670
      %v699 = vadd.f32 %v660, %v670
      %v700 = vadd.f32 %v661, %v670
      %v701 = vadd.f32 %v662, %v670
      %v702 = vadd.f32 %v663, %v670
      %v703 = vadd.f32 %v664, %v670
      %v704 = vadd.f32 %v530, %v672
      %v705 = vadd.f32 %v531, %v673
      %v706 = vadd.f32 %v532, %v674
      %v707 = vadd.f32 %v533, %v675
      %v708 = vadd.f32 %v534, %v676
      %v709 = vadd.f32 %v535, %v677
      %v710 = vadd.f32 %v536, %v678
      %v711 = vadd.f32 %v537, %v679
      %v712 = vadd.f32 %v538, %v680
      %v713 = vadd.f32 %v539, %v681
      %v714 = vadd.f32 %v540, %v682
      %v715 = vadd.f32 %v541, %v683
      %v716 = vadd.f32 %v542, %v684
      %v717 = vadd.f32 %v543, %v685
      %v718 = vadd.f32 %v544, %v686
      %v719 = vadd.f32 %v545, %v687
      %v720 = vadd.f32 %v546, %v688
      %v721 = vadd.f32 %v547, %v689
      %v722 = vadd.f32 %v548, %v690
      %v723 = vadd.f32 %v549, %v691
      %v724 = vadd.f32 %v550, %v692
      %v725 = vadd.f32 %v551, %v693
      %v726 = vadd.f32 %v552, %v694
      %v727 = vadd.f32 %v553, %v695
      %v728 = vadd.f32 %v554, %v696
      %v729 = vadd.f32 %v555, %v697
      %v730 = vadd.f32 %v556, %v698
      %v731 = vadd.f32 %v557, %v699
      %v732 = vadd.f32 %v558, %v700
      %v733 = vadd.f32 %v559, %v701
      %v734 = vadd.f32 %v560, %v702
      %v735 = vadd.f32 %v561, %v703
      %v736 = vmax.f32 %v704, 0.0
      %v737 = vmax.f32 %v705, 0.0
      %v738 = vmax.f32 %v706, 0.0
      %v739 = vmax.f32 %v707, 0.0
      %v740 = vmax.f32 %v708, 0.0
      %v741 = vmax.f32 %v709, 0.0
      %v742 = vmax.f32 %v710, 0.0
      %v743 = vmax.f32 %v711, 0.0
      %v744 = vmax.f32 %v712, 0.0
      %v745 = vmax.f32 %v713, 0.0
      %v746 = vmax.f32 %v714, 0.0
      %v747 = vmax.f32 %v715, 0.0
      %v748 = vmax.f32 %v716, 0.0
      %v749 = vmax.f32 %v717, 0.0
      %v750 = vmax.f32 %v718, 0.0
      %v751 = vmax.f32 %v719, 0.0
      %v752 = vmax.f32 %v720, 0.0
      %v753 = vmax.f32 %v721, 0.0
      %v754 = vmax.f32 %v722, 0.0
      %v755 = vmax.f32 %v723, 0.0
      %v756 = vmax.f32 %v724, 0.0
      %v757 = vmax.f32 %v725, 0.0
      %v758 = vmax.f32 %v726, 0.0
      %v759 = vmax.f32 %v727, 0.0
      %v760 = vmax.f32 %v728, 0.0
      %v761 = vmax.f32 %v729, 0.0
      %v762 = vmax.f32 %v730, 0.0
      %v763 = vmax.f32 %v731, 0.0
      %v764 = vmax.f32 %v732, 0.0
      %v765 = vmax.f32 %v733, 0.0
      %v766 = vmax.f32 %v734, 0.0
      %v767 = vmax.f32 %v735, 0.0
      %v768 = vpack.c.bf16 %v737, %v736
      %v769 = vpack.c.bf16 %v739, %v738
      %v770 = vpack.c.bf16 %v741, %v740
      %v771 = vpack.c.bf16 %v743, %v742
      %v772 = vpack.c.bf16 %v745, %v744
      %v773 = vpack.c.bf16 %v747, %v746
      %v774 = vpack.c.bf16 %v749, %v748
      %v775 = vpack.c.bf16 %v751, %v750
      %v776 = vpack.c.bf16 %v753, %v752
      %v777 = vpack.c.bf16 %v755, %v754
      %v778 = vpack.c.bf16 %v757, %v756
      %v779 = vpack.c.bf16 %v759, %v758
      %v780 = vpack.c.bf16 %v761, %v760
      %v781 = vpack.c.bf16 %v763, %v762
      %v782 = vpack.c.bf16 %v765, %v764
      %v783 = vpack.c.bf16 %v767, %v766
      %v800 = vunpack.c.l.b16 %v768
      %v801 = vunpack.c.h.b16 %v768
      %v802 = vunpack.c.l.b16 %v769
      %v803 = vunpack.c.h.b16 %v769
      %v804 = vunpack.c.l.b16 %v770
      %v805 = vunpack.c.h.b16 %v770
      %v806 = vunpack.c.l.b16 %v771
      %v807 = vunpack.c.h.b16 %v771
      %v808 = vunpack.c.l.b16 %v772
      %v809 = vunpack.c.h.b16 %v772
      %v810 = vunpack.c.l.b16 %v773
      %v811 = vunpack.c.h.b16 %v773
      %v812 = vunpack.c.l.b16 %v774
      %v813 = vunpack.c.h.b16 %v774
      %v814 = vunpack.c.l.b16 %v775
      %v815 = vunpack.c.h.b16 %v775
      %v816 = vunpack.c.l.b16 %v776
      %v817 = vunpack.c.h.b16 %v776
      %v818 = vunpack.c.l.b16 %v777
      %v819 = vunpack.c.h.b16 %v777
      %v820 = vunpack.c.l.b16 %v778
      %v821 = vunpack.c.h.b16 %v778
      %v822 = vunpack.c.l.b16 %v779
      %v823 = vunpack.c.h.b16 %v779
      %v824 = vunpack.c.l.b16 %v780
      %v825 = vunpack.c.h.b16 %v780
      %v826 = vunpack.c.l.b16 %v781
      %v827 = vunpack.c.h.b16 %v781
      %v828 = vunpack.c.l.b16 %v782
      %v829 = vunpack.c.h.b16 %v782
      %v830 = vunpack.c.l.b16 %v783
      %v831 = vunpack.c.h.b16 %v783
      %v832 = vpack.c.b16 %v800, %v800
      %v833 = vpack.c.b16 %v801, %v801
      %v834 = vpack.c.b16 %v802, %v802
      %v835 = vpack.c.b16 %v803, %v803
      %v836 = vpack.c.b16 %v804, %v804
      %v837 = vpack.c.b16 %v805, %v805
      %v838 = vpack.c.b16 %v806, %v806
      %v839 = vpack.c.b16 %v807, %v807
      %v840 = vpack.c.b16 %v808, %v808
      %v841 = vpack.c.b16 %v809, %v809
      %v842 = vpack.c.b16 %v810, %v810
      %v843 = vpack.c.b16 %v811, %v811
      %v844 = vpack.c.b16 %v812, %v812
      %v845 = vpack.c.b16 %v813, %v813
      %v846 = vpack.c.b16 %v814, %v814
      %v847 = vpack.c.b16 %v815, %v815
      %v848 = vpack.c.b16 %v816, %v816
      %v849 = vpack.c.b16 %v817, %v817
      %v850 = vpack.c.b16 %v818, %v818
      %v851 = vpack.c.b16 %v819, %v819
      %v852 = vpack.c.b16 %v820, %v820
      %v853 = vpack.c.b16 %v821, %v821
      %v854 = vpack.c.b16 %v822, %v822
      %v855 = vpack.c.b16 %v823, %v823
      %v856 = vpack.c.b16 %v824, %v824
      %v857 = vpack.c.b16 %v825, %v825
      %v858 = vpack.c.b16 %v826, %v826
      %v859 = vpack.c.b16 %v827, %v827
      %v860 = vpack.c.b16 %v828, %v828
      %v861 = vpack.c.b16 %v829, %v829
      %v862 = vpack.c.b16 %v830, %v830
      %v863 = vpack.c.b16 %v831, %v831
      %896 = vst [vmem:[%s418] sm:$0xf] %v832
      %897 = vst [vmem:[%s418 + $0x4] sm:$0xf] %v833
      %898 = vst [vmem:[%s418 + $0x8] sm:$0xf] %v834
      %899 = vst [vmem:[%s418 + $0xc] sm:$0xf] %v835
      %900 = vst [vmem:[%s418 + $0x10] sm:$0xf] %v836
      %901 = vst [vmem:[%s418 + $0x14] sm:$0xf] %v837
      %902 = vst [vmem:[%s418 + $0x18] sm:$0xf] %v838
      %903 = vst [vmem:[%s418 + $0x1c] sm:$0xf] %v839
      %904 = vst [vmem:[%s418 + $0x20] sm:$0xf] %v840
      %905 = vst [vmem:[%s418 + $0x24] sm:$0xf] %v841
      %906 = vst [vmem:[%s418 + $0x28] sm:$0xf] %v842
      %907 = vst [vmem:[%s418 + $0x2c] sm:$0xf] %v843
      %908 = vst [vmem:[%s418 + $0x30] sm:$0xf] %v844
      %909 = vst [vmem:[%s418 + $0x34] sm:$0xf] %v845
      %910 = vst [vmem:[%s418 + $0x38] sm:$0xf] %v846
      %911 = vst [vmem:[%s418 + $0x3c] sm:$0xf] %v847
      %912 = vst [vmem:[%s418 + $0x40] sm:$0xf] %v848
      %913 = vst [vmem:[%s418 + $0x44] sm:$0xf] %v849
      %914 = vst [vmem:[%s418 + $0x48] sm:$0xf] %v850
      %915 = vst [vmem:[%s418 + $0x4c] sm:$0xf] %v851
      %916 = vst [vmem:[%s418 + $0x50] sm:$0xf] %v852
      %917 = vst [vmem:[%s418 + $0x54] sm:$0xf] %v853
      %918 = vst [vmem:[%s418 + $0x58] sm:$0xf] %v854
      %919 = vst [vmem:[%s418 + $0x5c] sm:$0xf] %v855
      %920 = vst [vmem:[%s418 + $0x60] sm:$0xf] %v856
      %921 = vst [vmem:[%s418 + $0x64] sm:$0xf] %v857
      %922 = vst [vmem:[%s418 + $0x68] sm:$0xf] %v858
      %923 = vst [vmem:[%s418 + $0x6c] sm:$0xf] %v859
      %924 = vst [vmem:[%s418 + $0x70] sm:$0xf] %v860
      %925 = vst [vmem:[%s418 + $0x74] sm:$0xf] %v861
      %926 = vst [vmem:[%s418 + $0x78] sm:$0xf] %v862
      %927 = vst [vmem:[%s418 + $0x7c] sm:$0xf] %v863
      %s928 = smul.u32 32, %s23
      %p929 = scmp.lt.s32.totalorder %s22, 1
      %s930 = scalar_select %p929, %s22, 1
      %p931 = scmp.lt.s32.totalorder %s928, 31
      %s932 = scalar_select %p931, %s928, 31
      %p933 = scmp.lt.s32.totalorder %s24, 0
      %s934 = scalar_select %p933, %s24, 0
      %s935 = sadd.s32 %s934, %s932
      %s936 = smul.addr %s930, 32
      %s937 = sadd.s32 %s935, %s936
      %s938 = smul.addr %s937, 4
      %s939 = scalar_lea.vmem %s6, %s938
      // Predicated region
      $region45: #{bottleneck_forward.9} parent=43 // pred_check
        %p940 = pneg %p222
      $region46: #{bottleneck_forward.9} parent=43 // pred_check_branch
        %942 = sbr.rel (%p940) target = $region48
      $region47: #{bottleneck_forward.9} parent=43 // pred_region
        %s943 = smul.u32 32, %s23
      $region48: #{bottleneck_forward.9} parent=43 // pred_fallthru
        _
    $region44: #{bottleneck_forward.9} parent=5 // pred_fallthru
      _
    %p944 = scmp.le.s32.totalorder 2, %s12
    // Predicated region
    $region49: #{bottleneck_forward.9} parent=5 // pred_check
      %p945 = pneg %p944
    $region50: #{bottleneck_forward.9} parent=5 // pred_check_branch
      %947 = sbr.rel (%p945) target = $region52
    $region51: #{bottleneck_forward.9} parent=5 // pred_region
      %s948 = ssub.s32 %s12, 2
      // Predicated region
      $region53: #{bottleneck_forward.9} parent=51 // pred_check
        %p949 = pneg %p228
      $region54: #{bottleneck_forward.9} parent=51 // pred_check_branch
        %951 = sbr.rel (%p949) target = $region56
      $region55: #{bottleneck_forward.9} parent=51 // pred_region
        %s952 = smul.u32 32, %s26
        %p953 = scmp.lt.s32.totalorder %s25, 1
        %s954 = scalar_select %p953, %s25, 1
        %p955 = scmp.lt.s32.totalorder %s952, 31
        %s956 = scalar_select %p955, %s952, 31
        %p957 = scmp.lt.s32.totalorder %s27, 0
        %s958 = scalar_select %p957, %s27, 0
        %s959 = sadd.s32 %s958, %s956
        %s960 = smul.addr %s954, 32
        %s961 = sadd.s32 %s959, %s960
        %s962 = smul.addr %s961, 4
        %s963 = scalar_lea.vmem %s6, %s962
      $region56: #{bottleneck_forward.9} parent=51 // pred_fallthru
        _
    $region52: #{bottleneck_forward.9} parent=5 // pred_fallthru
      _
  $region6: #{bottleneck_forward.9} parent=0 // loop_footer
    %s16 = sadd.s32 1, %s12
  $region7: #{bottleneck_forward.9} parent=0 // loop_footer_branch
    %11 = sbr.rel target = $region3
  $region8: #{bottleneck_forward.9} parent=0 // loop_exit
    _

// kernel: bottleneck_forward.7
$region0: #{bottleneck_forward.7}
  #allocation0 [shape = 'u32[]', space=smem, size = 0x4, offset = 0x4, fixed_abs, tag = 'smem constant byte address 0x4 - core index']
  #allocation1 [shape = 'u32[144,128]{1,0:T(1,128)}', space=vmem, size = 0x12000, scoped, tag = 'internal scratch']
  #allocation2 [shape = 'bf16[256,128]{1,0:T(8,128)(2,1)}', space=vmem, size = 0x10000, scoped, tag = 'scratch operand']
  %s0 = inlined_call_operand.vmem [shape: bf16[2,256,128], index: 0, kind: input, shape index: {}]
  %s1 = inlined_call_operand.vmem [shape: f32[1,128], index: 1, kind: input, shape index: {}]
  %s2 = inlined_call_operand.vmem [shape: f32[1,128], index: 2, kind: input, shape index: {}]
  %s3 = inlined_call_operand.vmem [shape: bf16[128,128], index: 3, kind: input, shape index: {}]
  %s4 = inlined_call_operand.vmem [shape: bf16[2,256,128], index: 4, kind: output, shape index: {0}]
  %s5 = inlined_call_operand.vmem [shape: f32[2,1,8,128], index: 5, kind: output, shape index: {1}]
  %6 = xla_tuple %s4, %s5
  %s7 = sld [smem:[#allocation0]]
  $region61: #{bottleneck_forward.7} parent=0
    _
  %s9 = ssub.s32 1, %s7
  %s10 = scalar_select 0, %s9, %s7
  loop: start=0, step=1, limit=4
  $region2: #{bottleneck_forward.7} parent=0 // loop_pre_header
    _
  $region3: #{bottleneck_forward.7} parent=0 // loop_header
    %s12 = sphi 0, %s16
    %p13 = scmp.ge.s32.totalorder %s12, 4
    %s19 = sphi 0, %s38
    %s20 = sphi 0, %s34
    %s21 = sphi 0, %s30
    %s22 = sphi 0, %s19
    %s23 = sphi 0, %s20
    %s24 = sphi 0, %s21
    %s25 = sphi 0, %s22
    %s26 = sphi 0, %s23
    %s27 = sphi 0, %s24
    %s43 = sphi 0, %s45
    %s46 = sphi 0, %s43
    %s47 = sphi 0, %s46
    %s63 = sphi 0, %s47
    %s67 = sphi 0, %s67
    %s69 = sphi 0, %s67
    %s70 = sphi 0, %s69
    %s84 = sphi 0, %s70
    %s88 = sphi 0, %s88
    %s90 = sphi 0, %s88
    %s91 = sphi 0, %s90
    %s105 = sphi 0, %s91
    %s111 = sphi 0, %s113
    %s114 = sphi 0, %s111
    %s115 = sphi 0, %s114
    %s131 = sphi 0, %s115
    %s141 = sphi 0, %s143
    %s144 = sphi 0, %s141
    %s145 = sphi 0, %s144
    %s161 = sphi 0, %s145
    %s171 = sphi 0, %s173
    %s174 = sphi 0, %s171
    %s175 = sphi 0, %s174
    %s191 = sphi 0, %s175
  $region4: #{bottleneck_forward.7} parent=0 // loop_header_branch
    %15 = sbr.rel (%p13) target = $region8
  $region5: #{bottleneck_forward.7} parent=0 // loop_body
    %s17 = ssub.s32 %s12, 1
    %s18 = ssub.s32 %s12, 2
    %s28 = sadd.s32 1, %s21
    %p29 = scmp.ge.s32.totalorder %s28, 1
    %s30 = scalar_select %p29, 0, %s28
    %s31 = sadd.s32 1, %s20
    %s32 = scalar_select %p29, %s31, %s20
    %p33 = scmp.ge.s32.totalorder %s32, 1
    %s34 = scalar_select %p33, 0, %s32
    %s35 = sadd.s32 1, %s19
    %s36 = scalar_select %p33, %s35, %s19
    %p37 = scmp.ge.s32.totalorder %s36, 2
    %s38 = scalar_select %p37, 0, %s36
    %s39 = ssub.s32 %s19, %s38
    %s40 = ssub.s32 %s20, %s34
    %s41 = sor.u32 %s39, %s40
    %p42 = scmp.eq.s32.totalorder %s41, 0
    %s44 = sadd.s32 %s43, 1
    %s45 = scalar_select %p42, %s43, %s44
    %p48 = pneg %p42
    %p49 = scmp.eq.s32.totalorder %s12, 1
    %p50 = por %p48, %p49
    %p51 = scmp.ne.s32.totalorder %s43, %s46
    %p52 = scmp.eq.s32.totalorder %s12, 0
    %p53 = por %p51, %p52
    %p54 = scmp.ne.s32.totalorder %s43, %s46
    %p55 = scmp.eq.s32.totalorder %s17, 1
    %p56 = por %p54, %p55
    %p57 = scmp.ne.s32.totalorder %s46, %s47
    %p58 = scmp.eq.s32.totalorder %s17, 0
    %p59 = por %p57, %p58
    %p60 = scmp.ne.s32.totalorder %s46, %s47
    %p61 = scmp.eq.s32.totalorder %s18, 1
    %p62 = por %p60, %p61
    %p64 = scmp.ne.s32.totalorder %s47, %s63
    %p65 = scmp.eq.s32.totalorder %s18, 0
    %p66 = por %p64, %p65
    %s68 = sadd.s32 %s67, 1
    %p71 = scmp.eq.s32.totalorder %s12, 1
    %p72 = scmp.ne.s32.totalorder %s67, %s69
    %p73 = scmp.eq.s32.totalorder %s12, 0
    %p74 = por %p72, %p73
    %p75 = scmp.ne.s32.totalorder %s67, %s69
    %p76 = scmp.eq.s32.totalorder %s17, 1
    %p77 = por %p75, %p76
    %p78 = scmp.ne.s32.totalorder %s69, %s70
    %p79 = scmp.eq.s32.totalorder %s17, 0
    %p80 = por %p78, %p79
    %p81 = scmp.ne.s32.totalorder %s69, %s70
    %p82 = scmp.eq.s32.totalorder %s18, 1
    %p83 = por %p81, %p82
    %p85 = scmp.ne.s32.totalorder %s70, %s84
    %p86 = scmp.eq.s32.totalorder %s18, 0
    %p87 = por %p85, %p86
    %s89 = sadd.s32 %s88, 1
    %p92 = scmp.eq.s32.totalorder %s12, 1
    %p93 = scmp.ne.s32.totalorder %s88, %s90
    %p94 = scmp.eq.s32.totalorder %s12, 0
    %p95 = por %p93, %p94
    %p96 = scmp.ne.s32.totalorder %s88, %s90
    %p97 = scmp.eq.s32.totalorder %s17, 1
    %p98 = por %p96, %p97
    %p99 = scmp.ne.s32.totalorder %s90, %s91
    %p100 = scmp.eq.s32.totalorder %s17, 0
    %p101 = por %p99, %p100
    %p102 = scmp.ne.s32.totalorder %s90, %s91
    %p103 = scmp.eq.s32.totalorder %s18, 1
    %p104 = por %p102, %p103
    %p106 = scmp.ne.s32.totalorder %s91, %s105
    %p107 = scmp.eq.s32.totalorder %s18, 0
    %p108 = por %p106, %p107
    %s109 = ssub.s32 %s21, %s30
    %p110 = scmp.eq.s32.totalorder %s109, 0
    %s112 = sadd.s32 %s111, 1
    %s113 = scalar_select %p110, %s111, %s112
    %p116 = pneg %p110
    %p117 = scmp.eq.s32.totalorder %s12, 1
    %p118 = por %p116, %p117
    %p119 = scmp.ne.s32.totalorder %s111, %s114
    %p120 = scmp.eq.s32.totalorder %s12, 0
    %p121 = por %p119, %p120
    %p122 = scmp.ne.s32.totalorder %s111, %s114
    %p123 = scmp.eq.s32.totalorder %s17, 1
    %p124 = por %p122, %p123
    %p125 = scmp.ne.s32.totalorder %s114, %s115
    %p126 = scmp.eq.s32.totalorder %s17, 0
    %p127 = por %p125, %p126
    %p128 = scmp.ne.s32.totalorder %s114, %s115
    %p129 = scmp.eq.s32.totalorder %s18, 1
    %p130 = por %p128, %p129
    %p132 = scmp.ne.s32.totalorder %s115, %s131
    %p133 = scmp.eq.s32.totalorder %s18, 0
    %p134 = por %p132, %p133
    %s135 = ssub.s32 %s19, %s38
    %s136 = ssub.s32 %s20, %s34
    %s137 = sor.u32 %s135, %s136
    %s138 = ssub.s32 %s21, %s30
    %s139 = sor.u32 %s137, %s138
    %p140 = scmp.eq.s32.totalorder %s139, 0
    %s142 = sadd.s32 %s141, 1
    %s143 = scalar_select %p140, %s141, %s142
    %p146 = pneg %p140
    %p147 = scmp.eq.s32.totalorder %s12, 1
    %p148 = por %p146, %p147
    %p149 = scmp.ne.s32.totalorder %s141, %s144
    %p150 = scmp.eq.s32.totalorder %s12, 0
    %p151 = por %p149, %p150
    %p152 = scmp.ne.s32.totalorder %s141, %s144
    %p153 = scmp.eq.s32.totalorder %s17, 1
    %p154 = por %p152, %p153
    %p155 = scmp.ne.s32.totalorder %s144, %s145
    %p156 = scmp.eq.s32.totalorder %s17, 0
    %p157 = por %p155, %p156
    %p158 = scmp.ne.s32.totalorder %s144, %s145
    %p159 = scmp.eq.s32.totalorder %s18, 1
    %p160 = por %p158, %p159
    %p162 = scmp.ne.s32.totalorder %s145, %s161
    %p163 = scmp.eq.s32.totalorder %s18, 0
    %p164 = por %p162, %p163
    %s165 = ssub.s32 %s19, %s38
    %s166 = ssub.s32 %s20, %s34
    %s167 = sor.u32 %s165, %s166
    %s168 = ssub.s32 %s21, %s30
    %s169 = sor.u32 %s167, %s168
    %p170 = scmp.eq.s32.totalorder %s169, 0
    %s172 = sadd.s32 %s171, 1
    %s173 = scalar_select %p170, %s171, %s172
    %p176 = pneg %p170
    %p177 = scmp.eq.s32.totalorder %s12, 1
    %p178 = por %p176, %p177
    %p179 = scmp.ne.s32.totalorder %s171, %s174
    %p180 = scmp.eq.s32.totalorder %s12, 0
    %p181 = por %p179, %p180
    %p182 = scmp.ne.s32.totalorder %s171, %s174
    %p183 = scmp.eq.s32.totalorder %s17, 1
    %p184 = por %p182, %p183
    %p185 = scmp.ne.s32.totalorder %s174, %s175
    %p186 = scmp.eq.s32.totalorder %s17, 0
    %p187 = por %p185, %p186
    %p188 = scmp.ne.s32.totalorder %s174, %s175
    %p189 = scmp.eq.s32.totalorder %s18, 1
    %p190 = por %p188, %p189
    %p192 = scmp.ne.s32.totalorder %s175, %s191
    %p193 = scmp.eq.s32.totalorder %s18, 0
    %p194 = por %p192, %p193
    %p195 = scmp.le.s32.totalorder 1, %s12
    %p196 = scmp.lt.s32.totalorder %s12, 3
    %p197 = pnand %p195, %p196
    %p198 = pneg %p197
    // Predicated region
    $region9: #{bottleneck_forward.7} parent=5 // pred_check
      _
    $region10: #{bottleneck_forward.7} parent=5 // pred_check_branch
      %200 = sbr.rel (%p197) target = $region12
    $region11: #{bottleneck_forward.7} parent=5 // pred_region
      %s201 = ssub.s32 %s12, 1
      // Predicated region
      $region13: #{bottleneck_forward.7} parent=11 // pred_check
        %p202 = pneg %p80
      $region14: #{bottleneck_forward.7} parent=11 // pred_check_branch
        %204 = sbr.rel (%p202) target = $region16
      $region15: #{bottleneck_forward.7} parent=11 // pred_region
        _
      $region16: #{bottleneck_forward.7} parent=11 // pred_fallthru
        _
      // Predicated region
      $region17: #{bottleneck_forward.7} parent=11 // pred_check
        %p205 = pneg %p101
      $region18: #{bottleneck_forward.7} parent=11 // pred_check_branch
        %207 = sbr.rel (%p205) target = $region20
      $region19: #{bottleneck_forward.7} parent=11 // pred_region
        _
      $region20: #{bottleneck_forward.7} parent=11 // pred_fallthru
        _
      // Predicated region
      $region21: #{bottleneck_forward.7} parent=11 // pred_check
        %p208 = pneg %p127
      $region22: #{bottleneck_forward.7} parent=11 // pred_check_branch
        %210 = sbr.rel (%p208) target = $region24
      $region23: #{bottleneck_forward.7} parent=11 // pred_region
        %p211 = scmp.lt.s32.totalorder %s24, 0
        %s212 = scalar_select %p211, %s24, 0
        %s213 = smul.addr %s212, 4
        %s214 = scalar_lea.vmem %s3, %s213
      $region24: #{bottleneck_forward.7} parent=11 // pred_fallthru
        _
    $region12: #{bottleneck_forward.7} parent=5 // pred_fallthru
      _
    %p215 = scmp.lt.s32.totalorder %s12, 2
    // Predicated region
    $region25: #{bottleneck_forward.7} parent=5 // pred_check
      %p216 = pneg %p215
    $region26: #{bottleneck_forward.7} parent=5 // pred_check_branch
      %218 = sbr.rel (%p216) target = $region28
    $region27: #{bottleneck_forward.7} parent=5 // pred_region
      // Predicated region
      $region29: #{bottleneck_forward.7} parent=27 // pred_check
        %p219 = pneg %p53
      $region30: #{bottleneck_forward.7} parent=27 // pred_check_branch
        %221 = sbr.rel (%p219) target = $region32
      $region31: #{bottleneck_forward.7} parent=27 // pred_region
        %s222 = smul.u32 32, %s20
        %p223 = scmp.lt.s32.totalorder %s19, 1
        %s224 = scalar_select %p223, %s19, 1
        %p225 = scmp.lt.s32.totalorder %s222, 31
        %s226 = scalar_select %p225, %s222, 31
        %s227 = smul.addr %s224, 32
        %s228 = sadd.s32 %s226, %s227
        %s229 = smul.addr %s228, 4
        %s230 = scalar_lea.vmem %s0, %s229
        %s231 = smul.u32 32, %s20
      $region32: #{bottleneck_forward.7} parent=27 // pred_fallthru
        _
    $region28: #{bottleneck_forward.7} parent=5 // pred_fallthru
      _
    %p232 = scmp.le.s32.totalorder 1, %s12
    %p233 = scmp.lt.s32.totalorder %s12, 3
    %p234 = pnand %p232, %p233
    %p235 = pneg %p234
    // Predicated region
    $region33: #{bottleneck_forward.7} parent=5 // pred_check
      _
    $region34: #{bottleneck_forward.7} parent=5 // pred_check_branch
      %237 = sbr.rel (%p234) target = $region36
    $region35: #{bottleneck_forward.7} parent=5 // pred_region
      %s238 = ssub.s32 %s12, 1
      %s239 = smul.u32 32, %s23
      %p240 = scmp.lt.s32.totalorder %s22, 1
      %s241 = scalar_select %p240, %s22, 1
      %p242 = scmp.lt.s32.totalorder %s239, 31
      %s243 = scalar_select %p242, %s239, 31
      %s244 = smul.addr %s241, 32
      %s245 = sadd.s32 %s243, %s244
      %s246 = smul.addr %s245, 4
      %s247 = scalar_lea.vmem %s0, %s246
      %p248 = pneg %p59
      %p249 = pneg %p56
      %p250 = pneg %p80
      %p251 = pneg %p77
      %p252 = pneg %p101
      %p253 = pneg %p98
      %p254 = scmp.lt.s32.totalorder %s24, 0
      %s255 = scalar_select %p254, %s24, 0
      %s256 = smul.addr %s255, 4
      %s257 = scalar_lea.vmem %s3, %s256
      %p258 = pneg %p127
      %p259 = pneg %p124
      %p260 = pneg %p157
      %p261 = pneg %p154
      %s262 = smul.u32 32, %s23
      %p263 = scmp.lt.s32.totalorder %s22, 1
      %s264 = scalar_select %p263, %s22, 1
      %p265 = scmp.lt.s32.totalorder %s262, 31
      %s266 = scalar_select %p265, %s262, 31
      %p267 = scmp.lt.s32.totalorder %s24, 0
      %s268 = scalar_select %p267, %s24, 0
      %s269 = sadd.s32 %s268, %s266
      %s270 = smul.addr %s264, 32
      %s271 = sadd.s32 %s269, %s270
      %s272 = smul.addr %s271, 4
      %s273 = scalar_lea.vmem %s4, %s272
      %p274 = pneg %p187
      %p275 = pneg %p184
      %p276 = scmp.lt.s32.totalorder %s22, 1
      %s277 = scalar_select %p276, %s22, 1
      %p278 = scmp.lt.s32.totalorder %s23, 0
      %s279 = scalar_select %p278, %s23, 0
      %p280 = scmp.lt.s32.totalorder %s24, 0
      %s281 = scalar_select %p280, %s24, 0
      %s282 = sadd.s32 %s281, %s279
      %s283 = sadd.s32 %s282, %s277
      %s284 = smul.addr %s283, 8
      %s285 = scalar_lea.vmem %s5, %s284
      %s286 = smul.u32 32, %s23
      %p287 = scmp.lt.s32.totalorder %s22, 1
      %s288 = scalar_select %p287, %s22, 1
      %p289 = scmp.lt.s32.totalorder %s286, 31
      %s290 = scalar_select %p289, %s286, 31
      %s291 = smul.addr %s288, 32
      %s292 = sadd.s32 %s290, %s291
      %s293 = smul.addr %s292, 4
      %s294 = scalar_lea.vmem %s0, %s293
      %s295 = smul.u32 32, %s23
      %p296 = scmp.lt.s32.totalorder %s24, 0
      %s297 = scalar_select %p296, %s24, 0
      %s298 = smul.addr %s297, 4
      %s299 = scalar_lea.vmem %s3, %s298
      %s300 = smul.u32 32, %s23
      %p301 = scmp.lt.s32.totalorder %s22, 1
      %s302 = scalar_select %p301, %s22, 1
      %p303 = scmp.lt.s32.totalorder %s300, 31
      %s304 = scalar_select %p303, %s300, 31
      %p305 = scmp.lt.s32.totalorder %s24, 0
      %s306 = scalar_select %p305, %s24, 0
      %s307 = sadd.s32 %s306, %s304
      %s308 = smul.addr %s302, 32
      %s309 = sadd.s32 %s307, %s308
      %s310 = smul.addr %s309, 4
      %s311 = scalar_lea.vmem %s4, %s310
      %s312 = smul.u32 32, %s23
      %p313 = scmp.lt.s32.totalorder %s22, 1
      %s314 = scalar_select %p313, %s22, 1
      %p315 = scmp.lt.s32.totalorder %s23, 0
      %s316 = scalar_select %p315, %s23, 0
      %p317 = scmp.lt.s32.totalorder %s24, 0
      %s318 = scalar_select %p317, %s24, 0
      %s319 = sadd.s32 %s318, %s316
      %s320 = sadd.s32 %s319, %s314
      %s321 = smul.addr %s320, 8
      %s322 = scalar_lea.vmem %s5, %s321
      %p324 = scmp.eq.s32.totalorder %s24, 0
      // Predicated region
      $region37: #{bottleneck_forward.7} parent=35 // pred_check
        %p325 = pneg %p324
      $region38: #{bottleneck_forward.7} parent=35 // pred_check_branch
        %327 = sbr.rel (%p325) target = $region40
      $region39: #{bottleneck_forward.7} parent=35 // pred_region
        %v328 = vld [vmem:[%s294] sm:$0xf]
        %v329 = vld [vmem:[%s294 + $0x4] sm:$0xf]
        %v330 = vld [vmem:[%s294 + $0x8] sm:$0xf]
        %v331 = vld [vmem:[%s294 + $0xc] sm:$0xf]
        %v332 = vld [vmem:[%s294 + $0x10] sm:$0xf]
        %v333 = vld [vmem:[%s294 + $0x14] sm:$0xf]
        %v334 = vld [vmem:[%s294 + $0x18] sm:$0xf]
        %v335 = vld [vmem:[%s294 + $0x1c] sm:$0xf]
        %v336 = vld [vmem:[%s294 + $0x20] sm:$0xf]
        %v337 = vld [vmem:[%s294 + $0x24] sm:$0xf]
        %v338 = vld [vmem:[%s294 + $0x28] sm:$0xf]
        %v339 = vld [vmem:[%s294 + $0x2c] sm:$0xf]
        %v340 = vld [vmem:[%s294 + $0x30] sm:$0xf]
        %v341 = vld [vmem:[%s294 + $0x34] sm:$0xf]
        %v342 = vld [vmem:[%s294 + $0x38] sm:$0xf]
        %v343 = vld [vmem:[%s294 + $0x3c] sm:$0xf]
        %v344 = vld [vmem:[%s294 + $0x40] sm:$0xf]
        %v345 = vld [vmem:[%s294 + $0x44] sm:$0xf]
        %v346 = vld [vmem:[%s294 + $0x48] sm:$0xf]
        %v347 = vld [vmem:[%s294 + $0x4c] sm:$0xf]
        %v348 = vld [vmem:[%s294 + $0x50] sm:$0xf]
        %v349 = vld [vmem:[%s294 + $0x54] sm:$0xf]
        %v350 = vld [vmem:[%s294 + $0x58] sm:$0xf]
        %v351 = vld [vmem:[%s294 + $0x5c] sm:$0xf]
        %v352 = vld [vmem:[%s294 + $0x60] sm:$0xf]
        %v353 = vld [vmem:[%s294 + $0x64] sm:$0xf]
        %v354 = vld [vmem:[%s294 + $0x68] sm:$0xf]
        %v355 = vld [vmem:[%s294 + $0x6c] sm:$0xf]
        %v356 = vld [vmem:[%s294 + $0x70] sm:$0xf]
        %v357 = vld [vmem:[%s294 + $0x74] sm:$0xf]
        %v358 = vld [vmem:[%s294 + $0x78] sm:$0xf]
        %v359 = vld [vmem:[%s294 + $0x7c] sm:$0xf]
        %v360 = vunpack.c.l.bf16 %v328
        %v361 = vunpack.c.l.bf16 %v329
        %v362 = vunpack.c.l.bf16 %v330
        %v363 = vunpack.c.l.bf16 %v331
        %v364 = vunpack.c.l.bf16 %v332
        %v365 = vunpack.c.l.bf16 %v333
        %v366 = vunpack.c.l.bf16 %v334
        %v367 = vunpack.c.l.bf16 %v335
        %v368 = vunpack.c.l.bf16 %v336
        %v369 = vunpack.c.l.bf16 %v337
        %v370 = vunpack.c.l.bf16 %v338
        %v371 = vunpack.c.l.bf16 %v339
        %v372 = vunpack.c.l.bf16 %v340
        %v373 = vunpack.c.l.bf16 %v341
        %v374 = vunpack.c.l.bf16 %v342
        %v375 = vunpack.c.l.bf16 %v343
        %v376 = vunpack.c.l.bf16 %v344
        %v377 = vunpack.c.l.bf16 %v345
        %v378 = vunpack.c.l.bf16 %v346
        %v379 = vunpack.c.l.bf16 %v347
        %v380 = vunpack.c.l.bf16 %v348
        %v381 = vunpack.c.l.bf16 %v349
        %v382 = vunpack.c.l.bf16 %v350
        %v383 = vunpack.c.l.bf16 %v351
        %v384 = vunpack.c.l.bf16 %v352
        %v385 = vunpack.c.l.bf16 %v353
        %v386 = vunpack.c.l.bf16 %v354
        %v387 = vunpack.c.l.bf16 %v355
        %v388 = vunpack.c.l.bf16 %v356
        %v389 = vunpack.c.l.bf16 %v357
        %v390 = vunpack.c.l.bf16 %v358
        %v391 = vunpack.c.l.bf16 %v359
        %v392 = vld [vmem:[%s1] sm:$0x1]
        %v394 = vlaneseq
        %v395 = vshrl.u32 %v394, 7
        %v396 = vsub.s32 0, %v395
        %v397 = vrot.slane %v392, %v396
        %v399 = vmul.f32 %v360, %v397
        %v400 = vmul.f32 %v361, %v397
        %v401 = vmul.f32 %v362, %v397
        %v402 = vmul.f32 %v363, %v397
        %v403 = vmul.f32 %v364, %v397
        %v404 = vmul.f32 %v365, %v397
        %v405 = vmul.f32 %v366, %v397
        %v406 = vmul.f32 %v367, %v397
        %v407 = vmul.f32 %v368, %v397
        %v408 = vmul.f32 %v369, %v397
        %v409 = vmul.f32 %v370, %v397
        %v410 = vmul.f32 %v371, %v397
        %v411 = vmul.f32 %v372, %v397
        %v412 = vmul.f32 %v373, %v397
        %v413 = vmul.f32 %v374, %v397
        %v414 = vmul.f32 %v375, %v397
        %v415 = vmul.f32 %v376, %v397
        %v416 = vmul.f32 %v377, %v397
        %v417 = vmul.f32 %v378, %v397
        %v418 = vmul.f32 %v379, %v397
        %v419 = vmul.f32 %v380, %v397
        %v420 = vmul.f32 %v381, %v397
        %v421 = vmul.f32 %v382, %v397
        %v422 = vmul.f32 %v383, %v397
        %v423 = vmul.f32 %v384, %v397
        %v424 = vmul.f32 %v385, %v397
        %v425 = vmul.f32 %v386, %v397
        %v426 = vmul.f32 %v387, %v397
        %v427 = vmul.f32 %v388, %v397
        %v428 = vmul.f32 %v389, %v397
        %v429 = vmul.f32 %v390, %v397
        %v430 = vmul.f32 %v391, %v397
        %v431 = vld [vmem:[%s2] sm:$0x1]
        %v433 = vlaneseq
        %v434 = vshrl.u32 %v433, 7
        %v435 = vsub.s32 0, %v434
        %v436 = vrot.slane %v431, %v435
        %v438 = vadd.f32 %v399, %v436
        %v439 = vadd.f32 %v400, %v436
        %v440 = vadd.f32 %v401, %v436
        %v441 = vadd.f32 %v402, %v436
        %v442 = vadd.f32 %v403, %v436
        %v443 = vadd.f32 %v404, %v436
        %v444 = vadd.f32 %v405, %v436
        %v445 = vadd.f32 %v406, %v436
        %v446 = vadd.f32 %v407, %v436
        %v447 = vadd.f32 %v408, %v436
        %v448 = vadd.f32 %v409, %v436
        %v449 = vadd.f32 %v410, %v436
        %v450 = vadd.f32 %v411, %v436
        %v451 = vadd.f32 %v412, %v436
        %v452 = vadd.f32 %v413, %v436
        %v453 = vadd.f32 %v414, %v436
        %v454 = vadd.f32 %v415, %v436
        %v455 = vadd.f32 %v416, %v436
        %v456 = vadd.f32 %v417, %v436
        %v457 = vadd.f32 %v418, %v436
        %v458 = vadd.f32 %v419, %v436
        %v459 = vadd.f32 %v420, %v436
        %v460 = vadd.f32 %v421, %v436
        %v461 = vadd.f32 %v422, %v436
        %v462 = vadd.f32 %v423, %v436
        %v463 = vadd.f32 %v424, %v436
        %v464 = vadd.f32 %v425, %v436
        %v465 = vadd.f32 %v426, %v436
        %v466 = vadd.f32 %v427, %v436
        %v467 = vadd.f32 %v428, %v436
        %v468 = vadd.f32 %v429, %v436
        %v469 = vadd.f32 %v430, %v436
        %v470 = vmax.f32 %v438, 0.0
        %v471 = vmax.f32 %v439, 0.0
        %v472 = vmax.f32 %v440, 0.0
        %v473 = vmax.f32 %v441, 0.0
        %v474 = vmax.f32 %v442, 0.0
        %v475 = vmax.f32 %v443, 0.0
        %v476 = vmax.f32 %v444, 0.0
        %v477 = vmax.f32 %v445, 0.0
        %v478 = vmax.f32 %v446, 0.0
        %v479 = vmax.f32 %v447, 0.0
        %v480 = vmax.f32 %v448, 0.0
        %v481 = vmax.f32 %v449, 0.0
        %v482 = vmax.f32 %v450, 0.0
        %v483 = vmax.f32 %v451, 0.0
        %v484 = vmax.f32 %v452, 0.0
        %v485 = vmax.f32 %v453, 0.0
        %v486 = vmax.f32 %v454, 0.0
        %v487 = vmax.f32 %v455, 0.0
        %v488 = vmax.f32 %v456, 0.0
        %v489 = vmax.f32 %v457, 0.0
        %v490 = vmax.f32 %v458, 0.0
        %v491 = vmax.f32 %v459, 0.0
        %v492 = vmax.f32 %v460, 0.0
        %v493 = vmax.f32 %v461, 0.0
        %v494 = vmax.f32 %v462, 0.0
        %v495 = vmax.f32 %v463, 0.0
        %v496 = vmax.f32 %v464, 0.0
        %v497 = vmax.f32 %v465, 0.0
        %v498 = vmax.f32 %v466, 0.0
        %v499 = vmax.f32 %v467, 0.0
        %v500 = vmax.f32 %v468, 0.0
        %v501 = vmax.f32 %v469, 0.0
        %v502 = vpack.c.bf16 %v471, %v470
        %v503 = vpack.c.bf16 %v473, %v472
        %v504 = vpack.c.bf16 %v475, %v474
        %v505 = vpack.c.bf16 %v477, %v476
        %v506 = vpack.c.bf16 %v479, %v478
        %v507 = vpack.c.bf16 %v481, %v480
        %v508 = vpack.c.bf16 %v483, %v482
        %v509 = vpack.c.bf16 %v485, %v484
        %v510 = vpack.c.bf16 %v487, %v486
        %v511 = vpack.c.bf16 %v489, %v488
        %v512 = vpack.c.bf16 %v491, %v490
        %v513 = vpack.c.bf16 %v493, %v492
        %v514 = vpack.c.bf16 %v495, %v494
        %v515 = vpack.c.bf16 %v497, %v496
        %v516 = vpack.c.bf16 %v499, %v498
        %v517 = vpack.c.bf16 %v501, %v500
        %v534 = vunpack.c.l.b16 %v502
        %v535 = vunpack.c.h.b16 %v502
        %v536 = vunpack.c.l.b16 %v503
        %v537 = vunpack.c.h.b16 %v503
        %v538 = vunpack.c.l.b16 %v504
        %v539 = vunpack.c.h.b16 %v504
        %v540 = vunpack.c.l.b16 %v505
        %v541 = vunpack.c.h.b16 %v505
        %v542 = vunpack.c.l.b16 %v506
        %v543 = vunpack.c.h.b16 %v506
        %v544 = vunpack.c.l.b16 %v507
        %v545 = vunpack.c.h.b16 %v507
        %v546 = vunpack.c.l.b16 %v508
        %v547 = vunpack.c.h.b16 %v508
        %v548 = vunpack.c.l.b16 %v509
        %v549 = vunpack.c.h.b16 %v509
        %v550 = vunpack.c.l.b16 %v510
        %v551 = vunpack.c.h.b16 %v510
        %v552 = vunpack.c.l.b16 %v511
        %v553 = vunpack.c.h.b16 %v511
        %v554 = vunpack.c.l.b16 %v512
        %v555 = vunpack.c.h.b16 %v512
        %v556 = vunpack.c.l.b16 %v513
        %v557 = vunpack.c.h.b16 %v513
        %v558 = vunpack.c.l.b16 %v514
        %v559 = vunpack.c.h.b16 %v514
        %v560 = vunpack.c.l.b16 %v515
        %v561 = vunpack.c.h.b16 %v515
        %v562 = vunpack.c.l.b16 %v516
        %v563 = vunpack.c.h.b16 %v516
        %v564 = vunpack.c.l.b16 %v517
        %v565 = vunpack.c.h.b16 %v517
        %v566 = vpack.c.b16 %v534, %v534
        %v567 = vpack.c.b16 %v535, %v535
        %v568 = vpack.c.b16 %v536, %v536
        %v569 = vpack.c.b16 %v537, %v537
        %v570 = vpack.c.b16 %v538, %v538
        %v571 = vpack.c.b16 %v539, %v539
        %v572 = vpack.c.b16 %v540, %v540
        %v573 = vpack.c.b16 %v541, %v541
        %v574 = vpack.c.b16 %v542, %v542
        %v575 = vpack.c.b16 %v543, %v543
        %v576 = vpack.c.b16 %v544, %v544
        %v577 = vpack.c.b16 %v545, %v545
        %v578 = vpack.c.b16 %v546, %v546
        %v579 = vpack.c.b16 %v547, %v547
        %v580 = vpack.c.b16 %v548, %v548
        %v581 = vpack.c.b16 %v549, %v549
        %v582 = vpack.c.b16 %v550, %v550
        %v583 = vpack.c.b16 %v551, %v551
        %v584 = vpack.c.b16 %v552, %v552
        %v585 = vpack.c.b16 %v553, %v553
        %v586 = vpack.c.b16 %v554, %v554
        %v587 = vpack.c.b16 %v555, %v555
        %v588 = vpack.c.b16 %v556, %v556
        %v589 = vpack.c.b16 %v557, %v557
        %v590 = vpack.c.b16 %v558, %v558
        %v591 = vpack.c.b16 %v559, %v559
        %v592 = vpack.c.b16 %v560, %v560
        %v593 = vpack.c.b16 %v561, %v561
        %v594 = vpack.c.b16 %v562, %v562
        %v595 = vpack.c.b16 %v563, %v563
        %v596 = vpack.c.b16 %v564, %v564
        %v597 = vpack.c.b16 %v565, %v565
        %630 = vst [vmem:[#allocation2] sm:$0xf] %v566
        %631 = vst [vmem:[#allocation2 + $0x4] sm:$0xf] %v567
        %632 = vst [vmem:[#allocation2 + $0x8] sm:$0xf] %v568
        %633 = vst [vmem:[#allocation2 + $0xc] sm:$0xf] %v569
        %634 = vst [vmem:[#allocation2 + $0x10] sm:$0xf] %v570
        %635 = vst [vmem:[#allocation2 + $0x14] sm:$0xf] %v571
        %636 = vst [vmem:[#allocation2 + $0x18] sm:$0xf] %v572
        %637 = vst [vmem:[#allocation2 + $0x1c] sm:$0xf] %v573
        %638 = vst [vmem:[#allocation2 + $0x20] sm:$0xf] %v574
        %639 = vst [vmem:[#allocation2 + $0x24] sm:$0xf] %v575
        %640 = vst [vmem:[#allocation2 + $0x28] sm:$0xf] %v576
        %641 = vst [vmem:[#allocation2 + $0x2c] sm:$0xf] %v577
        %642 = vst [vmem:[#allocation2 + $0x30] sm:$0xf] %v578
        %643 = vst [vmem:[#allocation2 + $0x34] sm:$0xf] %v579
        %644 = vst [vmem:[#allocation2 + $0x38] sm:$0xf] %v580
        %645 = vst [vmem:[#allocation2 + $0x3c] sm:$0xf] %v581
        %646 = vst [vmem:[#allocation2 + $0x40] sm:$0xf] %v582
        %647 = vst [vmem:[#allocation2 + $0x44] sm:$0xf] %v583
        %648 = vst [vmem:[#allocation2 + $0x48] sm:$0xf] %v584
        %649 = vst [vmem:[#allocation2 + $0x4c] sm:$0xf] %v585
        %650 = vst [vmem:[#allocation2 + $0x50] sm:$0xf] %v586
        %651 = vst [vmem:[#allocation2 + $0x54] sm:$0xf] %v587
        %652 = vst [vmem:[#allocation2 + $0x58] sm:$0xf] %v588
        %653 = vst [vmem:[#allocation2 + $0x5c] sm:$0xf] %v589
        %654 = vst [vmem:[#allocation2 + $0x60] sm:$0xf] %v590
        %655 = vst [vmem:[#allocation2 + $0x64] sm:$0xf] %v591
        %656 = vst [vmem:[#allocation2 + $0x68] sm:$0xf] %v592
        %657 = vst [vmem:[#allocation2 + $0x6c] sm:$0xf] %v593
        %658 = vst [vmem:[#allocation2 + $0x70] sm:$0xf] %v594
        %659 = vst [vmem:[#allocation2 + $0x74] sm:$0xf] %v595
        %660 = vst [vmem:[#allocation2 + $0x78] sm:$0xf] %v596
        %661 = vst [vmem:[#allocation2 + $0x7c] sm:$0xf] %v597
      $region40: #{bottleneck_forward.7} parent=35 // pred_fallthru
        _
      %v662 = vld [vmem:[#allocation2] sm:$0xf]
      %v663 = vld [vmem:[#allocation2 + $0x4] sm:$0xf]
      %v664 = vld [vmem:[#allocation2 + $0x8] sm:$0xf]
      %v665 = vld [vmem:[#allocation2 + $0xc] sm:$0xf]
      %v666 = vld [vmem:[#allocation2 + $0x10] sm:$0xf]
      %v667 = vld [vmem:[#allocation2 + $0x14] sm:$0xf]
      %v668 = vld [vmem:[#allocation2 + $0x18] sm:$0xf]
      %v669 = vld [vmem:[#allocation2 + $0x1c] sm:$0xf]
      %v670 = vld [vmem:[#allocation2 + $0x20] sm:$0xf]
      %v671 = vld [vmem:[#allocation2 + $0x24] sm:$0xf]
      %v672 = vld [vmem:[#allocation2 + $0x28] sm:$0xf]
      %v673 = vld [vmem:[#allocation2 + $0x2c] sm:$0xf]
      %v674 = vld [vmem:[#allocation2 + $0x30] sm:$0xf]
      %v675 = vld [vmem:[#allocation2 + $0x34] sm:$0xf]
      %v676 = vld [vmem:[#allocation2 + $0x38] sm:$0xf]
      %v677 = vld [vmem:[#allocation2 + $0x3c] sm:$0xf]
      %v678 = vld [vmem:[#allocation2 + $0x40] sm:$0xf]
      %v679 = vld [vmem:[#allocation2 + $0x44] sm:$0xf]
      %v680 = vld [vmem:[#allocation2 + $0x48] sm:$0xf]
      %v681 = vld [vmem:[#allocation2 + $0x4c] sm:$0xf]
      %v682 = vld [vmem:[#allocation2 + $0x50] sm:$0xf]
      %v683 = vld [vmem:[#allocation2 + $0x54] sm:$0xf]
      %v684 = vld [vmem:[#allocation2 + $0x58] sm:$0xf]
      %v685 = vld [vmem:[#allocation2 + $0x5c] sm:$0xf]
      %v686 = vld [vmem:[#allocation2 + $0x60] sm:$0xf]
      %v687 = vld [vmem:[#allocation2 + $0x64] sm:$0xf]
      %v688 = vld [vmem:[#allocation2 + $0x68] sm:$0xf]
      %v689 = vld [vmem:[#allocation2 + $0x6c] sm:$0xf]
      %v690 = vld [vmem:[#allocation2 + $0x70] sm:$0xf]
      %v691 = vld [vmem:[#allocation2 + $0x74] sm:$0xf]
      %v692 = vld [vmem:[#allocation2 + $0x78] sm:$0xf]
      %v693 = vld [vmem:[#allocation2 + $0x7c] sm:$0xf]
      %v694 = vld [vmem:[%s299] sm:$0xf]
      %v695 = vld [vmem:[%s299 + $0x4] sm:$0xf]
      %v696 = vld [vmem:[%s299 + $0x8] sm:$0xf]
      %v697 = vld [vmem:[%s299 + $0xc] sm:$0xf]
      %v698 = vld [vmem:[%s299 + $0x10] sm:$0xf]
      %v699 = vld [vmem:[%s299 + $0x14] sm:$0xf]
      %v700 = vld [vmem:[%s299 + $0x18] sm:$0xf]
      %v701 = vld [vmem:[%s299 + $0x1c] sm:$0xf]
      %v702 = vld [vmem:[%s299 + $0x20] sm:$0xf]
      %v703 = vld [vmem:[%s299 + $0x24] sm:$0xf]
      %v704 = vld [vmem:[%s299 + $0x28] sm:$0xf]
      %v705 = vld [vmem:[%s299 + $0x2c] sm:$0xf]
      %v706 = vld [vmem:[%s299 + $0x30] sm:$0xf]
      %v707 = vld [vmem:[%s299 + $0x34] sm:$0xf]
      %v708 = vld [vmem:[%s299 + $0x38] sm:$0xf]
      %v709 = vld [vmem:[%s299 + $0x3c] sm:$0xf]
      %v742 = vunpack.c.l.b16 %v662
      %v743 = vunpack.c.l.b16 %v663
      %v744 = vunpack.c.l.b16 %v664
      %v745 = vunpack.c.l.b16 %v665
      %v746 = vunpack.c.l.b16 %v666
      %v747 = vunpack.c.l.b16 %v667
      %v748 = vunpack.c.l.b16 %v668
      %v749 = vunpack.c.l.b16 %v669
      %v750 = vunpack.c.l.b16 %v670
      %v751 = vunpack.c.l.b16 %v671
      %v752 = vunpack.c.l.b16 %v672
      %v753 = vunpack.c.l.b16 %v673
      %v754 = vunpack.c.l.b16 %v674
      %v755 = vunpack.c.l.b16 %v675
      %v756 = vunpack.c.l.b16 %v676
      %v757 = vunpack.c.l.b16 %v677
      %v758 = vunpack.c.l.b16 %v678
      %v759 = vunpack.c.l.b16 %v679
      %v760 = vunpack.c.l.b16 %v680
      %v761 = vunpack.c.l.b16 %v681
      %v762 = vunpack.c.l.b16 %v682
      %v763 = vunpack.c.l.b16 %v683
      %v764 = vunpack.c.l.b16 %v684
      %v765 = vunpack.c.l.b16 %v685
      %v766 = vunpack.c.l.b16 %v686
      %v767 = vunpack.c.l.b16 %v687
      %v768 = vunpack.c.l.b16 %v688
      %v769 = vunpack.c.l.b16 %v689
      %v770 = vunpack.c.l.b16 %v690
      %v771 = vunpack.c.l.b16 %v691
      %v772 = vunpack.c.l.b16 %v692
      %v773 = vunpack.c.l.b16 %v693
      %v774 = vpack.c.b16 %v743, %v742
      %v775 = vpack.c.b16 %v745, %v744
      %v776 = vpack.c.b16 %v747, %v746
      %v777 = vpack.c.b16 %v749, %v748
      %v778 = vpack.c.b16 %v751, %v750
      %v779 = vpack.c.b16 %v753, %v752
      %v780 = vpack.c.b16 %v755, %v754
      %v781 = vpack.c.b16 %v757, %v756
      %v782 = vpack.c.b16 %v759, %v758
      %v783 = vpack.c.b16 %v761, %v760
      %v784 = vpack.c.b16 %v763, %v762
      %v785 = vpack.c.b16 %v765, %v764
      %v786 = vpack.c.b16 %v767, %v766
      %v787 = vpack.c.b16 %v769, %v768
      %v788 = vpack.c.b16 %v771, %v770
      %v789 = vpack.c.b16 %v773, %v772
      %v822 = vunpack.c.l.b16 %v694
      %v823 = vunpack.c.l.b16 %v695
      %v824 = vunpack.c.l.b16 %v696
      %v825 = vunpack.c.l.b16 %v697
      %v826 = vunpack.c.l.b16 %v698
      %v827 = vunpack.c.l.b16 %v699
      %v828 = vunpack.c.l.b16 %v700
      %v829 = vunpack.c.l.b16 %v701
      %v830 = vunpack.c.l.b16 %v702
      %v831 = vunpack.c.l.b16 %v703
      %v832 = vunpack.c.l.b16 %v704
      %v833 = vunpack.c.l.b16 %v705
      %v834 = vunpack.c.l.b16 %v706
      %v835 = vunpack.c.l.b16 %v707
      %v836 = vunpack.c.l.b16 %v708
      %v837 = vunpack.c.l.b16 %v709
      %v838 = vpack.c.b16 %v823, %v822
      %v839 = vpack.c.b16 %v825, %v824
      %v840 = vpack.c.b16 %v827, %v826
      %v841 = vpack.c.b16 %v829, %v828
      %v842 = vpack.c.b16 %v831, %v830
      %v843 = vpack.c.b16 %v833, %v832
      %v844 = vpack.c.b16 %v835, %v834
      %v845 = vpack.c.b16 %v837, %v836
      %854 = vmatprep.subr.bf16.mxu0 0
      %855 = vmatpush1.bf16.msra.mxu0 %v845
      %856 = vmatprep.subr.bf16.mxu0 0
      %857 = vmatpush1.bf16.msra.mxu0 %v844
      %858 = vmatprep.subr.bf16.mxu0 0
      %859 = vmatpush1.bf16.msra.mxu0 %v843
      %860 = vmatprep.subr.bf16.mxu0 0
      %861 = vmatpush1.bf16.msra.mxu0 %v842
      %862 = vmatprep.subr.bf16.mxu0 0
      %863 = vmatpush1.bf16.msra.mxu0 %v841
      %864 = vmatprep.subr.bf16.mxu0 0
      %865 = vmatpush1.bf16.msra.mxu0 %v840
      %866 = vmatprep.subr.bf16.mxu0 0
      %867 = vmatpush1.bf16.msra.mxu0 %v839
      %868 = vmatprep.subr.bf16.mxu0 0
      %869 = vmatpush1.bf16.msra.mxu0 %v838
      %870 = vmatprep.subr.bf16.mxu0 0
      %871 = vmatpush2.bf16.msra.mxu0 0
      %872 = vmatprep.subr.bf16.mxu0 0
      %873 = vmatpush2.bf16.msra.mxu0 0
      %874 = vmatprep.subr.bf16.mxu0 0
      %875 = vmatpush2.bf16.msra.mxu0 0
      %876 = vmatprep.subr.bf16.mxu0 0
      %877 = vmatpush2.bf16.msra.mxu0 0
      %878 = vmatprep.subr.bf16.mxu0 0
      %879 = vmatpush2.bf16.msra.mxu0 0
      %880 = vmatprep.subr.bf16.mxu0 0
      %881 = vmatpush2.bf16.msra.mxu0 0
      %882 = vmatprep.subr.bf16.mxu0 0
      %883 = vmatpush2.bf16.msra.mxu0 0
      %884 = vmatprep.subr.bf16.mxu0 0
      %885 = vmatpush2.bf16.msra.mxu0 0
      %886 = vmatprep.mubr.bf16.mxu0 0
      %887 = vmatmul.mubr.bf16.gmra.mxu0 %v774
      %v888 = vpop.f32.mrf.mxu0
      %v889 = vadd.f32 0.0, %v888
      %v890 = vpop.f32.mrf.mxu0
      %v891 = vpop.f32.mrf.mxu0
      %v892 = vadd.f32 0.0, %v891
      %v893 = vpop.f32.mrf.mxu0
      %894 = vmatprep.mubr.bf16.mxu0 0
      %895 = vmatmul.mubr.bf16.gmra.mxu0 %v775
      %v896 = vpop.f32.mrf.mxu0
      %v897 = vadd.f32 0.0, %v896
      %v898 = vpop.f32.mrf.mxu0
      %v899 = vpop.f32.mrf.mxu0
      %v900 = vadd.f32 0.0, %v899
      %v901 = vpop.f32.mrf.mxu0
      %902 = vmatprep.mubr.bf16.mxu0 0
      %903 = vmatmul.mubr.bf16.gmra.mxu0 %v776
      %v904 = vpop.f32.mrf.mxu0
      %v905 = vadd.f32 0.0, %v904
      %v906 = vpop.f32.mrf.mxu0
      %v907 = vpop.f32.mrf.mxu0
      %v908 = vadd.f32 0.0, %v907
      %v909 = vpop.f32.mrf.mxu0
      %910 = vmatprep.mubr.bf16.mxu0 0
      %911 = vmatmul.mubr.bf16.gmra.mxu0 %v777
      %v912 = vpop.f32.mrf.mxu0
      %v913 = vadd.f32 0.0, %v912
      %v914 = vpop.f32.mrf.mxu0
      %v915 = vpop.f32.mrf.mxu0
      %v916 = vadd.f32 0.0, %v915
      %v917 = vpop.f32.mrf.mxu0
      %918 = vmatprep.mubr.bf16.mxu0 0
      %919 = vmatmul.mubr.bf16.gmra.mxu0 %v778
      %v920 = vpop.f32.mrf.mxu0
      %v921 = vadd.f32 0.0, %v920
      %v922 = vpop.f32.mrf.mxu0
      %v923 = vpop.f32.mrf.mxu0
      %v924 = vadd.f32 0.0, %v923
      %v925 = vpop.f32.mrf.mxu0
      %926 = vmatprep.mubr.bf16.mxu0 0
      %927 = vmatmul.mubr.bf16.gmra.mxu0 %v779
      %v928 = vpop.f32.mrf.mxu0
      %v929 = vadd.f32 0.0, %v928
      %v930 = vpop.f32.mrf.mxu0
      %v931 = vpop.f32.mrf.mxu0
      %v932 = vadd.f32 0.0, %v931
      %v933 = vpop.f32.mrf.mxu0
      %934 = vmatprep.mubr.bf16.mxu0 0
      %935 = vmatmul.mubr.bf16.gmra.mxu0 %v780
      %v936 = vpop.f32.mrf.mxu0
      %v937 = vadd.f32 0.0, %v936
      %v938 = vpop.f32.mrf.mxu0
      %v939 = vpop.f32.mrf.mxu0
      %v940 = vadd.f32 0.0, %v939
      %v941 = vpop.f32.mrf.mxu0
      %942 = vmatprep.mubr.bf16.mxu0 0
      %943 = vmatmul.mubr.bf16.gmra.mxu0 %v781
      %v944 = vpop.f32.mrf.mxu0
      %v945 = vadd.f32 0.0, %v944
      %v946 = vpop.f32.mrf.mxu0
      %v947 = vpop.f32.mrf.mxu0
      %v948 = vadd.f32 0.0, %v947
      %v949 = vpop.f32.mrf.mxu0
      %950 = vmatprep.mubr.bf16.mxu0 0
      %951 = vmatmul.mubr.bf16.gmra.mxu0 %v782
      %v952 = vpop.f32.mrf.mxu0
      %v953 = vadd.f32 0.0, %v952
      %v954 = vpop.f32.mrf.mxu0
      %v955 = vpop.f32.mrf.mxu0
      %v956 = vadd.f32 0.0, %v955
      %v957 = vpop.f32.mrf.mxu0
      %958 = vmatprep.mubr.bf16.mxu0 0
      %959 = vmatmul.mubr.bf16.gmra.mxu0 %v783
      %v960 = vpop.f32.mrf.mxu0
      %v961 = vadd.f32 0.0, %v960
      %v962 = vpop.f32.mrf.mxu0
      %v963 = vpop.f32.mrf.mxu0
      %v964 = vadd.f32 0.0, %v963
      %v965 = vpop.f32.mrf.mxu0
      %966 = vmatprep.mubr.bf16.mxu0 0
      %967 = vmatmul.mubr.bf16.gmra.mxu0 %v784
      %v968 = vpop.f32.mrf.mxu0
      %v969 = vadd.f32 0.0, %v968
      %v970 = vpop.f32.mrf.mxu0
      %v971 = vpop.f32.mrf.mxu0
      %v972 = vadd.f32 0.0, %v971
      %v973 = vpop.f32.mrf.mxu0
      %974 = vmatprep.mubr.bf16.mxu0 0
      %975 = vmatmul.mubr.bf16.gmra.mxu0 %v785
      %v976 = vpop.f32.mrf.mxu0
      %v977 = vadd.f32 0.0, %v976
      %v978 = vpop.f32.mrf.mxu0
      %v979 = vpop.f32.mrf.mxu0
      %v980 = vadd.f32 0.0, %v979
      %v981 = vpop.f32.mrf.mxu0
      %982 = vmatprep.mubr.bf16.mxu0 0
      %983 = vmatmul.mubr.bf16.gmra.mxu0 %v786
      %v984 = vpop.f32.mrf.mxu0
      %v985 = vadd.f32 0.0, %v984
      %v986 = vpop.f32.mrf.mxu0
      %v987 = vpop.f32.mrf.mxu0
      %v988 = vadd.f32 0.0, %v987
      %v989 = vpop.f32.mrf.mxu0
      %990 = vmatprep.mubr.bf16.mxu0 0
      %991 = vmatmul.mubr.bf16.gmra.mxu0 %v787
      %v992 = vpop.f32.mrf.mxu0
      %v993 = vadd.f32 0.0, %v992
      %v994 = vpop.f32.mrf.mxu0
      %v995 = vpop.f32.mrf.mxu0
      %v996 = vadd.f32 0.0, %v995
      %v997 = vpop.f32.mrf.mxu0
      %998 = vmatprep.mubr.bf16.mxu0 0
      %999 = vmatmul.mubr.bf16.gmra.mxu0 %v788
      %v1000 = vpop.f32.mrf.mxu0
      %v1001 = vadd.f32 0.0, %v1000
      %v1002 = vpop.f32.mrf.mxu0
      %v1003 = vpop.f32.mrf.mxu0
      %v1004 = vadd.f32 0.0, %v1003
      %v1005 = vpop.f32.mrf.mxu0
      %1006 = vmatprep.mubr.bf16.mxu0 0
      %1007 = vmatmul.mubr.bf16.gmra.mxu0 %v789
      %v1008 = vpop.f32.mrf.mxu0
      %v1009 = vadd.f32 0.0, %v1008
      %v1010 = vpop.f32.mrf.mxu0
      %v1011 = vpop.f32.mrf.mxu0
      %v1012 = vadd.f32 0.0, %v1011
      %v1013 = vpop.f32.mrf.mxu0
      %1014 = vdwg.mxu0
      %v1015 = vpack.c.bf16 %v892, %v889
      %v1016 = vpack.c.bf16 %v900, %v897
      %v1017 = vpack.c.bf16 %v908, %v905
      %v1018 = vpack.c.bf16 %v916, %v913
      %v1019 = vpack.c.bf16 %v924, %v921
      %v1020 = vpack.c.bf16 %v932, %v929
      %v1021 = vpack.c.bf16 %v940, %v937
      %v1022 = vpack.c.bf16 %v948, %v945
      %v1023 = vpack.c.bf16 %v956, %v953
      %v1024 = vpack.c.bf16 %v964, %v961
      %v1025 = vpack.c.bf16 %v972, %v969
      %v1026 = vpack.c.bf16 %v980, %v977
      %v1027 = vpack.c.bf16 %v988, %v985
      %v1028 = vpack.c.bf16 %v996, %v993
      %v1029 = vpack.c.bf16 %v1004, %v1001
      %v1030 = vpack.c.bf16 %v1012, %v1009
      %v1047 = vunpack.c.l.b16 %v1015
      %v1048 = vunpack.c.h.b16 %v1015
      %v1049 = vunpack.c.l.b16 %v1016
      %v1050 = vunpack.c.h.b16 %v1016
      %v1051 = vunpack.c.l.b16 %v1017
      %v1052 = vunpack.c.h.b16 %v1017
      %v1053 = vunpack.c.l.b16 %v1018
      %v1054 = vunpack.c.h.b16 %v1018
      %v1055 = vunpack.c.l.b16 %v1019
      %v1056 = vunpack.c.h.b16 %v1019
      %v1057 = vunpack.c.l.b16 %v1020
      %v1058 = vunpack.c.h.b16 %v1020
      %v1059 = vunpack.c.l.b16 %v1021
      %v1060 = vunpack.c.h.b16 %v1021
      %v1061 = vunpack.c.l.b16 %v1022
      %v1062 = vunpack.c.h.b16 %v1022
      %v1063 = vunpack.c.l.b16 %v1023
      %v1064 = vunpack.c.h.b16 %v1023
      %v1065 = vunpack.c.l.b16 %v1024
      %v1066 = vunpack.c.h.b16 %v1024
      %v1067 = vunpack.c.l.b16 %v1025
      %v1068 = vunpack.c.h.b16 %v1025
      %v1069 = vunpack.c.l.b16 %v1026
      %v1070 = vunpack.c.h.b16 %v1026
      %v1071 = vunpack.c.l.b16 %v1027
      %v1072 = vunpack.c.h.b16 %v1027
      %v1073 = vunpack.c.l.b16 %v1028
      %v1074 = vunpack.c.h.b16 %v1028
      %v1075 = vunpack.c.l.b16 %v1029
      %v1076 = vunpack.c.h.b16 %v1029
      %v1077 = vunpack.c.l.b16 %v1030
      %v1078 = vunpack.c.h.b16 %v1030
      %v1079 = vpack.c.b16 %v1047, %v1047
      %v1080 = vpack.c.b16 %v1048, %v1048
      %v1081 = vpack.c.b16 %v1049, %v1049
      %v1082 = vpack.c.b16 %v1050, %v1050
      %v1083 = vpack.c.b16 %v1051, %v1051
      %v1084 = vpack.c.b16 %v1052, %v1052
      %v1085 = vpack.c.b16 %v1053, %v1053
      %v1086 = vpack.c.b16 %v1054, %v1054
      %v1087 = vpack.c.b16 %v1055, %v1055
      %v1088 = vpack.c.b16 %v1056, %v1056
      %v1089 = vpack.c.b16 %v1057, %v1057
      %v1090 = vpack.c.b16 %v1058, %v1058
      %v1091 = vpack.c.b16 %v1059, %v1059
      %v1092 = vpack.c.b16 %v1060, %v1060
      %v1093 = vpack.c.b16 %v1061, %v1061
      %v1094 = vpack.c.b16 %v1062, %v1062
      %v1095 = vpack.c.b16 %v1063, %v1063
      %v1096 = vpack.c.b16 %v1064, %v1064
      %v1097 = vpack.c.b16 %v1065, %v1065
      %v1098 = vpack.c.b16 %v1066, %v1066
      %v1099 = vpack.c.b16 %v1067, %v1067
      %v1100 = vpack.c.b16 %v1068, %v1068
      %v1101 = vpack.c.b16 %v1069, %v1069
      %v1102 = vpack.c.b16 %v1070, %v1070
      %v1103 = vpack.c.b16 %v1071, %v1071
      %v1104 = vpack.c.b16 %v1072, %v1072
      %v1105 = vpack.c.b16 %v1073, %v1073
      %v1106 = vpack.c.b16 %v1074, %v1074
      %v1107 = vpack.c.b16 %v1075, %v1075
      %v1108 = vpack.c.b16 %v1076, %v1076
      %v1109 = vpack.c.b16 %v1077, %v1077
      %v1110 = vpack.c.b16 %v1078, %v1078
      %1143 = vst [vmem:[%s311] sm:$0xf] %v1079
      %1144 = vst [vmem:[%s311 + $0x4] sm:$0xf] %v1080
      %1145 = vst [vmem:[%s311 + $0x8] sm:$0xf] %v1081
      %1146 = vst [vmem:[%s311 + $0xc] sm:$0xf] %v1082
      %1147 = vst [vmem:[%s311 + $0x10] sm:$0xf] %v1083
      %1148 = vst [vmem:[%s311 + $0x14] sm:$0xf] %v1084
      %1149 = vst [vmem:[%s311 + $0x18] sm:$0xf] %v1085
      %1150 = vst [vmem:[%s311 + $0x1c] sm:$0xf] %v1086
      %1151 = vst [vmem:[%s311 + $0x20] sm:$0xf] %v1087
      %1152 = vst [vmem:[%s311 + $0x24] sm:$0xf] %v1088
      %1153 = vst [vmem:[%s311 + $0x28] sm:$0xf] %v1089
      %1154 = vst [vmem:[%s311 + $0x2c] sm:$0xf] %v1090
      %1155 = vst [vmem:[%s311 + $0x30] sm:$0xf] %v1091
      %1156 = vst [vmem:[%s311 + $0x34] sm:$0xf] %v1092
      %1157 = vst [vmem:[%s311 + $0x38] sm:$0xf] %v1093
      %1158 = vst [vmem:[%s311 + $0x3c] sm:$0xf] %v1094
      %1159 = vst [vmem:[%s311 + $0x40] sm:$0xf] %v1095
      %1160 = vst [vmem:[%s311 + $0x44] sm:$0xf] %v1096
      %1161 = vst [vmem:[%s311 + $0x48] sm:$0xf] %v1097
      %1162 = vst [vmem:[%s311 + $0x4c] sm:$0xf] %v1098
      %1163 = vst [vmem:[%s311 + $0x50] sm:$0xf] %v1099
      %1164 = vst [vmem:[%s311 + $0x54] sm:$0xf] %v1100
      %1165 = vst [vmem:[%s311 + $0x58] sm:$0xf] %v1101
      %1166 = vst [vmem:[%s311 + $0x5c] sm:$0xf] %v1102
      %1167 = vst [vmem:[%s311 + $0x60] sm:$0xf] %v1103
      %1168 = vst [vmem:[%s311 + $0x64] sm:$0xf] %v1104
      %1169 = vst [vmem:[%s311 + $0x68] sm:$0xf] %v1105
      %1170 = vst [vmem:[%s311 + $0x6c] sm:$0xf] %v1106
      %1171 = vst [vmem:[%s311 + $0x70] sm:$0xf] %v1107
      %1172 = vst [vmem:[%s311 + $0x74] sm:$0xf] %v1108
      %1173 = vst [vmem:[%s311 + $0x78] sm:$0xf] %v1109
      %1174 = vst [vmem:[%s311 + $0x7c] sm:$0xf] %v1110
      %v1175 = vunpack.c.l.bf16 %v1015
      %v1176 = vunpack.c.h.bf16 %v1015
      %v1177 = vunpack.c.l.bf16 %v1016
      %v1178 = vunpack.c.h.bf16 %v1016
      %v1179 = vunpack.c.l.bf16 %v1017
      %v1180 = vunpack.c.h.bf16 %v1017
      %v1181 = vunpack.c.l.bf16 %v1018
      %v1182 = vunpack.c.h.bf16 %v1018
      %v1183 = vunpack.c.l.bf16 %v1019
      %v1184 = vunpack.c.h.bf16 %v1019
      %v1185 = vunpack.c.l.bf16 %v1020
      %v1186 = vunpack.c.h.bf16 %v1020
      %v1187 = vunpack.c.l.bf16 %v1021
      %v1188 = vunpack.c.h.bf16 %v1021
      %v1189 = vunpack.c.l.bf16 %v1022
      %v1190 = vunpack.c.h.bf16 %v1022
      %v1191 = vunpack.c.l.bf16 %v1023
      %v1192 = vunpack.c.h.bf16 %v1023
      %v1193 = vunpack.c.l.bf16 %v1024
      %v1194 = vunpack.c.h.bf16 %v1024
      %v1195 = vunpack.c.l.bf16 %v1025
      %v1196 = vunpack.c.h.bf16 %v1025
      %v1197 = vunpack.c.l.bf16 %v1026
      %v1198 = vunpack.c.h.bf16 %v1026
      %v1199 = vunpack.c.l.bf16 %v1027
      %v1200 = vunpack.c.h.bf16 %v1027
      %v1201 = vunpack.c.l.bf16 %v1028
      %v1202 = vunpack.c.h.bf16 %v1028
      %v1203 = vunpack.c.l.bf16 %v1029
      %v1204 = vunpack.c.h.bf16 %v1029
      %v1205 = vunpack.c.l.bf16 %v1030
      %v1206 = vunpack.c.h.bf16 %v1030
      %v1207 = vadd.f32 %v1175, %v1176
      %v1208 = vadd.f32 %v1207, %v1177
      %v1209 = vadd.f32 %v1208, %v1178
      %v1210 = vadd.f32 %v1209, %v1179
      %v1211 = vadd.f32 %v1210, %v1180
      %v1212 = vadd.f32 %v1211, %v1181
      %v1213 = vadd.f32 %v1212, %v1182
      %v1214 = vadd.f32 %v1213, %v1183
      %v1215 = vadd.f32 %v1214, %v1184
      %v1216 = vadd.f32 %v1215, %v1185
      %v1217 = vadd.f32 %v1216, %v1186
      %v1218 = vadd.f32 %v1217, %v1187
      %v1219 = vadd.f32 %v1218, %v1188
      %v1220 = vadd.f32 %v1219, %v1189
      %v1221 = vadd.f32 %v1220, %v1190
      %v1222 = vadd.f32 %v1221, %v1191
      %v1223 = vadd.f32 %v1222, %v1192
      %v1224 = vadd.f32 %v1223, %v1193
      %v1225 = vadd.f32 %v1224, %v1194
      %v1226 = vadd.f32 %v1225, %v1195
      %v1227 = vadd.f32 %v1226, %v1196
      %v1228 = vadd.f32 %v1227, %v1197
      %v1229 = vadd.f32 %v1228, %v1198
      %v1230 = vadd.f32 %v1229, %v1199
      %v1231 = vadd.f32 %v1230, %v1200
      %v1232 = vadd.f32 %v1231, %v1201
      %v1233 = vadd.f32 %v1232, %v1202
      %v1234 = vadd.f32 %v1233, %v1203
      %v1235 = vadd.f32 %v1234, %v1204
      %v1236 = vadd.f32 %v1235, %v1205
      %v1237 = vadd.f32 %v1236, %v1206
      %v1238 = vrot.slane %v1237, 4
      %v1239 = vadd.f32 %v1237, %v1238
      %v1240 = vrot.slane %v1239, 2
      %v1241 = vadd.f32 %v1239, %v1240
      %v1242 = vrot.slane %v1241, 1
      %v1243 = vadd.f32 %v1241, %v1242
      %v1244 = vmul.f32 %v1175, %v1175
      %v1245 = vmul.f32 %v1176, %v1176
      %v1246 = vmul.f32 %v1177, %v1177
      %v1247 = vmul.f32 %v1178, %v1178
      %v1248 = vmul.f32 %v1179, %v1179
      %v1249 = vmul.f32 %v1180, %v1180
      %v1250 = vmul.f32 %v1181, %v1181
      %v1251 = vmul.f32 %v1182, %v1182
      %v1252 = vmul.f32 %v1183, %v1183
      %v1253 = vmul.f32 %v1184, %v1184
      %v1254 = vmul.f32 %v1185, %v1185
      %v1255 = vmul.f32 %v1186, %v1186
      %v1256 = vmul.f32 %v1187, %v1187
      %v1257 = vmul.f32 %v1188, %v1188
      %v1258 = vmul.f32 %v1189, %v1189
      %v1259 = vmul.f32 %v1190, %v1190
      %v1260 = vmul.f32 %v1191, %v1191
      %v1261 = vmul.f32 %v1192, %v1192
      %v1262 = vmul.f32 %v1193, %v1193
      %v1263 = vmul.f32 %v1194, %v1194
      %v1264 = vmul.f32 %v1195, %v1195
      %v1265 = vmul.f32 %v1196, %v1196
      %v1266 = vmul.f32 %v1197, %v1197
      %v1267 = vmul.f32 %v1198, %v1198
      %v1268 = vmul.f32 %v1199, %v1199
      %v1269 = vmul.f32 %v1200, %v1200
      %v1270 = vmul.f32 %v1201, %v1201
      %v1271 = vmul.f32 %v1202, %v1202
      %v1272 = vmul.f32 %v1203, %v1203
      %v1273 = vmul.f32 %v1204, %v1204
      %v1274 = vmul.f32 %v1205, %v1205
      %v1275 = vmul.f32 %v1206, %v1206
      %v1276 = vadd.f32 %v1244, %v1245
      %v1277 = vadd.f32 %v1276, %v1246
      %v1278 = vadd.f32 %v1277, %v1247
      %v1279 = vadd.f32 %v1278, %v1248
      %v1280 = vadd.f32 %v1279, %v1249
      %v1281 = vadd.f32 %v1280, %v1250
      %v1282 = vadd.f32 %v1281, %v1251
      %v1283 = vadd.f32 %v1282, %v1252
      %v1284 = vadd.f32 %v1283, %v1253
      %v1285 = vadd.f32 %v1284, %v1254
      %v1286 = vadd.f32 %v1285, %v1255
      %v1287 = vadd.f32 %v1286, %v1256
      %v1288 = vadd.f32 %v1287, %v1257
      %v1289 = vadd.f32 %v1288, %v1258
      %v1290 = vadd.f32 %v1289, %v1259
      %v1291 = vadd.f32 %v1290, %v1260
      %v1292 = vadd.f32 %v1291, %v1261
      %v1293 = vadd.f32 %v1292, %v1262
      %v1294 = vadd.f32 %v1293, %v1263
      %v1295 = vadd.f32 %v1294, %v1264
      %v1296 = vadd.f32 %v1295, %v1265
      %v1297 = vadd.f32 %v1296, %v1266
      %v1298 = vadd.f32 %v1297, %v1267
      %v1299 = vadd.f32 %v1298, %v1268
      %v1300 = vadd.f32 %v1299, %v1269
      %v1301 = vadd.f32 %v1300, %v1270
      %v1302 = vadd.f32 %v1301, %v1271
      %v1303 = vadd.f32 %v1302, %v1272
      %v1304 = vadd.f32 %v1303, %v1273
      %v1305 = vadd.f32 %v1304, %v1274
      %v1306 = vadd.f32 %v1305, %v1275
      %v1307 = vrot.slane %v1306, 4
      %v1308 = vadd.f32 %v1306, %v1307
      %v1309 = vrot.slane %v1308, 2
      %v1310 = vadd.f32 %v1308, %v1309
      %v1311 = vrot.slane %v1310, 1
      %v1312 = vadd.f32 %v1310, %v1311
      %v1313 = vlaneseq
      %v1314 = vshrl.u32 %v1313, 7
      %vm1315 = vcmp.eq.s32.totalorder %v1314, 0
      %vm1316 = vcmp.eq.s32.totalorder %v1314, 1
      %v1317 = vsel %vm1316, %v1312, 0.0
      %v1318 = vsel %vm1315, %v1243, %v1317
      %1319 = vst [vmem:[%s322] sm:$0xff] %v1318
      %s1320 = smul.u32 32, %s23
      %p1321 = scmp.lt.s32.totalorder %s22, 1
      %s1322 = scalar_select %p1321, %s22, 1
      %p1323 = scmp.lt.s32.totalorder %s1320, 31
      %s1324 = scalar_select %p1323, %s1320, 31
      %p1325 = scmp.lt.s32.totalorder %s24, 0
      %s1326 = scalar_select %p1325, %s24, 0
      %s1327 = sadd.s32 %s1326, %s1324
      %s1328 = smul.addr %s1322, 32
      %s1329 = sadd.s32 %s1327, %s1328
      %s1330 = smul.addr %s1329, 4
      %s1331 = scalar_lea.vmem %s4, %s1330
      %p1332 = scmp.lt.s32.totalorder %s22, 1
      %s1333 = scalar_select %p1332, %s22, 1
      %p1334 = scmp.lt.s32.totalorder %s23, 0
      %s1335 = scalar_select %p1334, %s23, 0
      %p1336 = scmp.lt.s32.totalorder %s24, 0
      %s1337 = scalar_select %p1336, %s24, 0
      %s1338 = sadd.s32 %s1337, %s1335
      %s1339 = sadd.s32 %s1338, %s1333
      %s1340 = smul.addr %s1339, 8
      %s1341 = scalar_lea.vmem %s5, %s1340
      // Predicated region
      $region41: #{bottleneck_forward.7} parent=35 // pred_check
        %p1342 = pneg %p154
      $region42: #{bottleneck_forward.7} parent=35 // pred_check_branch
        %1344 = sbr.rel (%p1342) target = $region44
      $region43: #{bottleneck_forward.7} parent=35 // pred_region
        %s1345 = smul.u32 32, %s23
      $region44: #{bottleneck_forward.7} parent=35 // pred_fallthru
        _
      // Predicated region
      $region45: #{bottleneck_forward.7} parent=35 // pred_check
        %p1346 = pneg %p184
      $region46: #{bottleneck_forward.7} parent=35 // pred_check_branch
        %1348 = sbr.rel (%p1346) target = $region48
      $region47: #{bottleneck_forward.7} parent=35 // pred_region
        _
      $region48: #{bottleneck_forward.7} parent=35 // pred_fallthru
        _
    $region36: #{bottleneck_forward.7} parent=5 // pred_fallthru
      _
    %p1349 = scmp.le.s32.totalorder 2, %s12
    // Predicated region
    $region49: #{bottleneck_forward.7} parent=5 // pred_check
      %p1350 = pneg %p1349
    $region50: #{bottleneck_forward.7} parent=5 // pred_check_branch
      %1352 = sbr.rel (%p1350) target = $region52
    $region51: #{bottleneck_forward.7} parent=5 // pred_region
      %s1353 = ssub.s32 %s12, 2
      // Predicated region
      $region53: #{bottleneck_forward.7} parent=51 // pred_check
        %p1354 = pneg %p160
      $region54: #{bottleneck_forward.7} parent=51 // pred_check_branch
        %1356 = sbr.rel (%p1354) target = $region56
      $region55: #{bottleneck_forward.7} parent=51 // pred_region
        %s1357 = smul.u32 32, %s26
        %p1358 = scmp.lt.s32.totalorder %s25, 1
        %s1359 = scalar_select %p1358, %s25, 1
        %p1360 = scmp.lt.s32.totalorder %s1357, 31
        %s1361 = scalar_select %p1360, %s1357, 31
        %p1362 = scmp.lt.s32.totalorder %s27, 0
        %s1363 = scalar_select %p1362, %s27, 0
        %s1364 = sadd.s32 %s1363, %s1361
        %s1365 = smul.addr %s1359, 32
        %s1366 = sadd.s32 %s1364, %s1365
        %s1367 = smul.addr %s1366, 4
        %s1368 = scalar_lea.vmem %s4, %s1367
      $region56: #{bottleneck_forward.7} parent=51 // pred_fallthru
        _
      // Predicated region
      $region57: #{bottleneck_forward.7} parent=51 // pred_check
        %p1369 = pneg %p190
      $region58: #{bottleneck_forward.7} parent=51 // pred_check_branch
        %1371 = sbr.rel (%p1369) target = $region60
      $region59: #{bottleneck_forward.7} parent=51 // pred_region
        %p1372 = scmp.lt.s32.totalorder %s25, 1
        %s1373 = scalar_select %p1372, %s25, 1
        %p1374 = scmp.lt.s32.totalorder %s26, 0
        %s1375 = scalar_select %p1374, %s26, 0
        %p1376 = scmp.lt.s32.totalorder %s27, 0
        %s1377 = scalar_select %p1376, %s27, 0
        %s1378 = sadd.s32 %s1377, %s1375
        %s1379 = sadd.s32 %s1378, %s1373
        %s1380 = smul.addr %s1379, 8
        %s1381 = scalar_lea.vmem %s5, %s1380
      $region60: #{bottleneck_forward.7} parent=51 // pred_fallthru
        _
    $region52: #{bottleneck_forward.7} parent=5 // pred_fallthru
      _
  $region6: #{bottleneck_forward.7} parent=0 // loop_footer
    %s16 = sadd.s32 1, %s12
  $region7: #{bottleneck_forward.7} parent=0 // loop_footer_branch
    %11 = sbr.rel target = $region3
  $region8: #{bottleneck_forward.7} parent=0 // loop_exit
    _

// kernel: bottleneck_forward.6
$region0: #{bottleneck_forward.6}
  #allocation0 [shape = 'u32[]', space=smem, size = 0x4, offset = 0x4, fixed_abs, tag = 'smem constant byte address 0x4 - core index']
  #allocation1 [shape = 'u32[144,128]{1,0:T(1,128)}', space=vmem, size = 0x12000, scoped, tag = 'internal scratch']
  #allocation2 [shape = 'bf16[305,128]{1,0:T(8,128)(2,1)}', space=vmem, size = 0x13800, scoped, tag = 'scratch operand']
  #allocation3 [shape = 'f32[256,128]{1,0:T(8,128)}', space=vmem, size = 0x20000, scoped, tag = 'scratch operand']
  %s0 = inlined_call_operand.vmem [shape: bf16[2,256,128], index: 0, kind: input, shape index: {}]
  %s1 = inlined_call_operand.vmem [shape: f32[1,128], index: 1, kind: input, shape index: {}]
  %s2 = inlined_call_operand.vmem [shape: f32[1,128], index: 2, kind: input, shape index: {}]
  %s3 = inlined_call_operand.vmem [shape: bf16[9,128,128], index: 3, kind: input, shape index: {}]
  %s4 = inlined_call_operand.vmem [shape: bf16[2,256,128], index: 4, kind: output, shape index: {0}]
  %s5 = inlined_call_operand.vmem [shape: f32[2,8,128], index: 5, kind: output, shape index: {1}]
  %6 = xla_tuple %s4, %s5
  %s7 = sld [smem:[#allocation0]]
  $region61: #{bottleneck_forward.6} parent=0
    _
  %s9 = ssub.s32 1, %s7
  %s10 = scalar_select 0, %s9, %s7
  loop: start=0, step=1, limit=4
  $region2: #{bottleneck_forward.6} parent=0 // loop_pre_header
    _
  $region3: #{bottleneck_forward.6} parent=0 // loop_header
    %s12 = sphi 0, %s16
    %p13 = scmp.ge.s32.totalorder %s12, 4
    %s19 = sphi 0, %s31
    %s20 = sphi 0, %s27
    %s21 = sphi 0, %s19
    %s22 = sphi 0, %s20
    %s23 = sphi 0, %s21
    %s24 = sphi 0, %s22
    %s34 = sphi 0, %s36
    %s37 = sphi 0, %s34
    %s38 = sphi 0, %s37
    %s54 = sphi 0, %s38
    %s58 = sphi 0, %s58
    %s60 = sphi 0, %s58
    %s61 = sphi 0, %s60
    %s75 = sphi 0, %s61
    %s79 = sphi 0, %s79
    %s81 = sphi 0, %s79
    %s82 = sphi 0, %s81
    %s96 = sphi 0, %s82
    %s102 = sphi 0, %s104
    %s105 = sphi 0, %s102
    %s106 = sphi 0, %s105
    %s122 = sphi 0, %s106
    %s130 = sphi 0, %s132
    %s133 = sphi 0, %s130
    %s134 = sphi 0, %s133
    %s150 = sphi 0, %s134
    %s158 = sphi 0, %s160
    %s161 = sphi 0, %s158
    %s162 = sphi 0, %s161
    %s178 = sphi 0, %s162
  $region4: #{bottleneck_forward.6} parent=0 // loop_header_branch
    %15 = sbr.rel (%p13) target = $region8
  $region5: #{bottleneck_forward.6} parent=0 // loop_body
    %s17 = ssub.s32 %s12, 1
    %s18 = ssub.s32 %s12, 2
    %s25 = sadd.s32 1, %s20
    %p26 = scmp.ge.s32.totalorder %s25, 1
    %s27 = scalar_select %p26, 0, %s25
    %s28 = sadd.s32 1, %s19
    %s29 = scalar_select %p26, %s28, %s19
    %p30 = scmp.ge.s32.totalorder %s29, 2
    %s31 = scalar_select %p30, 0, %s29
    %s32 = ssub.s32 %s19, %s31
    %p33 = scmp.eq.s32.totalorder %s32, 0
    %s35 = sadd.s32 %s34, 1
    %s36 = scalar_select %p33, %s34, %s35
    %p39 = pneg %p33
    %p40 = scmp.eq.s32.totalorder %s12, 1
    %p41 = por %p39, %p40
    %p42 = scmp.ne.s32.totalorder %s34, %s37
    %p43 = scmp.eq.s32.totalorder %s12, 0
    %p44 = por %p42, %p43
    %p45 = scmp.ne.s32.totalorder %s34, %s37
    %p46 = scmp.eq.s32.totalorder %s17, 1
    %p47 = por %p45, %p46
    %p48 = scmp.ne.s32.totalorder %s37, %s38
    %p49 = scmp.eq.s32.totalorder %s17, 0
    %p50 = por %p48, %p49
    %p51 = scmp.ne.s32.totalorder %s37, %s38
    %p52 = scmp.eq.s32.totalorder %s18, 1
    %p53 = por %p51, %p52
    %p55 = scmp.ne.s32.totalorder %s38, %s54
    %p56 = scmp.eq.s32.totalorder %s18, 0
    %p57 = por %p55, %p56
    %s59 = sadd.s32 %s58, 1
    %p62 = scmp.eq.s32.totalorder %s12, 1
    %p63 = scmp.ne.s32.totalorder %s58, %s60
    %p64 = scmp.eq.s32.totalorder %s12, 0
    %p65 = por %p63, %p64
    %p66 = scmp.ne.s32.totalorder %s58, %s60
    %p67 = scmp.eq.s32.totalorder %s17, 1
    %p68 = por %p66, %p67
    %p69 = scmp.ne.s32.totalorder %s60, %s61
    %p70 = scmp.eq.s32.totalorder %s17, 0
    %p71 = por %p69, %p70
    %p72 = scmp.ne.s32.totalorder %s60, %s61
    %p73 = scmp.eq.s32.totalorder %s18, 1
    %p74 = por %p72, %p73
    %p76 = scmp.ne.s32.totalorder %s61, %s75
    %p77 = scmp.eq.s32.totalorder %s18, 0
    %p78 = por %p76, %p77
    %s80 = sadd.s32 %s79, 1
    %p83 = scmp.eq.s32.totalorder %s12, 1
    %p84 = scmp.ne.s32.totalorder %s79, %s81
    %p85 = scmp.eq.s32.totalorder %s12, 0
    %p86 = por %p84, %p85
    %p87 = scmp.ne.s32.totalorder %s79, %s81
    %p88 = scmp.eq.s32.totalorder %s17, 1
    %p89 = por %p87, %p88
    %p90 = scmp.ne.s32.totalorder %s81, %s82
    %p91 = scmp.eq.s32.totalorder %s17, 0
    %p92 = por %p90, %p91
    %p93 = scmp.ne.s32.totalorder %s81, %s82
    %p94 = scmp.eq.s32.totalorder %s18, 1
    %p95 = por %p93, %p94
    %p97 = scmp.ne.s32.totalorder %s82, %s96
    %p98 = scmp.eq.s32.totalorder %s18, 0
    %p99 = por %p97, %p98
    %s100 = ssub.s32 %s20, %s27
    %p101 = scmp.eq.s32.totalorder %s100, 0
    %s103 = sadd.s32 %s102, 1
    %s104 = scalar_select %p101, %s102, %s103
    %p107 = pneg %p101
    %p108 = scmp.eq.s32.totalorder %s12, 1
    %p109 = por %p107, %p108
    %p110 = scmp.ne.s32.totalorder %s102, %s105
    %p111 = scmp.eq.s32.totalorder %s12, 0
    %p112 = por %p110, %p111
    %p113 = scmp.ne.s32.totalorder %s102, %s105
    %p114 = scmp.eq.s32.totalorder %s17, 1
    %p115 = por %p113, %p114
    %p116 = scmp.ne.s32.totalorder %s105, %s106
    %p117 = scmp.eq.s32.totalorder %s17, 0
    %p118 = por %p116, %p117
    %p119 = scmp.ne.s32.totalorder %s105, %s106
    %p120 = scmp.eq.s32.totalorder %s18, 1
    %p121 = por %p119, %p120
    %p123 = scmp.ne.s32.totalorder %s106, %s122
    %p124 = scmp.eq.s32.totalorder %s18, 0
    %p125 = por %p123, %p124
    %s126 = ssub.s32 %s19, %s31
    %s127 = ssub.s32 %s20, %s27
    %s128 = sor.u32 %s126, %s127
    %p129 = scmp.eq.s32.totalorder %s128, 0
    %s131 = sadd.s32 %s130, 1
    %s132 = scalar_select %p129, %s130, %s131
    %p135 = pneg %p129
    %p136 = scmp.eq.s32.totalorder %s12, 1
    %p137 = por %p135, %p136
    %p138 = scmp.ne.s32.totalorder %s130, %s133
    %p139 = scmp.eq.s32.totalorder %s12, 0
    %p140 = por %p138, %p139
    %p141 = scmp.ne.s32.totalorder %s130, %s133
    %p142 = scmp.eq.s32.totalorder %s17, 1
    %p143 = por %p141, %p142
    %p144 = scmp.ne.s32.totalorder %s133, %s134
    %p145 = scmp.eq.s32.totalorder %s17, 0
    %p146 = por %p144, %p145
    %p147 = scmp.ne.s32.totalorder %s133, %s134
    %p148 = scmp.eq.s32.totalorder %s18, 1
    %p149 = por %p147, %p148
    %p151 = scmp.ne.s32.totalorder %s134, %s150
    %p152 = scmp.eq.s32.totalorder %s18, 0
    %p153 = por %p151, %p152
    %s154 = ssub.s32 %s19, %s31
    %s155 = ssub.s32 %s20, %s27
    %s156 = sor.u32 %s154, %s155
    %p157 = scmp.eq.s32.totalorder %s156, 0
    %s159 = sadd.s32 %s158, 1
    %s160 = scalar_select %p157, %s158, %s159
    %p163 = pneg %p157
    %p164 = scmp.eq.s32.totalorder %s12, 1
    %p165 = por %p163, %p164
    %p166 = scmp.ne.s32.totalorder %s158, %s161
    %p167 = scmp.eq.s32.totalorder %s12, 0
    %p168 = por %p166, %p167
    %p169 = scmp.ne.s32.totalorder %s158, %s161
    %p170 = scmp.eq.s32.totalorder %s17, 1
    %p171 = por %p169, %p170
    %p172 = scmp.ne.s32.totalorder %s161, %s162
    %p173 = scmp.eq.s32.totalorder %s17, 0
    %p174 = por %p172, %p173
    %p175 = scmp.ne.s32.totalorder %s161, %s162
    %p176 = scmp.eq.s32.totalorder %s18, 1
    %p177 = por %p175, %p176
    %p179 = scmp.ne.s32.totalorder %s162, %s178
    %p180 = scmp.eq.s32.totalorder %s18, 0
    %p181 = por %p179, %p180
    %p182 = scmp.le.s32.totalorder 1, %s12
    %p183 = scmp.lt.s32.totalorder %s12, 3
    %p184 = pnand %p182, %p183
    %p185 = pneg %p184
    // Predicated region
    $region9: #{bottleneck_forward.6} parent=5 // pred_check
      _
    $region10: #{bottleneck_forward.6} parent=5 // pred_check_branch
      %187 = sbr.rel (%p184) target = $region12
    $region11: #{bottleneck_forward.6} parent=5 // pred_region
      %s188 = ssub.s32 %s12, 1
      // Predicated region
      $region13: #{bottleneck_forward.6} parent=11 // pred_check
        %p189 = pneg %p71
      $region14: #{bottleneck_forward.6} parent=11 // pred_check_branch
        %191 = sbr.rel (%p189) target = $region16
      $region15: #{bottleneck_forward.6} parent=11 // pred_region
        _
      $region16: #{bottleneck_forward.6} parent=11 // pred_fallthru
        _
      // Predicated region
      $region17: #{bottleneck_forward.6} parent=11 // pred_check
        %p192 = pneg %p92
      $region18: #{bottleneck_forward.6} parent=11 // pred_check_branch
        %194 = sbr.rel (%p192) target = $region20
      $region19: #{bottleneck_forward.6} parent=11 // pred_region
        _
      $region20: #{bottleneck_forward.6} parent=11 // pred_fallthru
        _
      // Predicated region
      $region21: #{bottleneck_forward.6} parent=11 // pred_check
        %p195 = pneg %p118
      $region22: #{bottleneck_forward.6} parent=11 // pred_check_branch
        %197 = sbr.rel (%p195) target = $region24
      $region23: #{bottleneck_forward.6} parent=11 // pred_region
        %p198 = scmp.lt.s32.totalorder %s22, 0
        %s199 = scalar_select %p198, %s22, 0
        %s200 = smul.addr %s199, 4
        %s201 = scalar_lea.vmem %s3, %s200
      $region24: #{bottleneck_forward.6} parent=11 // pred_fallthru
        _
    $region12: #{bottleneck_forward.6} parent=5 // pred_fallthru
      _
    %p202 = scmp.lt.s32.totalorder %s12, 2
    // Predicated region
    $region25: #{bottleneck_forward.6} parent=5 // pred_check
      %p203 = pneg %p202
    $region26: #{bottleneck_forward.6} parent=5 // pred_check_branch
      %205 = sbr.rel (%p203) target = $region28
    $region27: #{bottleneck_forward.6} parent=5 // pred_region
      // Predicated region
      $region29: #{bottleneck_forward.6} parent=27 // pred_check
        %p206 = pneg %p44
      $region30: #{bottleneck_forward.6} parent=27 // pred_check_branch
        %208 = sbr.rel (%p206) target = $region32
      $region31: #{bottleneck_forward.6} parent=27 // pred_region
        %p209 = scmp.lt.s32.totalorder %s19, 1
        %s210 = scalar_select %p209, %s19, 1
        %s211 = smul.addr %s210, 32
        %s212 = smul.addr %s211, 4
        %s213 = scalar_lea.vmem %s0, %s212
      $region32: #{bottleneck_forward.6} parent=27 // pred_fallthru
        _
    $region28: #{bottleneck_forward.6} parent=5 // pred_fallthru
      _
    %p214 = scmp.le.s32.totalorder 1, %s12
    %p215 = scmp.lt.s32.totalorder %s12, 3
    %p216 = pnand %p214, %p215
    %p217 = pneg %p216
    // Predicated region
    $region33: #{bottleneck_forward.6} parent=5 // pred_check
      _
    $region34: #{bottleneck_forward.6} parent=5 // pred_check_branch
      %219 = sbr.rel (%p216) target = $region36
    $region35: #{bottleneck_forward.6} parent=5 // pred_region
      %s220 = ssub.s32 %s12, 1
      %p221 = scmp.lt.s32.totalorder %s21, 1
      %s222 = scalar_select %p221, %s21, 1
      %s223 = smul.addr %s222, 32
      %s224 = smul.addr %s223, 4
      %s225 = scalar_lea.vmem %s0, %s224
      %p226 = pneg %p50
      %p227 = pneg %p47
      %p228 = pneg %p71
      %p229 = pneg %p68
      %p230 = pneg %p92
      %p231 = pneg %p89
      %p232 = scmp.lt.s32.totalorder %s22, 0
      %s233 = scalar_select %p232, %s22, 0
      %s234 = smul.addr %s233, 4
      %s235 = scalar_lea.vmem %s3, %s234
      %p236 = pneg %p118
      %p237 = pneg %p115
      %p238 = pneg %p146
      %p239 = pneg %p143
      %p240 = scmp.lt.s32.totalorder %s21, 1
      %s241 = scalar_select %p240, %s21, 1
      %p242 = scmp.lt.s32.totalorder %s22, 0
      %s243 = scalar_select %p242, %s22, 0
      %s244 = smul.addr %s241, 32
      %s245 = sadd.s32 %s243, %s244
      %s246 = smul.addr %s245, 4
      %s247 = scalar_lea.vmem %s4, %s246
      %p248 = pneg %p174
      %p249 = pneg %p171
      %p250 = scmp.lt.s32.totalorder %s21, 1
      %s251 = scalar_select %p250, %s21, 1
      %p252 = scmp.lt.s32.totalorder %s22, 0
      %s253 = scalar_select %p252, %s22, 0
      %s254 = sadd.s32 %s253, %s251
      %s255 = smul.addr %s254, 8
      %s256 = scalar_lea.vmem %s5, %s255
      %p257 = scmp.lt.s32.totalorder %s21, 1
      %s258 = scalar_select %p257, %s21, 1
      %s259 = smul.addr %s258, 32
      %s260 = smul.addr %s259, 4
      %s261 = scalar_lea.vmem %s0, %s260
      %p262 = scmp.lt.s32.totalorder %s22, 0
      %s263 = scalar_select %p262, %s22, 0
      %s264 = smul.addr %s263, 4
      %s265 = scalar_lea.vmem %s3, %s264
      %p266 = scmp.lt.s32.totalorder %s21, 1
      %s267 = scalar_select %p266, %s21, 1
      %p268 = scmp.lt.s32.totalorder %s22, 0
      %s269 = scalar_select %p268, %s22, 0
      %s270 = smul.addr %s267, 32
      %s271 = sadd.s32 %s269, %s270
      %s272 = smul.addr %s271, 4
      %s273 = scalar_lea.vmem %s4, %s272
      %p274 = scmp.lt.s32.totalorder %s21, 1
      %s275 = scalar_select %p274, %s21, 1
      %p276 = scmp.lt.s32.totalorder %s22, 0
      %s277 = scalar_select %p276, %s22, 0
      %s278 = sadd.s32 %s277, %s275
      %s279 = smul.addr %s278, 8
      %s280 = scalar_lea.vmem %s5, %s279
      %p284 = scmp.eq.s32.totalorder %s22, 0
      // Predicated region
      $region37: #{bottleneck_forward.6} parent=35 // pred_check
        %p285 = pneg %p284
      $region38: #{bottleneck_forward.6} parent=35 // pred_check_branch
        %287 = sbr.rel (%p285) target = $region40
      $region39: #{bottleneck_forward.6} parent=35 // pred_region
        %v288 = vld [vmem:[%s261] sm:$0xf]
        %v289 = vld [vmem:[%s261 + $0x4] sm:$0xf]
        %v290 = vld [vmem:[%s261 + $0x8] sm:$0xf]
        %v291 = vld [vmem:[%s261 + $0xc] sm:$0xf]
        %v292 = vld [vmem:[%s261 + $0x10] sm:$0xf]
        %v293 = vld [vmem:[%s261 + $0x14] sm:$0xf]
        %v294 = vld [vmem:[%s261 + $0x18] sm:$0xf]
        %v295 = vld [vmem:[%s261 + $0x1c] sm:$0xf]
        %v296 = vld [vmem:[%s261 + $0x20] sm:$0xf]
        %v297 = vld [vmem:[%s261 + $0x24] sm:$0xf]
        %v298 = vld [vmem:[%s261 + $0x28] sm:$0xf]
        %v299 = vld [vmem:[%s261 + $0x2c] sm:$0xf]
        %v300 = vld [vmem:[%s261 + $0x30] sm:$0xf]
        %v301 = vld [vmem:[%s261 + $0x34] sm:$0xf]
        %v302 = vld [vmem:[%s261 + $0x38] sm:$0xf]
        %v303 = vld [vmem:[%s261 + $0x3c] sm:$0xf]
        %v304 = vld [vmem:[%s261 + $0x40] sm:$0xf]
        %v305 = vld [vmem:[%s261 + $0x44] sm:$0xf]
        %v306 = vld [vmem:[%s261 + $0x48] sm:$0xf]
        %v307 = vld [vmem:[%s261 + $0x4c] sm:$0xf]
        %v308 = vld [vmem:[%s261 + $0x50] sm:$0xf]
        %v309 = vld [vmem:[%s261 + $0x54] sm:$0xf]
        %v310 = vld [vmem:[%s261 + $0x58] sm:$0xf]
        %v311 = vld [vmem:[%s261 + $0x5c] sm:$0xf]
        %v312 = vld [vmem:[%s261 + $0x60] sm:$0xf]
        %v313 = vld [vmem:[%s261 + $0x64] sm:$0xf]
        %v314 = vld [vmem:[%s261 + $0x68] sm:$0xf]
        %v315 = vld [vmem:[%s261 + $0x6c] sm:$0xf]
        %v316 = vld [vmem:[%s261 + $0x70] sm:$0xf]
        %v317 = vld [vmem:[%s261 + $0x74] sm:$0xf]
        %v318 = vld [vmem:[%s261 + $0x78] sm:$0xf]
        %v319 = vld [vmem:[%s261 + $0x7c] sm:$0xf]
        %v320 = vunpack.c.l.bf16 %v288
        %v321 = vunpack.c.l.bf16 %v289
        %v322 = vunpack.c.l.bf16 %v290
        %v323 = vunpack.c.l.bf16 %v291
        %v324 = vunpack.c.l.bf16 %v292
        %v325 = vunpack.c.l.bf16 %v293
        %v326 = vunpack.c.l.bf16 %v294
        %v327 = vunpack.c.l.bf16 %v295
        %v328 = vunpack.c.l.bf16 %v296
        %v329 = vunpack.c.l.bf16 %v297
        %v330 = vunpack.c.l.bf16 %v298
        %v331 = vunpack.c.l.bf16 %v299
        %v332 = vunpack.c.l.bf16 %v300
        %v333 = vunpack.c.l.bf16 %v301
        %v334 = vunpack.c.l.bf16 %v302
        %v335 = vunpack.c.l.bf16 %v303
        %v336 = vunpack.c.l.bf16 %v304
        %v337 = vunpack.c.l.bf16 %v305
        %v338 = vunpack.c.l.bf16 %v306
        %v339 = vunpack.c.l.bf16 %v307
        %v340 = vunpack.c.l.bf16 %v308
        %v341 = vunpack.c.l.bf16 %v309
        %v342 = vunpack.c.l.bf16 %v310
        %v343 = vunpack.c.l.bf16 %v311
        %v344 = vunpack.c.l.bf16 %v312
        %v345 = vunpack.c.l.bf16 %v313
        %v346 = vunpack.c.l.bf16 %v314
        %v347 = vunpack.c.l.bf16 %v315
        %v348 = vunpack.c.l.bf16 %v316
        %v349 = vunpack.c.l.bf16 %v317
        %v350 = vunpack.c.l.bf16 %v318
        %v351 = vunpack.c.l.bf16 %v319
        %v352 = vld [vmem:[%s1] sm:$0x1]
        %v354 = vlaneseq
        %v355 = vshrl.u32 %v354, 7
        %v356 = vsub.s32 0, %v355
        %v357 = vrot.slane %v352, %v356
        %v359 = vmul.f32 %v320, %v357
        %v360 = vmul.f32 %v321, %v357
        %v361 = vmul.f32 %v322, %v357
        %v362 = vmul.f32 %v323, %v357
        %v363 = vmul.f32 %v324, %v357
        %v364 = vmul.f32 %v325, %v357
        %v365 = vmul.f32 %v326, %v357
        %v366 = vmul.f32 %v327, %v357
        %v367 = vmul.f32 %v328, %v357
        %v368 = vmul.f32 %v329, %v357
        %v369 = vmul.f32 %v330, %v357
        %v370 = vmul.f32 %v331, %v357
        %v371 = vmul.f32 %v332, %v357
        %v372 = vmul.f32 %v333, %v357
        %v373 = vmul.f32 %v334, %v357
        %v374 = vmul.f32 %v335, %v357
        %v375 = vmul.f32 %v336, %v357
        %v376 = vmul.f32 %v337, %v357
        %v377 = vmul.f32 %v338, %v357
        %v378 = vmul.f32 %v339, %v357
        %v379 = vmul.f32 %v340, %v357
        %v380 = vmul.f32 %v341, %v357
        %v381 = vmul.f32 %v342, %v357
        %v382 = vmul.f32 %v343, %v357
        %v383 = vmul.f32 %v344, %v357
        %v384 = vmul.f32 %v345, %v357
        %v385 = vmul.f32 %v346, %v357
        %v386 = vmul.f32 %v347, %v357
        %v387 = vmul.f32 %v348, %v357
        %v388 = vmul.f32 %v349, %v357
        %v389 = vmul.f32 %v350, %v357
        %v390 = vmul.f32 %v351, %v357
        %v391 = vld [vmem:[%s2] sm:$0x1]
        %v393 = vlaneseq
        %v394 = vshrl.u32 %v393, 7
        %v395 = vsub.s32 0, %v394
        %v396 = vrot.slane %v391, %v395
        %v398 = vadd.f32 %v359, %v396
        %v399 = vadd.f32 %v360, %v396
        %v400 = vadd.f32 %v361, %v396
        %v401 = vadd.f32 %v362, %v396
        %v402 = vadd.f32 %v363, %v396
        %v403 = vadd.f32 %v364, %v396
        %v404 = vadd.f32 %v365, %v396
        %v405 = vadd.f32 %v366, %v396
        %v406 = vadd.f32 %v367, %v396
        %v407 = vadd.f32 %v368, %v396
        %v408 = vadd.f32 %v369, %v396
        %v409 = vadd.f32 %v370, %v396
        %v410 = vadd.f32 %v371, %v396
        %v411 = vadd.f32 %v372, %v396
        %v412 = vadd.f32 %v373, %v396
        %v413 = vadd.f32 %v374, %v396
        %v414 = vadd.f32 %v375, %v396
        %v415 = vadd.f32 %v376, %v396
        %v416 = vadd.f32 %v377, %v396
        %v417 = vadd.f32 %v378, %v396
        %v418 = vadd.f32 %v379, %v396
        %v419 = vadd.f32 %v380, %v396
        %v420 = vadd.f32 %v381, %v396
        %v421 = vadd.f32 %v382, %v396
        %v422 = vadd.f32 %v383, %v396
        %v423 = vadd.f32 %v384, %v396
        %v424 = vadd.f32 %v385, %v396
        %v425 = vadd.f32 %v386, %v396
        %v426 = vadd.f32 %v387, %v396
        %v427 = vadd.f32 %v388, %v396
        %v428 = vadd.f32 %v389, %v396
        %v429 = vadd.f32 %v390, %v396
        %v430 = vmax.f32 %v398, 0.0
        %v431 = vmax.f32 %v399, 0.0
        %v432 = vmax.f32 %v400, 0.0
        %v433 = vmax.f32 %v401, 0.0
        %v434 = vmax.f32 %v402, 0.0
        %v435 = vmax.f32 %v403, 0.0
        %v436 = vmax.f32 %v404, 0.0
        %v437 = vmax.f32 %v405, 0.0
        %v438 = vmax.f32 %v406, 0.0
        %v439 = vmax.f32 %v407, 0.0
        %v440 = vmax.f32 %v408, 0.0
        %v441 = vmax.f32 %v409, 0.0
        %v442 = vmax.f32 %v410, 0.0
        %v443 = vmax.f32 %v411, 0.0
        %v444 = vmax.f32 %v412, 0.0
        %v445 = vmax.f32 %v413, 0.0
        %v446 = vmax.f32 %v414, 0.0
        %v447 = vmax.f32 %v415, 0.0
        %v448 = vmax.f32 %v416, 0.0
        %v449 = vmax.f32 %v417, 0.0
        %v450 = vmax.f32 %v418, 0.0
        %v451 = vmax.f32 %v419, 0.0
        %v452 = vmax.f32 %v420, 0.0
        %v453 = vmax.f32 %v421, 0.0
        %v454 = vmax.f32 %v422, 0.0
        %v455 = vmax.f32 %v423, 0.0
        %v456 = vmax.f32 %v424, 0.0
        %v457 = vmax.f32 %v425, 0.0
        %v458 = vmax.f32 %v426, 0.0
        %v459 = vmax.f32 %v427, 0.0
        %v460 = vmax.f32 %v428, 0.0
        %v461 = vmax.f32 %v429, 0.0
        %v462 = vpack.c.bf16 %v431, %v430
        %v463 = vpack.c.bf16 %v433, %v432
        %v464 = vpack.c.bf16 %v435, %v434
        %v465 = vpack.c.bf16 %v437, %v436
        %v466 = vpack.c.bf16 %v439, %v438
        %v467 = vpack.c.bf16 %v441, %v440
        %v468 = vpack.c.bf16 %v443, %v442
        %v469 = vpack.c.bf16 %v445, %v444
        %v470 = vpack.c.bf16 %v447, %v446
        %v471 = vpack.c.bf16 %v449, %v448
        %v472 = vpack.c.bf16 %v451, %v450
        %v473 = vpack.c.bf16 %v453, %v452
        %v474 = vpack.c.bf16 %v455, %v454
        %v475 = vpack.c.bf16 %v457, %v456
        %v476 = vpack.c.bf16 %v459, %v458
        %v477 = vpack.c.bf16 %v461, %v460
        %478 = vst [vmem:[#allocation2] sm:$0xf] 0
        %479 = vst [vmem:[#allocation2 + $0x4] sm:$0xf] 0
        %480 = vst [vmem:[#allocation2 + $0x8] sm:$0xf] 0
        %481 = vst [vmem:[#allocation2 + $0xc] sm:$0xf] 0
        %v498 = vunpack.c.l.b16 %v462
        %v499 = vunpack.c.h.b16 %v462
        %v500 = vunpack.c.l.b16 %v463
        %v501 = vunpack.c.h.b16 %v463
        %v502 = vunpack.c.l.b16 %v464
        %v503 = vunpack.c.h.b16 %v464
        %v504 = vunpack.c.l.b16 %v465
        %v505 = vunpack.c.h.b16 %v465
        %v506 = vunpack.c.l.b16 %v466
        %v507 = vunpack.c.h.b16 %v466
        %v508 = vunpack.c.l.b16 %v467
        %v509 = vunpack.c.h.b16 %v467
        %v510 = vunpack.c.l.b16 %v468
        %v511 = vunpack.c.h.b16 %v468
        %v512 = vunpack.c.l.b16 %v469
        %v513 = vunpack.c.h.b16 %v469
        %v514 = vunpack.c.l.b16 %v470
        %v515 = vunpack.c.h.b16 %v470
        %v516 = vunpack.c.l.b16 %v471
        %v517 = vunpack.c.h.b16 %v471
        %v518 = vunpack.c.l.b16 %v472
        %v519 = vunpack.c.h.b16 %v472
        %v520 = vunpack.c.l.b16 %v473
        %v521 = vunpack.c.h.b16 %v473
        %v522 = vunpack.c.l.b16 %v474
        %v523 = vunpack.c.h.b16 %v474
        %v524 = vunpack.c.l.b16 %v475
        %v525 = vunpack.c.h.b16 %v475
        %v526 = vunpack.c.l.b16 %v476
        %v527 = vunpack.c.h.b16 %v476
        %v528 = vunpack.c.l.b16 %v477
        %v529 = vunpack.c.h.b16 %v477
        %v530 = vpack.c.b16 %v498, %v498
        %v531 = vpack.c.b16 %v499, %v499
        %v532 = vpack.c.b16 %v500, %v500
        %v533 = vpack.c.b16 %v501, %v501
        %v534 = vpack.c.b16 %v502, %v502
        %v535 = vpack.c.b16 %v503, %v503
        %v536 = vpack.c.b16 %v504, %v504
        %v537 = vpack.c.b16 %v505, %v505
        %v538 = vpack.c.b16 %v506, %v506
        %v539 = vpack.c.b16 %v507, %v507
        %v540 = vpack.c.b16 %v508, %v508
        %v541 = vpack.c.b16 %v509, %v509
        %v542 = vpack.c.b16 %v510, %v510
        %v543 = vpack.c.b16 %v511, %v511
        %v544 = vpack.c.b16 %v512, %v512
        %v545 = vpack.c.b16 %v513, %v513
        %v546 = vpack.c.b16 %v514, %v514
        %v547 = vpack.c.b16 %v515, %v515
        %v548 = vpack.c.b16 %v516, %v516
        %v549 = vpack.c.b16 %v517, %v517
        %v550 = vpack.c.b16 %v518, %v518
        %v551 = vpack.c.b16 %v519, %v519
        %v552 = vpack.c.b16 %v520, %v520
        %v553 = vpack.c.b16 %v521, %v521
        %v554 = vpack.c.b16 %v522, %v522
        %v555 = vpack.c.b16 %v523, %v523
        %v556 = vpack.c.b16 %v524, %v524
        %v557 = vpack.c.b16 %v525, %v525
        %v558 = vpack.c.b16 %v526, %v526
        %v559 = vpack.c.b16 %v527, %v527
        %v560 = vpack.c.b16 %v528, %v528
        %v561 = vpack.c.b16 %v529, %v529
        %594 = vst [vmem:[#allocation2 + $0x10] sm:$0xf] %v530
        %595 = vst [vmem:[#allocation2 + $0x14] sm:$0xf] %v531
        %596 = vst [vmem:[#allocation2 + $0x18] sm:$0xf] %v532
        %597 = vst [vmem:[#allocation2 + $0x1c] sm:$0xf] %v533
        %598 = vst [vmem:[#allocation2 + $0x20] sm:$0xf] %v534
        %599 = vst [vmem:[#allocation2 + $0x24] sm:$0xf] %v535
        %600 = vst [vmem:[#allocation2 + $0x28] sm:$0xf] %v536
        %601 = vst [vmem:[#allocation2 + $0x2c] sm:$0xf] %v537
        %602 = vst [vmem:[#allocation2 + $0x30] sm:$0xf] %v538
        %603 = vst [vmem:[#allocation2 + $0x34] sm:$0xf] %v539
        %604 = vst [vmem:[#allocation2 + $0x38] sm:$0xf] %v540
        %605 = vst [vmem:[#allocation2 + $0x3c] sm:$0xf] %v541
        %606 = vst [vmem:[#allocation2 + $0x40] sm:$0xf] %v542
        %607 = vst [vmem:[#allocation2 + $0x44] sm:$0xf] %v543
        %608 = vst [vmem:[#allocation2 + $0x48] sm:$0xf] %v544
        %609 = vst [vmem:[#allocation2 + $0x4c] sm:$0xf] %v545
        %610 = vst [vmem:[#allocation2 + $0x50] sm:$0xf] %v546
        %611 = vst [vmem:[#allocation2 + $0x54] sm:$0xf] %v547
        %612 = vst [vmem:[#allocation2 + $0x58] sm:$0xf] %v548
        %613 = vst [vmem:[#allocation2 + $0x5c] sm:$0xf] %v549
        %614 = vst [vmem:[#allocation2 + $0x60] sm:$0xf] %v550
        %615 = vst [vmem:[#allocation2 + $0x64] sm:$0xf] %v551
        %616 = vst [vmem:[#allocation2 + $0x68] sm:$0xf] %v552
        %617 = vst [vmem:[#allocation2 + $0x6c] sm:$0xf] %v553
        %618 = vst [vmem:[#allocation2 + $0x70] sm:$0xf] %v554
        %619 = vst [vmem:[#allocation2 + $0x74] sm:$0xf] %v555
        %620 = vst [vmem:[#allocation2 + $0x78] sm:$0xf] %v556
        %621 = vst [vmem:[#allocation2 + $0x7c] sm:$0xf] %v557
        %622 = vst [vmem:[#allocation2 + $0x80] sm:$0xf] %v558
        %623 = vst [vmem:[#allocation2 + $0x84] sm:$0xf] %v559
        %624 = vst [vmem:[#allocation2 + $0x88] sm:$0xf] %v560
        %625 = vst [vmem:[#allocation2 + $0x8c] sm:$0xf] %v561
        %626 = vst [vmem:[#allocation2 + $0x90] sm:$0xf] 0
        %627 = vst [vmem:[#allocation2 + $0x94] sm:$0xf] 0
        %vm628 = vcmask 1040384
        %vm629 = vsmask.f32 256
        %vm630 = vmand %vm628, %vm629
        %v631 = vld [vmem:[#allocation2 + $0x98] sm:$0x1]
        %v632 = vsel %vm630, 0, %v631
        %633 = vst [vmem:[#allocation2 + $0x98] sm:$0x1] %v632
      $region40: #{bottleneck_forward.6} parent=35 // pred_fallthru
        _
      %v634 = vlaneseq
      %v635 = vshrl.u32 %v634, 7
      %v636 = vadd.s32 %v635, 8
      %v637 = vadd.s32 %v635, 16
      %v638 = vadd.s32 %v635, 24
      %v639 = vadd.s32 %v635, 32
      %v640 = vadd.s32 %v635, 40
      %v641 = vadd.s32 %v635, 48
      %v642 = vadd.s32 %v635, 56
      %v643 = vadd.s32 %v635, 64
      %v644 = vadd.s32 %v635, 72
      %v645 = vadd.s32 %v635, 80
      %v646 = vadd.s32 %v635, 88
      %v647 = vadd.s32 %v635, 96
      %v648 = vadd.s32 %v635, 104
      %v649 = vadd.s32 %v635, 112
      %v650 = vadd.s32 %v635, 120
      %v651 = vadd.s32 %v635, 128
      %v652 = vadd.s32 %v635, 136
      %v653 = vadd.s32 %v635, 144
      %v654 = vadd.s32 %v635, 152
      %v655 = vadd.s32 %v635, 160
      %v656 = vadd.s32 %v635, 168
      %v657 = vadd.s32 %v635, 176
      %v658 = vadd.s32 %v635, 184
      %v659 = vadd.s32 %v635, 192
      %v660 = vadd.s32 %v635, 200
      %v661 = vadd.s32 %v635, 208
      %v662 = vadd.s32 %v635, 216
      %v663 = vadd.s32 %v635, 224
      %v664 = vadd.s32 %v635, 232
      %v665 = vadd.s32 %v635, 240
      %v666 = vadd.s32 %v635, 248
      %vm667 = vcmp.lt.s32.totalorder %v635, 0
      %v668 = vsub.s32 0, %v635
      %v669 = vsel %vm667, %v668, %v635
      %v670 = vshrl.u32 %v669, 4
      %v671 = vand.u32 %v669, 15
      %v672 = vsub.s32 0, %v671
      %v673 = vsel %vm667, %v672, %v671
      %vm674 = vcmp.lt.s32.totalorder %v636, 0
      %v675 = vsub.s32 0, %v636
      %v676 = vsel %vm674, %v675, %v636
      %v677 = vshrl.u32 %v676, 4
      %v678 = vand.u32 %v676, 15
      %v679 = vsub.s32 0, %v678
      %v680 = vsel %vm674, %v679, %v678
      %vm681 = vcmp.lt.s32.totalorder %v637, 0
      %v682 = vsub.s32 0, %v637
      %v683 = vsel %vm681, %v682, %v637
      %v684 = vshrl.u32 %v683, 4
      %v685 = vand.u32 %v683, 15
      %v686 = vsub.s32 0, %v685
      %v687 = vsel %vm681, %v686, %v685
      %vm688 = vcmp.lt.s32.totalorder %v638, 0
      %v689 = vsub.s32 0, %v638
      %v690 = vsel %vm688, %v689, %v638
      %v691 = vshrl.u32 %v690, 4
      %v692 = vand.u32 %v690, 15
      %v693 = vsub.s32 0, %v692
      %v694 = vsel %vm688, %v693, %v692
      %vm695 = vcmp.lt.s32.totalorder %v639, 0
      %v696 = vsub.s32 0, %v639
      %v697 = vsel %vm695, %v696, %v639
      %v698 = vshrl.u32 %v697, 4
      %v699 = vand.u32 %v697, 15
      %v700 = vsub.s32 0, %v699
      %v701 = vsel %vm695, %v700, %v699
      %vm702 = vcmp.lt.s32.totalorder %v640, 0
      %v703 = vsub.s32 0, %v640
      %v704 = vsel %vm702, %v703, %v640
      %v705 = vshrl.u32 %v704, 4
      %v706 = vand.u32 %v704, 15
      %v707 = vsub.s32 0, %v706
      %v708 = vsel %vm702, %v707, %v706
      %vm709 = vcmp.lt.s32.totalorder %v641, 0
      %v710 = vsub.s32 0, %v641
      %v711 = vsel %vm709, %v710, %v641
      %v712 = vshrl.u32 %v711, 4
      %v713 = vand.u32 %v711, 15
      %v714 = vsub.s32 0, %v713
      %v715 = vsel %vm709, %v714, %v713
      %vm716 = vcmp.lt.s32.totalorder %v642, 0
      %v717 = vsub.s32 0, %v642
      %v718 = vsel %vm716, %v717, %v642
      %v719 = vshrl.u32 %v718, 4
      %v720 = vand.u32 %v718, 15
      %v721 = vsub.s32 0, %v720
      %v722 = vsel %vm716, %v721, %v720
      %vm723 = vcmp.lt.s32.totalorder %v643, 0
      %v724 = vsub.s32 0, %v643
      %v725 = vsel %vm723, %v724, %v643
      %v726 = vshrl.u32 %v725, 4
      %v727 = vand.u32 %v725, 15
      %v728 = vsub.s32 0, %v727
      %v729 = vsel %vm723, %v728, %v727
      %vm730 = vcmp.lt.s32.totalorder %v644, 0
      %v731 = vsub.s32 0, %v644
      %v732 = vsel %vm730, %v731, %v644
      %v733 = vshrl.u32 %v732, 4
      %v734 = vand.u32 %v732, 15
      %v735 = vsub.s32 0, %v734
      %v736 = vsel %vm730, %v735, %v734
      %vm737 = vcmp.lt.s32.totalorder %v645, 0
      %v738 = vsub.s32 0, %v645
      %v739 = vsel %vm737, %v738, %v645
      %v740 = vshrl.u32 %v739, 4
      %v741 = vand.u32 %v739, 15
      %v742 = vsub.s32 0, %v741
      %v743 = vsel %vm737, %v742, %v741
      %vm744 = vcmp.lt.s32.totalorder %v646, 0
      %v745 = vsub.s32 0, %v646
      %v746 = vsel %vm744, %v745, %v646
      %v747 = vshrl.u32 %v746, 4
      %v748 = vand.u32 %v746, 15
      %v749 = vsub.s32 0, %v748
      %v750 = vsel %vm744, %v749, %v748
      %vm751 = vcmp.lt.s32.totalorder %v647, 0
      %v752 = vsub.s32 0, %v647
      %v753 = vsel %vm751, %v752, %v647
      %v754 = vshrl.u32 %v753, 4
      %v755 = vand.u32 %v753, 15
      %v756 = vsub.s32 0, %v755
      %v757 = vsel %vm751, %v756, %v755
      %vm758 = vcmp.lt.s32.totalorder %v648, 0
      %v759 = vsub.s32 0, %v648
      %v760 = vsel %vm758, %v759, %v648
      %v761 = vshrl.u32 %v760, 4
      %v762 = vand.u32 %v760, 15
      %v763 = vsub.s32 0, %v762
      %v764 = vsel %vm758, %v763, %v762
      %vm765 = vcmp.lt.s32.totalorder %v649, 0
      %v766 = vsub.s32 0, %v649
      %v767 = vsel %vm765, %v766, %v649
      %v768 = vshrl.u32 %v767, 4
      %v769 = vand.u32 %v767, 15
      %v770 = vsub.s32 0, %v769
      %v771 = vsel %vm765, %v770, %v769
      %vm772 = vcmp.lt.s32.totalorder %v650, 0
      %v773 = vsub.s32 0, %v650
      %v774 = vsel %vm772, %v773, %v650
      %v775 = vshrl.u32 %v774, 4
      %v776 = vand.u32 %v774, 15
      %v777 = vsub.s32 0, %v776
      %v778 = vsel %vm772, %v777, %v776
      %vm779 = vcmp.lt.s32.totalorder %v651, 0
      %v780 = vsub.s32 0, %v651
      %v781 = vsel %vm779, %v780, %v651
      %v782 = vshrl.u32 %v781, 4
      %v783 = vand.u32 %v781, 15
      %v784 = vsub.s32 0, %v783
      %v785 = vsel %vm779, %v784, %v783
      %vm786 = vcmp.lt.s32.totalorder %v652, 0
      %v787 = vsub.s32 0, %v652
      %v788 = vsel %vm786, %v787, %v652
      %v789 = vshrl.u32 %v788, 4
      %v790 = vand.u32 %v788, 15
      %v791 = vsub.s32 0, %v790
      %v792 = vsel %vm786, %v791, %v790
      %vm793 = vcmp.lt.s32.totalorder %v653, 0
      %v794 = vsub.s32 0, %v653
      %v795 = vsel %vm793, %v794, %v653
      %v796 = vshrl.u32 %v795, 4
      %v797 = vand.u32 %v795, 15
      %v798 = vsub.s32 0, %v797
      %v799 = vsel %vm793, %v798, %v797
      %vm800 = vcmp.lt.s32.totalorder %v654, 0
      %v801 = vsub.s32 0, %v654
      %v802 = vsel %vm800, %v801, %v654
      %v803 = vshrl.u32 %v802, 4
      %v804 = vand.u32 %v802, 15
      %v805 = vsub.s32 0, %v804
      %v806 = vsel %vm800, %v805, %v804
      %vm807 = vcmp.lt.s32.totalorder %v655, 0
      %v808 = vsub.s32 0, %v655
      %v809 = vsel %vm807, %v808, %v655
      %v810 = vshrl.u32 %v809, 4
      %v811 = vand.u32 %v809, 15
      %v812 = vsub.s32 0, %v811
      %v813 = vsel %vm807, %v812, %v811
      %vm814 = vcmp.lt.s32.totalorder %v656, 0
      %v815 = vsub.s32 0, %v656
      %v816 = vsel %vm814, %v815, %v656
      %v817 = vshrl.u32 %v816, 4
      %v818 = vand.u32 %v816, 15
      %v819 = vsub.s32 0, %v818
      %v820 = vsel %vm814, %v819, %v818
      %vm821 = vcmp.lt.s32.totalorder %v657, 0
      %v822 = vsub.s32 0, %v657
      %v823 = vsel %vm821, %v822, %v657
      %v824 = vshrl.u32 %v823, 4
      %v825 = vand.u32 %v823, 15
      %v826 = vsub.s32 0, %v825
      %v827 = vsel %vm821, %v826, %v825
      %vm828 = vcmp.lt.s32.totalorder %v658, 0
      %v829 = vsub.s32 0, %v658
      %v830 = vsel %vm828, %v829, %v658
      %v831 = vshrl.u32 %v830, 4
      %v832 = vand.u32 %v830, 15
      %v833 = vsub.s32 0, %v832
      %v834 = vsel %vm828, %v833, %v832
      %vm835 = vcmp.lt.s32.totalorder %v659, 0
      %v836 = vsub.s32 0, %v659
      %v837 = vsel %vm835, %v836, %v659
      %v838 = vshrl.u32 %v837, 4
      %v839 = vand.u32 %v837, 15
      %v840 = vsub.s32 0, %v839
      %v841 = vsel %vm835, %v840, %v839
      %vm842 = vcmp.lt.s32.totalorder %v660, 0
      %v843 = vsub.s32 0, %v660
      %v844 = vsel %vm842, %v843, %v660
      %v845 = vshrl.u32 %v844, 4
      %v846 = vand.u32 %v844, 15
      %v847 = vsub.s32 0, %v846
      %v848 = vsel %vm842, %v847, %v846
      %vm849 = vcmp.lt.s32.totalorder %v661, 0
      %v850 = vsub.s32 0, %v661
      %v851 = vsel %vm849, %v850, %v661
      %v852 = vshrl.u32 %v851, 4
      %v853 = vand.u32 %v851, 15
      %v854 = vsub.s32 0, %v853
      %v855 = vsel %vm849, %v854, %v853
      %vm856 = vcmp.lt.s32.totalorder %v662, 0
      %v857 = vsub.s32 0, %v662
      %v858 = vsel %vm856, %v857, %v662
      %v859 = vshrl.u32 %v858, 4
      %v860 = vand.u32 %v858, 15
      %v861 = vsub.s32 0, %v860
      %v862 = vsel %vm856, %v861, %v860
      %vm863 = vcmp.lt.s32.totalorder %v663, 0
      %v864 = vsub.s32 0, %v663
      %v865 = vsel %vm863, %v864, %v663
      %v866 = vshrl.u32 %v865, 4
      %v867 = vand.u32 %v865, 15
      %v868 = vsub.s32 0, %v867
      %v869 = vsel %vm863, %v868, %v867
      %vm870 = vcmp.lt.s32.totalorder %v664, 0
      %v871 = vsub.s32 0, %v664
      %v872 = vsel %vm870, %v871, %v664
      %v873 = vshrl.u32 %v872, 4
      %v874 = vand.u32 %v872, 15
      %v875 = vsub.s32 0, %v874
      %v876 = vsel %vm870, %v875, %v874
      %vm877 = vcmp.lt.s32.totalorder %v665, 0
      %v878 = vsub.s32 0, %v665
      %v879 = vsel %vm877, %v878, %v665
      %v880 = vshrl.u32 %v879, 4
      %v881 = vand.u32 %v879, 15
      %v882 = vsub.s32 0, %v881
      %v883 = vsel %vm877, %v882, %v881
      %vm884 = vcmp.lt.s32.totalorder %v666, 0
      %v885 = vsub.s32 0, %v666
      %v886 = vsel %vm884, %v885, %v666
      %v887 = vshrl.u32 %v886, 4
      %v888 = vand.u32 %v886, 15
      %v889 = vsub.s32 0, %v888
      %v890 = vsel %vm884, %v889, %v888
      %vm891 = vcmp.ne.s32.totalorder %v673, 0
      %vm892 = vcmp.ne.s32.totalorder %v680, 0
      %vm893 = vcmp.ne.s32.totalorder %v687, 0
      %vm894 = vcmp.ne.s32.totalorder %v694, 0
      %vm895 = vcmp.ne.s32.totalorder %v701, 0
      %vm896 = vcmp.ne.s32.totalorder %v708, 0
      %vm897 = vcmp.ne.s32.totalorder %v715, 0
      %vm898 = vcmp.ne.s32.totalorder %v722, 0
      %vm899 = vcmp.ne.s32.totalorder %v729, 0
      %vm900 = vcmp.ne.s32.totalorder %v736, 0
      %vm901 = vcmp.ne.s32.totalorder %v743, 0
      %vm902 = vcmp.ne.s32.totalorder %v750, 0
      %vm903 = vcmp.ne.s32.totalorder %v757, 0
      %vm904 = vcmp.ne.s32.totalorder %v764, 0
      %vm905 = vcmp.ne.s32.totalorder %v771, 0
      %vm906 = vcmp.ne.s32.totalorder %v778, 0
      %vm907 = vcmp.ne.s32.totalorder %v785, 0
      %vm908 = vcmp.ne.s32.totalorder %v792, 0
      %vm909 = vcmp.ne.s32.totalorder %v799, 0
      %vm910 = vcmp.ne.s32.totalorder %v806, 0
      %vm911 = vcmp.ne.s32.totalorder %v813, 0
      %vm912 = vcmp.ne.s32.totalorder %v820, 0
      %vm913 = vcmp.ne.s32.totalorder %v827, 0
      %vm914 = vcmp.ne.s32.totalorder %v834, 0
      %vm915 = vcmp.ne.s32.totalorder %v841, 0
      %vm916 = vcmp.ne.s32.totalorder %v848, 0
      %vm917 = vcmp.ne.s32.totalorder %v855, 0
      %vm918 = vcmp.ne.s32.totalorder %v862, 0
      %vm919 = vcmp.ne.s32.totalorder %v869, 0
      %vm920 = vcmp.ne.s32.totalorder %v876, 0
      %vm921 = vcmp.ne.s32.totalorder %v883, 0
      %vm922 = vcmp.ne.s32.totalorder %v890, 0
      %vm923 = vcmp.lt.s32.totalorder %v673, 0
      %vm924 = vcmp.lt.s32.totalorder %v680, 0
      %vm925 = vcmp.lt.s32.totalorder %v687, 0
      %vm926 = vcmp.lt.s32.totalorder %v694, 0
      %vm927 = vcmp.lt.s32.totalorder %v701, 0
      %vm928 = vcmp.lt.s32.totalorder %v708, 0
      %vm929 = vcmp.lt.s32.totalorder %v715, 0
      %vm930 = vcmp.lt.s32.totalorder %v722, 0
      %vm931 = vcmp.lt.s32.totalorder %v729, 0
      %vm932 = vcmp.lt.s32.totalorder %v736, 0
      %vm933 = vcmp.lt.s32.totalorder %v743, 0
      %vm934 = vcmp.lt.s32.totalorder %v750, 0
      %vm935 = vcmp.lt.s32.totalorder %v757, 0
      %vm936 = vcmp.lt.s32.totalorder %v764, 0
      %vm937 = vcmp.lt.s32.totalorder %v771, 0
      %vm938 = vcmp.lt.s32.totalorder %v778, 0
      %vm939 = vcmp.lt.s32.totalorder %v785, 0
      %vm940 = vcmp.lt.s32.totalorder %v792, 0
      %vm941 = vcmp.lt.s32.totalorder %v799, 0
      %vm942 = vcmp.lt.s32.totalorder %v806, 0
      %vm943 = vcmp.lt.s32.totalorder %v813, 0
      %vm944 = vcmp.lt.s32.totalorder %v820, 0
      %vm945 = vcmp.lt.s32.totalorder %v827, 0
      %vm946 = vcmp.lt.s32.totalorder %v834, 0
      %vm947 = vcmp.lt.s32.totalorder %v841, 0
      %vm948 = vcmp.lt.s32.totalorder %v848, 0
      %vm949 = vcmp.lt.s32.totalorder %v855, 0
      %vm950 = vcmp.lt.s32.totalorder %v862, 0
      %vm951 = vcmp.lt.s32.totalorder %v869, 0
      %vm952 = vcmp.lt.s32.totalorder %v876, 0
      %vm953 = vcmp.lt.s32.totalorder %v883, 0
      %vm954 = vcmp.lt.s32.totalorder %v890, 0
      %vm955 = vmand %vm923, %vm891
      %vm956 = vmand %vm924, %vm892
      %vm957 = vmand %vm925, %vm893
      %vm958 = vmand %vm926, %vm894
      %vm959 = vmand %vm927, %vm895
      %vm960 = vmand %vm928, %vm896
      %vm961 = vmand %vm929, %vm897
      %vm962 = vmand %vm930, %vm898
      %vm963 = vmand %vm931, %vm899
      %vm964 = vmand %vm932, %vm900
      %vm965 = vmand %vm933, %vm901
      %vm966 = vmand %vm934, %vm902
      %vm967 = vmand %vm935, %vm903
      %vm968 = vmand %vm936, %vm904
      %vm969 = vmand %vm937, %vm905
      %vm970 = vmand %vm938, %vm906
      %vm971 = vmand %vm939, %vm907
      %vm972 = vmand %vm940, %vm908
      %vm973 = vmand %vm941, %vm909
      %vm974 = vmand %vm942, %vm910
      %vm975 = vmand %vm943, %vm911
      %vm976 = vmand %vm944, %vm912
      %vm977 = vmand %vm945, %vm913
      %vm978 = vmand %vm946, %vm914
      %vm979 = vmand %vm947, %vm915
      %vm980 = vmand %vm948, %vm916
      %vm981 = vmand %vm949, %vm917
      %vm982 = vmand %vm950, %vm918
      %vm983 = vmand %vm951, %vm919
      %vm984 = vmand %vm952, %vm920
      %vm985 = vmand %vm953, %vm921
      %vm986 = vmand %vm954, %vm922
      %v987 = vadd.s32 %v673, 16
      %v988 = vadd.s32 %v680, 16
      %v989 = vadd.s32 %v687, 16
      %v990 = vadd.s32 %v694, 16
      %v991 = vadd.s32 %v701, 16
      %v992 = vadd.s32 %v708, 16
      %v993 = vadd.s32 %v715, 16
      %v994 = vadd.s32 %v722, 16
      %v995 = vadd.s32 %v729, 16
      %v996 = vadd.s32 %v736, 16
      %v997 = vadd.s32 %v743, 16
      %v998 = vadd.s32 %v750, 16
      %v999 = vadd.s32 %v757, 16
      %v1000 = vadd.s32 %v764, 16
      %v1001 = vadd.s32 %v771, 16
      %v1002 = vadd.s32 %v778, 16
      %v1003 = vadd.s32 %v785, 16
      %v1004 = vadd.s32 %v792, 16
      %v1005 = vadd.s32 %v799, 16
      %v1006 = vadd.s32 %v806, 16
      %v1007 = vadd.s32 %v813, 16
      %v1008 = vadd.s32 %v820, 16
      %v1009 = vadd.s32 %v827, 16
      %v1010 = vadd.s32 %v834, 16
      %v1011 = vadd.s32 %v841, 16
      %v1012 = vadd.s32 %v848, 16
      %v1013 = vadd.s32 %v855, 16
      %v1014 = vadd.s32 %v862, 16
      %v1015 = vadd.s32 %v869, 16
      %v1016 = vadd.s32 %v876, 16
      %v1017 = vadd.s32 %v883, 16
      %v1018 = vadd.s32 %v890, 16
      %v1019 = vsel %vm955, %v987, %v673
      %v1020 = vsel %vm956, %v988, %v680
      %v1021 = vsel %vm957, %v989, %v687
      %v1022 = vsel %vm958, %v990, %v694
      %v1023 = vsel %vm959, %v991, %v701
      %v1024 = vsel %vm960, %v992, %v708
      %v1025 = vsel %vm961, %v993, %v715
      %v1026 = vsel %vm962, %v994, %v722
      %v1027 = vsel %vm963, %v995, %v729
      %v1028 = vsel %vm964, %v996, %v736
      %v1029 = vsel %vm965, %v997, %v743
      %v1030 = vsel %vm966, %v998, %v750
      %v1031 = vsel %vm967, %v999, %v757
      %v1032 = vsel %vm968, %v1000, %v764
      %v1033 = vsel %vm969, %v1001, %v771
      %v1034 = vsel %vm970, %v1002, %v778
      %v1035 = vsel %vm971, %v1003, %v785
      %v1036 = vsel %vm972, %v1004, %v792
      %v1037 = vsel %vm973, %v1005, %v799
      %v1038 = vsel %vm974, %v1006, %v806
      %v1039 = vsel %vm975, %v1007, %v813
      %v1040 = vsel %vm976, %v1008, %v820
      %v1041 = vsel %vm977, %v1009, %v827
      %v1042 = vsel %vm978, %v1010, %v834
      %v1043 = vsel %vm979, %v1011, %v841
      %v1044 = vsel %vm980, %v1012, %v848
      %v1045 = vsel %vm981, %v1013, %v855
      %v1046 = vsel %vm982, %v1014, %v862
      %v1047 = vsel %vm983, %v1015, %v869
      %v1048 = vsel %vm984, %v1016, %v876
      %v1049 = vsel %vm985, %v1017, %v883
      %v1050 = vsel %vm986, %v1018, %v890
      %vm1051 = vcmp.ge.s32.totalorder %v1019, 1
      %vm1052 = vcmp.ge.s32.totalorder %v1020, 1
      %vm1053 = vcmp.ge.s32.totalorder %v1021, 1
      %vm1054 = vcmp.ge.s32.totalorder %v1022, 1
      %vm1055 = vcmp.ge.s32.totalorder %v1023, 1
      %vm1056 = vcmp.ge.s32.totalorder %v1024, 1
      %vm1057 = vcmp.ge.s32.totalorder %v1025, 1
      %vm1058 = vcmp.ge.s32.totalorder %v1026, 1
      %vm1059 = vcmp.ge.s32.totalorder %v1027, 1
      %vm1060 = vcmp.ge.s32.totalorder %v1028, 1
      %vm1061 = vcmp.ge.s32.totalorder %v1029, 1
      %vm1062 = vcmp.ge.s32.totalorder %v1030, 1
      %vm1063 = vcmp.ge.s32.totalorder %v1031, 1
      %vm1064 = vcmp.ge.s32.totalorder %v1032, 1
      %vm1065 = vcmp.ge.s32.totalorder %v1033, 1
      %vm1066 = vcmp.ge.s32.totalorder %v1034, 1
      %vm1067 = vcmp.ge.s32.totalorder %v1035, 1
      %vm1068 = vcmp.ge.s32.totalorder %v1036, 1
      %vm1069 = vcmp.ge.s32.totalorder %v1037, 1
      %vm1070 = vcmp.ge.s32.totalorder %v1038, 1
      %vm1071 = vcmp.ge.s32.totalorder %v1039, 1
      %vm1072 = vcmp.ge.s32.totalorder %v1040, 1
      %vm1073 = vcmp.ge.s32.totalorder %v1041, 1
      %vm1074 = vcmp.ge.s32.totalorder %v1042, 1
      %vm1075 = vcmp.ge.s32.totalorder %v1043, 1
      %vm1076 = vcmp.ge.s32.totalorder %v1044, 1
      %vm1077 = vcmp.ge.s32.totalorder %v1045, 1
      %vm1078 = vcmp.ge.s32.totalorder %v1046, 1
      %vm1079 = vcmp.ge.s32.totalorder %v1047, 1
      %vm1080 = vcmp.ge.s32.totalorder %v1048, 1
      %vm1081 = vcmp.ge.s32.totalorder %v1049, 1
      %vm1082 = vcmp.ge.s32.totalorder %v1050, 1
      %vm1083 = vcmp.le.s32.totalorder %v1019, 14
      %vm1084 = vcmp.le.s32.totalorder %v1020, 14
      %vm1085 = vcmp.le.s32.totalorder %v1021, 14
      %vm1086 = vcmp.le.s32.totalorder %v1022, 14
      %vm1087 = vcmp.le.s32.totalorder %v1023, 14
      %vm1088 = vcmp.le.s32.totalorder %v1024, 14
      %vm1089 = vcmp.le.s32.totalorder %v1025, 14
      %vm1090 = vcmp.le.s32.totalorder %v1026, 14
      %vm1091 = vcmp.le.s32.totalorder %v1027, 14
      %vm1092 = vcmp.le.s32.totalorder %v1028, 14
      %vm1093 = vcmp.le.s32.totalorder %v1029, 14
      %vm1094 = vcmp.le.s32.totalorder %v1030, 14
      %vm1095 = vcmp.le.s32.totalorder %v1031, 14
      %vm1096 = vcmp.le.s32.totalorder %v1032, 14
      %vm1097 = vcmp.le.s32.totalorder %v1033, 14
      %vm1098 = vcmp.le.s32.totalorder %v1034, 14
      %vm1099 = vcmp.le.s32.totalorder %v1035, 14
      %vm1100 = vcmp.le.s32.totalorder %v1036, 14
      %vm1101 = vcmp.le.s32.totalorder %v1037, 14
      %vm1102 = vcmp.le.s32.totalorder %v1038, 14
      %vm1103 = vcmp.le.s32.totalorder %v1039, 14
      %vm1104 = vcmp.le.s32.totalorder %v1040, 14
      %vm1105 = vcmp.le.s32.totalorder %v1041, 14
      %vm1106 = vcmp.le.s32.totalorder %v1042, 14
      %vm1107 = vcmp.le.s32.totalorder %v1043, 14
      %vm1108 = vcmp.le.s32.totalorder %v1044, 14
      %vm1109 = vcmp.le.s32.totalorder %v1045, 14
      %vm1110 = vcmp.le.s32.totalorder %v1046, 14
      %vm1111 = vcmp.le.s32.totalorder %v1047, 14
      %vm1112 = vcmp.le.s32.totalorder %v1048, 14
      %vm1113 = vcmp.le.s32.totalorder %v1049, 14
      %vm1114 = vcmp.le.s32.totalorder %v1050, 14
      %v1115 = vld [vmem:[#allocation2 + $0x4] sm:$0x8]
      %v1116 = vld [vmem:[#allocation2 + $0x8] sm:$0xf]
      %v1117 = vld [vmem:[#allocation2 + $0xc] sm:$0xf]
      %v1118 = vld [vmem:[#allocation2 + $0x10] sm:$0xf]
      %v1119 = vld [vmem:[#allocation2 + $0x14] sm:$0xf]
      %v1120 = vld [vmem:[#allocation2 + $0x18] sm:$0xf]
      %v1121 = vld [vmem:[#allocation2 + $0x1c] sm:$0xf]
      %v1122 = vld [vmem:[#allocation2 + $0x20] sm:$0xf]
      %v1123 = vld [vmem:[#allocation2 + $0x24] sm:$0xf]
      %v1124 = vld [vmem:[#allocation2 + $0x28] sm:$0xf]
      %v1125 = vld [vmem:[#allocation2 + $0x2c] sm:$0xf]
      %v1126 = vld [vmem:[#allocation2 + $0x30] sm:$0xf]
      %v1127 = vld [vmem:[#allocation2 + $0x34] sm:$0xf]
      %v1128 = vld [vmem:[#allocation2 + $0x38] sm:$0xf]
      %v1129 = vld [vmem:[#allocation2 + $0x3c] sm:$0xf]
      %v1130 = vld [vmem:[#allocation2 + $0x40] sm:$0xf]
      %v1131 = vld [vmem:[#allocation2 + $0x44] sm:$0xf]
      %v1132 = vld [vmem:[#allocation2 + $0x48] sm:$0xf]
      %v1133 = vld [vmem:[#allocation2 + $0x4c] sm:$0xf]
      %v1134 = vld [vmem:[#allocation2 + $0x50] sm:$0xf]
      %v1135 = vld [vmem:[#allocation2 + $0x54] sm:$0xf]
      %v1136 = vld [vmem:[#allocation2 + $0x58] sm:$0xf]
      %v1137 = vld [vmem:[#allocation2 + $0x5c] sm:$0xf]
      %v1138 = vld [vmem:[#allocation2 + $0x60] sm:$0xf]
      %v1139 = vld [vmem:[#allocation2 + $0x64] sm:$0xf]
      %v1140 = vld [vmem:[#allocation2 + $0x68] sm:$0xf]
      %v1141 = vld [vmem:[#allocation2 + $0x6c] sm:$0xf]
      %v1142 = vld [vmem:[#allocation2 + $0x70] sm:$0xf]
      %v1143 = vld [vmem:[#allocation2 + $0x74] sm:$0xf]
      %v1144 = vld [vmem:[#allocation2 + $0x78] sm:$0xf]
      %v1145 = vld [vmem:[#allocation2 + $0x7c] sm:$0xf]
      %v1146 = vld [vmem:[#allocation2 + $0x80] sm:$0xf]
      %v1147 = vld [vmem:[#allocation2 + $0x84] sm:$0xf]
      %v1148 = vsel %vm1051, 1, 0
      %v1149 = vsel %vm1052, 1, 0
      %v1150 = vsel %vm1053, 1, 0
      %v1151 = vsel %vm1054, 1, 0
      %v1152 = vsel %vm1055, 1, 0
      %v1153 = vsel %vm1056, 1, 0
      %v1154 = vsel %vm1057, 1, 0
      %v1155 = vsel %vm1058, 1, 0
      %v1156 = vsel %vm1059, 1, 0
      %v1157 = vsel %vm1060, 1, 0
      %v1158 = vsel %vm1061, 1, 0
      %v1159 = vsel %vm1062, 1, 0
      %v1160 = vsel %vm1063, 1, 0
      %v1161 = vsel %vm1064, 1, 0
      %v1162 = vsel %vm1065, 1, 0
      %v1163 = vsel %vm1066, 1, 0
      %v1164 = vsel %vm1067, 1, 0
      %v1165 = vsel %vm1068, 1, 0
      %v1166 = vsel %vm1069, 1, 0
      %v1167 = vsel %vm1070, 1, 0
      %v1168 = vsel %vm1071, 1, 0
      %v1169 = vsel %vm1072, 1, 0
      %v1170 = vsel %vm1073, 1, 0
      %v1171 = vsel %vm1074, 1, 0
      %v1172 = vsel %vm1075, 1, 0
      %v1173 = vsel %vm1076, 1, 0
      %v1174 = vsel %vm1077, 1, 0
      %v1175 = vsel %vm1078, 1, 0
      %v1176 = vsel %vm1079, 1, 0
      %v1177 = vsel %vm1080, 1, 0
      %v1178 = vsel %vm1081, 1, 0
      %v1179 = vsel %vm1082, 1, 0
      %vm1180 = vcmp.eq.s32.totalorder %v1148, 1
      %vm1181 = vcmp.eq.s32.totalorder %v1149, 1
      %vm1182 = vcmp.eq.s32.totalorder %v1150, 1
      %vm1183 = vcmp.eq.s32.totalorder %v1151, 1
      %vm1184 = vcmp.eq.s32.totalorder %v1152, 1
      %vm1185 = vcmp.eq.s32.totalorder %v1153, 1
      %vm1186 = vcmp.eq.s32.totalorder %v1154, 1
      %vm1187 = vcmp.eq.s32.totalorder %v1155, 1
      %vm1188 = vcmp.eq.s32.totalorder %v1156, 1
      %vm1189 = vcmp.eq.s32.totalorder %v1157, 1
      %vm1190 = vcmp.eq.s32.totalorder %v1158, 1
      %vm1191 = vcmp.eq.s32.totalorder %v1159, 1
      %vm1192 = vcmp.eq.s32.totalorder %v1160, 1
      %vm1193 = vcmp.eq.s32.totalorder %v1161, 1
      %vm1194 = vcmp.eq.s32.totalorder %v1162, 1
      %vm1195 = vcmp.eq.s32.totalorder %v1163, 1
      %vm1196 = vcmp.eq.s32.totalorder %v1164, 1
      %vm1197 = vcmp.eq.s32.totalorder %v1165, 1
      %vm1198 = vcmp.eq.s32.totalorder %v1166, 1
      %vm1199 = vcmp.eq.s32.totalorder %v1167, 1
      %vm1200 = vcmp.eq.s32.totalorder %v1168, 1
      %vm1201 = vcmp.eq.s32.totalorder %v1169, 1
      %vm1202 = vcmp.eq.s32.totalorder %v1170, 1
      %vm1203 = vcmp.eq.s32.totalorder %v1171, 1
      %vm1204 = vcmp.eq.s32.totalorder %v1172, 1
      %vm1205 = vcmp.eq.s32.totalorder %v1173, 1
      %vm1206 = vcmp.eq.s32.totalorder %v1174, 1
      %vm1207 = vcmp.eq.s32.totalorder %v1175, 1
      %vm1208 = vcmp.eq.s32.totalorder %v1176, 1
      %vm1209 = vcmp.eq.s32.totalorder %v1177, 1
      %vm1210 = vcmp.eq.s32.totalorder %v1178, 1
      %vm1211 = vcmp.eq.s32.totalorder %v1179, 1
      %vm1212 = vmpackc.low %vm1180, %vm1180
      %vm1213 = vmpackc.low %vm1181, %vm1181
      %vm1214 = vmpackc.low %vm1182, %vm1182
      %vm1215 = vmpackc.low %vm1183, %vm1183
      %vm1216 = vmpackc.low %vm1184, %vm1184
      %vm1217 = vmpackc.low %vm1185, %vm1185
      %vm1218 = vmpackc.low %vm1186, %vm1186
      %vm1219 = vmpackc.low %vm1187, %vm1187
      %vm1220 = vmpackc.low %vm1188, %vm1188
      %vm1221 = vmpackc.low %vm1189, %vm1189
      %vm1222 = vmpackc.low %vm1190, %vm1190
      %vm1223 = vmpackc.low %vm1191, %vm1191
      %vm1224 = vmpackc.low %vm1192, %vm1192
      %vm1225 = vmpackc.low %vm1193, %vm1193
      %vm1226 = vmpackc.low %vm1194, %vm1194
      %vm1227 = vmpackc.low %vm1195, %vm1195
      %vm1228 = vmpackc.low %vm1196, %vm1196
      %vm1229 = vmpackc.low %vm1197, %vm1197
      %vm1230 = vmpackc.low %vm1198, %vm1198
      %vm1231 = vmpackc.low %vm1199, %vm1199
      %vm1232 = vmpackc.low %vm1200, %vm1200
      %vm1233 = vmpackc.low %vm1201, %vm1201
      %vm1234 = vmpackc.low %vm1202, %vm1202
      %vm1235 = vmpackc.low %vm1203, %vm1203
      %vm1236 = vmpackc.low %vm1204, %vm1204
      %vm1237 = vmpackc.low %vm1205, %vm1205
      %vm1238 = vmpackc.low %vm1206, %vm1206
      %vm1239 = vmpackc.low %vm1207, %vm1207
      %vm1240 = vmpackc.low %vm1208, %vm1208
      %vm1241 = vmpackc.low %vm1209, %vm1209
      %vm1242 = vmpackc.low %vm1210, %vm1210
      %vm1243 = vmpackc.low %vm1211, %vm1211
      %v1244 = vsel %vm1212, 65537, 0
      %v1245 = vsel %vm1213, 65537, 0
      %v1246 = vsel %vm1214, 65537, 0
      %v1247 = vsel %vm1215, 65537, 0
      %v1248 = vsel %vm1216, 65537, 0
      %v1249 = vsel %vm1217, 65537, 0
      %v1250 = vsel %vm1218, 65537, 0
      %v1251 = vsel %vm1219, 65537, 0
      %v1252 = vsel %vm1220, 65537, 0
      %v1253 = vsel %vm1221, 65537, 0
      %v1254 = vsel %vm1222, 65537, 0
      %v1255 = vsel %vm1223, 65537, 0
      %v1256 = vsel %vm1224, 65537, 0
      %v1257 = vsel %vm1225, 65537, 0
      %v1258 = vsel %vm1226, 65537, 0
      %v1259 = vsel %vm1227, 65537, 0
      %v1260 = vsel %vm1228, 65537, 0
      %v1261 = vsel %vm1229, 65537, 0
      %v1262 = vsel %vm1230, 65537, 0
      %v1263 = vsel %vm1231, 65537, 0
      %v1264 = vsel %vm1232, 65537, 0
      %v1265 = vsel %vm1233, 65537, 0
      %v1266 = vsel %vm1234, 65537, 0
      %v1267 = vsel %vm1235, 65537, 0
      %v1268 = vsel %vm1236, 65537, 0
      %v1269 = vsel %vm1237, 65537, 0
      %v1270 = vsel %vm1238, 65537, 0
      %v1271 = vsel %vm1239, 65537, 0
      %v1272 = vsel %vm1240, 65537, 0
      %v1273 = vsel %vm1241, 65537, 0
      %v1274 = vsel %vm1242, 65537, 0
      %v1275 = vsel %vm1243, 65537, 0
      %vm1276 = vsmask.f32 3328
      %vm1277 = vsmask.f32 7440
      %vm1278 = vmor %vm1276, %vm1277
      %v1280 = vshll.u32 %v1244, 16
      %v1282 = vrot.slane %v1280, 5
      %v1283 = vshrl.u32 %v1244, 16
      %v1285 = vrot.slane %v1283, 4
      %v1286 = vor.u32 %v1285, %v1282
      %v1287 = vrot.slane %v1286, 4
      %v1289 = vshll.u32 %v1245, 16
      %v1291 = vrot.slane %v1289, 5
      %v1292 = vsel %vm1278, %v1287, %v1291
      %v1293 = vshrl.u32 %v1245, 16
      %v1295 = vrot.slane %v1293, 4
      %v1296 = vor.u32 %v1295, %v1291
      %v1297 = vrot.slane %v1296, 4
      %v1299 = vshll.u32 %v1246, 16
      %v1301 = vrot.slane %v1299, 5
      %v1302 = vsel %vm1278, %v1297, %v1301
      %v1303 = vshrl.u32 %v1246, 16
      %v1305 = vrot.slane %v1303, 4
      %v1306 = vor.u32 %v1305, %v1301
      %v1307 = vrot.slane %v1306, 4
      %v1309 = vshll.u32 %v1247, 16
      %v1311 = vrot.slane %v1309, 5
      %v1312 = vsel %vm1278, %v1307, %v1311
      %v1313 = vshrl.u32 %v1247, 16
      %v1315 = vrot.slane %v1313, 4
      %v1316 = vor.u32 %v1315, %v1311
      %v1317 = vrot.slane %v1316, 4
      %v1319 = vshll.u32 %v1248, 16
      %v1321 = vrot.slane %v1319, 5
      %v1322 = vsel %vm1278, %v1317, %v1321
      %v1323 = vshrl.u32 %v1248, 16
      %v1325 = vrot.slane %v1323, 4
      %v1326 = vor.u32 %v1325, %v1321
      %v1327 = vrot.slane %v1326, 4
      %v1329 = vshll.u32 %v1249, 16
      %v1331 = vrot.slane %v1329, 5
      %v1332 = vsel %vm1278, %v1327, %v1331
      %v1333 = vshrl.u32 %v1249, 16
      %v1335 = vrot.slane %v1333, 4
      %v1336 = vor.u32 %v1335, %v1331
      %v1337 = vrot.slane %v1336, 4
      %v1339 = vshll.u32 %v1250, 16
      %v1341 = vrot.slane %v1339, 5
      %v1342 = vsel %vm1278, %v1337, %v1341
      %v1343 = vshrl.u32 %v1250, 16
      %v1345 = vrot.slane %v1343, 4
      %v1346 = vor.u32 %v1345, %v1341
      %v1347 = vrot.slane %v1346, 4
      %v1349 = vshll.u32 %v1251, 16
      %v1351 = vrot.slane %v1349, 5
      %v1352 = vsel %vm1278, %v1347, %v1351
      %v1353 = vshrl.u32 %v1251, 16
      %v1355 = vrot.slane %v1353, 4
      %v1356 = vor.u32 %v1355, %v1351
      %v1357 = vrot.slane %v1356, 4
      %v1359 = vshll.u32 %v1252, 16
      %v1361 = vrot.slane %v1359, 5
      %v1362 = vsel %vm1278, %v1357, %v1361
      %v1363 = vshrl.u32 %v1252, 16
      %v1365 = vrot.slane %v1363, 4
      %v1366 = vor.u32 %v1365, %v1361
      %v1367 = vrot.slane %v1366, 4
      %v1369 = vshll.u32 %v1253, 16
      %v1371 = vrot.slane %v1369, 5
      %v1372 = vsel %vm1278, %v1367, %v1371
      %v1373 = vshrl.u32 %v1253, 16
      %v1375 = vrot.slane %v1373, 4
      %v1376 = vor.u32 %v1375, %v1371
      %v1377 = vrot.slane %v1376, 4
      %v1379 = vshll.u32 %v1254, 16
      %v1381 = vrot.slane %v1379, 5
      %v1382 = vsel %vm1278, %v1377, %v1381
      %v1383 = vshrl.u32 %v1254, 16
      %v1385 = vrot.slane %v1383, 4
      %v1386 = vor.u32 %v1385, %v1381
      %v1387 = vrot.slane %v1386, 4
      %v1389 = vshll.u32 %v1255, 16
      %v1391 = vrot.slane %v1389, 5
      %v1392 = vsel %vm1278, %v1387, %v1391
      %v1393 = vshrl.u32 %v1255, 16
      %v1395 = vrot.slane %v1393, 4
      %v1396 = vor.u32 %v1395, %v1391
      %v1397 = vrot.slane %v1396, 4
      %v1399 = vshll.u32 %v1256, 16
      %v1401 = vrot.slane %v1399, 5
      %v1402 = vsel %vm1278, %v1397, %v1401
      %v1403 = vshrl.u32 %v1256, 16
      %v1405 = vrot.slane %v1403, 4
      %v1406 = vor.u32 %v1405, %v1401
      %v1407 = vrot.slane %v1406, 4
      %v1409 = vshll.u32 %v1257, 16
      %v1411 = vrot.slane %v1409, 5
      %v1412 = vsel %vm1278, %v1407, %v1411
      %v1413 = vshrl.u32 %v1257, 16
      %v1415 = vrot.slane %v1413, 4
      %v1416 = vor.u32 %v1415, %v1411
      %v1417 = vrot.slane %v1416, 4
      %v1419 = vshll.u32 %v1258, 16
      %v1421 = vrot.slane %v1419, 5
      %v1422 = vsel %vm1278, %v1417, %v1421
      %v1423 = vshrl.u32 %v1258, 16
      %v1425 = vrot.slane %v1423, 4
      %v1426 = vor.u32 %v1425, %v1421
      %v1427 = vrot.slane %v1426, 4
      %v1429 = vshll.u32 %v1259, 16
      %v1431 = vrot.slane %v1429, 5
      %v1432 = vsel %vm1278, %v1427, %v1431
      %v1433 = vshrl.u32 %v1259, 16
      %v1435 = vrot.slane %v1433, 4
      %v1436 = vor.u32 %v1435, %v1431
      %v1437 = vrot.slane %v1436, 4
      %v1439 = vshll.u32 %v1260, 16
      %v1441 = vrot.slane %v1439, 5
      %v1442 = vsel %vm1278, %v1437, %v1441
      %v1443 = vshrl.u32 %v1260, 16
      %v1445 = vrot.slane %v1443, 4
      %v1446 = vor.u32 %v1445, %v1441
      %v1447 = vrot.slane %v1446, 4
      %v1449 = vshll.u32 %v1261, 16
      %v1451 = vrot.slane %v1449, 5
      %v1452 = vsel %vm1278, %v1447, %v1451
      %v1453 = vshrl.u32 %v1261, 16
      %v1455 = vrot.slane %v1453, 4
      %v1456 = vor.u32 %v1455, %v1451
      %v1457 = vrot.slane %v1456, 4
      %v1459 = vshll.u32 %v1262, 16
      %v1461 = vrot.slane %v1459, 5
      %v1462 = vsel %vm1278, %v1457, %v1461
      %v1463 = vshrl.u32 %v1262, 16
      %v1465 = vrot.slane %v1463, 4
      %v1466 = vor.u32 %v1465, %v1461
      %v1467 = vrot.slane %v1466, 4
      %v1469 = vshll.u32 %v1263, 16
      %v1471 = vrot.slane %v1469, 5
      %v1472 = vsel %vm1278, %v1467, %v1471
      %v1473 = vshrl.u32 %v1263, 16
      %v1475 = vrot.slane %v1473, 4
      %v1476 = vor.u32 %v1475, %v1471
      %v1477 = vrot.slane %v1476, 4
      %v1479 = vshll.u32 %v1264, 16
      %v1481 = vrot.slane %v1479, 5
      %v1482 = vsel %vm1278, %v1477, %v1481
      %v1483 = vshrl.u32 %v1264, 16
      %v1485 = vrot.slane %v1483, 4
      %v1486 = vor.u32 %v1485, %v1481
      %v1487 = vrot.slane %v1486, 4
      %v1489 = vshll.u32 %v1265, 16
      %v1491 = vrot.slane %v1489, 5
      %v1492 = vsel %vm1278, %v1487, %v1491
      %v1493 = vshrl.u32 %v1265, 16
      %v1495 = vrot.slane %v1493, 4
      %v1496 = vor.u32 %v1495, %v1491
      %v1497 = vrot.slane %v1496, 4
      %v1499 = vshll.u32 %v1266, 16
      %v1501 = vrot.slane %v1499, 5
      %v1502 = vsel %vm1278, %v1497, %v1501
      %v1503 = vshrl.u32 %v1266, 16
      %v1505 = vrot.slane %v1503, 4
      %v1506 = vor.u32 %v1505, %v1501
      %v1507 = vrot.slane %v1506, 4
      %v1509 = vshll.u32 %v1267, 16
      %v1511 = vrot.slane %v1509, 5
      %v1512 = vsel %vm1278, %v1507, %v1511
      %v1513 = vshrl.u32 %v1267, 16
      %v1515 = vrot.slane %v1513, 4
      %v1516 = vor.u32 %v1515, %v1511
      %v1517 = vrot.slane %v1516, 4
      %v1519 = vshll.u32 %v1268, 16
      %v1521 = vrot.slane %v1519, 5
      %v1522 = vsel %vm1278, %v1517, %v1521
      %v1523 = vshrl.u32 %v1268, 16
      %v1525 = vrot.slane %v1523, 4
      %v1526 = vor.u32 %v1525, %v1521
      %v1527 = vrot.slane %v1526, 4
      %v1529 = vshll.u32 %v1269, 16
      %v1531 = vrot.slane %v1529, 5
      %v1532 = vsel %vm1278, %v1527, %v1531
      %v1533 = vshrl.u32 %v1269, 16
      %v1535 = vrot.slane %v1533, 4
      %v1536 = vor.u32 %v1535, %v1531
      %v1537 = vrot.slane %v1536, 4
      %v1539 = vshll.u32 %v1270, 16
      %v1541 = vrot.slane %v1539, 5
      %v1542 = vsel %vm1278, %v1537, %v1541
      %v1543 = vshrl.u32 %v1270, 16
      %v1545 = vrot.slane %v1543, 4
      %v1546 = vor.u32 %v1545, %v1541
      %v1547 = vrot.slane %v1546, 4
      %v1549 = vshll.u32 %v1271, 16
      %v1551 = vrot.slane %v1549, 5
      %v1552 = vsel %vm1278, %v1547, %v1551
      %v1553 = vshrl.u32 %v1271, 16
      %v1555 = vrot.slane %v1553, 4
      %v1556 = vor.u32 %v1555, %v1551
      %v1557 = vrot.slane %v1556, 4
      %v1559 = vshll.u32 %v1272, 16
      %v1561 = vrot.slane %v1559, 5
      %v1562 = vsel %vm1278, %v1557, %v1561
      %v1563 = vshrl.u32 %v1272, 16
      %v1565 = vrot.slane %v1563, 4
      %v1566 = vor.u32 %v1565, %v1561
      %v1567 = vrot.slane %v1566, 4
      %v1569 = vshll.u32 %v1273, 16
      %v1571 = vrot.slane %v1569, 5
      %v1572 = vsel %vm1278, %v1567, %v1571
      %v1573 = vshrl.u32 %v1273, 16
      %v1575 = vrot.slane %v1573, 4
      %v1576 = vor.u32 %v1575, %v1571
      %v1577 = vrot.slane %v1576, 4
      %v1579 = vshll.u32 %v1274, 16
      %v1581 = vrot.slane %v1579, 5
      %v1582 = vsel %vm1278, %v1577, %v1581
      %v1583 = vshrl.u32 %v1274, 16
      %v1585 = vrot.slane %v1583, 4
      %v1586 = vor.u32 %v1585, %v1581
      %v1587 = vrot.slane %v1586, 4
      %v1589 = vshll.u32 %v1275, 16
      %v1591 = vrot.slane %v1589, 5
      %v1592 = vsel %vm1278, %v1587, %v1591
      %v1593 = vshrl.u32 %v1275, 16
      %v1595 = vrot.slane %v1593, 4
      %v1596 = vor.u32 %v1595, %v1591
      %v1597 = vrot.slane %v1596, 4
      %vm1598 = vcmp.ne.s16.totalorder %v1282, 0
      %vm1599 = vcmp.ne.s16.totalorder %v1292, 0
      %vm1600 = vcmp.ne.s16.totalorder %v1302, 0
      %vm1601 = vcmp.ne.s16.totalorder %v1312, 0
      %vm1602 = vcmp.ne.s16.totalorder %v1322, 0
      %vm1603 = vcmp.ne.s16.totalorder %v1332, 0
      %vm1604 = vcmp.ne.s16.totalorder %v1342, 0
      %vm1605 = vcmp.ne.s16.totalorder %v1352, 0
      %vm1606 = vcmp.ne.s16.totalorder %v1362, 0
      %vm1607 = vcmp.ne.s16.totalorder %v1372, 0
      %vm1608 = vcmp.ne.s16.totalorder %v1382, 0
      %vm1609 = vcmp.ne.s16.totalorder %v1392, 0
      %vm1610 = vcmp.ne.s16.totalorder %v1402, 0
      %vm1611 = vcmp.ne.s16.totalorder %v1412, 0
      %vm1612 = vcmp.ne.s16.totalorder %v1422, 0
      %vm1613 = vcmp.ne.s16.totalorder %v1432, 0
      %vm1614 = vcmp.ne.s16.totalorder %v1442, 0
      %vm1615 = vcmp.ne.s16.totalorder %v1452, 0
      %vm1616 = vcmp.ne.s16.totalorder %v1462, 0
      %vm1617 = vcmp.ne.s16.totalorder %v1472, 0
      %vm1618 = vcmp.ne.s16.totalorder %v1482, 0
      %vm1619 = vcmp.ne.s16.totalorder %v1492, 0
      %vm1620 = vcmp.ne.s16.totalorder %v1502, 0
      %vm1621 = vcmp.ne.s16.totalorder %v1512, 0
      %vm1622 = vcmp.ne.s16.totalorder %v1522, 0
      %vm1623 = vcmp.ne.s16.totalorder %v1532, 0
      %vm1624 = vcmp.ne.s16.totalorder %v1542, 0
      %vm1625 = vcmp.ne.s16.totalorder %v1552, 0
      %vm1626 = vcmp.ne.s16.totalorder %v1562, 0
      %vm1627 = vcmp.ne.s16.totalorder %v1572, 0
      %vm1628 = vcmp.ne.s16.totalorder %v1582, 0
      %vm1629 = vcmp.ne.s16.totalorder %v1592, 0
      %vm1630 = vcmp.ne.s16.totalorder %v1597, 0
      %v1631 = vsel %vm1598, %v1115, 0
      %v1632 = vsel %vm1599, %v1116, 0
      %v1633 = vsel %vm1600, %v1117, 0
      %v1634 = vsel %vm1601, %v1118, 0
      %v1635 = vsel %vm1602, %v1119, 0
      %v1636 = vsel %vm1603, %v1120, 0
      %v1637 = vsel %vm1604, %v1121, 0
      %v1638 = vsel %vm1605, %v1122, 0
      %v1639 = vsel %vm1606, %v1123, 0
      %v1640 = vsel %vm1607, %v1124, 0
      %v1641 = vsel %vm1608, %v1125, 0
      %v1642 = vsel %vm1609, %v1126, 0
      %v1643 = vsel %vm1610, %v1127, 0
      %v1644 = vsel %vm1611, %v1128, 0
      %v1645 = vsel %vm1612, %v1129, 0
      %v1646 = vsel %vm1613, %v1130, 0
      %v1647 = vsel %vm1614, %v1131, 0
      %v1648 = vsel %vm1615, %v1132, 0
      %v1649 = vsel %vm1616, %v1133, 0
      %v1650 = vsel %vm1617, %v1134, 0
      %v1651 = vsel %vm1618, %v1135, 0
      %v1652 = vsel %vm1619, %v1136, 0
      %v1653 = vsel %vm1620, %v1137, 0
      %v1654 = vsel %vm1621, %v1138, 0
      %v1655 = vsel %vm1622, %v1139, 0
      %v1656 = vsel %vm1623, %v1140, 0
      %v1657 = vsel %vm1624, %v1141, 0
      %v1658 = vsel %vm1625, %v1142, 0
      %v1659 = vsel %vm1626, %v1143, 0
      %v1660 = vsel %vm1627, %v1144, 0
      %v1661 = vsel %vm1628, %v1145, 0
      %v1662 = vsel %vm1629, %v1146, 0
      %v1663 = vsel %vm1630, %v1147, 0
      %v1664 = vld [vmem:[%s265] sm:$0xf]
      %v1665 = vld [vmem:[%s265 + $0x4] sm:$0xf]
      %v1666 = vld [vmem:[%s265 + $0x8] sm:$0xf]
      %v1667 = vld [vmem:[%s265 + $0xc] sm:$0xf]
      %v1668 = vld [vmem:[%s265 + $0x10] sm:$0xf]
      %v1669 = vld [vmem:[%s265 + $0x14] sm:$0xf]
      %v1670 = vld [vmem:[%s265 + $0x18] sm:$0xf]
      %v1671 = vld [vmem:[%s265 + $0x1c] sm:$0xf]
      %v1672 = vld [vmem:[%s265 + $0x20] sm:$0xf]
      %v1673 = vld [vmem:[%s265 + $0x24] sm:$0xf]
      %v1674 = vld [vmem:[%s265 + $0x28] sm:$0xf]
      %v1675 = vld [vmem:[%s265 + $0x2c] sm:$0xf]
      %v1676 = vld [vmem:[%s265 + $0x30] sm:$0xf]
      %v1677 = vld [vmem:[%s265 + $0x34] sm:$0xf]
      %v1678 = vld [vmem:[%s265 + $0x38] sm:$0xf]
      %v1679 = vld [vmem:[%s265 + $0x3c] sm:$0xf]
      %v1713 = vunpack.c.l.b16 %v1631
      %v1714 = vunpack.c.l.b16 %v1632
      %v1715 = vunpack.c.l.b16 %v1633
      %v1716 = vunpack.c.l.b16 %v1634
      %v1717 = vunpack.c.l.b16 %v1635
      %v1718 = vunpack.c.l.b16 %v1636
      %v1719 = vunpack.c.l.b16 %v1637
      %v1720 = vunpack.c.l.b16 %v1638
      %v1721 = vunpack.c.l.b16 %v1639
      %v1722 = vunpack.c.l.b16 %v1640
      %v1723 = vunpack.c.l.b16 %v1641
      %v1724 = vunpack.c.l.b16 %v1642
      %v1725 = vunpack.c.l.b16 %v1643
      %v1726 = vunpack.c.l.b16 %v1644
      %v1727 = vunpack.c.l.b16 %v1645
      %v1728 = vunpack.c.l.b16 %v1646
      %v1729 = vunpack.c.l.b16 %v1647
      %v1730 = vunpack.c.l.b16 %v1648
      %v1731 = vunpack.c.l.b16 %v1649
      %v1732 = vunpack.c.l.b16 %v1650
      %v1733 = vunpack.c.l.b16 %v1651
      %v1734 = vunpack.c.l.b16 %v1652
      %v1735 = vunpack.c.l.b16 %v1653
      %v1736 = vunpack.c.l.b16 %v1654
      %v1737 = vunpack.c.l.b16 %v1655
      %v1738 = vunpack.c.l.b16 %v1656
      %v1739 = vunpack.c.l.b16 %v1657
      %v1740 = vunpack.c.l.b16 %v1658
      %v1741 = vunpack.c.l.b16 %v1659
      %v1742 = vunpack.c.l.b16 %v1660
      %v1743 = vunpack.c.l.b16 %v1661
      %v1744 = vunpack.c.l.b16 %v1662
      %v1745 = vunpack.c.l.b16 %v1663
      %v1746 = vpack.c.b16 %v1714, %v1713
      %v1747 = vpack.c.b16 %v1716, %v1715
      %v1748 = vpack.c.b16 %v1718, %v1717
      %v1749 = vpack.c.b16 %v1720, %v1719
      %v1750 = vpack.c.b16 %v1722, %v1721
      %v1751 = vpack.c.b16 %v1724, %v1723
      %v1752 = vpack.c.b16 %v1726, %v1725
      %v1753 = vpack.c.b16 %v1728, %v1727
      %v1754 = vpack.c.b16 %v1730, %v1729
      %v1755 = vpack.c.b16 %v1732, %v1731
      %v1756 = vpack.c.b16 %v1734, %v1733
      %v1757 = vpack.c.b16 %v1736, %v1735
      %v1758 = vpack.c.b16 %v1738, %v1737
      %v1759 = vpack.c.b16 %v1740, %v1739
      %v1760 = vpack.c.b16 %v1742, %v1741
      %v1761 = vpack.c.b16 %v1744, %v1743
      %v1762 = vpack.c.b16 %v1745, %v1745
      %vm1763 = vsmask.f32 4352
      %v1765 = vshrl.u32 %v1746, 16
      %v1767 = vrot.slane %v1765, 3
      %v1768 = vshll.u32 %v1746, 16
      %v1770 = vrot.slane %v1768, 4
      %v1771 = vor.u32 %v1767, %v1770
      %v1773 = vshrl.u32 %v1747, 16
      %v1775 = vrot.slane %v1773, 3
      %v1776 = vshll.u32 %v1747, 16
      %v1778 = vrot.slane %v1776, 4
      %v1779 = vor.u32 %v1775, %v1778
      %v1780 = vsel %vm1763, %v1771, %v1779
      %v1782 = vshrl.u32 %v1748, 16
      %v1784 = vrot.slane %v1782, 3
      %v1785 = vshll.u32 %v1748, 16
      %v1787 = vrot.slane %v1785, 4
      %v1788 = vor.u32 %v1784, %v1787
      %v1789 = vsel %vm1763, %v1779, %v1788
      %v1791 = vshrl.u32 %v1749, 16
      %v1793 = vrot.slane %v1791, 3
      %v1794 = vshll.u32 %v1749, 16
      %v1796 = vrot.slane %v1794, 4
      %v1797 = vor.u32 %v1793, %v1796
      %v1798 = vsel %vm1763, %v1788, %v1797
      %v1800 = vshrl.u32 %v1750, 16
      %v1802 = vrot.slane %v1800, 3
      %v1803 = vshll.u32 %v1750, 16
      %v1805 = vrot.slane %v1803, 4
      %v1806 = vor.u32 %v1802, %v1805
      %v1807 = vsel %vm1763, %v1797, %v1806
      %v1809 = vshrl.u32 %v1751, 16
      %v1811 = vrot.slane %v1809, 3
      %v1812 = vshll.u32 %v1751, 16
      %v1814 = vrot.slane %v1812, 4
      %v1815 = vor.u32 %v1811, %v1814
      %v1816 = vsel %vm1763, %v1806, %v1815
      %v1818 = vshrl.u32 %v1752, 16
      %v1820 = vrot.slane %v1818, 3
      %v1821 = vshll.u32 %v1752, 16
      %v1823 = vrot.slane %v1821, 4
      %v1824 = vor.u32 %v1820, %v1823
      %v1825 = vsel %vm1763, %v1815, %v1824
      %v1827 = vshrl.u32 %v1753, 16
      %v1829 = vrot.slane %v1827, 3
      %v1830 = vshll.u32 %v1753, 16
      %v1832 = vrot.slane %v1830, 4
      %v1833 = vor.u32 %v1829, %v1832
      %v1834 = vsel %vm1763, %v1824, %v1833
      %v1836 = vshrl.u32 %v1754, 16
      %v1838 = vrot.slane %v1836, 3
      %v1839 = vshll.u32 %v1754, 16
      %v1841 = vrot.slane %v1839, 4
      %v1842 = vor.u32 %v1838, %v1841
      %v1843 = vsel %vm1763, %v1833, %v1842
      %v1845 = vshrl.u32 %v1755, 16
      %v1847 = vrot.slane %v1845, 3
      %v1848 = vshll.u32 %v1755, 16
      %v1850 = vrot.slane %v1848, 4
      %v1851 = vor.u32 %v1847, %v1850
      %v1852 = vsel %vm1763, %v1842, %v1851
      %v1854 = vshrl.u32 %v1756, 16
      %v1856 = vrot.slane %v1854, 3
      %v1857 = vshll.u32 %v1756, 16
      %v1859 = vrot.slane %v1857, 4
      %v1860 = vor.u32 %v1856, %v1859
      %v1861 = vsel %vm1763, %v1851, %v1860
      %v1863 = vshrl.u32 %v1757, 16
      %v1865 = vrot.slane %v1863, 3
      %v1866 = vshll.u32 %v1757, 16
      %v1868 = vrot.slane %v1866, 4
      %v1869 = vor.u32 %v1865, %v1868
      %v1870 = vsel %vm1763, %v1860, %v1869
      %v1872 = vshrl.u32 %v1758, 16
      %v1874 = vrot.slane %v1872, 3
      %v1875 = vshll.u32 %v1758, 16
      %v1877 = vrot.slane %v1875, 4
      %v1878 = vor.u32 %v1874, %v1877
      %v1879 = vsel %vm1763, %v1869, %v1878
      %v1881 = vshrl.u32 %v1759, 16
      %v1883 = vrot.slane %v1881, 3
      %v1884 = vshll.u32 %v1759, 16
      %v1886 = vrot.slane %v1884, 4
      %v1887 = vor.u32 %v1883, %v1886
      %v1888 = vsel %vm1763, %v1878, %v1887
      %v1890 = vshrl.u32 %v1760, 16
      %v1892 = vrot.slane %v1890, 3
      %v1893 = vshll.u32 %v1760, 16
      %v1895 = vrot.slane %v1893, 4
      %v1896 = vor.u32 %v1892, %v1895
      %v1897 = vsel %vm1763, %v1887, %v1896
      %v1899 = vshrl.u32 %v1761, 16
      %v1901 = vrot.slane %v1899, 3
      %v1902 = vshll.u32 %v1761, 16
      %v1904 = vrot.slane %v1902, 4
      %v1905 = vor.u32 %v1901, %v1904
      %v1906 = vsel %vm1763, %v1896, %v1905
      %v1908 = vshrl.u32 %v1762, 16
      %v1910 = vrot.slane %v1908, 3
      %v1911 = vshll.u32 %v1762, 16
      %v1913 = vrot.slane %v1911, 4
      %v1914 = vor.u32 %v1910, %v1913
      %v1915 = vsel %vm1763, %v1905, %v1914
      %v1948 = vunpack.c.l.b16 %v1664
      %v1949 = vunpack.c.l.b16 %v1665
      %v1950 = vunpack.c.l.b16 %v1666
      %v1951 = vunpack.c.l.b16 %v1667
      %v1952 = vunpack.c.l.b16 %v1668
      %v1953 = vunpack.c.l.b16 %v1669
      %v1954 = vunpack.c.l.b16 %v1670
      %v1955 = vunpack.c.l.b16 %v1671
      %v1956 = vunpack.c.l.b16 %v1672
      %v1957 = vunpack.c.l.b16 %v1673
      %v1958 = vunpack.c.l.b16 %v1674
      %v1959 = vunpack.c.l.b16 %v1675
      %v1960 = vunpack.c.l.b16 %v1676
      %v1961 = vunpack.c.l.b16 %v1677
      %v1962 = vunpack.c.l.b16 %v1678
      %v1963 = vunpack.c.l.b16 %v1679
      %v1964 = vpack.c.b16 %v1949, %v1948
      %v1965 = vpack.c.b16 %v1951, %v1950
      %v1966 = vpack.c.b16 %v1953, %v1952
      %v1967 = vpack.c.b16 %v1955, %v1954
      %v1968 = vpack.c.b16 %v1957, %v1956
      %v1969 = vpack.c.b16 %v1959, %v1958
      %v1970 = vpack.c.b16 %v1961, %v1960
      %v1971 = vpack.c.b16 %v1963, %v1962
      %1980 = vmatprep.subr.bf16.mxu0 0
      %1981 = vmatpush1.bf16.msra.mxu0 %v1971
      %1982 = vmatprep.subr.bf16.mxu0 0
      %1983 = vmatpush1.bf16.msra.mxu0 %v1970
      %1984 = vmatprep.subr.bf16.mxu0 0
      %1985 = vmatpush1.bf16.msra.mxu0 %v1969
      %1986 = vmatprep.subr.bf16.mxu0 0
      %1987 = vmatpush1.bf16.msra.mxu0 %v1968
      %1988 = vmatprep.subr.bf16.mxu0 0
      %1989 = vmatpush1.bf16.msra.mxu0 %v1967
      %1990 = vmatprep.subr.bf16.mxu0 0
      %1991 = vmatpush1.bf16.msra.mxu0 %v1966
      %1992 = vmatprep.subr.bf16.mxu0 0
      %1993 = vmatpush1.bf16.msra.mxu0 %v1965
      %1994 = vmatprep.subr.bf16.mxu0 0
      %1995 = vmatpush1.bf16.msra.mxu0 %v1964
      %1996 = vmatprep.subr.bf16.mxu0 0
      %1997 = vmatpush2.bf16.msra.mxu0 0
      %1998 = vmatprep.subr.bf16.mxu0 0
      %1999 = vmatpush2.bf16.msra.mxu0 0
      %2000 = vmatprep.subr.bf16.mxu0 0
      %2001 = vmatpush2.bf16.msra.mxu0 0
      %2002 = vmatprep.subr.bf16.mxu0 0
      %2003 = vmatpush2.bf16.msra.mxu0 0
      %2004 = vmatprep.subr.bf16.mxu0 0
      %2005 = vmatpush2.bf16.msra.mxu0 0
      %2006 = vmatprep.subr.bf16.mxu0 0
      %2007 = vmatpush2.bf16.msra.mxu0 0
      %2008 = vmatprep.subr.bf16.mxu0 0
      %2009 = vmatpush2.bf16.msra.mxu0 0
      %2010 = vmatprep.subr.bf16.mxu0 0
      %2011 = vmatpush2.bf16.msra.mxu0 0
      %2012 = vmatprep.mubr.bf16.mxu0 0
      %2013 = vmatmul.mubr.bf16.gmra.mxu0 %v1780
      %v2014 = vpop.f32.mrf.mxu0
      %v2015 = vadd.f32 0.0, %v2014
      %v2016 = vpop.f32.mrf.mxu0
      %v2017 = vpop.f32.mrf.mxu0
      %v2018 = vadd.f32 0.0, %v2017
      %v2019 = vpop.f32.mrf.mxu0
      %2020 = vmatprep.mubr.bf16.mxu0 0
      %2021 = vmatmul.mubr.bf16.gmra.mxu0 %v1789
      %v2022 = vpop.f32.mrf.mxu0
      %v2023 = vadd.f32 0.0, %v2022
      %v2024 = vpop.f32.mrf.mxu0
      %v2025 = vpop.f32.mrf.mxu0
      %v2026 = vadd.f32 0.0, %v2025
      %v2027 = vpop.f32.mrf.mxu0
      %2028 = vmatprep.mubr.bf16.mxu0 0
      %2029 = vmatmul.mubr.bf16.gmra.mxu0 %v1798
      %v2030 = vpop.f32.mrf.mxu0
      %v2031 = vadd.f32 0.0, %v2030
      %v2032 = vpop.f32.mrf.mxu0
      %v2033 = vpop.f32.mrf.mxu0
      %v2034 = vadd.f32 0.0, %v2033
      %v2035 = vpop.f32.mrf.mxu0
      %2036 = vmatprep.mubr.bf16.mxu0 0
      %2037 = vmatmul.mubr.bf16.gmra.mxu0 %v1807
      %v2038 = vpop.f32.mrf.mxu0
      %v2039 = vadd.f32 0.0, %v2038
      %v2040 = vpop.f32.mrf.mxu0
      %v2041 = vpop.f32.mrf.mxu0
      %v2042 = vadd.f32 0.0, %v2041
      %v2043 = vpop.f32.mrf.mxu0
      %2044 = vmatprep.mubr.bf16.mxu0 0
      %2045 = vmatmul.mubr.bf16.gmra.mxu0 %v1816
      %v2046 = vpop.f32.mrf.mxu0
      %v2047 = vadd.f32 0.0, %v2046
      %v2048 = vpop.f32.mrf.mxu0
      %v2049 = vpop.f32.mrf.mxu0
      %v2050 = vadd.f32 0.0, %v2049
      %v2051 = vpop.f32.mrf.mxu0
      %2052 = vmatprep.mubr.bf16.mxu0 0
      %2053 = vmatmul.mubr.bf16.gmra.mxu0 %v1825
      %v2054 = vpop.f32.mrf.mxu0
      %v2055 = vadd.f32 0.0, %v2054
      %v2056 = vpop.f32.mrf.mxu0
      %v2057 = vpop.f32.mrf.mxu0
      %v2058 = vadd.f32 0.0, %v2057
      %v2059 = vpop.f32.mrf.mxu0
      %2060 = vmatprep.mubr.bf16.mxu0 0
      %2061 = vmatmul.mubr.bf16.gmra.mxu0 %v1834
      %v2062 = vpop.f32.mrf.mxu0
      %v2063 = vadd.f32 0.0, %v2062
      %v2064 = vpop.f32.mrf.mxu0
      %v2065 = vpop.f32.mrf.mxu0
      %v2066 = vadd.f32 0.0, %v2065
      %v2067 = vpop.f32.mrf.mxu0
      %2068 = vmatprep.mubr.bf16.mxu0 0
      %2069 = vmatmul.mubr.bf16.gmra.mxu0 %v1843
      %v2070 = vpop.f32.mrf.mxu0
      %v2071 = vadd.f32 0.0, %v2070
      %v2072 = vpop.f32.mrf.mxu0
      %v2073 = vpop.f32.mrf.mxu0
      %v2074 = vadd.f32 0.0, %v2073
      %v2075 = vpop.f32.mrf.mxu0
      %2076 = vmatprep.mubr.bf16.mxu0 0
      %2077 = vmatmul.mubr.bf16.gmra.mxu0 %v1852
      %v2078 = vpop.f32.mrf.mxu0
      %v2079 = vadd.f32 0.0, %v2078
      %v2080 = vpop.f32.mrf.mxu0
      %v2081 = vpop.f32.mrf.mxu0
      %v2082 = vadd.f32 0.0, %v2081
      %v2083 = vpop.f32.mrf.mxu0
      %2084 = vmatprep.mubr.bf16.mxu0 0
      %2085 = vmatmul.mubr.bf16.gmra.mxu0 %v1861
      %v2086 = vpop.f32.mrf.mxu0
      %v2087 = vadd.f32 0.0, %v2086
      %v2088 = vpop.f32.mrf.mxu0
      %v2089 = vpop.f32.mrf.mxu0
      %v2090 = vadd.f32 0.0, %v2089
      %v2091 = vpop.f32.mrf.mxu0
      %2092 = vmatprep.mubr.bf16.mxu0 0
      %2093 = vmatmul.mubr.bf16.gmra.mxu0 %v1870
      %v2094 = vpop.f32.mrf.mxu0
      %v2095 = vadd.f32 0.0, %v2094
      %v2096 = vpop.f32.mrf.mxu0
      %v2097 = vpop.f32.mrf.mxu0
      %v2098 = vadd.f32 0.0, %v2097
      %v2099 = vpop.f32.mrf.mxu0
      %2100 = vmatprep.mubr.bf16.mxu0 0
      %2101 = vmatmul.mubr.bf16.gmra.mxu0 %v1879
      %v2102 = vpop.f32.mrf.mxu0
      %v2103 = vadd.f32 0.0, %v2102
      %v2104 = vpop.f32.mrf.mxu0
      %v2105 = vpop.f32.mrf.mxu0
      %v2106 = vadd.f32 0.0, %v2105
      %v2107 = vpop.f32.mrf.mxu0
      %2108 = vmatprep.mubr.bf16.mxu0 0
      %2109 = vmatmul.mubr.bf16.gmra.mxu0 %v1888
      %v2110 = vpop.f32.mrf.mxu0
      %v2111 = vadd.f32 0.0, %v2110
      %v2112 = vpop.f32.mrf.mxu0
      %v2113 = vpop.f32.mrf.mxu0
      %v2114 = vadd.f32 0.0, %v2113
      %v2115 = vpop.f32.mrf.mxu0
      %2116 = vmatprep.mubr.bf16.mxu0 0
      %2117 = vmatmul.mubr.bf16.gmra.mxu0 %v1897
      %v2118 = vpop.f32.mrf.mxu0
      %v2119 = vadd.f32 0.0, %v2118
      %v2120 = vpop.f32.mrf.mxu0
      %v2121 = vpop.f32.mrf.mxu0
      %v2122 = vadd.f32 0.0, %v2121
      %v2123 = vpop.f32.mrf.mxu0
      %2124 = vmatprep.mubr.bf16.mxu0 0
      %2125 = vmatmul.mubr.bf16.gmra.mxu0 %v1906
      %v2126 = vpop.f32.mrf.mxu0
      %v2127 = vadd.f32 0.0, %v2126
      %v2128 = vpop.f32.mrf.mxu0
      %v2129 = vpop.f32.mrf.mxu0
      %v2130 = vadd.f32 0.0, %v2129
      %v2131 = vpop.f32.mrf.mxu0
      %2132 = vmatprep.mubr.bf16.mxu0 0
      %2133 = vmatmul.mubr.bf16.gmra.mxu0 %v1915
      %v2134 = vpop.f32.mrf.mxu0
      %v2135 = vadd.f32 0.0, %v2134
      %v2136 = vpop.f32.mrf.mxu0
      %v2137 = vpop.f32.mrf.mxu0
      %v2138 = vadd.f32 0.0, %v2137
      %v2139 = vpop.f32.mrf.mxu0
      %2140 = vdwg.mxu0
      %2141 = vst [vmem:[#allocation3] sm:$0xff] %v2015
      %2142 = vst [vmem:[#allocation3 + $0x8] sm:$0xff] %v2018
      %2143 = vst [vmem:[#allocation3 + $0x10] sm:$0xff] %v2023
      %2144 = vst [vmem:[#allocation3 + $0x18] sm:$0xff] %v2026
      %2145 = vst [vmem:[#allocation3 + $0x20] sm:$0xff] %v2031
      %2146 = vst [vmem:[#allocation3 + $0x28] sm:$0xff] %v2034
      %2147 = vst [vmem:[#allocation3 + $0x30] sm:$0xff] %v2039
      %2148 = vst [vmem:[#allocation3 + $0x38] sm:$0xff] %v2042
      %2149 = vst [vmem:[#allocation3 + $0x40] sm:$0xff] %v2047
      %2150 = vst [vmem:[#allocation3 + $0x48] sm:$0xff] %v2050
      %2151 = vst [vmem:[#allocation3 + $0x50] sm:$0xff] %v2055
      %2152 = vst [vmem:[#allocation3 + $0x58] sm:$0xff] %v2058
      %2153 = vst [vmem:[#allocation3 + $0x60] sm:$0xff] %v2063
      %2154 = vst [vmem:[#allocation3 + $0x68] sm:$0xff] %v2066
      %2155 = vst [vmem:[#allocation3 + $0x70] sm:$0xff] %v2071
      %2156 = vst [vmem:[#allocation3 + $0x78] sm:$0xff] %v2074
      %2157 = vst [vmem:[#allocation3 + $0x80] sm:$0xff] %v2079
      %2158 = vst [vmem:[#allocation3 + $0x88] sm:$0xff] %v2082
      %2159 = vst [vmem:[#allocation3 + $0x90] sm:$0xff] %v2087
      %2160 = vst [vmem:[#allocation3 + $0x98] sm:$0xff] %v2090
      %2161 = vst [vmem:[#allocation3 + $0xa0] sm:$0xff] %v2095
      %2162 = vst [vmem:[#allocation3 + $0xa8] sm:$0xff] %v2098
      %2163 = vst [vmem:[#allocation3 + $0xb0] sm:$0xff] %v2103
      %2164 = vst [vmem:[#allocation3 + $0xb8] sm:$0xff] %v2106
      %2165 = vst [vmem:[#allocation3 + $0xc0] sm:$0xff] %v2111
      %2166 = vst [vmem:[#allocation3 + $0xc8] sm:$0xff] %v2114
      %2167 = vst [vmem:[#allocation3 + $0xd0] sm:$0xff] %v2119
      %2168 = vst [vmem:[#allocation3 + $0xd8] sm:$0xff] %v2122
      %2169 = vst [vmem:[#allocation3 + $0xe0] sm:$0xff] %v2127
      %2170 = vst [vmem:[#allocation3 + $0xe8] sm:$0xff] %v2130
      %2171 = vst [vmem:[#allocation3 + $0xf0] sm:$0xff] %v2135
      %2172 = vst [vmem:[#allocation3 + $0xf8] sm:$0xff] %v2138
      %v2173 = vld [vmem:[#allocation2 + $0x8] sm:$0xf]
      %v2174 = vld [vmem:[#allocation2 + $0xc] sm:$0xf]
      %v2175 = vld [vmem:[#allocation2 + $0x10] sm:$0xf]
      %v2176 = vld [vmem:[#allocation2 + $0x14] sm:$0xf]
      %v2177 = vld [vmem:[#allocation2 + $0x18] sm:$0xf]
      %v2178 = vld [vmem:[#allocation2 + $0x1c] sm:$0xf]
      %v2179 = vld [vmem:[#allocation2 + $0x20] sm:$0xf]
      %v2180 = vld [vmem:[#allocation2 + $0x24] sm:$0xf]
      %v2181 = vld [vmem:[#allocation2 + $0x28] sm:$0xf]
      %v2182 = vld [vmem:[#allocation2 + $0x2c] sm:$0xf]
      %v2183 = vld [vmem:[#allocation2 + $0x30] sm:$0xf]
      %v2184 = vld [vmem:[#allocation2 + $0x34] sm:$0xf]
      %v2185 = vld [vmem:[#allocation2 + $0x38] sm:$0xf]
      %v2186 = vld [vmem:[#allocation2 + $0x3c] sm:$0xf]
      %v2187 = vld [vmem:[#allocation2 + $0x40] sm:$0xf]
      %v2188 = vld [vmem:[#allocation2 + $0x44] sm:$0xf]
      %v2189 = vld [vmem:[#allocation2 + $0x48] sm:$0xf]
      %v2190 = vld [vmem:[#allocation2 + $0x4c] sm:$0xf]
      %v2191 = vld [vmem:[#allocation2 + $0x50] sm:$0xf]
      %v2192 = vld [vmem:[#allocation2 + $0x54] sm:$0xf]
      %v2193 = vld [vmem:[#allocation2 + $0x58] sm:$0xf]
      %v2194 = vld [vmem:[#allocation2 + $0x5c] sm:$0xf]
      %v2195 = vld [vmem:[#allocation2 + $0x60] sm:$0xf]
      %v2196 = vld [vmem:[#allocation2 + $0x64] sm:$0xf]
      %v2197 = vld [vmem:[#allocation2 + $0x68] sm:$0xf]
      %v2198 = vld [vmem:[#allocation2 + $0x6c] sm:$0xf]
      %v2199 = vld [vmem:[#allocation2 + $0x70] sm:$0xf]
      %v2200 = vld [vmem:[#allocation2 + $0x74] sm:$0xf]
      %v2201 = vld [vmem:[#allocation2 + $0x78] sm:$0xf]
      %v2202 = vld [vmem:[#allocation2 + $0x7c] sm:$0xf]
      %v2203 = vld [vmem:[#allocation2 + $0x80] sm:$0xf]
      %v2204 = vld [vmem:[#allocation2 + $0x84] sm:$0xf]
      %s2205 = scalar_lea.vmem %s265, 64
      %v2206 = vld [vmem:[%s2205] sm:$0xf]
      %v2207 = vld [vmem:[%s2205 + $0x4] sm:$0xf]
      %v2208 = vld [vmem:[%s2205 + $0x8] sm:$0xf]
      %v2209 = vld [vmem:[%s2205 + $0xc] sm:$0xf]
      %v2210 = vld [vmem:[%s2205 + $0x10] sm:$0xf]
      %v2211 = vld [vmem:[%s2205 + $0x14] sm:$0xf]
      %v2212 = vld [vmem:[%s2205 + $0x18] sm:$0xf]
      %v2213 = vld [vmem:[%s2205 + $0x1c] sm:$0xf]
      %v2214 = vld [vmem:[%s2205 + $0x20] sm:$0xf]
      %v2215 = vld [vmem:[%s2205 + $0x24] sm:$0xf]
      %v2216 = vld [vmem:[%s2205 + $0x28] sm:$0xf]
      %v2217 = vld [vmem:[%s2205 + $0x2c] sm:$0xf]
      %v2218 = vld [vmem:[%s2205 + $0x30] sm:$0xf]
      %v2219 = vld [vmem:[%s2205 + $0x34] sm:$0xf]
      %v2220 = vld [vmem:[%s2205 + $0x38] sm:$0xf]
      %v2221 = vld [vmem:[%s2205 + $0x3c] sm:$0xf]
      %v2254 = vunpack.c.l.b16 %v2173
      %v2255 = vunpack.c.l.b16 %v2174
      %v2256 = vunpack.c.l.b16 %v2175
      %v2257 = vunpack.c.l.b16 %v2176
      %v2258 = vunpack.c.l.b16 %v2177
      %v2259 = vunpack.c.l.b16 %v2178
      %v2260 = vunpack.c.l.b16 %v2179
      %v2261 = vunpack.c.l.b16 %v2180
      %v2262 = vunpack.c.l.b16 %v2181
      %v2263 = vunpack.c.l.b16 %v2182
      %v2264 = vunpack.c.l.b16 %v2183
      %v2265 = vunpack.c.l.b16 %v2184
      %v2266 = vunpack.c.l.b16 %v2185
      %v2267 = vunpack.c.l.b16 %v2186
      %v2268 = vunpack.c.l.b16 %v2187
      %v2269 = vunpack.c.l.b16 %v2188
      %v2270 = vunpack.c.l.b16 %v2189
      %v2271 = vunpack.c.l.b16 %v2190
      %v2272 = vunpack.c.l.b16 %v2191
      %v2273 = vunpack.c.l.b16 %v2192
      %v2274 = vunpack.c.l.b16 %v2193
      %v2275 = vunpack.c.l.b16 %v2194
      %v2276 = vunpack.c.l.b16 %v2195
      %v2277 = vunpack.c.l.b16 %v2196
      %v2278 = vunpack.c.l.b16 %v2197
      %v2279 = vunpack.c.l.b16 %v2198
      %v2280 = vunpack.c.l.b16 %v2199
      %v2281 = vunpack.c.l.b16 %v2200
      %v2282 = vunpack.c.l.b16 %v2201
      %v2283 = vunpack.c.l.b16 %v2202
      %v2284 = vunpack.c.l.b16 %v2203
      %v2285 = vunpack.c.l.b16 %v2204
      %v2286 = vpack.c.b16 %v2255, %v2254
      %v2287 = vpack.c.b16 %v2257, %v2256
      %v2288 = vpack.c.b16 %v2259, %v2258
      %v2289 = vpack.c.b16 %v2261, %v2260
      %v2290 = vpack.c.b16 %v2263, %v2262
      %v2291 = vpack.c.b16 %v2265, %v2264
      %v2292 = vpack.c.b16 %v2267, %v2266
      %v2293 = vpack.c.b16 %v2269, %v2268
      %v2294 = vpack.c.b16 %v2271, %v2270
      %v2295 = vpack.c.b16 %v2273, %v2272
      %v2296 = vpack.c.b16 %v2275, %v2274
      %v2297 = vpack.c.b16 %v2277, %v2276
      %v2298 = vpack.c.b16 %v2279, %v2278
      %v2299 = vpack.c.b16 %v2281, %v2280
      %v2300 = vpack.c.b16 %v2283, %v2282
      %v2301 = vpack.c.b16 %v2285, %v2284
      %v2334 = vunpack.c.l.b16 %v2206
      %v2335 = vunpack.c.l.b16 %v2207
      %v2336 = vunpack.c.l.b16 %v2208
      %v2337 = vunpack.c.l.b16 %v2209
      %v2338 = vunpack.c.l.b16 %v2210
      %v2339 = vunpack.c.l.b16 %v2211
      %v2340 = vunpack.c.l.b16 %v2212
      %v2341 = vunpack.c.l.b16 %v2213
      %v2342 = vunpack.c.l.b16 %v2214
      %v2343 = vunpack.c.l.b16 %v2215
      %v2344 = vunpack.c.l.b16 %v2216
      %v2345 = vunpack.c.l.b16 %v2217
      %v2346 = vunpack.c.l.b16 %v2218
      %v2347 = vunpack.c.l.b16 %v2219
      %v2348 = vunpack.c.l.b16 %v2220
      %v2349 = vunpack.c.l.b16 %v2221
      %v2350 = vpack.c.b16 %v2335, %v2334
      %v2351 = vpack.c.b16 %v2337, %v2336
      %v2352 = vpack.c.b16 %v2339, %v2338
      %v2353 = vpack.c.b16 %v2341, %v2340
      %v2354 = vpack.c.b16 %v2343, %v2342
      %v2355 = vpack.c.b16 %v2345, %v2344
      %v2356 = vpack.c.b16 %v2347, %v2346
      %v2357 = vpack.c.b16 %v2349, %v2348
      %2366 = vmatprep.subr.bf16.mxu0 0
      %2367 = vmatpush1.bf16.msra.mxu0 %v2357
      %2368 = vmatprep.subr.bf16.mxu0 0
      %2369 = vmatpush1.bf16.msra.mxu0 %v2356
      %2370 = vmatprep.subr.bf16.mxu0 0
      %2371 = vmatpush1.bf16.msra.mxu0 %v2355
      %2372 = vmatprep.subr.bf16.mxu0 0
      %2373 = vmatpush1.bf16.msra.mxu0 %v2354
      %2374 = vmatprep.subr.bf16.mxu0 0
      %2375 = vmatpush1.bf16.msra.mxu0 %v2353
      %2376 = vmatprep.subr.bf16.mxu0 0
      %2377 = vmatpush1.bf16.msra.mxu0 %v2352
      %2378 = vmatprep.subr.bf16.mxu0 0
      %2379 = vmatpush1.bf16.msra.mxu0 %v2351
      %2380 = vmatprep.subr.bf16.mxu0 0
      %2381 = vmatpush1.bf16.msra.mxu0 %v2350
      %2382 = vmatprep.subr.bf16.mxu0 0
      %2383 = vmatpush2.bf16.msra.mxu0 0
      %2384 = vmatprep.subr.bf16.mxu0 0
      %2385 = vmatpush2.bf16.msra.mxu0 0
      %2386 = vmatprep.subr.bf16.mxu0 0
      %2387 = vmatpush2.bf16.msra.mxu0 0
      %2388 = vmatprep.subr.bf16.mxu0 0
      %2389 = vmatpush2.bf16.msra.mxu0 0
      %2390 = vmatprep.subr.bf16.mxu0 0
      %2391 = vmatpush2.bf16.msra.mxu0 0
      %2392 = vmatprep.subr.bf16.mxu0 0
      %2393 = vmatpush2.bf16.msra.mxu0 0
      %2394 = vmatprep.subr.bf16.mxu0 0
      %2395 = vmatpush2.bf16.msra.mxu0 0
      %2396 = vmatprep.subr.bf16.mxu0 0
      %2397 = vmatpush2.bf16.msra.mxu0 0
      %2398 = vmatprep.mubr.bf16.mxu0 0
      %2399 = vmatmul.mubr.bf16.gmra.mxu0 %v2286
      %v2400 = vpop.f32.mrf.mxu0
      %v2401 = vadd.f32 0.0, %v2400
      %v2402 = vpop.f32.mrf.mxu0
      %v2403 = vpop.f32.mrf.mxu0
      %v2404 = vadd.f32 0.0, %v2403
      %v2405 = vpop.f32.mrf.mxu0
      %2406 = vmatprep.mubr.bf16.mxu0 0
      %2407 = vmatmul.mubr.bf16.gmra.mxu0 %v2287
      %v2408 = vpop.f32.mrf.mxu0
      %v2409 = vadd.f32 0.0, %v2408
      %v2410 = vpop.f32.mrf.mxu0
      %v2411 = vpop.f32.mrf.mxu0
      %v2412 = vadd.f32 0.0, %v2411
      %v2413 = vpop.f32.mrf.mxu0
      %2414 = vmatprep.mubr.bf16.mxu0 0
      %2415 = vmatmul.mubr.bf16.gmra.mxu0 %v2288
      %v2416 = vpop.f32.mrf.mxu0
      %v2417 = vadd.f32 0.0, %v2416
      %v2418 = vpop.f32.mrf.mxu0
      %v2419 = vpop.f32.mrf.mxu0
      %v2420 = vadd.f32 0.0, %v2419
      %v2421 = vpop.f32.mrf.mxu0
      %2422 = vmatprep.mubr.bf16.mxu0 0
      %2423 = vmatmul.mubr.bf16.gmra.mxu0 %v2289
      %v2424 = vpop.f32.mrf.mxu0
      %v2425 = vadd.f32 0.0, %v2424
      %v2426 = vpop.f32.mrf.mxu0
      %v2427 = vpop.f32.mrf.mxu0
      %v2428 = vadd.f32 0.0, %v2427
      %v2429 = vpop.f32.mrf.mxu0
      %2430 = vmatprep.mubr.bf16.mxu0 0
      %2431 = vmatmul.mubr.bf16.gmra.mxu0 %v2290
      %v2432 = vpop.f32.mrf.mxu0
      %v2433 = vadd.f32 0.0, %v2432
      %v2434 = vpop.f32.mrf.mxu0
      %v2435 = vpop.f32.mrf.mxu0
      %v2436 = vadd.f32 0.0, %v2435
      %v2437 = vpop.f32.mrf.mxu0
      %2438 = vmatprep.mubr.bf16.mxu0 0
      %2439 = vmatmul.mubr.bf16.gmra.mxu0 %v2291
      %v2440 = vpop.f32.mrf.mxu0
      %v2441 = vadd.f32 0.0, %v2440
      %v2442 = vpop.f32.mrf.mxu0
      %v2443 = vpop.f32.mrf.mxu0
      %v2444 = vadd.f32 0.0, %v2443
      %v2445 = vpop.f32.mrf.mxu0
      %2446 = vmatprep.mubr.bf16.mxu0 0
      %2447 = vmatmul.mubr.bf16.gmra.mxu0 %v2292
      %v2448 = vpop.f32.mrf.mxu0
      %v2449 = vadd.f32 0.0, %v2448
      %v2450 = vpop.f32.mrf.mxu0
      %v2451 = vpop.f32.mrf.mxu0
      %v2452 = vadd.f32 0.0, %v2451
      %v2453 = vpop.f32.mrf.mxu0
      %2454 = vmatprep.mubr.bf16.mxu0 0
      %2455 = vmatmul.mubr.bf16.gmra.mxu0 %v2293
      %v2456 = vpop.f32.mrf.mxu0
      %v2457 = vadd.f32 0.0, %v2456
      %v2458 = vpop.f32.mrf.mxu0
      %v2459 = vpop.f32.mrf.mxu0
      %v2460 = vadd.f32 0.0, %v2459
      %v2461 = vpop.f32.mrf.mxu0
      %2462 = vmatprep.mubr.bf16.mxu0 0
      %2463 = vmatmul.mubr.bf16.gmra.mxu0 %v2294
      %v2464 = vpop.f32.mrf.mxu0
      %v2465 = vadd.f32 0.0, %v2464
      %v2466 = vpop.f32.mrf.mxu0
      %v2467 = vpop.f32.mrf.mxu0
      %v2468 = vadd.f32 0.0, %v2467
      %v2469 = vpop.f32.mrf.mxu0
      %2470 = vmatprep.mubr.bf16.mxu0 0
      %2471 = vmatmul.mubr.bf16.gmra.mxu0 %v2295
      %v2472 = vpop.f32.mrf.mxu0
      %v2473 = vadd.f32 0.0, %v2472
      %v2474 = vpop.f32.mrf.mxu0
      %v2475 = vpop.f32.mrf.mxu0
      %v2476 = vadd.f32 0.0, %v2475
      %v2477 = vpop.f32.mrf.mxu0
      %2478 = vmatprep.mubr.bf16.mxu0 0
      %2479 = vmatmul.mubr.bf16.gmra.mxu0 %v2296
      %v2480 = vpop.f32.mrf.mxu0
      %v2481 = vadd.f32 0.0, %v2480
      %v2482 = vpop.f32.mrf.mxu0
      %v2483 = vpop.f32.mrf.mxu0
      %v2484 = vadd.f32 0.0, %v2483
      %v2485 = vpop.f32.mrf.mxu0
      %2486 = vmatprep.mubr.bf16.mxu0 0
      %2487 = vmatmul.mubr.bf16.gmra.mxu0 %v2297
      %v2488 = vpop.f32.mrf.mxu0
      %v2489 = vadd.f32 0.0, %v2488
      %v2490 = vpop.f32.mrf.mxu0
      %v2491 = vpop.f32.mrf.mxu0
      %v2492 = vadd.f32 0.0, %v2491
      %v2493 = vpop.f32.mrf.mxu0
      %2494 = vmatprep.mubr.bf16.mxu0 0
      %2495 = vmatmul.mubr.bf16.gmra.mxu0 %v2298
      %v2496 = vpop.f32.mrf.mxu0
      %v2497 = vadd.f32 0.0, %v2496
      %v2498 = vpop.f32.mrf.mxu0
      %v2499 = vpop.f32.mrf.mxu0
      %v2500 = vadd.f32 0.0, %v2499
      %v2501 = vpop.f32.mrf.mxu0
      %2502 = vmatprep.mubr.bf16.mxu0 0
      %2503 = vmatmul.mubr.bf16.gmra.mxu0 %v2299
      %v2504 = vpop.f32.mrf.mxu0
      %v2505 = vadd.f32 0.0, %v2504
      %v2506 = vpop.f32.mrf.mxu0
      %v2507 = vpop.f32.mrf.mxu0
      %v2508 = vadd.f32 0.0, %v2507
      %v2509 = vpop.f32.mrf.mxu0
      %2510 = vmatprep.mubr.bf16.mxu0 0
      %2511 = vmatmul.mubr.bf16.gmra.mxu0 %v2300
      %v2512 = vpop.f32.mrf.mxu0
      %v2513 = vadd.f32 0.0, %v2512
      %v2514 = vpop.f32.mrf.mxu0
      %v2515 = vpop.f32.mrf.mxu0
      %v2516 = vadd.f32 0.0, %v2515
      %v2517 = vpop.f32.mrf.mxu0
      %2518 = vmatprep.mubr.bf16.mxu0 0
      %2519 = vmatmul.mubr.bf16.gmra.mxu0 %v2301
      %v2520 = vpop.f32.mrf.mxu0
      %v2521 = vadd.f32 0.0, %v2520
      %v2522 = vpop.f32.mrf.mxu0
      %v2523 = vpop.f32.mrf.mxu0
      %v2524 = vadd.f32 0.0, %v2523
      %v2525 = vpop.f32.mrf.mxu0
      %2526 = vdwg.mxu0
      %v2527 = vld [vmem:[#allocation3] sm:$0xff]
      %v2528 = vld [vmem:[#allocation3 + $0x8] sm:$0xff]
      %v2529 = vld [vmem:[#allocation3 + $0x10] sm:$0xff]
      %v2530 = vld [vmem:[#allocation3 + $0x18] sm:$0xff]
      %v2531 = vld [vmem:[#allocation3 + $0x20] sm:$0xff]
      %v2532 = vld [vmem:[#allocation3 + $0x28] sm:$0xff]
      %v2533 = vld [vmem:[#allocation3 + $0x30] sm:$0xff]
      %v2534 = vld [vmem:[#allocation3 + $0x38] sm:$0xff]
      %v2535 = vld [vmem:[#allocation3 + $0x40] sm:$0xff]
      %v2536 = vld [vmem:[#allocation3 + $0x48] sm:$0xff]
      %v2537 = vld [vmem:[#allocation3 + $0x50] sm:$0xff]
      %v2538 = vld [vmem:[#allocation3 + $0x58] sm:$0xff]
      %v2539 = vld [vmem:[#allocation3 + $0x60] sm:$0xff]
      %v2540 = vld [vmem:[#allocation3 + $0x68] sm:$0xff]
      %v2541 = vld [vmem:[#allocation3 + $0x70] sm:$0xff]
      %v2542 = vld [vmem:[#allocation3 + $0x78] sm:$0xff]
      %v2543 = vld [vmem:[#allocation3 + $0x80] sm:$0xff]
      %v2544 = vld [vmem:[#allocation3 + $0x88] sm:$0xff]
      %v2545 = vld [vmem:[#allocation3 + $0x90] sm:$0xff]
      %v2546 = vld [vmem:[#allocation3 + $0x98] sm:$0xff]
      %v2547 = vld [vmem:[#allocation3 + $0xa0] sm:$0xff]
      %v2548 = vld [vmem:[#allocation3 + $0xa8] sm:$0xff]
      %v2549 = vld [vmem:[#allocation3 + $0xb0] sm:$0xff]
      %v2550 = vld [vmem:[#allocation3 + $0xb8] sm:$0xff]
      %v2551 = vld [vmem:[#allocation3 + $0xc0] sm:$0xff]
      %v2552 = vld [vmem:[#allocation3 + $0xc8] sm:$0xff]
      %v2553 = vld [vmem:[#allocation3 + $0xd0] sm:$0xff]
      %v2554 = vld [vmem:[#allocation3 + $0xd8] sm:$0xff]
      %v2555 = vld [vmem:[#allocation3 + $0xe0] sm:$0xff]
      %v2556 = vld [vmem:[#allocation3 + $0xe8] sm:$0xff]
      %v2557 = vld [vmem:[#allocation3 + $0xf0] sm:$0xff]
      %v2558 = vld [vmem:[#allocation3 + $0xf8] sm:$0xff]
      %v2559 = vadd.f32 %v2527, %v2401
      %v2560 = vadd.f32 %v2528, %v2404
      %v2561 = vadd.f32 %v2529, %v2409
      %v2562 = vadd.f32 %v2530, %v2412
      %v2563 = vadd.f32 %v2531, %v2417
      %v2564 = vadd.f32 %v2532, %v2420
      %v2565 = vadd.f32 %v2533, %v2425
      %v2566 = vadd.f32 %v2534, %v2428
      %v2567 = vadd.f32 %v2535, %v2433
      %v2568 = vadd.f32 %v2536, %v2436
      %v2569 = vadd.f32 %v2537, %v2441
      %v2570 = vadd.f32 %v2538, %v2444
      %v2571 = vadd.f32 %v2539, %v2449
      %v2572 = vadd.f32 %v2540, %v2452
      %v2573 = vadd.f32 %v2541, %v2457
      %v2574 = vadd.f32 %v2542, %v2460
      %v2575 = vadd.f32 %v2543, %v2465
      %v2576 = vadd.f32 %v2544, %v2468
      %v2577 = vadd.f32 %v2545, %v2473
      %v2578 = vadd.f32 %v2546, %v2476
      %v2579 = vadd.f32 %v2547, %v2481
      %v2580 = vadd.f32 %v2548, %v2484
      %v2581 = vadd.f32 %v2549, %v2489
      %v2582 = vadd.f32 %v2550, %v2492
      %v2583 = vadd.f32 %v2551, %v2497
      %v2584 = vadd.f32 %v2552, %v2500
      %v2585 = vadd.f32 %v2553, %v2505
      %v2586 = vadd.f32 %v2554, %v2508
      %v2587 = vadd.f32 %v2555, %v2513
      %v2588 = vadd.f32 %v2556, %v2516
      %v2589 = vadd.f32 %v2557, %v2521
      %v2590 = vadd.f32 %v2558, %v2524
      %2591 = vst [vmem:[#allocation3] sm:$0xff] %v2559
      %2592 = vst [vmem:[#allocation3 + $0x8] sm:$0xff] %v2560
      %2593 = vst [vmem:[#allocation3 + $0x10] sm:$0xff] %v2561
      %2594 = vst [vmem:[#allocation3 + $0x18] sm:$0xff] %v2562
      %2595 = vst [vmem:[#allocation3 + $0x20] sm:$0xff] %v2563
      %2596 = vst [vmem:[#allocation3 + $0x28] sm:$0xff] %v2564
      %2597 = vst [vmem:[#allocation3 + $0x30] sm:$0xff] %v2565
      %2598 = vst [vmem:[#allocation3 + $0x38] sm:$0xff] %v2566
      %2599 = vst [vmem:[#allocation3 + $0x40] sm:$0xff] %v2567
      %2600 = vst [vmem:[#allocation3 + $0x48] sm:$0xff] %v2568
      %2601 = vst [vmem:[#allocation3 + $0x50] sm:$0xff] %v2569
      %2602 = vst [vmem:[#allocation3 + $0x58] sm:$0xff] %v2570
      %2603 = vst [vmem:[#allocation3 + $0x60] sm:$0xff] %v2571
      %2604 = vst [vmem:[#allocation3 + $0x68] sm:$0xff] %v2572
      %2605 = vst [vmem:[#allocation3 + $0x70] sm:$0xff] %v2573
      %2606 = vst [vmem:[#allocation3 + $0x78] sm:$0xff] %v2574
      %2607 = vst [vmem:[#allocation3 + $0x80] sm:$0xff] %v2575
      %2608 = vst [vmem:[#allocation3 + $0x88] sm:$0xff] %v2576
      %2609 = vst [vmem:[#allocation3 + $0x90] sm:$0xff] %v2577
      %2610 = vst [vmem:[#allocation3 + $0x98] sm:$0xff] %v2578
      %2611 = vst [vmem:[#allocation3 + $0xa0] sm:$0xff] %v2579
      %2612 = vst [vmem:[#allocation3 + $0xa8] sm:$0xff] %v2580
      %2613 = vst [vmem:[#allocation3 + $0xb0] sm:$0xff] %v2581
      %2614 = vst [vmem:[#allocation3 + $0xb8] sm:$0xff] %v2582
      %2615 = vst [vmem:[#allocation3 + $0xc0] sm:$0xff] %v2583
      %2616 = vst [vmem:[#allocation3 + $0xc8] sm:$0xff] %v2584
      %2617 = vst [vmem:[#allocation3 + $0xd0] sm:$0xff] %v2585
      %2618 = vst [vmem:[#allocation3 + $0xd8] sm:$0xff] %v2586
      %2619 = vst [vmem:[#allocation3 + $0xe0] sm:$0xff] %v2587
      %2620 = vst [vmem:[#allocation3 + $0xe8] sm:$0xff] %v2588
      %2621 = vst [vmem:[#allocation3 + $0xf0] sm:$0xff] %v2589
      %2622 = vst [vmem:[#allocation3 + $0xf8] sm:$0xff] %v2590
      %v2623 = vld [vmem:[#allocation2 + $0x8] sm:$0xf]
      %v2624 = vld [vmem:[#allocation2 + $0xc] sm:$0xf]
      %v2625 = vld [vmem:[#allocation2 + $0x10] sm:$0xf]
      %v2626 = vld [vmem:[#allocation2 + $0x14] sm:$0xf]
      %v2627 = vld [vmem:[#allocation2 + $0x18] sm:$0xf]
      %v2628 = vld [vmem:[#allocation2 + $0x1c] sm:$0xf]
      %v2629 = vld [vmem:[#allocation2 + $0x20] sm:$0xf]
      %v2630 = vld [vmem:[#allocation2 + $0x24] sm:$0xf]
      %v2631 = vld [vmem:[#allocation2 + $0x28] sm:$0xf]
      %v2632 = vld [vmem:[#allocation2 + $0x2c] sm:$0xf]
      %v2633 = vld [vmem:[#allocation2 + $0x30] sm:$0xf]
      %v2634 = vld [vmem:[#allocation2 + $0x34] sm:$0xf]
      %v2635 = vld [vmem:[#allocation2 + $0x38] sm:$0xf]
      %v2636 = vld [vmem:[#allocation2 + $0x3c] sm:$0xf]
      %v2637 = vld [vmem:[#allocation2 + $0x40] sm:$0xf]
      %v2638 = vld [vmem:[#allocation2 + $0x44] sm:$0xf]
      %v2639 = vld [vmem:[#allocation2 + $0x48] sm:$0xf]
      %v2640 = vld [vmem:[#allocation2 + $0x4c] sm:$0xf]
      %v2641 = vld [vmem:[#allocation2 + $0x50] sm:$0xf]
      %v2642 = vld [vmem:[#allocation2 + $0x54] sm:$0xf]
      %v2643 = vld [vmem:[#allocation2 + $0x58] sm:$0xf]
      %v2644 = vld [vmem:[#allocation2 + $0x5c] sm:$0xf]
      %v2645 = vld [vmem:[#allocation2 + $0x60] sm:$0xf]
      %v2646 = vld [vmem:[#allocation2 + $0x64] sm:$0xf]
      %v2647 = vld [vmem:[#allocation2 + $0x68] sm:$0xf]
      %v2648 = vld [vmem:[#allocation2 + $0x6c] sm:$0xf]
      %v2649 = vld [vmem:[#allocation2 + $0x70] sm:$0xf]
      %v2650 = vld [vmem:[#allocation2 + $0x74] sm:$0xf]
      %v2651 = vld [vmem:[#allocation2 + $0x78] sm:$0xf]
      %v2652 = vld [vmem:[#allocation2 + $0x7c] sm:$0xf]
      %v2653 = vld [vmem:[#allocation2 + $0x80] sm:$0xf]
      %v2654 = vld [vmem:[#allocation2 + $0x84] sm:$0xf]
      %v2655 = vld [vmem:[#allocation2 + $0x88] sm:$0x1]
      %v2656 = vsel %vm1083, 1, 0
      %v2657 = vsel %vm1084, 1, 0
      %v2658 = vsel %vm1085, 1, 0
      %v2659 = vsel %vm1086, 1, 0
      %v2660 = vsel %vm1087, 1, 0
      %v2661 = vsel %vm1088, 1, 0
      %v2662 = vsel %vm1089, 1, 0
      %v2663 = vsel %vm1090, 1, 0
      %v2664 = vsel %vm1091, 1, 0
      %v2665 = vsel %vm1092, 1, 0
      %v2666 = vsel %vm1093, 1, 0
      %v2667 = vsel %vm1094, 1, 0
      %v2668 = vsel %vm1095, 1, 0
      %v2669 = vsel %vm1096, 1, 0
      %v2670 = vsel %vm1097, 1, 0
      %v2671 = vsel %vm1098, 1, 0
      %v2672 = vsel %vm1099, 1, 0
      %v2673 = vsel %vm1100, 1, 0
      %v2674 = vsel %vm1101, 1, 0
      %v2675 = vsel %vm1102, 1, 0
      %v2676 = vsel %vm1103, 1, 0
      %v2677 = vsel %vm1104, 1, 0
      %v2678 = vsel %vm1105, 1, 0
      %v2679 = vsel %vm1106, 1, 0
      %v2680 = vsel %vm1107, 1, 0
      %v2681 = vsel %vm1108, 1, 0
      %v2682 = vsel %vm1109, 1, 0
      %v2683 = vsel %vm1110, 1, 0
      %v2684 = vsel %vm1111, 1, 0
      %v2685 = vsel %vm1112, 1, 0
      %v2686 = vsel %vm1113, 1, 0
      %v2687 = vsel %vm1114, 1, 0
      %vm2688 = vcmp.eq.s32.totalorder %v2656, 1
      %vm2689 = vcmp.eq.s32.totalorder %v2657, 1
      %vm2690 = vcmp.eq.s32.totalorder %v2658, 1
      %vm2691 = vcmp.eq.s32.totalorder %v2659, 1
      %vm2692 = vcmp.eq.s32.totalorder %v2660, 1
      %vm2693 = vcmp.eq.s32.totalorder %v2661, 1
      %vm2694 = vcmp.eq.s32.totalorder %v2662, 1
      %vm2695 = vcmp.eq.s32.totalorder %v2663, 1
      %vm2696 = vcmp.eq.s32.totalorder %v2664, 1
      %vm2697 = vcmp.eq.s32.totalorder %v2665, 1
      %vm2698 = vcmp.eq.s32.totalorder %v2666, 1
      %vm2699 = vcmp.eq.s32.totalorder %v2667, 1
      %vm2700 = vcmp.eq.s32.totalorder %v2668, 1
      %vm2701 = vcmp.eq.s32.totalorder %v2669, 1
      %vm2702 = vcmp.eq.s32.totalorder %v2670, 1
      %vm2703 = vcmp.eq.s32.totalorder %v2671, 1
      %vm2704 = vcmp.eq.s32.totalorder %v2672, 1
      %vm2705 = vcmp.eq.s32.totalorder %v2673, 1
      %vm2706 = vcmp.eq.s32.totalorder %v2674, 1
      %vm2707 = vcmp.eq.s32.totalorder %v2675, 1
      %vm2708 = vcmp.eq.s32.totalorder %v2676, 1
      %vm2709 = vcmp.eq.s32.totalorder %v2677, 1
      %vm2710 = vcmp.eq.s32.totalorder %v2678, 1
      %vm2711 = vcmp.eq.s32.totalorder %v2679, 1
      %vm2712 = vcmp.eq.s32.totalorder %v2680, 1
      %vm2713 = vcmp.eq.s32.totalorder %v2681, 1
      %vm2714 = vcmp.eq.s32.totalorder %v2682, 1
      %vm2715 = vcmp.eq.s32.totalorder %v2683, 1
      %vm2716 = vcmp.eq.s32.totalorder %v2684, 1
      %vm2717 = vcmp.eq.s32.totalorder %v2685, 1
      %vm2718 = vcmp.eq.s32.totalorder %v2686, 1
      %vm2719 = vcmp.eq.s32.totalorder %v2687, 1
      %vm2720 = vmpackc.low %vm2688, %vm2688
      %vm2721 = vmpackc.low %vm2689, %vm2689
      %vm2722 = vmpackc.low %vm2690, %vm2690
      %vm2723 = vmpackc.low %vm2691, %vm2691
      %vm2724 = vmpackc.low %vm2692, %vm2692
      %vm2725 = vmpackc.low %vm2693, %vm2693
      %vm2726 = vmpackc.low %vm2694, %vm2694
      %vm2727 = vmpackc.low %vm2695, %vm2695
      %vm2728 = vmpackc.low %vm2696, %vm2696
      %vm2729 = vmpackc.low %vm2697, %vm2697
      %vm2730 = vmpackc.low %vm2698, %vm2698
      %vm2731 = vmpackc.low %vm2699, %vm2699
      %vm2732 = vmpackc.low %vm2700, %vm2700
      %vm2733 = vmpackc.low %vm2701, %vm2701
      %vm2734 = vmpackc.low %vm2702, %vm2702
      %vm2735 = vmpackc.low %vm2703, %vm2703
      %vm2736 = vmpackc.low %vm2704, %vm2704
      %vm2737 = vmpackc.low %vm2705, %vm2705
      %vm2738 = vmpackc.low %vm2706, %vm2706
      %vm2739 = vmpackc.low %vm2707, %vm2707
      %vm2740 = vmpackc.low %vm2708, %vm2708
      %vm2741 = vmpackc.low %vm2709, %vm2709
      %vm2742 = vmpackc.low %vm2710, %vm2710
      %vm2743 = vmpackc.low %vm2711, %vm2711
      %vm2744 = vmpackc.low %vm2712, %vm2712
      %vm2745 = vmpackc.low %vm2713, %vm2713
      %vm2746 = vmpackc.low %vm2714, %vm2714
      %vm2747 = vmpackc.low %vm2715, %vm2715
      %vm2748 = vmpackc.low %vm2716, %vm2716
      %vm2749 = vmpackc.low %vm2717, %vm2717
      %vm2750 = vmpackc.low %vm2718, %vm2718
      %vm2751 = vmpackc.low %vm2719, %vm2719
      %v2752 = vsel %vm2720, 65537, 0
      %v2753 = vsel %vm2721, 65537, 0
      %v2754 = vsel %vm2722, 65537, 0
      %v2755 = vsel %vm2723, 65537, 0
      %v2756 = vsel %vm2724, 65537, 0
      %v2757 = vsel %vm2725, 65537, 0
      %v2758 = vsel %vm2726, 65537, 0
      %v2759 = vsel %vm2727, 65537, 0
      %v2760 = vsel %vm2728, 65537, 0
      %v2761 = vsel %vm2729, 65537, 0
      %v2762 = vsel %vm2730, 65537, 0
      %v2763 = vsel %vm2731, 65537, 0
      %v2764 = vsel %vm2732, 65537, 0
      %v2765 = vsel %vm2733, 65537, 0
      %v2766 = vsel %vm2734, 65537, 0
      %v2767 = vsel %vm2735, 65537, 0
      %v2768 = vsel %vm2736, 65537, 0
      %v2769 = vsel %vm2737, 65537, 0
      %v2770 = vsel %vm2738, 65537, 0
      %v2771 = vsel %vm2739, 65537, 0
      %v2772 = vsel %vm2740, 65537, 0
      %v2773 = vsel %vm2741, 65537, 0
      %v2774 = vsel %vm2742, 65537, 0
      %v2775 = vsel %vm2743, 65537, 0
      %v2776 = vsel %vm2744, 65537, 0
      %v2777 = vsel %vm2745, 65537, 0
      %v2778 = vsel %vm2746, 65537, 0
      %v2779 = vsel %vm2747, 65537, 0
      %v2780 = vsel %vm2748, 65537, 0
      %v2781 = vsel %vm2749, 65537, 0
      %v2782 = vsel %vm2750, 65537, 0
      %v2783 = vsel %vm2751, 65537, 0
      %vm2784 = vsmask.f32 256
      %vm2785 = vsmask.f32 4368
      %vm2786 = vmor %vm2784, %vm2785
      %v2788 = vshrl.u32 %v2752, 16
      %v2790 = vrot.slane %v2788, 7
      %v2791 = vshll.u32 %v2752, 16
      %v2793 = vor.u32 %v2790, %v2791
      %v2794 = vrot.slane %v2790, 4
      %v2796 = vshrl.u32 %v2753, 16
      %v2798 = vrot.slane %v2796, 7
      %v2799 = vshll.u32 %v2753, 16
      %v2801 = vor.u32 %v2798, %v2799
      %v2802 = vsel %vm2786, %v2794, %v2801
      %v2803 = vrot.slane %v2798, 4
      %v2805 = vshrl.u32 %v2754, 16
      %v2807 = vrot.slane %v2805, 7
      %v2808 = vshll.u32 %v2754, 16
      %v2810 = vor.u32 %v2807, %v2808
      %v2811 = vsel %vm2786, %v2803, %v2810
      %v2812 = vrot.slane %v2807, 4
      %v2814 = vshrl.u32 %v2755, 16
      %v2816 = vrot.slane %v2814, 7
      %v2817 = vshll.u32 %v2755, 16
      %v2819 = vor.u32 %v2816, %v2817
      %v2820 = vsel %vm2786, %v2812, %v2819
      %v2821 = vrot.slane %v2816, 4
      %v2823 = vshrl.u32 %v2756, 16
      %v2825 = vrot.slane %v2823, 7
      %v2826 = vshll.u32 %v2756, 16
      %v2828 = vor.u32 %v2825, %v2826
      %v2829 = vsel %vm2786, %v2821, %v2828
      %v2830 = vrot.slane %v2825, 4
      %v2832 = vshrl.u32 %v2757, 16
      %v2834 = vrot.slane %v2832, 7
      %v2835 = vshll.u32 %v2757, 16
      %v2837 = vor.u32 %v2834, %v2835
      %v2838 = vsel %vm2786, %v2830, %v2837
      %v2839 = vrot.slane %v2834, 4
      %v2841 = vshrl.u32 %v2758, 16
      %v2843 = vrot.slane %v2841, 7
      %v2844 = vshll.u32 %v2758, 16
      %v2846 = vor.u32 %v2843, %v2844
      %v2847 = vsel %vm2786, %v2839, %v2846
      %v2848 = vrot.slane %v2843, 4
      %v2850 = vshrl.u32 %v2759, 16
      %v2852 = vrot.slane %v2850, 7
      %v2853 = vshll.u32 %v2759, 16
      %v2855 = vor.u32 %v2852, %v2853
      %v2856 = vsel %vm2786, %v2848, %v2855
      %v2857 = vrot.slane %v2852, 4
      %v2859 = vshrl.u32 %v2760, 16
      %v2861 = vrot.slane %v2859, 7
      %v2862 = vshll.u32 %v2760, 16
      %v2864 = vor.u32 %v2861, %v2862
      %v2865 = vsel %vm2786, %v2857, %v2864
      %v2866 = vrot.slane %v2861, 4
      %v2868 = vshrl.u32 %v2761, 16
      %v2870 = vrot.slane %v2868, 7
      %v2871 = vshll.u32 %v2761, 16
      %v2873 = vor.u32 %v2870, %v2871
      %v2874 = vsel %vm2786, %v2866, %v2873
      %v2875 = vrot.slane %v2870, 4
      %v2877 = vshrl.u32 %v2762, 16
      %v2879 = vrot.slane %v2877, 7
      %v2880 = vshll.u32 %v2762, 16
      %v2882 = vor.u32 %v2879, %v2880
      %v2883 = vsel %vm2786, %v2875, %v2882
      %v2884 = vrot.slane %v2879, 4
      %v2886 = vshrl.u32 %v2763, 16
      %v2888 = vrot.slane %v2886, 7
      %v2889 = vshll.u32 %v2763, 16
      %v2891 = vor.u32 %v2888, %v2889
      %v2892 = vsel %vm2786, %v2884, %v2891
      %v2893 = vrot.slane %v2888, 4
      %v2895 = vshrl.u32 %v2764, 16
      %v2897 = vrot.slane %v2895, 7
      %v2898 = vshll.u32 %v2764, 16
      %v2900 = vor.u32 %v2897, %v2898
      %v2901 = vsel %vm2786, %v2893, %v2900
      %v2902 = vrot.slane %v2897, 4
      %v2904 = vshrl.u32 %v2765, 16
      %v2906 = vrot.slane %v2904, 7
      %v2907 = vshll.u32 %v2765, 16
      %v2909 = vor.u32 %v2906, %v2907
      %v2910 = vsel %vm2786, %v2902, %v2909
      %v2911 = vrot.slane %v2906, 4
      %v2913 = vshrl.u32 %v2766, 16
      %v2915 = vrot.slane %v2913, 7
      %v2916 = vshll.u32 %v2766, 16
      %v2918 = vor.u32 %v2915, %v2916
      %v2919 = vsel %vm2786, %v2911, %v2918
      %v2920 = vrot.slane %v2915, 4
      %v2922 = vshrl.u32 %v2767, 16
      %v2924 = vrot.slane %v2922, 7
      %v2925 = vshll.u32 %v2767, 16
      %v2927 = vor.u32 %v2924, %v2925
      %v2928 = vsel %vm2786, %v2920, %v2927
      %v2929 = vrot.slane %v2924, 4
      %v2931 = vshrl.u32 %v2768, 16
      %v2933 = vrot.slane %v2931, 7
      %v2934 = vshll.u32 %v2768, 16
      %v2936 = vor.u32 %v2933, %v2934
      %v2937 = vsel %vm2786, %v2929, %v2936
      %v2938 = vrot.slane %v2933, 4
      %v2940 = vshrl.u32 %v2769, 16
      %v2942 = vrot.slane %v2940, 7
      %v2943 = vshll.u32 %v2769, 16
      %v2945 = vor.u32 %v2942, %v2943
      %v2946 = vsel %vm2786, %v2938, %v2945
      %v2947 = vrot.slane %v2942, 4
      %v2949 = vshrl.u32 %v2770, 16
      %v2951 = vrot.slane %v2949, 7
      %v2952 = vshll.u32 %v2770, 16
      %v2954 = vor.u32 %v2951, %v2952
      %v2955 = vsel %vm2786, %v2947, %v2954
      %v2956 = vrot.slane %v2951, 4
      %v2958 = vshrl.u32 %v2771, 16
      %v2960 = vrot.slane %v2958, 7
      %v2961 = vshll.u32 %v2771, 16
      %v2963 = vor.u32 %v2960, %v2961
      %v2964 = vsel %vm2786, %v2956, %v2963
      %v2965 = vrot.slane %v2960, 4
      %v2967 = vshrl.u32 %v2772, 16
      %v2969 = vrot.slane %v2967, 7
      %v2970 = vshll.u32 %v2772, 16
      %v2972 = vor.u32 %v2969, %v2970
      %v2973 = vsel %vm2786, %v2965, %v2972
      %v2974 = vrot.slane %v2969, 4
      %v2976 = vshrl.u32 %v2773, 16
      %v2978 = vrot.slane %v2976, 7
      %v2979 = vshll.u32 %v2773, 16
      %v2981 = vor.u32 %v2978, %v2979
      %v2982 = vsel %vm2786, %v2974, %v2981
      %v2983 = vrot.slane %v2978, 4
      %v2985 = vshrl.u32 %v2774, 16
      %v2987 = vrot.slane %v2985, 7
      %v2988 = vshll.u32 %v2774, 16
      %v2990 = vor.u32 %v2987, %v2988
      %v2991 = vsel %vm2786, %v2983, %v2990
      %v2992 = vrot.slane %v2987, 4
      %v2994 = vshrl.u32 %v2775, 16
      %v2996 = vrot.slane %v2994, 7
      %v2997 = vshll.u32 %v2775, 16
      %v2999 = vor.u32 %v2996, %v2997
      %v3000 = vsel %vm2786, %v2992, %v2999
      %v3001 = vrot.slane %v2996, 4
      %v3003 = vshrl.u32 %v2776, 16
      %v3005 = vrot.slane %v3003, 7
      %v3006 = vshll.u32 %v2776, 16
      %v3008 = vor.u32 %v3005, %v3006
      %v3009 = vsel %vm2786, %v3001, %v3008
      %v3010 = vrot.slane %v3005, 4
      %v3012 = vshrl.u32 %v2777, 16
      %v3014 = vrot.slane %v3012, 7
      %v3015 = vshll.u32 %v2777, 16
      %v3017 = vor.u32 %v3014, %v3015
      %v3018 = vsel %vm2786, %v3010, %v3017
      %v3019 = vrot.slane %v3014, 4
      %v3021 = vshrl.u32 %v2778, 16
      %v3023 = vrot.slane %v3021, 7
      %v3024 = vshll.u32 %v2778, 16
      %v3026 = vor.u32 %v3023, %v3024
      %v3027 = vsel %vm2786, %v3019, %v3026
      %v3028 = vrot.slane %v3023, 4
      %v3030 = vshrl.u32 %v2779, 16
      %v3032 = vrot.slane %v3030, 7
      %v3033 = vshll.u32 %v2779, 16
      %v3035 = vor.u32 %v3032, %v3033
      %v3036 = vsel %vm2786, %v3028, %v3035
      %v3037 = vrot.slane %v3032, 4
      %v3039 = vshrl.u32 %v2780, 16
      %v3041 = vrot.slane %v3039, 7
      %v3042 = vshll.u32 %v2780, 16
      %v3044 = vor.u32 %v3041, %v3042
      %v3045 = vsel %vm2786, %v3037, %v3044
      %v3046 = vrot.slane %v3041, 4
      %v3048 = vshrl.u32 %v2781, 16
      %v3050 = vrot.slane %v3048, 7
      %v3051 = vshll.u32 %v2781, 16
      %v3053 = vor.u32 %v3050, %v3051
      %v3054 = vsel %vm2786, %v3046, %v3053
      %v3055 = vrot.slane %v3050, 4
      %v3057 = vshrl.u32 %v2782, 16
      %v3059 = vrot.slane %v3057, 7
      %v3060 = vshll.u32 %v2782, 16
      %v3062 = vor.u32 %v3059, %v3060
      %v3063 = vsel %vm2786, %v3055, %v3062
      %v3064 = vrot.slane %v3059, 4
      %v3066 = vshrl.u32 %v2783, 16
      %v3068 = vrot.slane %v3066, 7
      %v3069 = vshll.u32 %v2783, 16
      %v3071 = vor.u32 %v3068, %v3069
      %v3072 = vsel %vm2786, %v3064, %v3071
      %v3073 = vrot.slane %v3068, 4
      %vm3074 = vcmp.ne.s16.totalorder %v2793, 0
      %vm3075 = vcmp.ne.s16.totalorder %v2802, 0
      %vm3076 = vcmp.ne.s16.totalorder %v2811, 0
      %vm3077 = vcmp.ne.s16.totalorder %v2820, 0
      %vm3078 = vcmp.ne.s16.totalorder %v2829, 0
      %vm3079 = vcmp.ne.s16.totalorder %v2838, 0
      %vm3080 = vcmp.ne.s16.totalorder %v2847, 0
      %vm3081 = vcmp.ne.s16.totalorder %v2856, 0
      %vm3082 = vcmp.ne.s16.totalorder %v2865, 0
      %vm3083 = vcmp.ne.s16.totalorder %v2874, 0
      %vm3084 = vcmp.ne.s16.totalorder %v2883, 0
      %vm3085 = vcmp.ne.s16.totalorder %v2892, 0
      %vm3086 = vcmp.ne.s16.totalorder %v2901, 0
      %vm3087 = vcmp.ne.s16.totalorder %v2910, 0
      %vm3088 = vcmp.ne.s16.totalorder %v2919, 0
      %vm3089 = vcmp.ne.s16.totalorder %v2928, 0
      %vm3090 = vcmp.ne.s16.totalorder %v2937, 0
      %vm3091 = vcmp.ne.s16.totalorder %v2946, 0
      %vm3092 = vcmp.ne.s16.totalorder %v2955, 0
      %vm3093 = vcmp.ne.s16.totalorder %v2964, 0
      %vm3094 = vcmp.ne.s16.totalorder %v2973, 0
      %vm3095 = vcmp.ne.s16.totalorder %v2982, 0
      %vm3096 = vcmp.ne.s16.totalorder %v2991, 0
      %vm3097 = vcmp.ne.s16.totalorder %v3000, 0
      %vm3098 = vcmp.ne.s16.totalorder %v3009, 0
      %vm3099 = vcmp.ne.s16.totalorder %v3018, 0
      %vm3100 = vcmp.ne.s16.totalorder %v3027, 0
      %vm3101 = vcmp.ne.s16.totalorder %v3036, 0
      %vm3102 = vcmp.ne.s16.totalorder %v3045, 0
      %vm3103 = vcmp.ne.s16.totalorder %v3054, 0
      %vm3104 = vcmp.ne.s16.totalorder %v3063, 0
      %vm3105 = vcmp.ne.s16.totalorder %v3072, 0
      %vm3106 = vcmp.ne.s16.totalorder %v3073, 0
      %v3107 = vsel %vm3074, %v2623, 0
      %v3108 = vsel %vm3075, %v2624, 0
      %v3109 = vsel %vm3076, %v2625, 0
      %v3110 = vsel %vm3077, %v2626, 0
      %v3111 = vsel %vm3078, %v2627, 0
      %v3112 = vsel %vm3079, %v2628, 0
      %v3113 = vsel %vm3080, %v2629, 0
      %v3114 = vsel %vm3081, %v2630, 0
      %v3115 = vsel %vm3082, %v2631, 0
      %v3116 = vsel %vm3083, %v2632, 0
      %v3117 = vsel %vm3084, %v2633, 0
      %v3118 = vsel %vm3085, %v2634, 0
      %v3119 = vsel %vm3086, %v2635, 0
      %v3120 = vsel %vm3087, %v2636, 0
      %v3121 = vsel %vm3088, %v2637, 0
      %v3122 = vsel %vm3089, %v2638, 0
      %v3123 = vsel %vm3090, %v2639, 0
      %v3124 = vsel %vm3091, %v2640, 0
      %v3125 = vsel %vm3092, %v2641, 0
      %v3126 = vsel %vm3093, %v2642, 0
      %v3127 = vsel %vm3094, %v2643, 0
      %v3128 = vsel %vm3095, %v2644, 0
      %v3129 = vsel %vm3096, %v2645, 0
      %v3130 = vsel %vm3097, %v2646, 0
      %v3131 = vsel %vm3098, %v2647, 0
      %v3132 = vsel %vm3099, %v2648, 0
      %v3133 = vsel %vm3100, %v2649, 0
      %v3134 = vsel %vm3101, %v2650, 0
      %v3135 = vsel %vm3102, %v2651, 0
      %v3136 = vsel %vm3103, %v2652, 0
      %v3137 = vsel %vm3104, %v2653, 0
      %v3138 = vsel %vm3105, %v2654, 0
      %v3139 = vsel %vm3106, %v2655, 0
      %s3140 = scalar_lea.vmem %s265, 128
      %v3141 = vld [vmem:[%s3140] sm:$0xf]
      %v3142 = vld [vmem:[%s3140 + $0x4] sm:$0xf]
      %v3143 = vld [vmem:[%s3140 + $0x8] sm:$0xf]
      %v3144 = vld [vmem:[%s3140 + $0xc] sm:$0xf]
      %v3145 = vld [vmem:[%s3140 + $0x10] sm:$0xf]
      %v3146 = vld [vmem:[%s3140 + $0x14] sm:$0xf]
      %v3147 = vld [vmem:[%s3140 + $0x18] sm:$0xf]
      %v3148 = vld [vmem:[%s3140 + $0x1c] sm:$0xf]
      %v3149 = vld [vmem:[%s3140 + $0x20] sm:$0xf]
      %v3150 = vld [vmem:[%s3140 + $0x24] sm:$0xf]
      %v3151 = vld [vmem:[%s3140 + $0x28] sm:$0xf]
      %v3152 = vld [vmem:[%s3140 + $0x2c] sm:$0xf]
      %v3153 = vld [vmem:[%s3140 + $0x30] sm:$0xf]
      %v3154 = vld [vmem:[%s3140 + $0x34] sm:$0xf]
      %v3155 = vld [vmem:[%s3140 + $0x38] sm:$0xf]
      %v3156 = vld [vmem:[%s3140 + $0x3c] sm:$0xf]
      %v3190 = vunpack.c.l.b16 %v3107
      %v3191 = vunpack.c.l.b16 %v3108
      %v3192 = vunpack.c.l.b16 %v3109
      %v3193 = vunpack.c.l.b16 %v3110
      %v3194 = vunpack.c.l.b16 %v3111
      %v3195 = vunpack.c.l.b16 %v3112
      %v3196 = vunpack.c.l.b16 %v3113
      %v3197 = vunpack.c.l.b16 %v3114
      %v3198 = vunpack.c.l.b16 %v3115
      %v3199 = vunpack.c.l.b16 %v3116
      %v3200 = vunpack.c.l.b16 %v3117
      %v3201 = vunpack.c.l.b16 %v3118
      %v3202 = vunpack.c.l.b16 %v3119
      %v3203 = vunpack.c.l.b16 %v3120
      %v3204 = vunpack.c.l.b16 %v3121
      %v3205 = vunpack.c.l.b16 %v3122
      %v3206 = vunpack.c.l.b16 %v3123
      %v3207 = vunpack.c.l.b16 %v3124
      %v3208 = vunpack.c.l.b16 %v3125
      %v3209 = vunpack.c.l.b16 %v3126
      %v3210 = vunpack.c.l.b16 %v3127
      %v3211 = vunpack.c.l.b16 %v3128
      %v3212 = vunpack.c.l.b16 %v3129
      %v3213 = vunpack.c.l.b16 %v3130
      %v3214 = vunpack.c.l.b16 %v3131
      %v3215 = vunpack.c.l.b16 %v3132
      %v3216 = vunpack.c.l.b16 %v3133
      %v3217 = vunpack.c.l.b16 %v3134
      %v3218 = vunpack.c.l.b16 %v3135
      %v3219 = vunpack.c.l.b16 %v3136
      %v3220 = vunpack.c.l.b16 %v3137
      %v3221 = vunpack.c.l.b16 %v3138
      %v3222 = vunpack.c.l.b16 %v3139
      %v3223 = vpack.c.b16 %v3191, %v3190
      %v3224 = vpack.c.b16 %v3193, %v3192
      %v3225 = vpack.c.b16 %v3195, %v3194
      %v3226 = vpack.c.b16 %v3197, %v3196
      %v3227 = vpack.c.b16 %v3199, %v3198
      %v3228 = vpack.c.b16 %v3201, %v3200
      %v3229 = vpack.c.b16 %v3203, %v3202
      %v3230 = vpack.c.b16 %v3205, %v3204
      %v3231 = vpack.c.b16 %v3207, %v3206
      %v3232 = vpack.c.b16 %v3209, %v3208
      %v3233 = vpack.c.b16 %v3211, %v3210
      %v3234 = vpack.c.b16 %v3213, %v3212
      %v3235 = vpack.c.b16 %v3215, %v3214
      %v3236 = vpack.c.b16 %v3217, %v3216
      %v3237 = vpack.c.b16 %v3219, %v3218
      %v3238 = vpack.c.b16 %v3221, %v3220
      %v3239 = vpack.c.b16 %v3222, %v3222
      %vm3240 = vsmask.f32 7424
      %v3242 = vshrl.u32 %v3223, 16
      %v3244 = vshll.u32 %v3223, 16
      %v3246 = vrot.slane %v3244, 1
      %v3247 = vor.u32 %v3242, %v3246
      %v3249 = vshll.u32 %v3224, 16
      %v3251 = vrot.slane %v3249, 1
      %v3252 = vsel %vm3240, %v3247, %v3251
      %v3253 = vshrl.u32 %v3224, 16
      %v3255 = vor.u32 %v3253, %v3251
      %v3257 = vshll.u32 %v3225, 16
      %v3259 = vrot.slane %v3257, 1
      %v3260 = vsel %vm3240, %v3255, %v3259
      %v3261 = vshrl.u32 %v3225, 16
      %v3263 = vor.u32 %v3261, %v3259
      %v3265 = vshll.u32 %v3226, 16
      %v3267 = vrot.slane %v3265, 1
      %v3268 = vsel %vm3240, %v3263, %v3267
      %v3269 = vshrl.u32 %v3226, 16
      %v3271 = vor.u32 %v3269, %v3267
      %v3273 = vshll.u32 %v3227, 16
      %v3275 = vrot.slane %v3273, 1
      %v3276 = vsel %vm3240, %v3271, %v3275
      %v3277 = vshrl.u32 %v3227, 16
      %v3279 = vor.u32 %v3277, %v3275
      %v3281 = vshll.u32 %v3228, 16
      %v3283 = vrot.slane %v3281, 1
      %v3284 = vsel %vm3240, %v3279, %v3283
      %v3285 = vshrl.u32 %v3228, 16
      %v3287 = vor.u32 %v3285, %v3283
      %v3289 = vshll.u32 %v3229, 16
      %v3291 = vrot.slane %v3289, 1
      %v3292 = vsel %vm3240, %v3287, %v3291
      %v3293 = vshrl.u32 %v3229, 16
      %v3295 = vor.u32 %v3293, %v3291
      %v3297 = vshll.u32 %v3230, 16
      %v3299 = vrot.slane %v3297, 1
      %v3300 = vsel %vm3240, %v3295, %v3299
      %v3301 = vshrl.u32 %v3230, 16
      %v3303 = vor.u32 %v3301, %v3299
      %v3305 = vshll.u32 %v3231, 16
      %v3307 = vrot.slane %v3305, 1
      %v3308 = vsel %vm3240, %v3303, %v3307
      %v3309 = vshrl.u32 %v3231, 16
      %v3311 = vor.u32 %v3309, %v3307
      %v3313 = vshll.u32 %v3232, 16
      %v3315 = vrot.slane %v3313, 1
      %v3316 = vsel %vm3240, %v3311, %v3315
      %v3317 = vshrl.u32 %v3232, 16
      %v3319 = vor.u32 %v3317, %v3315
      %v3321 = vshll.u32 %v3233, 16
      %v3323 = vrot.slane %v3321, 1
      %v3324 = vsel %vm3240, %v3319, %v3323
      %v3325 = vshrl.u32 %v3233, 16
      %v3327 = vor.u32 %v3325, %v3323
      %v3329 = vshll.u32 %v3234, 16
      %v3331 = vrot.slane %v3329, 1
      %v3332 = vsel %vm3240, %v3327, %v3331
      %v3333 = vshrl.u32 %v3234, 16
      %v3335 = vor.u32 %v3333, %v3331
      %v3337 = vshll.u32 %v3235, 16
      %v3339 = vrot.slane %v3337, 1
      %v3340 = vsel %vm3240, %v3335, %v3339
      %v3341 = vshrl.u32 %v3235, 16
      %v3343 = vor.u32 %v3341, %v3339
      %v3345 = vshll.u32 %v3236, 16
      %v3347 = vrot.slane %v3345, 1
      %v3348 = vsel %vm3240, %v3343, %v3347
      %v3349 = vshrl.u32 %v3236, 16
      %v3351 = vor.u32 %v3349, %v3347
      %v3353 = vshll.u32 %v3237, 16
      %v3355 = vrot.slane %v3353, 1
      %v3356 = vsel %vm3240, %v3351, %v3355
      %v3357 = vshrl.u32 %v3237, 16
      %v3359 = vor.u32 %v3357, %v3355
      %v3361 = vshll.u32 %v3238, 16
      %v3363 = vrot.slane %v3361, 1
      %v3364 = vsel %vm3240, %v3359, %v3363
      %v3365 = vshrl.u32 %v3238, 16
      %v3367 = vor.u32 %v3365, %v3363
      %v3369 = vshll.u32 %v3239, 16
      %v3371 = vrot.slane %v3369, 1
      %v3372 = vsel %vm3240, %v3367, %v3371
      %v3405 = vunpack.c.l.b16 %v3141
      %v3406 = vunpack.c.l.b16 %v3142
      %v3407 = vunpack.c.l.b16 %v3143
      %v3408 = vunpack.c.l.b16 %v3144
      %v3409 = vunpack.c.l.b16 %v3145
      %v3410 = vunpack.c.l.b16 %v3146
      %v3411 = vunpack.c.l.b16 %v3147
      %v3412 = vunpack.c.l.b16 %v3148
      %v3413 = vunpack.c.l.b16 %v3149
      %v3414 = vunpack.c.l.b16 %v3150
      %v3415 = vunpack.c.l.b16 %v3151
      %v3416 = vunpack.c.l.b16 %v3152
      %v3417 = vunpack.c.l.b16 %v3153
      %v3418 = vunpack.c.l.b16 %v3154
      %v3419 = vunpack.c.l.b16 %v3155
      %v3420 = vunpack.c.l.b16 %v3156
      %v3421 = vpack.c.b16 %v3406, %v3405
      %v3422 = vpack.c.b16 %v3408, %v3407
      %v3423 = vpack.c.b16 %v3410, %v3409
      %v3424 = vpack.c.b16 %v3412, %v3411
      %v3425 = vpack.c.b16 %v3414, %v3413
      %v3426 = vpack.c.b16 %v3416, %v3415
      %v3427 = vpack.c.b16 %v3418, %v3417
      %v3428 = vpack.c.b16 %v3420, %v3419
      %3437 = vmatprep.subr.bf16.mxu0 0
      %3438 = vmatpush1.bf16.msra.mxu0 %v3428
      %3439 = vmatprep.subr.bf16.mxu0 0
      %3440 = vmatpush1.bf16.msra.mxu0 %v3427
      %3441 = vmatprep.subr.bf16.mxu0 0
      %3442 = vmatpush1.bf16.msra.mxu0 %v3426
      %3443 = vmatprep.subr.bf16.mxu0 0
      %3444 = vmatpush1.bf16.msra.mxu0 %v3425
      %3445 = vmatprep.subr.bf16.mxu0 0
      %3446 = vmatpush1.bf16.msra.mxu0 %v3424
      %3447 = vmatprep.subr.bf16.mxu0 0
      %3448 = vmatpush1.bf16.msra.mxu0 %v3423
      %3449 = vmatprep.subr.bf16.mxu0 0
      %3450 = vmatpush1.bf16.msra.mxu0 %v3422
      %3451 = vmatprep.subr.bf16.mxu0 0
      %3452 = vmatpush1.bf16.msra.mxu0 %v3421
      %3453 = vmatprep.subr.bf16.mxu0 0
      %3454 = vmatpush2.bf16.msra.mxu0 0
      %3455 = vmatprep.subr.bf16.mxu0 0
      %3456 = vmatpush2.bf16.msra.mxu0 0
      %3457 = vmatprep.subr.bf16.mxu0 0
      %3458 = vmatpush2.bf16.msra.mxu0 0
      %3459 = vmatprep.subr.bf16.mxu0 0
      %3460 = vmatpush2.bf16.msra.mxu0 0
      %3461 = vmatprep.subr.bf16.mxu0 0
      %3462 = vmatpush2.bf16.msra.mxu0 0
      %3463 = vmatprep.subr.bf16.mxu0 0
      %3464 = vmatpush2.bf16.msra.mxu0 0
      %3465 = vmatprep.subr.bf16.mxu0 0
      %3466 = vmatpush2.bf16.msra.mxu0 0
      %3467 = vmatprep.subr.bf16.mxu0 0
      %3468 = vmatpush2.bf16.msra.mxu0 0
      %3469 = vmatprep.mubr.bf16.mxu0 0
      %3470 = vmatmul.mubr.bf16.gmra.mxu0 %v3252
      %v3471 = vpop.f32.mrf.mxu0
      %v3472 = vadd.f32 0.0, %v3471
      %v3473 = vpop.f32.mrf.mxu0
      %v3474 = vpop.f32.mrf.mxu0
      %v3475 = vadd.f32 0.0, %v3474
      %v3476 = vpop.f32.mrf.mxu0
      %3477 = vmatprep.mubr.bf16.mxu0 0
      %3478 = vmatmul.mubr.bf16.gmra.mxu0 %v3260
      %v3479 = vpop.f32.mrf.mxu0
      %v3480 = vadd.f32 0.0, %v3479
      %v3481 = vpop.f32.mrf.mxu0
      %v3482 = vpop.f32.mrf.mxu0
      %v3483 = vadd.f32 0.0, %v3482
      %v3484 = vpop.f32.mrf.mxu0
      %3485 = vmatprep.mubr.bf16.mxu0 0
      %3486 = vmatmul.mubr.bf16.gmra.mxu0 %v3268
      %v3487 = vpop.f32.mrf.mxu0
      %v3488 = vadd.f32 0.0, %v3487
      %v3489 = vpop.f32.mrf.mxu0
      %v3490 = vpop.f32.mrf.mxu0
      %v3491 = vadd.f32 0.0, %v3490
      %v3492 = vpop.f32.mrf.mxu0
      %3493 = vmatprep.mubr.bf16.mxu0 0
      %3494 = vmatmul.mubr.bf16.gmra.mxu0 %v3276
      %v3495 = vpop.f32.mrf.mxu0
      %v3496 = vadd.f32 0.0, %v3495
      %v3497 = vpop.f32.mrf.mxu0
      %v3498 = vpop.f32.mrf.mxu0
      %v3499 = vadd.f32 0.0, %v3498
      %v3500 = vpop.f32.mrf.mxu0
      %3501 = vmatprep.mubr.bf16.mxu0 0
      %3502 = vmatmul.mubr.bf16.gmra.mxu0 %v3284
      %v3503 = vpop.f32.mrf.mxu0
      %v3504 = vadd.f32 0.0, %v3503
      %v3505 = vpop.f32.mrf.mxu0
      %v3506 = vpop.f32.mrf.mxu0
      %v3507 = vadd.f32 0.0, %v3506
      %v3508 = vpop.f32.mrf.mxu0
      %3509 = vmatprep.mubr.bf16.mxu0 0
      %3510 = vmatmul.mubr.bf16.gmra.mxu0 %v3292
      %v3511 = vpop.f32.mrf.mxu0
      %v3512 = vadd.f32 0.0, %v3511
      %v3513 = vpop.f32.mrf.mxu0
      %v3514 = vpop.f32.mrf.mxu0
      %v3515 = vadd.f32 0.0, %v3514
      %v3516 = vpop.f32.mrf.mxu0
      %3517 = vmatprep.mubr.bf16.mxu0 0
      %3518 = vmatmul.mubr.bf16.gmra.mxu0 %v3300
      %v3519 = vpop.f32.mrf.mxu0
      %v3520 = vadd.f32 0.0, %v3519
      %v3521 = vpop.f32.mrf.mxu0
      %v3522 = vpop.f32.mrf.mxu0
      %v3523 = vadd.f32 0.0, %v3522
      %v3524 = vpop.f32.mrf.mxu0
      %3525 = vmatprep.mubr.bf16.mxu0 0
      %3526 = vmatmul.mubr.bf16.gmra.mxu0 %v3308
      %v3527 = vpop.f32.mrf.mxu0
      %v3528 = vadd.f32 0.0, %v3527
      %v3529 = vpop.f32.mrf.mxu0
      %v3530 = vpop.f32.mrf.mxu0
      %v3531 = vadd.f32 0.0, %v3530
      %v3532 = vpop.f32.mrf.mxu0
      %3533 = vmatprep.mubr.bf16.mxu0 0
      %3534 = vmatmul.mubr.bf16.gmra.mxu0 %v3316
      %v3535 = vpop.f32.mrf.mxu0
      %v3536 = vadd.f32 0.0, %v3535
      %v3537 = vpop.f32.mrf.mxu0
      %v3538 = vpop.f32.mrf.mxu0
      %v3539 = vadd.f32 0.0, %v3538
      %v3540 = vpop.f32.mrf.mxu0
      %3541 = vmatprep.mubr.bf16.mxu0 0
      %3542 = vmatmul.mubr.bf16.gmra.mxu0 %v3324
      %v3543 = vpop.f32.mrf.mxu0
      %v3544 = vadd.f32 0.0, %v3543
      %v3545 = vpop.f32.mrf.mxu0
      %v3546 = vpop.f32.mrf.mxu0
      %v3547 = vadd.f32 0.0, %v3546
      %v3548 = vpop.f32.mrf.mxu0
      %3549 = vmatprep.mubr.bf16.mxu0 0
      %3550 = vmatmul.mubr.bf16.gmra.mxu0 %v3332
      %v3551 = vpop.f32.mrf.mxu0
      %v3552 = vadd.f32 0.0, %v3551
      %v3553 = vpop.f32.mrf.mxu0
      %v3554 = vpop.f32.mrf.mxu0
      %v3555 = vadd.f32 0.0, %v3554
      %v3556 = vpop.f32.mrf.mxu0
      %3557 = vmatprep.mubr.bf16.mxu0 0
      %3558 = vmatmul.mubr.bf16.gmra.mxu0 %v3340
      %v3559 = vpop.f32.mrf.mxu0
      %v3560 = vadd.f32 0.0, %v3559
      %v3561 = vpop.f32.mrf.mxu0
      %v3562 = vpop.f32.mrf.mxu0
      %v3563 = vadd.f32 0.0, %v3562
      %v3564 = vpop.f32.mrf.mxu0
      %3565 = vmatprep.mubr.bf16.mxu0 0
      %3566 = vmatmul.mubr.bf16.gmra.mxu0 %v3348
      %v3567 = vpop.f32.mrf.mxu0
      %v3568 = vadd.f32 0.0, %v3567
      %v3569 = vpop.f32.mrf.mxu0
      %v3570 = vpop.f32.mrf.mxu0
      %v3571 = vadd.f32 0.0, %v3570
      %v3572 = vpop.f32.mrf.mxu0
      %3573 = vmatprep.mubr.bf16.mxu0 0
      %3574 = vmatmul.mubr.bf16.gmra.mxu0 %v3356
      %v3575 = vpop.f32.mrf.mxu0
      %v3576 = vadd.f32 0.0, %v3575
      %v3577 = vpop.f32.mrf.mxu0
      %v3578 = vpop.f32.mrf.mxu0
      %v3579 = vadd.f32 0.0, %v3578
      %v3580 = vpop.f32.mrf.mxu0
      %3581 = vmatprep.mubr.bf16.mxu0 0
      %3582 = vmatmul.mubr.bf16.gmra.mxu0 %v3364
      %v3583 = vpop.f32.mrf.mxu0
      %v3584 = vadd.f32 0.0, %v3583
      %v3585 = vpop.f32.mrf.mxu0
      %v3586 = vpop.f32.mrf.mxu0
      %v3587 = vadd.f32 0.0, %v3586
      %v3588 = vpop.f32.mrf.mxu0
      %3589 = vmatprep.mubr.bf16.mxu0 0
      %3590 = vmatmul.mubr.bf16.gmra.mxu0 %v3372
      %v3591 = vpop.f32.mrf.mxu0
      %v3592 = vadd.f32 0.0, %v3591
      %v3593 = vpop.f32.mrf.mxu0
      %v3594 = vpop.f32.mrf.mxu0
      %v3595 = vadd.f32 0.0, %v3594
      %v3596 = vpop.f32.mrf.mxu0
      %3597 = vdwg.mxu0
      %v3598 = vld [vmem:[#allocation3] sm:$0xff]
      %v3599 = vld [vmem:[#allocation3 + $0x8] sm:$0xff]
      %v3600 = vld [vmem:[#allocation3 + $0x10] sm:$0xff]
      %v3601 = vld [vmem:[#allocation3 + $0x18] sm:$0xff]
      %v3602 = vld [vmem:[#allocation3 + $0x20] sm:$0xff]
      %v3603 = vld [vmem:[#allocation3 + $0x28] sm:$0xff]
      %v3604 = vld [vmem:[#allocation3 + $0x30] sm:$0xff]
      %v3605 = vld [vmem:[#allocation3 + $0x38] sm:$0xff]
      %v3606 = vld [vmem:[#allocation3 + $0x40] sm:$0xff]
      %v3607 = vld [vmem:[#allocation3 + $0x48] sm:$0xff]
      %v3608 = vld [vmem:[#allocation3 + $0x50] sm:$0xff]
      %v3609 = vld [vmem:[#allocation3 + $0x58] sm:$0xff]
      %v3610 = vld [vmem:[#allocation3 + $0x60] sm:$0xff]
      %v3611 = vld [vmem:[#allocation3 + $0x68] sm:$0xff]
      %v3612 = vld [vmem:[#allocation3 + $0x70] sm:$0xff]
      %v3613 = vld [vmem:[#allocation3 + $0x78] sm:$0xff]
      %v3614 = vld [vmem:[#allocation3 + $0x80] sm:$0xff]
      %v3615 = vld [vmem:[#allocation3 + $0x88] sm:$0xff]
      %v3616 = vld [vmem:[#allocation3 + $0x90] sm:$0xff]
      %v3617 = vld [vmem:[#allocation3 + $0x98] sm:$0xff]
      %v3618 = vld [vmem:[#allocation3 + $0xa0] sm:$0xff]
      %v3619 = vld [vmem:[#allocation3 + $0xa8] sm:$0xff]
      %v3620 = vld [vmem:[#allocation3 + $0xb0] sm:$0xff]
      %v3621 = vld [vmem:[#allocation3 + $0xb8] sm:$0xff]
      %v3622 = vld [vmem:[#allocation3 + $0xc0] sm:$0xff]
      %v3623 = vld [vmem:[#allocation3 + $0xc8] sm:$0xff]
      %v3624 = vld [vmem:[#allocation3 + $0xd0] sm:$0xff]
      %v3625 = vld [vmem:[#allocation3 + $0xd8] sm:$0xff]
      %v3626 = vld [vmem:[#allocation3 + $0xe0] sm:$0xff]
      %v3627 = vld [vmem:[#allocation3 + $0xe8] sm:$0xff]
      %v3628 = vld [vmem:[#allocation3 + $0xf0] sm:$0xff]
      %v3629 = vld [vmem:[#allocation3 + $0xf8] sm:$0xff]
      %v3630 = vadd.f32 %v3598, %v3472
      %v3631 = vadd.f32 %v3599, %v3475
      %v3632 = vadd.f32 %v3600, %v3480
      %v3633 = vadd.f32 %v3601, %v3483
      %v3634 = vadd.f32 %v3602, %v3488
      %v3635 = vadd.f32 %v3603, %v3491
      %v3636 = vadd.f32 %v3604, %v3496
      %v3637 = vadd.f32 %v3605, %v3499
      %v3638 = vadd.f32 %v3606, %v3504
      %v3639 = vadd.f32 %v3607, %v3507
      %v3640 = vadd.f32 %v3608, %v3512
      %v3641 = vadd.f32 %v3609, %v3515
      %v3642 = vadd.f32 %v3610, %v3520
      %v3643 = vadd.f32 %v3611, %v3523
      %v3644 = vadd.f32 %v3612, %v3528
      %v3645 = vadd.f32 %v3613, %v3531
      %v3646 = vadd.f32 %v3614, %v3536
      %v3647 = vadd.f32 %v3615, %v3539
      %v3648 = vadd.f32 %v3616, %v3544
      %v3649 = vadd.f32 %v3617, %v3547
      %v3650 = vadd.f32 %v3618, %v3552
      %v3651 = vadd.f32 %v3619, %v3555
      %v3652 = vadd.f32 %v3620, %v3560
      %v3653 = vadd.f32 %v3621, %v3563
      %v3654 = vadd.f32 %v3622, %v3568
      %v3655 = vadd.f32 %v3623, %v3571
      %v3656 = vadd.f32 %v3624, %v3576
      %v3657 = vadd.f32 %v3625, %v3579
      %v3658 = vadd.f32 %v3626, %v3584
      %v3659 = vadd.f32 %v3627, %v3587
      %v3660 = vadd.f32 %v3628, %v3592
      %v3661 = vadd.f32 %v3629, %v3595
      %3662 = vst [vmem:[#allocation3] sm:$0xff] %v3630
      %3663 = vst [vmem:[#allocation3 + $0x8] sm:$0xff] %v3631
      %3664 = vst [vmem:[#allocation3 + $0x10] sm:$0xff] %v3632
      %3665 = vst [vmem:[#allocation3 + $0x18] sm:$0xff] %v3633
      %3666 = vst [vmem:[#allocation3 + $0x20] sm:$0xff] %v3634
      %3667 = vst [vmem:[#allocation3 + $0x28] sm:$0xff] %v3635
      %3668 = vst [vmem:[#allocation3 + $0x30] sm:$0xff] %v3636
      %3669 = vst [vmem:[#allocation3 + $0x38] sm:$0xff] %v3637
      %3670 = vst [vmem:[#allocation3 + $0x40] sm:$0xff] %v3638
      %3671 = vst [vmem:[#allocation3 + $0x48] sm:$0xff] %v3639
      %3672 = vst [vmem:[#allocation3 + $0x50] sm:$0xff] %v3640
      %3673 = vst [vmem:[#allocation3 + $0x58] sm:$0xff] %v3641
      %3674 = vst [vmem:[#allocation3 + $0x60] sm:$0xff] %v3642
      %3675 = vst [vmem:[#allocation3 + $0x68] sm:$0xff] %v3643
      %3676 = vst [vmem:[#allocation3 + $0x70] sm:$0xff] %v3644
      %3677 = vst [vmem:[#allocation3 + $0x78] sm:$0xff] %v3645
      %3678 = vst [vmem:[#allocation3 + $0x80] sm:$0xff] %v3646
      %3679 = vst [vmem:[#allocation3 + $0x88] sm:$0xff] %v3647
      %3680 = vst [vmem:[#allocation3 + $0x90] sm:$0xff] %v3648
      %3681 = vst [vmem:[#allocation3 + $0x98] sm:$0xff] %v3649
      %3682 = vst [vmem:[#allocation3 + $0xa0] sm:$0xff] %v3650
      %3683 = vst [vmem:[#allocation3 + $0xa8] sm:$0xff] %v3651
      %3684 = vst [vmem:[#allocation3 + $0xb0] sm:$0xff] %v3652
      %3685 = vst [vmem:[#allocation3 + $0xb8] sm:$0xff] %v3653
      %3686 = vst [vmem:[#allocation3 + $0xc0] sm:$0xff] %v3654
      %3687 = vst [vmem:[#allocation3 + $0xc8] sm:$0xff] %v3655
      %3688 = vst [vmem:[#allocation3 + $0xd0] sm:$0xff] %v3656
      %3689 = vst [vmem:[#allocation3 + $0xd8] sm:$0xff] %v3657
      %3690 = vst [vmem:[#allocation3 + $0xe0] sm:$0xff] %v3658
      %3691 = vst [vmem:[#allocation3 + $0xe8] sm:$0xff] %v3659
      %3692 = vst [vmem:[#allocation3 + $0xf0] sm:$0xff] %v3660
      %3693 = vst [vmem:[#allocation3 + $0xf8] sm:$0xff] %v3661
      %v3694 = vld [vmem:[#allocation2 + $0xc] sm:$0x8]
      %v3695 = vld [vmem:[#allocation2 + $0x10] sm:$0xf]
      %v3696 = vld [vmem:[#allocation2 + $0x14] sm:$0xf]
      %v3697 = vld [vmem:[#allocation2 + $0x18] sm:$0xf]
      %v3698 = vld [vmem:[#allocation2 + $0x1c] sm:$0xf]
      %v3699 = vld [vmem:[#allocation2 + $0x20] sm:$0xf]
      %v3700 = vld [vmem:[#allocation2 + $0x24] sm:$0xf]
      %v3701 = vld [vmem:[#allocation2 + $0x28] sm:$0xf]
      %v3702 = vld [vmem:[#allocation2 + $0x2c] sm:$0xf]
      %v3703 = vld [vmem:[#allocation2 + $0x30] sm:$0xf]
      %v3704 = vld [vmem:[#allocation2 + $0x34] sm:$0xf]
      %v3705 = vld [vmem:[#allocation2 + $0x38] sm:$0xf]
      %v3706 = vld [vmem:[#allocation2 + $0x3c] sm:$0xf]
      %v3707 = vld [vmem:[#allocation2 + $0x40] sm:$0xf]
      %v3708 = vld [vmem:[#allocation2 + $0x44] sm:$0xf]
      %v3709 = vld [vmem:[#allocation2 + $0x48] sm:$0xf]
      %v3710 = vld [vmem:[#allocation2 + $0x4c] sm:$0xf]
      %v3711 = vld [vmem:[#allocation2 + $0x50] sm:$0xf]
      %v3712 = vld [vmem:[#allocation2 + $0x54] sm:$0xf]
      %v3713 = vld [vmem:[#allocation2 + $0x58] sm:$0xf]
      %v3714 = vld [vmem:[#allocation2 + $0x5c] sm:$0xf]
      %v3715 = vld [vmem:[#allocation2 + $0x60] sm:$0xf]
      %v3716 = vld [vmem:[#allocation2 + $0x64] sm:$0xf]
      %v3717 = vld [vmem:[#allocation2 + $0x68] sm:$0xf]
      %v3718 = vld [vmem:[#allocation2 + $0x6c] sm:$0xf]
      %v3719 = vld [vmem:[#allocation2 + $0x70] sm:$0xf]
      %v3720 = vld [vmem:[#allocation2 + $0x74] sm:$0xf]
      %v3721 = vld [vmem:[#allocation2 + $0x78] sm:$0xf]
      %v3722 = vld [vmem:[#allocation2 + $0x7c] sm:$0xf]
      %v3723 = vld [vmem:[#allocation2 + $0x80] sm:$0xf]
      %v3724 = vld [vmem:[#allocation2 + $0x84] sm:$0xf]
      %v3725 = vld [vmem:[#allocation2 + $0x88] sm:$0xf]
      %v3726 = vld [vmem:[#allocation2 + $0x8c] sm:$0xf]
      %v3727 = vsel %vm1598, %v3694, 0
      %v3728 = vsel %vm1599, %v3695, 0
      %v3729 = vsel %vm1600, %v3696, 0
      %v3730 = vsel %vm1601, %v3697, 0
      %v3731 = vsel %vm1602, %v3698, 0
      %v3732 = vsel %vm1603, %v3699, 0
      %v3733 = vsel %vm1604, %v3700, 0
      %v3734 = vsel %vm1605, %v3701, 0
      %v3735 = vsel %vm1606, %v3702, 0
      %v3736 = vsel %vm1607, %v3703, 0
      %v3737 = vsel %vm1608, %v3704, 0
      %v3738 = vsel %vm1609, %v3705, 0
      %v3739 = vsel %vm1610, %v3706, 0
      %v3740 = vsel %vm1611, %v3707, 0
      %v3741 = vsel %vm1612, %v3708, 0
      %v3742 = vsel %vm1613, %v3709, 0
      %v3743 = vsel %vm1614, %v3710, 0
      %v3744 = vsel %vm1615, %v3711, 0
      %v3745 = vsel %vm1616, %v3712, 0
      %v3746 = vsel %vm1617, %v3713, 0
      %v3747 = vsel %vm1618, %v3714, 0
      %v3748 = vsel %vm1619, %v3715, 0
      %v3749 = vsel %vm1620, %v3716, 0
      %v3750 = vsel %vm1621, %v3717, 0
      %v3751 = vsel %vm1622, %v3718, 0
      %v3752 = vsel %vm1623, %v3719, 0
      %v3753 = vsel %vm1624, %v3720, 0
      %v3754 = vsel %vm1625, %v3721, 0
      %v3755 = vsel %vm1626, %v3722, 0
      %v3756 = vsel %vm1627, %v3723, 0
      %v3757 = vsel %vm1628, %v3724, 0
      %v3758 = vsel %vm1629, %v3725, 0
      %v3759 = vsel %vm1630, %v3726, 0
      %s3760 = scalar_lea.vmem %s265, 192
      %v3761 = vld [vmem:[%s3760] sm:$0xf]
      %v3762 = vld [vmem:[%s3760 + $0x4] sm:$0xf]
      %v3763 = vld [vmem:[%s3760 + $0x8] sm:$0xf]
      %v3764 = vld [vmem:[%s3760 + $0xc] sm:$0xf]
      %v3765 = vld [vmem:[%s3760 + $0x10] sm:$0xf]
      %v3766 = vld [vmem:[%s3760 + $0x14] sm:$0xf]
      %v3767 = vld [vmem:[%s3760 + $0x18] sm:$0xf]
      %v3768 = vld [vmem:[%s3760 + $0x1c] sm:$0xf]
      %v3769 = vld [vmem:[%s3760 + $0x20] sm:$0xf]
      %v3770 = vld [vmem:[%s3760 + $0x24] sm:$0xf]
      %v3771 = vld [vmem:[%s3760 + $0x28] sm:$0xf]
      %v3772 = vld [vmem:[%s3760 + $0x2c] sm:$0xf]
      %v3773 = vld [vmem:[%s3760 + $0x30] sm:$0xf]
      %v3774 = vld [vmem:[%s3760 + $0x34] sm:$0xf]
      %v3775 = vld [vmem:[%s3760 + $0x38] sm:$0xf]
      %v3776 = vld [vmem:[%s3760 + $0x3c] sm:$0xf]
      %v3810 = vunpack.c.l.b16 %v3727
      %v3811 = vunpack.c.l.b16 %v3728
      %v3812 = vunpack.c.l.b16 %v3729
      %v3813 = vunpack.c.l.b16 %v3730
      %v3814 = vunpack.c.l.b16 %v3731
      %v3815 = vunpack.c.l.b16 %v3732
      %v3816 = vunpack.c.l.b16 %v3733
      %v3817 = vunpack.c.l.b16 %v3734
      %v3818 = vunpack.c.l.b16 %v3735
      %v3819 = vunpack.c.l.b16 %v3736
      %v3820 = vunpack.c.l.b16 %v3737
      %v3821 = vunpack.c.l.b16 %v3738
      %v3822 = vunpack.c.l.b16 %v3739
      %v3823 = vunpack.c.l.b16 %v3740
      %v3824 = vunpack.c.l.b16 %v3741
      %v3825 = vunpack.c.l.b16 %v3742
      %v3826 = vunpack.c.l.b16 %v3743
      %v3827 = vunpack.c.l.b16 %v3744
      %v3828 = vunpack.c.l.b16 %v3745
      %v3829 = vunpack.c.l.b16 %v3746
      %v3830 = vunpack.c.l.b16 %v3747
      %v3831 = vunpack.c.l.b16 %v3748
      %v3832 = vunpack.c.l.b16 %v3749
      %v3833 = vunpack.c.l.b16 %v3750
      %v3834 = vunpack.c.l.b16 %v3751
      %v3835 = vunpack.c.l.b16 %v3752
      %v3836 = vunpack.c.l.b16 %v3753
      %v3837 = vunpack.c.l.b16 %v3754
      %v3838 = vunpack.c.l.b16 %v3755
      %v3839 = vunpack.c.l.b16 %v3756
      %v3840 = vunpack.c.l.b16 %v3757
      %v3841 = vunpack.c.l.b16 %v3758
      %v3842 = vunpack.c.l.b16 %v3759
      %v3843 = vpack.c.b16 %v3811, %v3810
      %v3844 = vpack.c.b16 %v3813, %v3812
      %v3845 = vpack.c.b16 %v3815, %v3814
      %v3846 = vpack.c.b16 %v3817, %v3816
      %v3847 = vpack.c.b16 %v3819, %v3818
      %v3848 = vpack.c.b16 %v3821, %v3820
      %v3849 = vpack.c.b16 %v3823, %v3822
      %v3850 = vpack.c.b16 %v3825, %v3824
      %v3851 = vpack.c.b16 %v3827, %v3826
      %v3852 = vpack.c.b16 %v3829, %v3828
      %v3853 = vpack.c.b16 %v3831, %v3830
      %v3854 = vpack.c.b16 %v3833, %v3832
      %v3855 = vpack.c.b16 %v3835, %v3834
      %v3856 = vpack.c.b16 %v3837, %v3836
      %v3857 = vpack.c.b16 %v3839, %v3838
      %v3858 = vpack.c.b16 %v3841, %v3840
      %v3859 = vpack.c.b16 %v3842, %v3842
      %v3861 = vshrl.u32 %v3843, 16
      %v3863 = vrot.slane %v3861, 3
      %v3864 = vshll.u32 %v3843, 16
      %v3866 = vrot.slane %v3864, 4
      %v3867 = vor.u32 %v3863, %v3866
      %v3869 = vshrl.u32 %v3844, 16
      %v3871 = vrot.slane %v3869, 3
      %v3872 = vshll.u32 %v3844, 16
      %v3874 = vrot.slane %v3872, 4
      %v3875 = vor.u32 %v3871, %v3874
      %v3876 = vsel %vm1763, %v3867, %v3875
      %v3878 = vshrl.u32 %v3845, 16
      %v3880 = vrot.slane %v3878, 3
      %v3881 = vshll.u32 %v3845, 16
      %v3883 = vrot.slane %v3881, 4
      %v3884 = vor.u32 %v3880, %v3883
      %v3885 = vsel %vm1763, %v3875, %v3884
      %v3887 = vshrl.u32 %v3846, 16
      %v3889 = vrot.slane %v3887, 3
      %v3890 = vshll.u32 %v3846, 16
      %v3892 = vrot.slane %v3890, 4
      %v3893 = vor.u32 %v3889, %v3892
      %v3894 = vsel %vm1763, %v3884, %v3893
      %v3896 = vshrl.u32 %v3847, 16
      %v3898 = vrot.slane %v3896, 3
      %v3899 = vshll.u32 %v3847, 16
      %v3901 = vrot.slane %v3899, 4
      %v3902 = vor.u32 %v3898, %v3901
      %v3903 = vsel %vm1763, %v3893, %v3902
      %v3905 = vshrl.u32 %v3848, 16
      %v3907 = vrot.slane %v3905, 3
      %v3908 = vshll.u32 %v3848, 16
      %v3910 = vrot.slane %v3908, 4
      %v3911 = vor.u32 %v3907, %v3910
      %v3912 = vsel %vm1763, %v3902, %v3911
      %v3914 = vshrl.u32 %v3849, 16
      %v3916 = vrot.slane %v3914, 3
      %v3917 = vshll.u32 %v3849, 16
      %v3919 = vrot.slane %v3917, 4
      %v3920 = vor.u32 %v3916, %v3919
      %v3921 = vsel %vm1763, %v3911, %v3920
      %v3923 = vshrl.u32 %v3850, 16
      %v3925 = vrot.slane %v3923, 3
      %v3926 = vshll.u32 %v3850, 16
      %v3928 = vrot.slane %v3926, 4
      %v3929 = vor.u32 %v3925, %v3928
      %v3930 = vsel %vm1763, %v3920, %v3929
      %v3932 = vshrl.u32 %v3851, 16
      %v3934 = vrot.slane %v3932, 3
      %v3935 = vshll.u32 %v3851, 16
      %v3937 = vrot.slane %v3935, 4
      %v3938 = vor.u32 %v3934, %v3937
      %v3939 = vsel %vm1763, %v3929, %v3938
      %v3941 = vshrl.u32 %v3852, 16
      %v3943 = vrot.slane %v3941, 3
      %v3944 = vshll.u32 %v3852, 16
      %v3946 = vrot.slane %v3944, 4
      %v3947 = vor.u32 %v3943, %v3946
      %v3948 = vsel %vm1763, %v3938, %v3947
      %v3950 = vshrl.u32 %v3853, 16
      %v3952 = vrot.slane %v3950, 3
      %v3953 = vshll.u32 %v3853, 16
      %v3955 = vrot.slane %v3953, 4
      %v3956 = vor.u32 %v3952, %v3955
      %v3957 = vsel %vm1763, %v3947, %v3956
      %v3959 = vshrl.u32 %v3854, 16
      %v3961 = vrot.slane %v3959, 3
      %v3962 = vshll.u32 %v3854, 16
      %v3964 = vrot.slane %v3962, 4
      %v3965 = vor.u32 %v3961, %v3964
      %v3966 = vsel %vm1763, %v3956, %v3965
      %v3968 = vshrl.u32 %v3855, 16
      %v3970 = vrot.slane %v3968, 3
      %v3971 = vshll.u32 %v3855, 16
      %v3973 = vrot.slane %v3971, 4
      %v3974 = vor.u32 %v3970, %v3973
      %v3975 = vsel %vm1763, %v3965, %v3974
      %v3977 = vshrl.u32 %v3856, 16
      %v3979 = vrot.slane %v3977, 3
      %v3980 = vshll.u32 %v3856, 16
      %v3982 = vrot.slane %v3980, 4
      %v3983 = vor.u32 %v3979, %v3982
      %v3984 = vsel %vm1763, %v3974, %v3983
      %v3986 = vshrl.u32 %v3857, 16
      %v3988 = vrot.slane %v3986, 3
      %v3989 = vshll.u32 %v3857, 16
      %v3991 = vrot.slane %v3989, 4
      %v3992 = vor.u32 %v3988, %v3991
      %v3993 = vsel %vm1763, %v3983, %v3992
      %v3995 = vshrl.u32 %v3858, 16
      %v3997 = vrot.slane %v3995, 3
      %v3998 = vshll.u32 %v3858, 16
      %v4000 = vrot.slane %v3998, 4
      %v4001 = vor.u32 %v3997, %v4000
      %v4002 = vsel %vm1763, %v3992, %v4001
      %v4004 = vshrl.u32 %v3859, 16
      %v4006 = vrot.slane %v4004, 3
      %v4007 = vshll.u32 %v3859, 16
      %v4009 = vrot.slane %v4007, 4
      %v4010 = vor.u32 %v4006, %v4009
      %v4011 = vsel %vm1763, %v4001, %v4010
      %v4044 = vunpack.c.l.b16 %v3761
      %v4045 = vunpack.c.l.b16 %v3762
      %v4046 = vunpack.c.l.b16 %v3763
      %v4047 = vunpack.c.l.b16 %v3764
      %v4048 = vunpack.c.l.b16 %v3765
      %v4049 = vunpack.c.l.b16 %v3766
      %v4050 = vunpack.c.l.b16 %v3767
      %v4051 = vunpack.c.l.b16 %v3768
      %v4052 = vunpack.c.l.b16 %v3769
      %v4053 = vunpack.c.l.b16 %v3770
      %v4054 = vunpack.c.l.b16 %v3771
      %v4055 = vunpack.c.l.b16 %v3772
      %v4056 = vunpack.c.l.b16 %v3773
      %v4057 = vunpack.c.l.b16 %v3774
      %v4058 = vunpack.c.l.b16 %v3775
      %v4059 = vunpack.c.l.b16 %v3776
      %v4060 = vpack.c.b16 %v4045, %v4044
      %v4061 = vpack.c.b16 %v4047, %v4046
      %v4062 = vpack.c.b16 %v4049, %v4048
      %v4063 = vpack.c.b16 %v4051, %v4050
      %v4064 = vpack.c.b16 %v4053, %v4052
      %v4065 = vpack.c.b16 %v4055, %v4054
      %v4066 = vpack.c.b16 %v4057, %v4056
      %v4067 = vpack.c.b16 %v4059, %v4058
      %4076 = vmatprep.subr.bf16.mxu0 0
      %4077 = vmatpush1.bf16.msra.mxu0 %v4067
      %4078 = vmatprep.subr.bf16.mxu0 0
      %4079 = vmatpush1.bf16.msra.mxu0 %v4066
      %4080 = vmatprep.subr.bf16.mxu0 0
      %4081 = vmatpush1.bf16.msra.mxu0 %v4065
      %4082 = vmatprep.subr.bf16.mxu0 0
      %4083 = vmatpush1.bf16.msra.mxu0 %v4064
      %4084 = vmatprep.subr.bf16.mxu0 0
      %4085 = vmatpush1.bf16.msra.mxu0 %v4063
      %4086 = vmatprep.subr.bf16.mxu0 0
      %4087 = vmatpush1.bf16.msra.mxu0 %v4062
      %4088 = vmatprep.subr.bf16.mxu0 0
      %4089 = vmatpush1.bf16.msra.mxu0 %v4061
      %4090 = vmatprep.subr.bf16.mxu0 0
      %4091 = vmatpush1.bf16.msra.mxu0 %v4060
      %4092 = vmatprep.subr.bf16.mxu0 0
      %4093 = vmatpush2.bf16.msra.mxu0 0
      %4094 = vmatprep.subr.bf16.mxu0 0
      %4095 = vmatpush2.bf16.msra.mxu0 0
      %4096 = vmatprep.subr.bf16.mxu0 0
      %4097 = vmatpush2.bf16.msra.mxu0 0
      %4098 = vmatprep.subr.bf16.mxu0 0
      %4099 = vmatpush2.bf16.msra.mxu0 0
      %4100 = vmatprep.subr.bf16.mxu0 0
      %4101 = vmatpush2.bf16.msra.mxu0 0
      %4102 = vmatprep.subr.bf16.mxu0 0
      %4103 = vmatpush2.bf16.msra.mxu0 0
      %4104 = vmatprep.subr.bf16.mxu0 0
      %4105 = vmatpush2.bf16.msra.mxu0 0
      %4106 = vmatprep.subr.bf16.mxu0 0
      %4107 = vmatpush2.bf16.msra.mxu0 0
      %4108 = vmatprep.mubr.bf16.mxu0 0
      %4109 = vmatmul.mubr.bf16.gmra.mxu0 %v3876
      %v4110 = vpop.f32.mrf.mxu0
      %v4111 = vadd.f32 0.0, %v4110
      %v4112 = vpop.f32.mrf.mxu0
      %v4113 = vpop.f32.mrf.mxu0
      %v4114 = vadd.f32 0.0, %v4113
      %v4115 = vpop.f32.mrf.mxu0
      %4116 = vmatprep.mubr.bf16.mxu0 0
      %4117 = vmatmul.mubr.bf16.gmra.mxu0 %v3885
      %v4118 = vpop.f32.mrf.mxu0
      %v4119 = vadd.f32 0.0, %v4118
      %v4120 = vpop.f32.mrf.mxu0
      %v4121 = vpop.f32.mrf.mxu0
      %v4122 = vadd.f32 0.0, %v4121
      %v4123 = vpop.f32.mrf.mxu0
      %4124 = vmatprep.mubr.bf16.mxu0 0
      %4125 = vmatmul.mubr.bf16.gmra.mxu0 %v3894
      %v4126 = vpop.f32.mrf.mxu0
      %v4127 = vadd.f32 0.0, %v4126
      %v4128 = vpop.f32.mrf.mxu0
      %v4129 = vpop.f32.mrf.mxu0
      %v4130 = vadd.f32 0.0, %v4129
      %v4131 = vpop.f32.mrf.mxu0
      %4132 = vmatprep.mubr.bf16.mxu0 0
      %4133 = vmatmul.mubr.bf16.gmra.mxu0 %v3903
      %v4134 = vpop.f32.mrf.mxu0
      %v4135 = vadd.f32 0.0, %v4134
      %v4136 = vpop.f32.mrf.mxu0
      %v4137 = vpop.f32.mrf.mxu0
      %v4138 = vadd.f32 0.0, %v4137
      %v4139 = vpop.f32.mrf.mxu0
      %4140 = vmatprep.mubr.bf16.mxu0 0
      %4141 = vmatmul.mubr.bf16.gmra.mxu0 %v3912
      %v4142 = vpop.f32.mrf.mxu0
      %v4143 = vadd.f32 0.0, %v4142
      %v4144 = vpop.f32.mrf.mxu0
      %v4145 = vpop.f32.mrf.mxu0
      %v4146 = vadd.f32 0.0, %v4145
      %v4147 = vpop.f32.mrf.mxu0
      %4148 = vmatprep.mubr.bf16.mxu0 0
      %4149 = vmatmul.mubr.bf16.gmra.mxu0 %v3921
      %v4150 = vpop.f32.mrf.mxu0
      %v4151 = vadd.f32 0.0, %v4150
      %v4152 = vpop.f32.mrf.mxu0
      %v4153 = vpop.f32.mrf.mxu0
      %v4154 = vadd.f32 0.0, %v4153
      %v4155 = vpop.f32.mrf.mxu0
      %4156 = vmatprep.mubr.bf16.mxu0 0
      %4157 = vmatmul.mubr.bf16.gmra.mxu0 %v3930
      %v4158 = vpop.f32.mrf.mxu0
      %v4159 = vadd.f32 0.0, %v4158
      %v4160 = vpop.f32.mrf.mxu0
      %v4161 = vpop.f32.mrf.mxu0
      %v4162 = vadd.f32 0.0, %v4161
      %v4163 = vpop.f32.mrf.mxu0
      %4164 = vmatprep.mubr.bf16.mxu0 0
      %4165 = vmatmul.mubr.bf16.gmra.mxu0 %v3939
      %v4166 = vpop.f32.mrf.mxu0
      %v4167 = vadd.f32 0.0, %v4166
      %v4168 = vpop.f32.mrf.mxu0
      %v4169 = vpop.f32.mrf.mxu0
      %v4170 = vadd.f32 0.0, %v4169
      %v4171 = vpop.f32.mrf.mxu0
      %4172 = vmatprep.mubr.bf16.mxu0 0
      %4173 = vmatmul.mubr.bf16.gmra.mxu0 %v3948
      %v4174 = vpop.f32.mrf.mxu0
      %v4175 = vadd.f32 0.0, %v4174
      %v4176 = vpop.f32.mrf.mxu0
      %v4177 = vpop.f32.mrf.mxu0
      %v4178 = vadd.f32 0.0, %v4177
      %v4179 = vpop.f32.mrf.mxu0
      %4180 = vmatprep.mubr.bf16.mxu0 0
      %4181 = vmatmul.mubr.bf16.gmra.mxu0 %v3957
      %v4182 = vpop.f32.mrf.mxu0
      %v4183 = vadd.f32 0.0, %v4182
      %v4184 = vpop.f32.mrf.mxu0
      %v4185 = vpop.f32.mrf.mxu0
      %v4186 = vadd.f32 0.0, %v4185
      %v4187 = vpop.f32.mrf.mxu0
      %4188 = vmatprep.mubr.bf16.mxu0 0
      %4189 = vmatmul.mubr.bf16.gmra.mxu0 %v3966
      %v4190 = vpop.f32.mrf.mxu0
      %v4191 = vadd.f32 0.0, %v4190
      %v4192 = vpop.f32.mrf.mxu0
      %v4193 = vpop.f32.mrf.mxu0
      %v4194 = vadd.f32 0.0, %v4193
      %v4195 = vpop.f32.mrf.mxu0
      %4196 = vmatprep.mubr.bf16.mxu0 0
      %4197 = vmatmul.mubr.bf16.gmra.mxu0 %v3975
      %v4198 = vpop.f32.mrf.mxu0
      %v4199 = vadd.f32 0.0, %v4198
      %v4200 = vpop.f32.mrf.mxu0
      %v4201 = vpop.f32.mrf.mxu0
      %v4202 = vadd.f32 0.0, %v4201
      %v4203 = vpop.f32.mrf.mxu0
      %4204 = vmatprep.mubr.bf16.mxu0 0
      %4205 = vmatmul.mubr.bf16.gmra.mxu0 %v3984
      %v4206 = vpop.f32.mrf.mxu0
      %v4207 = vadd.f32 0.0, %v4206
      %v4208 = vpop.f32.mrf.mxu0
      %v4209 = vpop.f32.mrf.mxu0
      %v4210 = vadd.f32 0.0, %v4209
      %v4211 = vpop.f32.mrf.mxu0
      %4212 = vmatprep.mubr.bf16.mxu0 0
      %4213 = vmatmul.mubr.bf16.gmra.mxu0 %v3993
      %v4214 = vpop.f32.mrf.mxu0
      %v4215 = vadd.f32 0.0, %v4214
      %v4216 = vpop.f32.mrf.mxu0
      %v4217 = vpop.f32.mrf.mxu0
      %v4218 = vadd.f32 0.0, %v4217
      %v4219 = vpop.f32.mrf.mxu0
      %4220 = vmatprep.mubr.bf16.mxu0 0
      %4221 = vmatmul.mubr.bf16.gmra.mxu0 %v4002
      %v4222 = vpop.f32.mrf.mxu0
      %v4223 = vadd.f32 0.0, %v4222
      %v4224 = vpop.f32.mrf.mxu0
      %v4225 = vpop.f32.mrf.mxu0
      %v4226 = vadd.f32 0.0, %v4225
      %v4227 = vpop.f32.mrf.mxu0
      %4228 = vmatprep.mubr.bf16.mxu0 0
      %4229 = vmatmul.mubr.bf16.gmra.mxu0 %v4011
      %v4230 = vpop.f32.mrf.mxu0
      %v4231 = vadd.f32 0.0, %v4230
      %v4232 = vpop.f32.mrf.mxu0
      %v4233 = vpop.f32.mrf.mxu0
      %v4234 = vadd.f32 0.0, %v4233
      %v4235 = vpop.f32.mrf.mxu0
      %4236 = vdwg.mxu0
      %v4237 = vld [vmem:[#allocation3] sm:$0xff]
      %v4238 = vld [vmem:[#allocation3 + $0x8] sm:$0xff]
      %v4239 = vld [vmem:[#allocation3 + $0x10] sm:$0xff]
      %v4240 = vld [vmem:[#allocation3 + $0x18] sm:$0xff]
      %v4241 = vld [vmem:[#allocation3 + $0x20] sm:$0xff]
      %v4242 = vld [vmem:[#allocation3 + $0x28] sm:$0xff]
      %v4243 = vld [vmem:[#allocation3 + $0x30] sm:$0xff]
      %v4244 = vld [vmem:[#allocation3 + $0x38] sm:$0xff]
      %v4245 = vld [vmem:[#allocation3 + $0x40] sm:$0xff]
      %v4246 = vld [vmem:[#allocation3 + $0x48] sm:$0xff]
      %v4247 = vld [vmem:[#allocation3 + $0x50] sm:$0xff]
      %v4248 = vld [vmem:[#allocation3 + $0x58] sm:$0xff]
      %v4249 = vld [vmem:[#allocation3 + $0x60] sm:$0xff]
      %v4250 = vld [vmem:[#allocation3 + $0x68] sm:$0xff]
      %v4251 = vld [vmem:[#allocation3 + $0x70] sm:$0xff]
      %v4252 = vld [vmem:[#allocation3 + $0x78] sm:$0xff]
      %v4253 = vld [vmem:[#allocation3 + $0x80] sm:$0xff]
      %v4254 = vld [vmem:[#allocation3 + $0x88] sm:$0xff]
      %v4255 = vld [vmem:[#allocation3 + $0x90] sm:$0xff]
      %v4256 = vld [vmem:[#allocation3 + $0x98] sm:$0xff]
      %v4257 = vld [vmem:[#allocation3 + $0xa0] sm:$0xff]
      %v4258 = vld [vmem:[#allocation3 + $0xa8] sm:$0xff]
      %v4259 = vld [vmem:[#allocation3 + $0xb0] sm:$0xff]
      %v4260 = vld [vmem:[#allocation3 + $0xb8] sm:$0xff]
      %v4261 = vld [vmem:[#allocation3 + $0xc0] sm:$0xff]
      %v4262 = vld [vmem:[#allocation3 + $0xc8] sm:$0xff]
      %v4263 = vld [vmem:[#allocation3 + $0xd0] sm:$0xff]
      %v4264 = vld [vmem:[#allocation3 + $0xd8] sm:$0xff]
      %v4265 = vld [vmem:[#allocation3 + $0xe0] sm:$0xff]
      %v4266 = vld [vmem:[#allocation3 + $0xe8] sm:$0xff]
      %v4267 = vld [vmem:[#allocation3 + $0xf0] sm:$0xff]
      %v4268 = vld [vmem:[#allocation3 + $0xf8] sm:$0xff]
      %v4269 = vadd.f32 %v4237, %v4111
      %v4270 = vadd.f32 %v4238, %v4114
      %v4271 = vadd.f32 %v4239, %v4119
      %v4272 = vadd.f32 %v4240, %v4122
      %v4273 = vadd.f32 %v4241, %v4127
      %v4274 = vadd.f32 %v4242, %v4130
      %v4275 = vadd.f32 %v4243, %v4135
      %v4276 = vadd.f32 %v4244, %v4138
      %v4277 = vadd.f32 %v4245, %v4143
      %v4278 = vadd.f32 %v4246, %v4146
      %v4279 = vadd.f32 %v4247, %v4151
      %v4280 = vadd.f32 %v4248, %v4154
      %v4281 = vadd.f32 %v4249, %v4159
      %v4282 = vadd.f32 %v4250, %v4162
      %v4283 = vadd.f32 %v4251, %v4167
      %v4284 = vadd.f32 %v4252, %v4170
      %v4285 = vadd.f32 %v4253, %v4175
      %v4286 = vadd.f32 %v4254, %v4178
      %v4287 = vadd.f32 %v4255, %v4183
      %v4288 = vadd.f32 %v4256, %v4186
      %v4289 = vadd.f32 %v4257, %v4191
      %v4290 = vadd.f32 %v4258, %v4194
      %v4291 = vadd.f32 %v4259, %v4199
      %v4292 = vadd.f32 %v4260, %v4202
      %v4293 = vadd.f32 %v4261, %v4207
      %v4294 = vadd.f32 %v4262, %v4210
      %v4295 = vadd.f32 %v4263, %v4215
      %v4296 = vadd.f32 %v4264, %v4218
      %v4297 = vadd.f32 %v4265, %v4223
      %v4298 = vadd.f32 %v4266, %v4226
      %v4299 = vadd.f32 %v4267, %v4231
      %v4300 = vadd.f32 %v4268, %v4234
      %4301 = vst [vmem:[#allocation3] sm:$0xff] %v4269
      %4302 = vst [vmem:[#allocation3 + $0x8] sm:$0xff] %v4270
      %4303 = vst [vmem:[#allocation3 + $0x10] sm:$0xff] %v4271
      %4304 = vst [vmem:[#allocation3 + $0x18] sm:$0xff] %v4272
      %4305 = vst [vmem:[#allocation3 + $0x20] sm:$0xff] %v4273
      %4306 = vst [vmem:[#allocation3 + $0x28] sm:$0xff] %v4274
      %4307 = vst [vmem:[#allocation3 + $0x30] sm:$0xff] %v4275
      %4308 = vst [vmem:[#allocation3 + $0x38] sm:$0xff] %v4276
      %4309 = vst [vmem:[#allocation3 + $0x40] sm:$0xff] %v4277
      %4310 = vst [vmem:[#allocation3 + $0x48] sm:$0xff] %v4278
      %4311 = vst [vmem:[#allocation3 + $0x50] sm:$0xff] %v4279
      %4312 = vst [vmem:[#allocation3 + $0x58] sm:$0xff] %v4280
      %4313 = vst [vmem:[#allocation3 + $0x60] sm:$0xff] %v4281
      %4314 = vst [vmem:[#allocation3 + $0x68] sm:$0xff] %v4282
      %4315 = vst [vmem:[#allocation3 + $0x70] sm:$0xff] %v4283
      %4316 = vst [vmem:[#allocation3 + $0x78] sm:$0xff] %v4284
      %4317 = vst [vmem:[#allocation3 + $0x80] sm:$0xff] %v4285
      %4318 = vst [vmem:[#allocation3 + $0x88] sm:$0xff] %v4286
      %4319 = vst [vmem:[#allocation3 + $0x90] sm:$0xff] %v4287
      %4320 = vst [vmem:[#allocation3 + $0x98] sm:$0xff] %v4288
      %4321 = vst [vmem:[#allocation3 + $0xa0] sm:$0xff] %v4289
      %4322 = vst [vmem:[#allocation3 + $0xa8] sm:$0xff] %v4290
      %4323 = vst [vmem:[#allocation3 + $0xb0] sm:$0xff] %v4291
      %4324 = vst [vmem:[#allocation3 + $0xb8] sm:$0xff] %v4292
      %4325 = vst [vmem:[#allocation3 + $0xc0] sm:$0xff] %v4293
      %4326 = vst [vmem:[#allocation3 + $0xc8] sm:$0xff] %v4294
      %4327 = vst [vmem:[#allocation3 + $0xd0] sm:$0xff] %v4295
      %4328 = vst [vmem:[#allocation3 + $0xd8] sm:$0xff] %v4296
      %4329 = vst [vmem:[#allocation3 + $0xe0] sm:$0xff] %v4297
      %4330 = vst [vmem:[#allocation3 + $0xe8] sm:$0xff] %v4298
      %4331 = vst [vmem:[#allocation3 + $0xf0] sm:$0xff] %v4299
      %4332 = vst [vmem:[#allocation3 + $0xf8] sm:$0xff] %v4300
      %v4333 = vld [vmem:[#allocation2 + $0x10] sm:$0xf]
      %v4334 = vld [vmem:[#allocation2 + $0x14] sm:$0xf]
      %v4335 = vld [vmem:[#allocation2 + $0x18] sm:$0xf]
      %v4336 = vld [vmem:[#allocation2 + $0x1c] sm:$0xf]
      %v4337 = vld [vmem:[#allocation2 + $0x20] sm:$0xf]
      %v4338 = vld [vmem:[#allocation2 + $0x24] sm:$0xf]
      %v4339 = vld [vmem:[#allocation2 + $0x28] sm:$0xf]
      %v4340 = vld [vmem:[#allocation2 + $0x2c] sm:$0xf]
      %v4341 = vld [vmem:[#allocation2 + $0x30] sm:$0xf]
      %v4342 = vld [vmem:[#allocation2 + $0x34] sm:$0xf]
      %v4343 = vld [vmem:[#allocation2 + $0x38] sm:$0xf]
      %v4344 = vld [vmem:[#allocation2 + $0x3c] sm:$0xf]
      %v4345 = vld [vmem:[#allocation2 + $0x40] sm:$0xf]
      %v4346 = vld [vmem:[#allocation2 + $0x44] sm:$0xf]
      %v4347 = vld [vmem:[#allocation2 + $0x48] sm:$0xf]
      %v4348 = vld [vmem:[#allocation2 + $0x4c] sm:$0xf]
      %v4349 = vld [vmem:[#allocation2 + $0x50] sm:$0xf]
      %v4350 = vld [vmem:[#allocation2 + $0x54] sm:$0xf]
      %v4351 = vld [vmem:[#allocation2 + $0x58] sm:$0xf]
      %v4352 = vld [vmem:[#allocation2 + $0x5c] sm:$0xf]
      %v4353 = vld [vmem:[#allocation2 + $0x60] sm:$0xf]
      %v4354 = vld [vmem:[#allocation2 + $0x64] sm:$0xf]
      %v4355 = vld [vmem:[#allocation2 + $0x68] sm:$0xf]
      %v4356 = vld [vmem:[#allocation2 + $0x6c] sm:$0xf]
      %v4357 = vld [vmem:[#allocation2 + $0x70] sm:$0xf]
      %v4358 = vld [vmem:[#allocation2 + $0x74] sm:$0xf]
      %v4359 = vld [vmem:[#allocation2 + $0x78] sm:$0xf]
      %v4360 = vld [vmem:[#allocation2 + $0x7c] sm:$0xf]
      %v4361 = vld [vmem:[#allocation2 + $0x80] sm:$0xf]
      %v4362 = vld [vmem:[#allocation2 + $0x84] sm:$0xf]
      %v4363 = vld [vmem:[#allocation2 + $0x88] sm:$0xf]
      %v4364 = vld [vmem:[#allocation2 + $0x8c] sm:$0xf]
      %s4365 = scalar_lea.vmem %s265, 256
      %v4366 = vld [vmem:[%s4365] sm:$0xf]
      %v4367 = vld [vmem:[%s4365 + $0x4] sm:$0xf]
      %v4368 = vld [vmem:[%s4365 + $0x8] sm:$0xf]
      %v4369 = vld [vmem:[%s4365 + $0xc] sm:$0xf]
      %v4370 = vld [vmem:[%s4365 + $0x10] sm:$0xf]
      %v4371 = vld [vmem:[%s4365 + $0x14] sm:$0xf]
      %v4372 = vld [vmem:[%s4365 + $0x18] sm:$0xf]
      %v4373 = vld [vmem:[%s4365 + $0x1c] sm:$0xf]
      %v4374 = vld [vmem:[%s4365 + $0x20] sm:$0xf]
      %v4375 = vld [vmem:[%s4365 + $0x24] sm:$0xf]
      %v4376 = vld [vmem:[%s4365 + $0x28] sm:$0xf]
      %v4377 = vld [vmem:[%s4365 + $0x2c] sm:$0xf]
      %v4378 = vld [vmem:[%s4365 + $0x30] sm:$0xf]
      %v4379 = vld [vmem:[%s4365 + $0x34] sm:$0xf]
      %v4380 = vld [vmem:[%s4365 + $0x38] sm:$0xf]
      %v4381 = vld [vmem:[%s4365 + $0x3c] sm:$0xf]
      %v4414 = vunpack.c.l.b16 %v4333
      %v4415 = vunpack.c.l.b16 %v4334
      %v4416 = vunpack.c.l.b16 %v4335
      %v4417 = vunpack.c.l.b16 %v4336
      %v4418 = vunpack.c.l.b16 %v4337
      %v4419 = vunpack.c.l.b16 %v4338
      %v4420 = vunpack.c.l.b16 %v4339
      %v4421 = vunpack.c.l.b16 %v4340
      %v4422 = vunpack.c.l.b16 %v4341
      %v4423 = vunpack.c.l.b16 %v4342
      %v4424 = vunpack.c.l.b16 %v4343
      %v4425 = vunpack.c.l.b16 %v4344
      %v4426 = vunpack.c.l.b16 %v4345
      %v4427 = vunpack.c.l.b16 %v4346
      %v4428 = vunpack.c.l.b16 %v4347
      %v4429 = vunpack.c.l.b16 %v4348
      %v4430 = vunpack.c.l.b16 %v4349
      %v4431 = vunpack.c.l.b16 %v4350
      %v4432 = vunpack.c.l.b16 %v4351
      %v4433 = vunpack.c.l.b16 %v4352
      %v4434 = vunpack.c.l.b16 %v4353
      %v4435 = vunpack.c.l.b16 %v4354
      %v4436 = vunpack.c.l.b16 %v4355
      %v4437 = vunpack.c.l.b16 %v4356
      %v4438 = vunpack.c.l.b16 %v4357
      %v4439 = vunpack.c.l.b16 %v4358
      %v4440 = vunpack.c.l.b16 %v4359
      %v4441 = vunpack.c.l.b16 %v4360
      %v4442 = vunpack.c.l.b16 %v4361
      %v4443 = vunpack.c.l.b16 %v4362
      %v4444 = vunpack.c.l.b16 %v4363
      %v4445 = vunpack.c.l.b16 %v4364
      %v4446 = vpack.c.b16 %v4415, %v4414
      %v4447 = vpack.c.b16 %v4417, %v4416
      %v4448 = vpack.c.b16 %v4419, %v4418
      %v4449 = vpack.c.b16 %v4421, %v4420
      %v4450 = vpack.c.b16 %v4423, %v4422
      %v4451 = vpack.c.b16 %v4425, %v4424
      %v4452 = vpack.c.b16 %v4427, %v4426
      %v4453 = vpack.c.b16 %v4429, %v4428
      %v4454 = vpack.c.b16 %v4431, %v4430
      %v4455 = vpack.c.b16 %v4433, %v4432
      %v4456 = vpack.c.b16 %v4435, %v4434
      %v4457 = vpack.c.b16 %v4437, %v4436
      %v4458 = vpack.c.b16 %v4439, %v4438
      %v4459 = vpack.c.b16 %v4441, %v4440
      %v4460 = vpack.c.b16 %v4443, %v4442
      %v4461 = vpack.c.b16 %v4445, %v4444
      %v4494 = vunpack.c.l.b16 %v4366
      %v4495 = vunpack.c.l.b16 %v4367
      %v4496 = vunpack.c.l.b16 %v4368
      %v4497 = vunpack.c.l.b16 %v4369
      %v4498 = vunpack.c.l.b16 %v4370
      %v4499 = vunpack.c.l.b16 %v4371
      %v4500 = vunpack.c.l.b16 %v4372
      %v4501 = vunpack.c.l.b16 %v4373
      %v4502 = vunpack.c.l.b16 %v4374
      %v4503 = vunpack.c.l.b16 %v4375
      %v4504 = vunpack.c.l.b16 %v4376
      %v4505 = vunpack.c.l.b16 %v4377
      %v4506 = vunpack.c.l.b16 %v4378
      %v4507 = vunpack.c.l.b16 %v4379
      %v4508 = vunpack.c.l.b16 %v4380
      %v4509 = vunpack.c.l.b16 %v4381
      %v4510 = vpack.c.b16 %v4495, %v4494
      %v4511 = vpack.c.b16 %v4497, %v4496
      %v4512 = vpack.c.b16 %v4499, %v4498
      %v4513 = vpack.c.b16 %v4501, %v4500
      %v4514 = vpack.c.b16 %v4503, %v4502
      %v4515 = vpack.c.b16 %v4505, %v4504
      %v4516 = vpack.c.b16 %v4507, %v4506
      %v4517 = vpack.c.b16 %v4509, %v4508
      %4526 = vmatprep.subr.bf16.mxu0 0
      %4527 = vmatpush1.bf16.msra.mxu0 %v4517
      %4528 = vmatprep.subr.bf16.mxu0 0
      %4529 = vmatpush1.bf16.msra.mxu0 %v4516
      %4530 = vmatprep.subr.bf16.mxu0 0
      %4531 = vmatpush1.bf16.msra.mxu0 %v4515
      %4532 = vmatprep.subr.bf16.mxu0 0
      %4533 = vmatpush1.bf16.msra.mxu0 %v4514
      %4534 = vmatprep.subr.bf16.mxu0 0
      %4535 = vmatpush1.bf16.msra.mxu0 %v4513
      %4536 = vmatprep.subr.bf16.mxu0 0
      %4537 = vmatpush1.bf16.msra.mxu0 %v4512
      %4538 = vmatprep.subr.bf16.mxu0 0
      %4539 = vmatpush1.bf16.msra.mxu0 %v4511
      %4540 = vmatprep.subr.bf16.mxu0 0
      %4541 = vmatpush1.bf16.msra.mxu0 %v4510
      %4542 = vmatprep.subr.bf16.mxu0 0
      %4543 = vmatpush2.bf16.msra.mxu0 0
      %4544 = vmatprep.subr.bf16.mxu0 0
      %4545 = vmatpush2.bf16.msra.mxu0 0
      %4546 = vmatprep.subr.bf16.mxu0 0
      %4547 = vmatpush2.bf16.msra.mxu0 0
      %4548 = vmatprep.subr.bf16.mxu0 0
      %4549 = vmatpush2.bf16.msra.mxu0 0
      %4550 = vmatprep.subr.bf16.mxu0 0
      %4551 = vmatpush2.bf16.msra.mxu0 0
      %4552 = vmatprep.subr.bf16.mxu0 0
      %4553 = vmatpush2.bf16.msra.mxu0 0
      %4554 = vmatprep.subr.bf16.mxu0 0
      %4555 = vmatpush2.bf16.msra.mxu0 0
      %4556 = vmatprep.subr.bf16.mxu0 0
      %4557 = vmatpush2.bf16.msra.mxu0 0
      %4558 = vmatprep.mubr.bf16.mxu0 0
      %4559 = vmatmul.mubr.bf16.gmra.mxu0 %v4446
      %v4560 = vpop.f32.mrf.mxu0
      %v4561 = vadd.f32 0.0, %v4560
      %v4562 = vpop.f32.mrf.mxu0
      %v4563 = vpop.f32.mrf.mxu0
      %v4564 = vadd.f32 0.0, %v4563
      %v4565 = vpop.f32.mrf.mxu0
      %4566 = vmatprep.mubr.bf16.mxu0 0
      %4567 = vmatmul.mubr.bf16.gmra.mxu0 %v4447
      %v4568 = vpop.f32.mrf.mxu0
      %v4569 = vadd.f32 0.0, %v4568
      %v4570 = vpop.f32.mrf.mxu0
      %v4571 = vpop.f32.mrf.mxu0
      %v4572 = vadd.f32 0.0, %v4571
      %v4573 = vpop.f32.mrf.mxu0
      %4574 = vmatprep.mubr.bf16.mxu0 0
      %4575 = vmatmul.mubr.bf16.gmra.mxu0 %v4448
      %v4576 = vpop.f32.mrf.mxu0
      %v4577 = vadd.f32 0.0, %v4576
      %v4578 = vpop.f32.mrf.mxu0
      %v4579 = vpop.f32.mrf.mxu0
      %v4580 = vadd.f32 0.0, %v4579
      %v4581 = vpop.f32.mrf.mxu0
      %4582 = vmatprep.mubr.bf16.mxu0 0
      %4583 = vmatmul.mubr.bf16.gmra.mxu0 %v4449
      %v4584 = vpop.f32.mrf.mxu0
      %v4585 = vadd.f32 0.0, %v4584
      %v4586 = vpop.f32.mrf.mxu0
      %v4587 = vpop.f32.mrf.mxu0
      %v4588 = vadd.f32 0.0, %v4587
      %v4589 = vpop.f32.mrf.mxu0
      %4590 = vmatprep.mubr.bf16.mxu0 0
      %4591 = vmatmul.mubr.bf16.gmra.mxu0 %v4450
      %v4592 = vpop.f32.mrf.mxu0
      %v4593 = vadd.f32 0.0, %v4592
      %v4594 = vpop.f32.mrf.mxu0
      %v4595 = vpop.f32.mrf.mxu0
      %v4596 = vadd.f32 0.0, %v4595
      %v4597 = vpop.f32.mrf.mxu0
      %4598 = vmatprep.mubr.bf16.mxu0 0
      %4599 = vmatmul.mubr.bf16.gmra.mxu0 %v4451
      %v4600 = vpop.f32.mrf.mxu0
      %v4601 = vadd.f32 0.0, %v4600
      %v4602 = vpop.f32.mrf.mxu0
      %v4603 = vpop.f32.mrf.mxu0
      %v4604 = vadd.f32 0.0, %v4603
      %v4605 = vpop.f32.mrf.mxu0
      %4606 = vmatprep.mubr.bf16.mxu0 0
      %4607 = vmatmul.mubr.bf16.gmra.mxu0 %v4452
      %v4608 = vpop.f32.mrf.mxu0
      %v4609 = vadd.f32 0.0, %v4608
      %v4610 = vpop.f32.mrf.mxu0
      %v4611 = vpop.f32.mrf.mxu0
      %v4612 = vadd.f32 0.0, %v4611
      %v4613 = vpop.f32.mrf.mxu0
      %4614 = vmatprep.mubr.bf16.mxu0 0
      %4615 = vmatmul.mubr.bf16.gmra.mxu0 %v4453
      %v4616 = vpop.f32.mrf.mxu0
      %v4617 = vadd.f32 0.0, %v4616
      %v4618 = vpop.f32.mrf.mxu0
      %v4619 = vpop.f32.mrf.mxu0
      %v4620 = vadd.f32 0.0, %v4619
      %v4621 = vpop.f32.mrf.mxu0
      %4622 = vmatprep.mubr.bf16.mxu0 0
      %4623 = vmatmul.mubr.bf16.gmra.mxu0 %v4454
      %v4624 = vpop.f32.mrf.mxu0
      %v4625 = vadd.f32 0.0, %v4624
      %v4626 = vpop.f32.mrf.mxu0
      %v4627 = vpop.f32.mrf.mxu0
      %v4628 = vadd.f32 0.0, %v4627
      %v4629 = vpop.f32.mrf.mxu0
      %4630 = vmatprep.mubr.bf16.mxu0 0
      %4631 = vmatmul.mubr.bf16.gmra.mxu0 %v4455
      %v4632 = vpop.f32.mrf.mxu0
      %v4633 = vadd.f32 0.0, %v4632
      %v4634 = vpop.f32.mrf.mxu0
      %v4635 = vpop.f32.mrf.mxu0
      %v4636 = vadd.f32 0.0, %v4635
      %v4637 = vpop.f32.mrf.mxu0
      %4638 = vmatprep.mubr.bf16.mxu0 0
      %4639 = vmatmul.mubr.bf16.gmra.mxu0 %v4456
      %v4640 = vpop.f32.mrf.mxu0
      %v4641 = vadd.f32 0.0, %v4640
      %v4642 = vpop.f32.mrf.mxu0
      %v4643 = vpop.f32.mrf.mxu0
      %v4644 = vadd.f32 0.0, %v4643
      %v4645 = vpop.f32.mrf.mxu0
      %4646 = vmatprep.mubr.bf16.mxu0 0
      %4647 = vmatmul.mubr.bf16.gmra.mxu0 %v4457
      %v4648 = vpop.f32.mrf.mxu0
      %v4649 = vadd.f32 0.0, %v4648
      %v4650 = vpop.f32.mrf.mxu0
      %v4651 = vpop.f32.mrf.mxu0
      %v4652 = vadd.f32 0.0, %v4651
      %v4653 = vpop.f32.mrf.mxu0
      %4654 = vmatprep.mubr.bf16.mxu0 0
      %4655 = vmatmul.mubr.bf16.gmra.mxu0 %v4458
      %v4656 = vpop.f32.mrf.mxu0
      %v4657 = vadd.f32 0.0, %v4656
      %v4658 = vpop.f32.mrf.mxu0
      %v4659 = vpop.f32.mrf.mxu0
      %v4660 = vadd.f32 0.0, %v4659
      %v4661 = vpop.f32.mrf.mxu0
      %4662 = vmatprep.mubr.bf16.mxu0 0
      %4663 = vmatmul.mubr.bf16.gmra.mxu0 %v4459
      %v4664 = vpop.f32.mrf.mxu0
      %v4665 = vadd.f32 0.0, %v4664
      %v4666 = vpop.f32.mrf.mxu0
      %v4667 = vpop.f32.mrf.mxu0
      %v4668 = vadd.f32 0.0, %v4667
      %v4669 = vpop.f32.mrf.mxu0
      %4670 = vmatprep.mubr.bf16.mxu0 0
      %4671 = vmatmul.mubr.bf16.gmra.mxu0 %v4460
      %v4672 = vpop.f32.mrf.mxu0
      %v4673 = vadd.f32 0.0, %v4672
      %v4674 = vpop.f32.mrf.mxu0
      %v4675 = vpop.f32.mrf.mxu0
      %v4676 = vadd.f32 0.0, %v4675
      %v4677 = vpop.f32.mrf.mxu0
      %4678 = vmatprep.mubr.bf16.mxu0 0
      %4679 = vmatmul.mubr.bf16.gmra.mxu0 %v4461
      %v4680 = vpop.f32.mrf.mxu0
      %v4681 = vadd.f32 0.0, %v4680
      %v4682 = vpop.f32.mrf.mxu0
      %v4683 = vpop.f32.mrf.mxu0
      %v4684 = vadd.f32 0.0, %v4683
      %v4685 = vpop.f32.mrf.mxu0
      %4686 = vdwg.mxu0
      %v4687 = vld [vmem:[#allocation3] sm:$0xff]
      %v4688 = vld [vmem:[#allocation3 + $0x8] sm:$0xff]
      %v4689 = vld [vmem:[#allocation3 + $0x10] sm:$0xff]
      %v4690 = vld [vmem:[#allocation3 + $0x18] sm:$0xff]
      %v4691 = vld [vmem:[#allocation3 + $0x20] sm:$0xff]
      %v4692 = vld [vmem:[#allocation3 + $0x28] sm:$0xff]
      %v4693 = vld [vmem:[#allocation3 + $0x30] sm:$0xff]
      %v4694 = vld [vmem:[#allocation3 + $0x38] sm:$0xff]
      %v4695 = vld [vmem:[#allocation3 + $0x40] sm:$0xff]
      %v4696 = vld [vmem:[#allocation3 + $0x48] sm:$0xff]
      %v4697 = vld [vmem:[#allocation3 + $0x50] sm:$0xff]
      %v4698 = vld [vmem:[#allocation3 + $0x58] sm:$0xff]
      %v4699 = vld [vmem:[#allocation3 + $0x60] sm:$0xff]
      %v4700 = vld [vmem:[#allocation3 + $0x68] sm:$0xff]
      %v4701 = vld [vmem:[#allocation3 + $0x70] sm:$0xff]
      %v4702 = vld [vmem:[#allocation3 + $0x78] sm:$0xff]
      %v4703 = vld [vmem:[#allocation3 + $0x80] sm:$0xff]
      %v4704 = vld [vmem:[#allocation3 + $0x88] sm:$0xff]
      %v4705 = vld [vmem:[#allocation3 + $0x90] sm:$0xff]
      %v4706 = vld [vmem:[#allocation3 + $0x98] sm:$0xff]
      %v4707 = vld [vmem:[#allocation3 + $0xa0] sm:$0xff]
      %v4708 = vld [vmem:[#allocation3 + $0xa8] sm:$0xff]
      %v4709 = vld [vmem:[#allocation3 + $0xb0] sm:$0xff]
      %v4710 = vld [vmem:[#allocation3 + $0xb8] sm:$0xff]
      %v4711 = vld [vmem:[#allocation3 + $0xc0] sm:$0xff]
      %v4712 = vld [vmem:[#allocation3 + $0xc8] sm:$0xff]
      %v4713 = vld [vmem:[#allocation3 + $0xd0] sm:$0xff]
      %v4714 = vld [vmem:[#allocation3 + $0xd8] sm:$0xff]
      %v4715 = vld [vmem:[#allocation3 + $0xe0] sm:$0xff]
      %v4716 = vld [vmem:[#allocation3 + $0xe8] sm:$0xff]
      %v4717 = vld [vmem:[#allocation3 + $0xf0] sm:$0xff]
      %v4718 = vld [vmem:[#allocation3 + $0xf8] sm:$0xff]
      %v4719 = vadd.f32 %v4687, %v4561
      %v4720 = vadd.f32 %v4688, %v4564
      %v4721 = vadd.f32 %v4689, %v4569
      %v4722 = vadd.f32 %v4690, %v4572
      %v4723 = vadd.f32 %v4691, %v4577
      %v4724 = vadd.f32 %v4692, %v4580
      %v4725 = vadd.f32 %v4693, %v4585
      %v4726 = vadd.f32 %v4694, %v4588
      %v4727 = vadd.f32 %v4695, %v4593
      %v4728 = vadd.f32 %v4696, %v4596
      %v4729 = vadd.f32 %v4697, %v4601
      %v4730 = vadd.f32 %v4698, %v4604
      %v4731 = vadd.f32 %v4699, %v4609
      %v4732 = vadd.f32 %v4700, %v4612
      %v4733 = vadd.f32 %v4701, %v4617
      %v4734 = vadd.f32 %v4702, %v4620
      %v4735 = vadd.f32 %v4703, %v4625
      %v4736 = vadd.f32 %v4704, %v4628
      %v4737 = vadd.f32 %v4705, %v4633
      %v4738 = vadd.f32 %v4706, %v4636
      %v4739 = vadd.f32 %v4707, %v4641
      %v4740 = vadd.f32 %v4708, %v4644
      %v4741 = vadd.f32 %v4709, %v4649
      %v4742 = vadd.f32 %v4710, %v4652
      %v4743 = vadd.f32 %v4711, %v4657
      %v4744 = vadd.f32 %v4712, %v4660
      %v4745 = vadd.f32 %v4713, %v4665
      %v4746 = vadd.f32 %v4714, %v4668
      %v4747 = vadd.f32 %v4715, %v4673
      %v4748 = vadd.f32 %v4716, %v4676
      %v4749 = vadd.f32 %v4717, %v4681
      %v4750 = vadd.f32 %v4718, %v4684
      %4751 = vst [vmem:[#allocation3] sm:$0xff] %v4719
      %4752 = vst [vmem:[#allocation3 + $0x8] sm:$0xff] %v4720
      %4753 = vst [vmem:[#allocation3 + $0x10] sm:$0xff] %v4721
      %4754 = vst [vmem:[#allocation3 + $0x18] sm:$0xff] %v4722
      %4755 = vst [vmem:[#allocation3 + $0x20] sm:$0xff] %v4723
      %4756 = vst [vmem:[#allocation3 + $0x28] sm:$0xff] %v4724
      %4757 = vst [vmem:[#allocation3 + $0x30] sm:$0xff] %v4725
      %4758 = vst [vmem:[#allocation3 + $0x38] sm:$0xff] %v4726
      %4759 = vst [vmem:[#allocation3 + $0x40] sm:$0xff] %v4727
      %4760 = vst [vmem:[#allocation3 + $0x48] sm:$0xff] %v4728
      %4761 = vst [vmem:[#allocation3 + $0x50] sm:$0xff] %v4729
      %4762 = vst [vmem:[#allocation3 + $0x58] sm:$0xff] %v4730
      %4763 = vst [vmem:[#allocation3 + $0x60] sm:$0xff] %v4731
      %4764 = vst [vmem:[#allocation3 + $0x68] sm:$0xff] %v4732
      %4765 = vst [vmem:[#allocation3 + $0x70] sm:$0xff] %v4733
      %4766 = vst [vmem:[#allocation3 + $0x78] sm:$0xff] %v4734
      %4767 = vst [vmem:[#allocation3 + $0x80] sm:$0xff] %v4735
      %4768 = vst [vmem:[#allocation3 + $0x88] sm:$0xff] %v4736
      %4769 = vst [vmem:[#allocation3 + $0x90] sm:$0xff] %v4737
      %4770 = vst [vmem:[#allocation3 + $0x98] sm:$0xff] %v4738
      %4771 = vst [vmem:[#allocation3 + $0xa0] sm:$0xff] %v4739
      %4772 = vst [vmem:[#allocation3 + $0xa8] sm:$0xff] %v4740
      %4773 = vst [vmem:[#allocation3 + $0xb0] sm:$0xff] %v4741
      %4774 = vst [vmem:[#allocation3 + $0xb8] sm:$0xff] %v4742
      %4775 = vst [vmem:[#allocation3 + $0xc0] sm:$0xff] %v4743
      %4776 = vst [vmem:[#allocation3 + $0xc8] sm:$0xff] %v4744
      %4777 = vst [vmem:[#allocation3 + $0xd0] sm:$0xff] %v4745
      %4778 = vst [vmem:[#allocation3 + $0xd8] sm:$0xff] %v4746
      %4779 = vst [vmem:[#allocation3 + $0xe0] sm:$0xff] %v4747
      %4780 = vst [vmem:[#allocation3 + $0xe8] sm:$0xff] %v4748
      %4781 = vst [vmem:[#allocation3 + $0xf0] sm:$0xff] %v4749
      %4782 = vst [vmem:[#allocation3 + $0xf8] sm:$0xff] %v4750
      %v4783 = vld [vmem:[#allocation2 + $0x10] sm:$0xf]
      %v4784 = vld [vmem:[#allocation2 + $0x14] sm:$0xf]
      %v4785 = vld [vmem:[#allocation2 + $0x18] sm:$0xf]
      %v4786 = vld [vmem:[#allocation2 + $0x1c] sm:$0xf]
      %v4787 = vld [vmem:[#allocation2 + $0x20] sm:$0xf]
      %v4788 = vld [vmem:[#allocation2 + $0x24] sm:$0xf]
      %v4789 = vld [vmem:[#allocation2 + $0x28] sm:$0xf]
      %v4790 = vld [vmem:[#allocation2 + $0x2c] sm:$0xf]
      %v4791 = vld [vmem:[#allocation2 + $0x30] sm:$0xf]
      %v4792 = vld [vmem:[#allocation2 + $0x34] sm:$0xf]
      %v4793 = vld [vmem:[#allocation2 + $0x38] sm:$0xf]
      %v4794 = vld [vmem:[#allocation2 + $0x3c] sm:$0xf]
      %v4795 = vld [vmem:[#allocation2 + $0x40] sm:$0xf]
      %v4796 = vld [vmem:[#allocation2 + $0x44] sm:$0xf]
      %v4797 = vld [vmem:[#allocation2 + $0x48] sm:$0xf]
      %v4798 = vld [vmem:[#allocation2 + $0x4c] sm:$0xf]
      %v4799 = vld [vmem:[#allocation2 + $0x50] sm:$0xf]
      %v4800 = vld [vmem:[#allocation2 + $0x54] sm:$0xf]
      %v4801 = vld [vmem:[#allocation2 + $0x58] sm:$0xf]
      %v4802 = vld [vmem:[#allocation2 + $0x5c] sm:$0xf]
      %v4803 = vld [vmem:[#allocation2 + $0x60] sm:$0xf]
      %v4804 = vld [vmem:[#allocation2 + $0x64] sm:$0xf]
      %v4805 = vld [vmem:[#allocation2 + $0x68] sm:$0xf]
      %v4806 = vld [vmem:[#allocation2 + $0x6c] sm:$0xf]
      %v4807 = vld [vmem:[#allocation2 + $0x70] sm:$0xf]
      %v4808 = vld [vmem:[#allocation2 + $0x74] sm:$0xf]
      %v4809 = vld [vmem:[#allocation2 + $0x78] sm:$0xf]
      %v4810 = vld [vmem:[#allocation2 + $0x7c] sm:$0xf]
      %v4811 = vld [vmem:[#allocation2 + $0x80] sm:$0xf]
      %v4812 = vld [vmem:[#allocation2 + $0x84] sm:$0xf]
      %v4813 = vld [vmem:[#allocation2 + $0x88] sm:$0xf]
      %v4814 = vld [vmem:[#allocation2 + $0x8c] sm:$0xf]
      %v4815 = vld [vmem:[#allocation2 + $0x90] sm:$0x1]
      %v4816 = vsel %vm3074, %v4783, 0
      %v4817 = vsel %vm3075, %v4784, 0
      %v4818 = vsel %vm3076, %v4785, 0
      %v4819 = vsel %vm3077, %v4786, 0
      %v4820 = vsel %vm3078, %v4787, 0
      %v4821 = vsel %vm3079, %v4788, 0
      %v4822 = vsel %vm3080, %v4789, 0
      %v4823 = vsel %vm3081, %v4790, 0
      %v4824 = vsel %vm3082, %v4791, 0
      %v4825 = vsel %vm3083, %v4792, 0
      %v4826 = vsel %vm3084, %v4793, 0
      %v4827 = vsel %vm3085, %v4794, 0
      %v4828 = vsel %vm3086, %v4795, 0
      %v4829 = vsel %vm3087, %v4796, 0
      %v4830 = vsel %vm3088, %v4797, 0
      %v4831 = vsel %vm3089, %v4798, 0
      %v4832 = vsel %vm3090, %v4799, 0
      %v4833 = vsel %vm3091, %v4800, 0
      %v4834 = vsel %vm3092, %v4801, 0
      %v4835 = vsel %vm3093, %v4802, 0
      %v4836 = vsel %vm3094, %v4803, 0
      %v4837 = vsel %vm3095, %v4804, 0
      %v4838 = vsel %vm3096, %v4805, 0
      %v4839 = vsel %vm3097, %v4806, 0
      %v4840 = vsel %vm3098, %v4807, 0
      %v4841 = vsel %vm3099, %v4808, 0
      %v4842 = vsel %vm3100, %v4809, 0
      %v4843 = vsel %vm3101, %v4810, 0
      %v4844 = vsel %vm3102, %v4811, 0
      %v4845 = vsel %vm3103, %v4812, 0
      %v4846 = vsel %vm3104, %v4813, 0
      %v4847 = vsel %vm3105, %v4814, 0
      %v4848 = vsel %vm3106, %v4815, 0
      %s4849 = scalar_lea.vmem %s265, 320
      %v4850 = vld [vmem:[%s4849] sm:$0xf]
      %v4851 = vld [vmem:[%s4849 + $0x4] sm:$0xf]
      %v4852 = vld [vmem:[%s4849 + $0x8] sm:$0xf]
      %v4853 = vld [vmem:[%s4849 + $0xc] sm:$0xf]
      %v4854 = vld [vmem:[%s4849 + $0x10] sm:$0xf]
      %v4855 = vld [vmem:[%s4849 + $0x14] sm:$0xf]
      %v4856 = vld [vmem:[%s4849 + $0x18] sm:$0xf]
      %v4857 = vld [vmem:[%s4849 + $0x1c] sm:$0xf]
      %v4858 = vld [vmem:[%s4849 + $0x20] sm:$0xf]
      %v4859 = vld [vmem:[%s4849 + $0x24] sm:$0xf]
      %v4860 = vld [vmem:[%s4849 + $0x28] sm:$0xf]
      %v4861 = vld [vmem:[%s4849 + $0x2c] sm:$0xf]
      %v4862 = vld [vmem:[%s4849 + $0x30] sm:$0xf]
      %v4863 = vld [vmem:[%s4849 + $0x34] sm:$0xf]
      %v4864 = vld [vmem:[%s4849 + $0x38] sm:$0xf]
      %v4865 = vld [vmem:[%s4849 + $0x3c] sm:$0xf]
      %v4899 = vunpack.c.l.b16 %v4816
      %v4900 = vunpack.c.l.b16 %v4817
      %v4901 = vunpack.c.l.b16 %v4818
      %v4902 = vunpack.c.l.b16 %v4819
      %v4903 = vunpack.c.l.b16 %v4820
      %v4904 = vunpack.c.l.b16 %v4821
      %v4905 = vunpack.c.l.b16 %v4822
      %v4906 = vunpack.c.l.b16 %v4823
      %v4907 = vunpack.c.l.b16 %v4824
      %v4908 = vunpack.c.l.b16 %v4825
      %v4909 = vunpack.c.l.b16 %v4826
      %v4910 = vunpack.c.l.b16 %v4827
      %v4911 = vunpack.c.l.b16 %v4828
      %v4912 = vunpack.c.l.b16 %v4829
      %v4913 = vunpack.c.l.b16 %v4830
      %v4914 = vunpack.c.l.b16 %v4831
      %v4915 = vunpack.c.l.b16 %v4832
      %v4916 = vunpack.c.l.b16 %v4833
      %v4917 = vunpack.c.l.b16 %v4834
      %v4918 = vunpack.c.l.b16 %v4835
      %v4919 = vunpack.c.l.b16 %v4836
      %v4920 = vunpack.c.l.b16 %v4837
      %v4921 = vunpack.c.l.b16 %v4838
      %v4922 = vunpack.c.l.b16 %v4839
      %v4923 = vunpack.c.l.b16 %v4840
      %v4924 = vunpack.c.l.b16 %v4841
      %v4925 = vunpack.c.l.b16 %v4842
      %v4926 = vunpack.c.l.b16 %v4843
      %v4927 = vunpack.c.l.b16 %v4844
      %v4928 = vunpack.c.l.b16 %v4845
      %v4929 = vunpack.c.l.b16 %v4846
      %v4930 = vunpack.c.l.b16 %v4847
      %v4931 = vunpack.c.l.b16 %v4848
      %v4932 = vpack.c.b16 %v4900, %v4899
      %v4933 = vpack.c.b16 %v4902, %v4901
      %v4934 = vpack.c.b16 %v4904, %v4903
      %v4935 = vpack.c.b16 %v4906, %v4905
      %v4936 = vpack.c.b16 %v4908, %v4907
      %v4937 = vpack.c.b16 %v4910, %v4909
      %v4938 = vpack.c.b16 %v4912, %v4911
      %v4939 = vpack.c.b16 %v4914, %v4913
      %v4940 = vpack.c.b16 %v4916, %v4915
      %v4941 = vpack.c.b16 %v4918, %v4917
      %v4942 = vpack.c.b16 %v4920, %v4919
      %v4943 = vpack.c.b16 %v4922, %v4921
      %v4944 = vpack.c.b16 %v4924, %v4923
      %v4945 = vpack.c.b16 %v4926, %v4925
      %v4946 = vpack.c.b16 %v4928, %v4927
      %v4947 = vpack.c.b16 %v4930, %v4929
      %v4948 = vpack.c.b16 %v4931, %v4931
      %v4950 = vshrl.u32 %v4932, 16
      %v4952 = vshll.u32 %v4932, 16
      %v4954 = vrot.slane %v4952, 1
      %v4955 = vor.u32 %v4950, %v4954
      %v4957 = vshll.u32 %v4933, 16
      %v4959 = vrot.slane %v4957, 1
      %v4960 = vsel %vm3240, %v4955, %v4959
      %v4961 = vshrl.u32 %v4933, 16
      %v4963 = vor.u32 %v4961, %v4959
      %v4965 = vshll.u32 %v4934, 16
      %v4967 = vrot.slane %v4965, 1
      %v4968 = vsel %vm3240, %v4963, %v4967
      %v4969 = vshrl.u32 %v4934, 16
      %v4971 = vor.u32 %v4969, %v4967
      %v4973 = vshll.u32 %v4935, 16
      %v4975 = vrot.slane %v4973, 1
      %v4976 = vsel %vm3240, %v4971, %v4975
      %v4977 = vshrl.u32 %v4935, 16
      %v4979 = vor.u32 %v4977, %v4975
      %v4981 = vshll.u32 %v4936, 16
      %v4983 = vrot.slane %v4981, 1
      %v4984 = vsel %vm3240, %v4979, %v4983
      %v4985 = vshrl.u32 %v4936, 16
      %v4987 = vor.u32 %v4985, %v4983
      %v4989 = vshll.u32 %v4937, 16
      %v4991 = vrot.slane %v4989, 1
      %v4992 = vsel %vm3240, %v4987, %v4991
      %v4993 = vshrl.u32 %v4937, 16
      %v4995 = vor.u32 %v4993, %v4991
      %v4997 = vshll.u32 %v4938, 16
      %v4999 = vrot.slane %v4997, 1
      %v5000 = vsel %vm3240, %v4995, %v4999
      %v5001 = vshrl.u32 %v4938, 16
      %v5003 = vor.u32 %v5001, %v4999
      %v5005 = vshll.u32 %v4939, 16
      %v5007 = vrot.slane %v5005, 1
      %v5008 = vsel %vm3240, %v5003, %v5007
      %v5009 = vshrl.u32 %v4939, 16
      %v5011 = vor.u32 %v5009, %v5007
      %v5013 = vshll.u32 %v4940, 16
      %v5015 = vrot.slane %v5013, 1
      %v5016 = vsel %vm3240, %v5011, %v5015
      %v5017 = vshrl.u32 %v4940, 16
      %v5019 = vor.u32 %v5017, %v5015
      %v5021 = vshll.u32 %v4941, 16
      %v5023 = vrot.slane %v5021, 1
      %v5024 = vsel %vm3240, %v5019, %v5023
      %v5025 = vshrl.u32 %v4941, 16
      %v5027 = vor.u32 %v5025, %v5023
      %v5029 = vshll.u32 %v4942, 16
      %v5031 = vrot.slane %v5029, 1
      %v5032 = vsel %vm3240, %v5027, %v5031
      %v5033 = vshrl.u32 %v4942, 16
      %v5035 = vor.u32 %v5033, %v5031
      %v5037 = vshll.u32 %v4943, 16
      %v5039 = vrot.slane %v5037, 1
      %v5040 = vsel %vm3240, %v5035, %v5039
      %v5041 = vshrl.u32 %v4943, 16
      %v5043 = vor.u32 %v5041, %v5039
      %v5045 = vshll.u32 %v4944, 16
      %v5047 = vrot.slane %v5045, 1
      %v5048 = vsel %vm3240, %v5043, %v5047
      %v5049 = vshrl.u32 %v4944, 16
      %v5051 = vor.u32 %v5049, %v5047
      %v5053 = vshll.u32 %v4945, 16
      %v5055 = vrot.slane %v5053, 1
      %v5056 = vsel %vm3240, %v5051, %v5055
      %v5057 = vshrl.u32 %v4945, 16
      %v5059 = vor.u32 %v5057, %v5055
      %v5061 = vshll.u32 %v4946, 16
      %v5063 = vrot.slane %v5061, 1
      %v5064 = vsel %vm3240, %v5059, %v5063
      %v5065 = vshrl.u32 %v4946, 16
      %v5067 = vor.u32 %v5065, %v5063
      %v5069 = vshll.u32 %v4947, 16
      %v5071 = vrot.slane %v5069, 1
      %v5072 = vsel %vm3240, %v5067, %v5071
      %v5073 = vshrl.u32 %v4947, 16
      %v5075 = vor.u32 %v5073, %v5071
      %v5077 = vshll.u32 %v4948, 16
      %v5079 = vrot.slane %v5077, 1
      %v5080 = vsel %vm3240, %v5075, %v5079
      %v5113 = vunpack.c.l.b16 %v4850
      %v5114 = vunpack.c.l.b16 %v4851
      %v5115 = vunpack.c.l.b16 %v4852
      %v5116 = vunpack.c.l.b16 %v4853
      %v5117 = vunpack.c.l.b16 %v4854
      %v5118 = vunpack.c.l.b16 %v4855
      %v5119 = vunpack.c.l.b16 %v4856
      %v5120 = vunpack.c.l.b16 %v4857
      %v5121 = vunpack.c.l.b16 %v4858
      %v5122 = vunpack.c.l.b16 %v4859
      %v5123 = vunpack.c.l.b16 %v4860
      %v5124 = vunpack.c.l.b16 %v4861
      %v5125 = vunpack.c.l.b16 %v4862
      %v5126 = vunpack.c.l.b16 %v4863
      %v5127 = vunpack.c.l.b16 %v4864
      %v5128 = vunpack.c.l.b16 %v4865
      %v5129 = vpack.c.b16 %v5114, %v5113
      %v5130 = vpack.c.b16 %v5116, %v5115
      %v5131 = vpack.c.b16 %v5118, %v5117
      %v5132 = vpack.c.b16 %v5120, %v5119
      %v5133 = vpack.c.b16 %v5122, %v5121
      %v5134 = vpack.c.b16 %v5124, %v5123
      %v5135 = vpack.c.b16 %v5126, %v5125
      %v5136 = vpack.c.b16 %v5128, %v5127
      %5145 = vmatprep.subr.bf16.mxu0 0
      %5146 = vmatpush1.bf16.msra.mxu0 %v5136
      %5147 = vmatprep.subr.bf16.mxu0 0
      %5148 = vmatpush1.bf16.msra.mxu0 %v5135
      %5149 = vmatprep.subr.bf16.mxu0 0
      %5150 = vmatpush1.bf16.msra.mxu0 %v5134
      %5151 = vmatprep.subr.bf16.mxu0 0
      %5152 = vmatpush1.bf16.msra.mxu0 %v5133
      %5153 = vmatprep.subr.bf16.mxu0 0
      %5154 = vmatpush1.bf16.msra.mxu0 %v5132
      %5155 = vmatprep.subr.bf16.mxu0 0
      %5156 = vmatpush1.bf16.msra.mxu0 %v5131
      %5157 = vmatprep.subr.bf16.mxu0 0
      %5158 = vmatpush1.bf16.msra.mxu0 %v5130
      %5159 = vmatprep.subr.bf16.mxu0 0
      %5160 = vmatpush1.bf16.msra.mxu0 %v5129
      %5161 = vmatprep.subr.bf16.mxu0 0
      %5162 = vmatpush2.bf16.msra.mxu0 0
      %5163 = vmatprep.subr.bf16.mxu0 0
      %5164 = vmatpush2.bf16.msra.mxu0 0
      %5165 = vmatprep.subr.bf16.mxu0 0
      %5166 = vmatpush2.bf16.msra.mxu0 0
      %5167 = vmatprep.subr.bf16.mxu0 0
      %5168 = vmatpush2.bf16.msra.mxu0 0
      %5169 = vmatprep.subr.bf16.mxu0 0
      %5170 = vmatpush2.bf16.msra.mxu0 0
      %5171 = vmatprep.subr.bf16.mxu0 0
      %5172 = vmatpush2.bf16.msra.mxu0 0
      %5173 = vmatprep.subr.bf16.mxu0 0
      %5174 = vmatpush2.bf16.msra.mxu0 0
      %5175 = vmatprep.subr.bf16.mxu0 0
      %5176 = vmatpush2.bf16.msra.mxu0 0
      %5177 = vmatprep.mubr.bf16.mxu0 0
      %5178 = vmatmul.mubr.bf16.gmra.mxu0 %v4960
      %v5179 = vpop.f32.mrf.mxu0
      %v5180 = vadd.f32 0.0, %v5179
      %v5181 = vpop.f32.mrf.mxu0
      %v5182 = vpop.f32.mrf.mxu0
      %v5183 = vadd.f32 0.0, %v5182
      %v5184 = vpop.f32.mrf.mxu0
      %5185 = vmatprep.mubr.bf16.mxu0 0
      %5186 = vmatmul.mubr.bf16.gmra.mxu0 %v4968
      %v5187 = vpop.f32.mrf.mxu0
      %v5188 = vadd.f32 0.0, %v5187
      %v5189 = vpop.f32.mrf.mxu0
      %v5190 = vpop.f32.mrf.mxu0
      %v5191 = vadd.f32 0.0, %v5190
      %v5192 = vpop.f32.mrf.mxu0
      %5193 = vmatprep.mubr.bf16.mxu0 0
      %5194 = vmatmul.mubr.bf16.gmra.mxu0 %v4976
      %v5195 = vpop.f32.mrf.mxu0
      %v5196 = vadd.f32 0.0, %v5195
      %v5197 = vpop.f32.mrf.mxu0
      %v5198 = vpop.f32.mrf.mxu0
      %v5199 = vadd.f32 0.0, %v5198
      %v5200 = vpop.f32.mrf.mxu0
      %5201 = vmatprep.mubr.bf16.mxu0 0
      %5202 = vmatmul.mubr.bf16.gmra.mxu0 %v4984
      %v5203 = vpop.f32.mrf.mxu0
      %v5204 = vadd.f32 0.0, %v5203
      %v5205 = vpop.f32.mrf.mxu0
      %v5206 = vpop.f32.mrf.mxu0
      %v5207 = vadd.f32 0.0, %v5206
      %v5208 = vpop.f32.mrf.mxu0
      %5209 = vmatprep.mubr.bf16.mxu0 0
      %5210 = vmatmul.mubr.bf16.gmra.mxu0 %v4992
      %v5211 = vpop.f32.mrf.mxu0
      %v5212 = vadd.f32 0.0, %v5211
      %v5213 = vpop.f32.mrf.mxu0
      %v5214 = vpop.f32.mrf.mxu0
      %v5215 = vadd.f32 0.0, %v5214
      %v5216 = vpop.f32.mrf.mxu0
      %5217 = vmatprep.mubr.bf16.mxu0 0
      %5218 = vmatmul.mubr.bf16.gmra.mxu0 %v5000
      %v5219 = vpop.f32.mrf.mxu0
      %v5220 = vadd.f32 0.0, %v5219
      %v5221 = vpop.f32.mrf.mxu0
      %v5222 = vpop.f32.mrf.mxu0
      %v5223 = vadd.f32 0.0, %v5222
      %v5224 = vpop.f32.mrf.mxu0
      %5225 = vmatprep.mubr.bf16.mxu0 0
      %5226 = vmatmul.mubr.bf16.gmra.mxu0 %v5008
      %v5227 = vpop.f32.mrf.mxu0
      %v5228 = vadd.f32 0.0, %v5227
      %v5229 = vpop.f32.mrf.mxu0
      %v5230 = vpop.f32.mrf.mxu0
      %v5231 = vadd.f32 0.0, %v5230
      %v5232 = vpop.f32.mrf.mxu0
      %5233 = vmatprep.mubr.bf16.mxu0 0
      %5234 = vmatmul.mubr.bf16.gmra.mxu0 %v5016
      %v5235 = vpop.f32.mrf.mxu0
      %v5236 = vadd.f32 0.0, %v5235
      %v5237 = vpop.f32.mrf.mxu0
      %v5238 = vpop.f32.mrf.mxu0
      %v5239 = vadd.f32 0.0, %v5238
      %v5240 = vpop.f32.mrf.mxu0
      %5241 = vmatprep.mubr.bf16.mxu0 0
      %5242 = vmatmul.mubr.bf16.gmra.mxu0 %v5024
      %v5243 = vpop.f32.mrf.mxu0
      %v5244 = vadd.f32 0.0, %v5243
      %v5245 = vpop.f32.mrf.mxu0
      %v5246 = vpop.f32.mrf.mxu0
      %v5247 = vadd.f32 0.0, %v5246
      %v5248 = vpop.f32.mrf.mxu0
      %5249 = vmatprep.mubr.bf16.mxu0 0
      %5250 = vmatmul.mubr.bf16.gmra.mxu0 %v5032
      %v5251 = vpop.f32.mrf.mxu0
      %v5252 = vadd.f32 0.0, %v5251
      %v5253 = vpop.f32.mrf.mxu0
      %v5254 = vpop.f32.mrf.mxu0
      %v5255 = vadd.f32 0.0, %v5254
      %v5256 = vpop.f32.mrf.mxu0
      %5257 = vmatprep.mubr.bf16.mxu0 0
      %5258 = vmatmul.mubr.bf16.gmra.mxu0 %v5040
      %v5259 = vpop.f32.mrf.mxu0
      %v5260 = vadd.f32 0.0, %v5259
      %v5261 = vpop.f32.mrf.mxu0
      %v5262 = vpop.f32.mrf.mxu0
      %v5263 = vadd.f32 0.0, %v5262
      %v5264 = vpop.f32.mrf.mxu0
      %5265 = vmatprep.mubr.bf16.mxu0 0
      %5266 = vmatmul.mubr.bf16.gmra.mxu0 %v5048
      %v5267 = vpop.f32.mrf.mxu0
      %v5268 = vadd.f32 0.0, %v5267
      %v5269 = vpop.f32.mrf.mxu0
      %v5270 = vpop.f32.mrf.mxu0
      %v5271 = vadd.f32 0.0, %v5270
      %v5272 = vpop.f32.mrf.mxu0
      %5273 = vmatprep.mubr.bf16.mxu0 0
      %5274 = vmatmul.mubr.bf16.gmra.mxu0 %v5056
      %v5275 = vpop.f32.mrf.mxu0
      %v5276 = vadd.f32 0.0, %v5275
      %v5277 = vpop.f32.mrf.mxu0
      %v5278 = vpop.f32.mrf.mxu0
      %v5279 = vadd.f32 0.0, %v5278
      %v5280 = vpop.f32.mrf.mxu0
      %5281 = vmatprep.mubr.bf16.mxu0 0
      %5282 = vmatmul.mubr.bf16.gmra.mxu0 %v5064
      %v5283 = vpop.f32.mrf.mxu0
      %v5284 = vadd.f32 0.0, %v5283
      %v5285 = vpop.f32.mrf.mxu0
      %v5286 = vpop.f32.mrf.mxu0
      %v5287 = vadd.f32 0.0, %v5286
      %v5288 = vpop.f32.mrf.mxu0
      %5289 = vmatprep.mubr.bf16.mxu0 0
      %5290 = vmatmul.mubr.bf16.gmra.mxu0 %v5072
      %v5291 = vpop.f32.mrf.mxu0
      %v5292 = vadd.f32 0.0, %v5291
      %v5293 = vpop.f32.mrf.mxu0
      %v5294 = vpop.f32.mrf.mxu0
      %v5295 = vadd.f32 0.0, %v5294
      %v5296 = vpop.f32.mrf.mxu0
      %5297 = vmatprep.mubr.bf16.mxu0 0
      %5298 = vmatmul.mubr.bf16.gmra.mxu0 %v5080
      %v5299 = vpop.f32.mrf.mxu0
      %v5300 = vadd.f32 0.0, %v5299
      %v5301 = vpop.f32.mrf.mxu0
      %v5302 = vpop.f32.mrf.mxu0
      %v5303 = vadd.f32 0.0, %v5302
      %v5304 = vpop.f32.mrf.mxu0
      %5305 = vdwg.mxu0
      %v5306 = vld [vmem:[#allocation3] sm:$0xff]
      %v5307 = vld [vmem:[#allocation3 + $0x8] sm:$0xff]
      %v5308 = vld [vmem:[#allocation3 + $0x10] sm:$0xff]
      %v5309 = vld [vmem:[#allocation3 + $0x18] sm:$0xff]
      %v5310 = vld [vmem:[#allocation3 + $0x20] sm:$0xff]
      %v5311 = vld [vmem:[#allocation3 + $0x28] sm:$0xff]
      %v5312 = vld [vmem:[#allocation3 + $0x30] sm:$0xff]
      %v5313 = vld [vmem:[#allocation3 + $0x38] sm:$0xff]
      %v5314 = vld [vmem:[#allocation3 + $0x40] sm:$0xff]
      %v5315 = vld [vmem:[#allocation3 + $0x48] sm:$0xff]
      %v5316 = vld [vmem:[#allocation3 + $0x50] sm:$0xff]
      %v5317 = vld [vmem:[#allocation3 + $0x58] sm:$0xff]
      %v5318 = vld [vmem:[#allocation3 + $0x60] sm:$0xff]
      %v5319 = vld [vmem:[#allocation3 + $0x68] sm:$0xff]
      %v5320 = vld [vmem:[#allocation3 + $0x70] sm:$0xff]
      %v5321 = vld [vmem:[#allocation3 + $0x78] sm:$0xff]
      %v5322 = vld [vmem:[#allocation3 + $0x80] sm:$0xff]
      %v5323 = vld [vmem:[#allocation3 + $0x88] sm:$0xff]
      %v5324 = vld [vmem:[#allocation3 + $0x90] sm:$0xff]
      %v5325 = vld [vmem:[#allocation3 + $0x98] sm:$0xff]
      %v5326 = vld [vmem:[#allocation3 + $0xa0] sm:$0xff]
      %v5327 = vld [vmem:[#allocation3 + $0xa8] sm:$0xff]
      %v5328 = vld [vmem:[#allocation3 + $0xb0] sm:$0xff]
      %v5329 = vld [vmem:[#allocation3 + $0xb8] sm:$0xff]
      %v5330 = vld [vmem:[#allocation3 + $0xc0] sm:$0xff]
      %v5331 = vld [vmem:[#allocation3 + $0xc8] sm:$0xff]
      %v5332 = vld [vmem:[#allocation3 + $0xd0] sm:$0xff]
      %v5333 = vld [vmem:[#allocation3 + $0xd8] sm:$0xff]
      %v5334 = vld [vmem:[#allocation3 + $0xe0] sm:$0xff]
      %v5335 = vld [vmem:[#allocation3 + $0xe8] sm:$0xff]
      %v5336 = vld [vmem:[#allocation3 + $0xf0] sm:$0xff]
      %v5337 = vld [vmem:[#allocation3 + $0xf8] sm:$0xff]
      %v5338 = vadd.f32 %v5306, %v5180
      %v5339 = vadd.f32 %v5307, %v5183
      %v5340 = vadd.f32 %v5308, %v5188
      %v5341 = vadd.f32 %v5309, %v5191
      %v5342 = vadd.f32 %v5310, %v5196
      %v5343 = vadd.f32 %v5311, %v5199
      %v5344 = vadd.f32 %v5312, %v5204
      %v5345 = vadd.f32 %v5313, %v5207
      %v5346 = vadd.f32 %v5314, %v5212
      %v5347 = vadd.f32 %v5315, %v5215
      %v5348 = vadd.f32 %v5316, %v5220
      %v5349 = vadd.f32 %v5317, %v5223
      %v5350 = vadd.f32 %v5318, %v5228
      %v5351 = vadd.f32 %v5319, %v5231
      %v5352 = vadd.f32 %v5320, %v5236
      %v5353 = vadd.f32 %v5321, %v5239
      %v5354 = vadd.f32 %v5322, %v5244
      %v5355 = vadd.f32 %v5323, %v5247
      %v5356 = vadd.f32 %v5324, %v5252
      %v5357 = vadd.f32 %v5325, %v5255
      %v5358 = vadd.f32 %v5326, %v5260
      %v5359 = vadd.f32 %v5327, %v5263
      %v5360 = vadd.f32 %v5328, %v5268
      %v5361 = vadd.f32 %v5329, %v5271
      %v5362 = vadd.f32 %v5330, %v5276
      %v5363 = vadd.f32 %v5331, %v5279
      %v5364 = vadd.f32 %v5332, %v5284
      %v5365 = vadd.f32 %v5333, %v5287
      %v5366 = vadd.f32 %v5334, %v5292
      %v5367 = vadd.f32 %v5335, %v5295
      %v5368 = vadd.f32 %v5336, %v5300
      %v5369 = vadd.f32 %v5337, %v5303
      %5370 = vst [vmem:[#allocation3] sm:$0xff] %v5338
      %5371 = vst [vmem:[#allocation3 + $0x8] sm:$0xff] %v5339
      %5372 = vst [vmem:[#allocation3 + $0x10] sm:$0xff] %v5340
      %5373 = vst [vmem:[#allocation3 + $0x18] sm:$0xff] %v5341
      %5374 = vst [vmem:[#allocation3 + $0x20] sm:$0xff] %v5342
      %5375 = vst [vmem:[#allocation3 + $0x28] sm:$0xff] %v5343
      %5376 = vst [vmem:[#allocation3 + $0x30] sm:$0xff] %v5344
      %5377 = vst [vmem:[#allocation3 + $0x38] sm:$0xff] %v5345
      %5378 = vst [vmem:[#allocation3 + $0x40] sm:$0xff] %v5346
      %5379 = vst [vmem:[#allocation3 + $0x48] sm:$0xff] %v5347
      %5380 = vst [vmem:[#allocation3 + $0x50] sm:$0xff] %v5348
      %5381 = vst [vmem:[#allocation3 + $0x58] sm:$0xff] %v5349
      %5382 = vst [vmem:[#allocation3 + $0x60] sm:$0xff] %v5350
      %5383 = vst [vmem:[#allocation3 + $0x68] sm:$0xff] %v5351
      %5384 = vst [vmem:[#allocation3 + $0x70] sm:$0xff] %v5352
      %5385 = vst [vmem:[#allocation3 + $0x78] sm:$0xff] %v5353
      %5386 = vst [vmem:[#allocation3 + $0x80] sm:$0xff] %v5354
      %5387 = vst [vmem:[#allocation3 + $0x88] sm:$0xff] %v5355
      %5388 = vst [vmem:[#allocation3 + $0x90] sm:$0xff] %v5356
      %5389 = vst [vmem:[#allocation3 + $0x98] sm:$0xff] %v5357
      %5390 = vst [vmem:[#allocation3 + $0xa0] sm:$0xff] %v5358
      %5391 = vst [vmem:[#allocation3 + $0xa8] sm:$0xff] %v5359
      %5392 = vst [vmem:[#allocation3 + $0xb0] sm:$0xff] %v5360
      %5393 = vst [vmem:[#allocation3 + $0xb8] sm:$0xff] %v5361
      %5394 = vst [vmem:[#allocation3 + $0xc0] sm:$0xff] %v5362
      %5395 = vst [vmem:[#allocation3 + $0xc8] sm:$0xff] %v5363
      %5396 = vst [vmem:[#allocation3 + $0xd0] sm:$0xff] %v5364
      %5397 = vst [vmem:[#allocation3 + $0xd8] sm:$0xff] %v5365
      %5398 = vst [vmem:[#allocation3 + $0xe0] sm:$0xff] %v5366
      %5399 = vst [vmem:[#allocation3 + $0xe8] sm:$0xff] %v5367
      %5400 = vst [vmem:[#allocation3 + $0xf0] sm:$0xff] %v5368
      %5401 = vst [vmem:[#allocation3 + $0xf8] sm:$0xff] %v5369
      %v5402 = vld [vmem:[#allocation2 + $0x14] sm:$0x8]
      %v5403 = vld [vmem:[#allocation2 + $0x18] sm:$0xf]
      %v5404 = vld [vmem:[#allocation2 + $0x1c] sm:$0xf]
      %v5405 = vld [vmem:[#allocation2 + $0x20] sm:$0xf]
      %v5406 = vld [vmem:[#allocation2 + $0x24] sm:$0xf]
      %v5407 = vld [vmem:[#allocation2 + $0x28] sm:$0xf]
      %v5408 = vld [vmem:[#allocation2 + $0x2c] sm:$0xf]
      %v5409 = vld [vmem:[#allocation2 + $0x30] sm:$0xf]
      %v5410 = vld [vmem:[#allocation2 + $0x34] sm:$0xf]
      %v5411 = vld [vmem:[#allocation2 + $0x38] sm:$0xf]
      %v5412 = vld [vmem:[#allocation2 + $0x3c] sm:$0xf]
      %v5413 = vld [vmem:[#allocation2 + $0x40] sm:$0xf]
      %v5414 = vld [vmem:[#allocation2 + $0x44] sm:$0xf]
      %v5415 = vld [vmem:[#allocation2 + $0x48] sm:$0xf]
      %v5416 = vld [vmem:[#allocation2 + $0x4c] sm:$0xf]
      %v5417 = vld [vmem:[#allocation2 + $0x50] sm:$0xf]
      %v5418 = vld [vmem:[#allocation2 + $0x54] sm:$0xf]
      %v5419 = vld [vmem:[#allocation2 + $0x58] sm:$0xf]
      %v5420 = vld [vmem:[#allocation2 + $0x5c] sm:$0xf]
      %v5421 = vld [vmem:[#allocation2 + $0x60] sm:$0xf]
      %v5422 = vld [vmem:[#allocation2 + $0x64] sm:$0xf]
      %v5423 = vld [vmem:[#allocation2 + $0x68] sm:$0xf]
      %v5424 = vld [vmem:[#allocation2 + $0x6c] sm:$0xf]
      %v5425 = vld [vmem:[#allocation2 + $0x70] sm:$0xf]
      %v5426 = vld [vmem:[#allocation2 + $0x74] sm:$0xf]
      %v5427 = vld [vmem:[#allocation2 + $0x78] sm:$0xf]
      %v5428 = vld [vmem:[#allocation2 + $0x7c] sm:$0xf]
      %v5429 = vld [vmem:[#allocation2 + $0x80] sm:$0xf]
      %v5430 = vld [vmem:[#allocation2 + $0x84] sm:$0xf]
      %v5431 = vld [vmem:[#allocation2 + $0x88] sm:$0xf]
      %v5432 = vld [vmem:[#allocation2 + $0x8c] sm:$0xf]
      %v5433 = vld [vmem:[#allocation2 + $0x90] sm:$0xf]
      %v5434 = vld [vmem:[#allocation2 + $0x94] sm:$0xf]
      %v5435 = vsel %vm1598, %v5402, 0
      %v5436 = vsel %vm1599, %v5403, 0
      %v5437 = vsel %vm1600, %v5404, 0
      %v5438 = vsel %vm1601, %v5405, 0
      %v5439 = vsel %vm1602, %v5406, 0
      %v5440 = vsel %vm1603, %v5407, 0
      %v5441 = vsel %vm1604, %v5408, 0
      %v5442 = vsel %vm1605, %v5409, 0
      %v5443 = vsel %vm1606, %v5410, 0
      %v5444 = vsel %vm1607, %v5411, 0
      %v5445 = vsel %vm1608, %v5412, 0
      %v5446 = vsel %vm1609, %v5413, 0
      %v5447 = vsel %vm1610, %v5414, 0
      %v5448 = vsel %vm1611, %v5415, 0
      %v5449 = vsel %vm1612, %v5416, 0
      %v5450 = vsel %vm1613, %v5417, 0
      %v5451 = vsel %vm1614, %v5418, 0
      %v5452 = vsel %vm1615, %v5419, 0
      %v5453 = vsel %vm1616, %v5420, 0
      %v5454 = vsel %vm1617, %v5421, 0
      %v5455 = vsel %vm1618, %v5422, 0
      %v5456 = vsel %vm1619, %v5423, 0
      %v5457 = vsel %vm1620, %v5424, 0
      %v5458 = vsel %vm1621, %v5425, 0
      %v5459 = vsel %vm1622, %v5426, 0
      %v5460 = vsel %vm1623, %v5427, 0
      %v5461 = vsel %vm1624, %v5428, 0
      %v5462 = vsel %vm1625, %v5429, 0
      %v5463 = vsel %vm1626, %v5430, 0
      %v5464 = vsel %vm1627, %v5431, 0
      %v5465 = vsel %vm1628, %v5432, 0
      %v5466 = vsel %vm1629, %v5433, 0
      %v5467 = vsel %vm1630, %v5434, 0
      %s5468 = scalar_lea.vmem %s265, 384
      %v5469 = vld [vmem:[%s5468] sm:$0xf]
      %v5470 = vld [vmem:[%s5468 + $0x4] sm:$0xf]
      %v5471 = vld [vmem:[%s5468 + $0x8] sm:$0xf]
      %v5472 = vld [vmem:[%s5468 + $0xc] sm:$0xf]
      %v5473 = vld [vmem:[%s5468 + $0x10] sm:$0xf]
      %v5474 = vld [vmem:[%s5468 + $0x14] sm:$0xf]
      %v5475 = vld [vmem:[%s5468 + $0x18] sm:$0xf]
      %v5476 = vld [vmem:[%s5468 + $0x1c] sm:$0xf]
      %v5477 = vld [vmem:[%s5468 + $0x20] sm:$0xf]
      %v5478 = vld [vmem:[%s5468 + $0x24] sm:$0xf]
      %v5479 = vld [vmem:[%s5468 + $0x28] sm:$0xf]
      %v5480 = vld [vmem:[%s5468 + $0x2c] sm:$0xf]
      %v5481 = vld [vmem:[%s5468 + $0x30] sm:$0xf]
      %v5482 = vld [vmem:[%s5468 + $0x34] sm:$0xf]
      %v5483 = vld [vmem:[%s5468 + $0x38] sm:$0xf]
      %v5484 = vld [vmem:[%s5468 + $0x3c] sm:$0xf]
      %v5518 = vunpack.c.l.b16 %v5435
      %v5519 = vunpack.c.l.b16 %v5436
      %v5520 = vunpack.c.l.b16 %v5437
      %v5521 = vunpack.c.l.b16 %v5438
      %v5522 = vunpack.c.l.b16 %v5439
      %v5523 = vunpack.c.l.b16 %v5440
      %v5524 = vunpack.c.l.b16 %v5441
      %v5525 = vunpack.c.l.b16 %v5442
      %v5526 = vunpack.c.l.b16 %v5443
      %v5527 = vunpack.c.l.b16 %v5444
      %v5528 = vunpack.c.l.b16 %v5445
      %v5529 = vunpack.c.l.b16 %v5446
      %v5530 = vunpack.c.l.b16 %v5447
      %v5531 = vunpack.c.l.b16 %v5448
      %v5532 = vunpack.c.l.b16 %v5449
      %v5533 = vunpack.c.l.b16 %v5450
      %v5534 = vunpack.c.l.b16 %v5451
      %v5535 = vunpack.c.l.b16 %v5452
      %v5536 = vunpack.c.l.b16 %v5453
      %v5537 = vunpack.c.l.b16 %v5454
      %v5538 = vunpack.c.l.b16 %v5455
      %v5539 = vunpack.c.l.b16 %v5456
      %v5540 = vunpack.c.l.b16 %v5457
      %v5541 = vunpack.c.l.b16 %v5458
      %v5542 = vunpack.c.l.b16 %v5459
      %v5543 = vunpack.c.l.b16 %v5460
      %v5544 = vunpack.c.l.b16 %v5461
      %v5545 = vunpack.c.l.b16 %v5462
      %v5546 = vunpack.c.l.b16 %v5463
      %v5547 = vunpack.c.l.b16 %v5464
      %v5548 = vunpack.c.l.b16 %v5465
      %v5549 = vunpack.c.l.b16 %v5466
      %v5550 = vunpack.c.l.b16 %v5467
      %v5551 = vpack.c.b16 %v5519, %v5518
      %v5552 = vpack.c.b16 %v5521, %v5520
      %v5553 = vpack.c.b16 %v5523, %v5522
      %v5554 = vpack.c.b16 %v5525, %v5524
      %v5555 = vpack.c.b16 %v5527, %v5526
      %v5556 = vpack.c.b16 %v5529, %v5528
      %v5557 = vpack.c.b16 %v5531, %v5530
      %v5558 = vpack.c.b16 %v5533, %v5532
      %v5559 = vpack.c.b16 %v5535, %v5534
      %v5560 = vpack.c.b16 %v5537, %v5536
      %v5561 = vpack.c.b16 %v5539, %v5538
      %v5562 = vpack.c.b16 %v5541, %v5540
      %v5563 = vpack.c.b16 %v5543, %v5542
      %v5564 = vpack.c.b16 %v5545, %v5544
      %v5565 = vpack.c.b16 %v5547, %v5546
      %v5566 = vpack.c.b16 %v5549, %v5548
      %v5567 = vpack.c.b16 %v5550, %v5550
      %v5569 = vshrl.u32 %v5551, 16
      %v5571 = vrot.slane %v5569, 3
      %v5572 = vshll.u32 %v5551, 16
      %v5574 = vrot.slane %v5572, 4
      %v5575 = vor.u32 %v5571, %v5574
      %v5577 = vshrl.u32 %v5552, 16
      %v5579 = vrot.slane %v5577, 3
      %v5580 = vshll.u32 %v5552, 16
      %v5582 = vrot.slane %v5580, 4
      %v5583 = vor.u32 %v5579, %v5582
      %v5584 = vsel %vm1763, %v5575, %v5583
      %v5586 = vshrl.u32 %v5553, 16
      %v5588 = vrot.slane %v5586, 3
      %v5589 = vshll.u32 %v5553, 16
      %v5591 = vrot.slane %v5589, 4
      %v5592 = vor.u32 %v5588, %v5591
      %v5593 = vsel %vm1763, %v5583, %v5592
      %v5595 = vshrl.u32 %v5554, 16
      %v5597 = vrot.slane %v5595, 3
      %v5598 = vshll.u32 %v5554, 16
      %v5600 = vrot.slane %v5598, 4
      %v5601 = vor.u32 %v5597, %v5600
      %v5602 = vsel %vm1763, %v5592, %v5601
      %v5604 = vshrl.u32 %v5555, 16
      %v5606 = vrot.slane %v5604, 3
      %v5607 = vshll.u32 %v5555, 16
      %v5609 = vrot.slane %v5607, 4
      %v5610 = vor.u32 %v5606, %v5609
      %v5611 = vsel %vm1763, %v5601, %v5610
      %v5613 = vshrl.u32 %v5556, 16
      %v5615 = vrot.slane %v5613, 3
      %v5616 = vshll.u32 %v5556, 16
      %v5618 = vrot.slane %v5616, 4
      %v5619 = vor.u32 %v5615, %v5618
      %v5620 = vsel %vm1763, %v5610, %v5619
      %v5622 = vshrl.u32 %v5557, 16
      %v5624 = vrot.slane %v5622, 3
      %v5625 = vshll.u32 %v5557, 16
      %v5627 = vrot.slane %v5625, 4
      %v5628 = vor.u32 %v5624, %v5627
      %v5629 = vsel %vm1763, %v5619, %v5628
      %v5631 = vshrl.u32 %v5558, 16
      %v5633 = vrot.slane %v5631, 3
      %v5634 = vshll.u32 %v5558, 16
      %v5636 = vrot.slane %v5634, 4
      %v5637 = vor.u32 %v5633, %v5636
      %v5638 = vsel %vm1763, %v5628, %v5637
      %v5640 = vshrl.u32 %v5559, 16
      %v5642 = vrot.slane %v5640, 3
      %v5643 = vshll.u32 %v5559, 16
      %v5645 = vrot.slane %v5643, 4
      %v5646 = vor.u32 %v5642, %v5645
      %v5647 = vsel %vm1763, %v5637, %v5646
      %v5649 = vshrl.u32 %v5560, 16
      %v5651 = vrot.slane %v5649, 3
      %v5652 = vshll.u32 %v5560, 16
      %v5654 = vrot.slane %v5652, 4
      %v5655 = vor.u32 %v5651, %v5654
      %v5656 = vsel %vm1763, %v5646, %v5655
      %v5658 = vshrl.u32 %v5561, 16
      %v5660 = vrot.slane %v5658, 3
      %v5661 = vshll.u32 %v5561, 16
      %v5663 = vrot.slane %v5661, 4
      %v5664 = vor.u32 %v5660, %v5663
      %v5665 = vsel %vm1763, %v5655, %v5664
      %v5667 = vshrl.u32 %v5562, 16
      %v5669 = vrot.slane %v5667, 3
      %v5670 = vshll.u32 %v5562, 16
      %v5672 = vrot.slane %v5670, 4
      %v5673 = vor.u32 %v5669, %v5672
      %v5674 = vsel %vm1763, %v5664, %v5673
      %v5676 = vshrl.u32 %v5563, 16
      %v5678 = vrot.slane %v5676, 3
      %v5679 = vshll.u32 %v5563, 16
      %v5681 = vrot.slane %v5679, 4
      %v5682 = vor.u32 %v5678, %v5681
      %v5683 = vsel %vm1763, %v5673, %v5682
      %v5685 = vshrl.u32 %v5564, 16
      %v5687 = vrot.slane %v5685, 3
      %v5688 = vshll.u32 %v5564, 16
      %v5690 = vrot.slane %v5688, 4
      %v5691 = vor.u32 %v5687, %v5690
      %v5692 = vsel %vm1763, %v5682, %v5691
      %v5694 = vshrl.u32 %v5565, 16
      %v5696 = vrot.slane %v5694, 3
      %v5697 = vshll.u32 %v5565, 16
      %v5699 = vrot.slane %v5697, 4
      %v5700 = vor.u32 %v5696, %v5699
      %v5701 = vsel %vm1763, %v5691, %v5700
      %v5703 = vshrl.u32 %v5566, 16
      %v5705 = vrot.slane %v5703, 3
      %v5706 = vshll.u32 %v5566, 16
      %v5708 = vrot.slane %v5706, 4
      %v5709 = vor.u32 %v5705, %v5708
      %v5710 = vsel %vm1763, %v5700, %v5709
      %v5712 = vshrl.u32 %v5567, 16
      %v5714 = vrot.slane %v5712, 3
      %v5715 = vshll.u32 %v5567, 16
      %v5717 = vrot.slane %v5715, 4
      %v5718 = vor.u32 %v5714, %v5717
      %v5719 = vsel %vm1763, %v5709, %v5718
      %v5752 = vunpack.c.l.b16 %v5469
      %v5753 = vunpack.c.l.b16 %v5470
      %v5754 = vunpack.c.l.b16 %v5471
      %v5755 = vunpack.c.l.b16 %v5472
      %v5756 = vunpack.c.l.b16 %v5473
      %v5757 = vunpack.c.l.b16 %v5474
      %v5758 = vunpack.c.l.b16 %v5475
      %v5759 = vunpack.c.l.b16 %v5476
      %v5760 = vunpack.c.l.b16 %v5477
      %v5761 = vunpack.c.l.b16 %v5478
      %v5762 = vunpack.c.l.b16 %v5479
      %v5763 = vunpack.c.l.b16 %v5480
      %v5764 = vunpack.c.l.b16 %v5481
      %v5765 = vunpack.c.l.b16 %v5482
      %v5766 = vunpack.c.l.b16 %v5483
      %v5767 = vunpack.c.l.b16 %v5484
      %v5768 = vpack.c.b16 %v5753, %v5752
      %v5769 = vpack.c.b16 %v5755, %v5754
      %v5770 = vpack.c.b16 %v5757, %v5756
      %v5771 = vpack.c.b16 %v5759, %v5758
      %v5772 = vpack.c.b16 %v5761, %v5760
      %v5773 = vpack.c.b16 %v5763, %v5762
      %v5774 = vpack.c.b16 %v5765, %v5764
      %v5775 = vpack.c.b16 %v5767, %v5766
      %5784 = vmatprep.subr.bf16.mxu0 0
      %5785 = vmatpush1.bf16.msra.mxu0 %v5775
      %5786 = vmatprep.subr.bf16.mxu0 0
      %5787 = vmatpush1.bf16.msra.mxu0 %v5774
      %5788 = vmatprep.subr.bf16.mxu0 0
      %5789 = vmatpush1.bf16.msra.mxu0 %v5773
      %5790 = vmatprep.subr.bf16.mxu0 0
      %5791 = vmatpush1.bf16.msra.mxu0 %v5772
      %5792 = vmatprep.subr.bf16.mxu0 0
      %5793 = vmatpush1.bf16.msra.mxu0 %v5771
      %5794 = vmatprep.subr.bf16.mxu0 0
      %5795 = vmatpush1.bf16.msra.mxu0 %v5770
      %5796 = vmatprep.subr.bf16.mxu0 0
      %5797 = vmatpush1.bf16.msra.mxu0 %v5769
      %5798 = vmatprep.subr.bf16.mxu0 0
      %5799 = vmatpush1.bf16.msra.mxu0 %v5768
      %5800 = vmatprep.subr.bf16.mxu0 0
      %5801 = vmatpush2.bf16.msra.mxu0 0
      %5802 = vmatprep.subr.bf16.mxu0 0
      %5803 = vmatpush2.bf16.msra.mxu0 0
      %5804 = vmatprep.subr.bf16.mxu0 0
      %5805 = vmatpush2.bf16.msra.mxu0 0
      %5806 = vmatprep.subr.bf16.mxu0 0
      %5807 = vmatpush2.bf16.msra.mxu0 0
      %5808 = vmatprep.subr.bf16.mxu0 0
      %5809 = vmatpush2.bf16.msra.mxu0 0
      %5810 = vmatprep.subr.bf16.mxu0 0
      %5811 = vmatpush2.bf16.msra.mxu0 0
      %5812 = vmatprep.subr.bf16.mxu0 0
      %5813 = vmatpush2.bf16.msra.mxu0 0
      %5814 = vmatprep.subr.bf16.mxu0 0
      %5815 = vmatpush2.bf16.msra.mxu0 0
      %5816 = vmatprep.mubr.bf16.mxu0 0
      %5817 = vmatmul.mubr.bf16.gmra.mxu0 %v5584
      %v5818 = vpop.f32.mrf.mxu0
      %v5819 = vadd.f32 0.0, %v5818
      %v5820 = vpop.f32.mrf.mxu0
      %v5821 = vpop.f32.mrf.mxu0
      %v5822 = vadd.f32 0.0, %v5821
      %v5823 = vpop.f32.mrf.mxu0
      %5824 = vmatprep.mubr.bf16.mxu0 0
      %5825 = vmatmul.mubr.bf16.gmra.mxu0 %v5593
      %v5826 = vpop.f32.mrf.mxu0
      %v5827 = vadd.f32 0.0, %v5826
      %v5828 = vpop.f32.mrf.mxu0
      %v5829 = vpop.f32.mrf.mxu0
      %v5830 = vadd.f32 0.0, %v5829
      %v5831 = vpop.f32.mrf.mxu0
      %5832 = vmatprep.mubr.bf16.mxu0 0
      %5833 = vmatmul.mubr.bf16.gmra.mxu0 %v5602
      %v5834 = vpop.f32.mrf.mxu0
      %v5835 = vadd.f32 0.0, %v5834
      %v5836 = vpop.f32.mrf.mxu0
      %v5837 = vpop.f32.mrf.mxu0
      %v5838 = vadd.f32 0.0, %v5837
      %v5839 = vpop.f32.mrf.mxu0
      %5840 = vmatprep.mubr.bf16.mxu0 0
      %5841 = vmatmul.mubr.bf16.gmra.mxu0 %v5611
      %v5842 = vpop.f32.mrf.mxu0
      %v5843 = vadd.f32 0.0, %v5842
      %v5844 = vpop.f32.mrf.mxu0
      %v5845 = vpop.f32.mrf.mxu0
      %v5846 = vadd.f32 0.0, %v5845
      %v5847 = vpop.f32.mrf.mxu0
      %5848 = vmatprep.mubr.bf16.mxu0 0
      %5849 = vmatmul.mubr.bf16.gmra.mxu0 %v5620
      %v5850 = vpop.f32.mrf.mxu0
      %v5851 = vadd.f32 0.0, %v5850
      %v5852 = vpop.f32.mrf.mxu0
      %v5853 = vpop.f32.mrf.mxu0
      %v5854 = vadd.f32 0.0, %v5853
      %v5855 = vpop.f32.mrf.mxu0
      %5856 = vmatprep.mubr.bf16.mxu0 0
      %5857 = vmatmul.mubr.bf16.gmra.mxu0 %v5629
      %v5858 = vpop.f32.mrf.mxu0
      %v5859 = vadd.f32 0.0, %v5858
      %v5860 = vpop.f32.mrf.mxu0
      %v5861 = vpop.f32.mrf.mxu0
      %v5862 = vadd.f32 0.0, %v5861
      %v5863 = vpop.f32.mrf.mxu0
      %5864 = vmatprep.mubr.bf16.mxu0 0
      %5865 = vmatmul.mubr.bf16.gmra.mxu0 %v5638
      %v5866 = vpop.f32.mrf.mxu0
      %v5867 = vadd.f32 0.0, %v5866
      %v5868 = vpop.f32.mrf.mxu0
      %v5869 = vpop.f32.mrf.mxu0
      %v5870 = vadd.f32 0.0, %v5869
      %v5871 = vpop.f32.mrf.mxu0
      %5872 = vmatprep.mubr.bf16.mxu0 0
      %5873 = vmatmul.mubr.bf16.gmra.mxu0 %v5647
      %v5874 = vpop.f32.mrf.mxu0
      %v5875 = vadd.f32 0.0, %v5874
      %v5876 = vpop.f32.mrf.mxu0
      %v5877 = vpop.f32.mrf.mxu0
      %v5878 = vadd.f32 0.0, %v5877
      %v5879 = vpop.f32.mrf.mxu0
      %5880 = vmatprep.mubr.bf16.mxu0 0
      %5881 = vmatmul.mubr.bf16.gmra.mxu0 %v5656
      %v5882 = vpop.f32.mrf.mxu0
      %v5883 = vadd.f32 0.0, %v5882
      %v5884 = vpop.f32.mrf.mxu0
      %v5885 = vpop.f32.mrf.mxu0
      %v5886 = vadd.f32 0.0, %v5885
      %v5887 = vpop.f32.mrf.mxu0
      %5888 = vmatprep.mubr.bf16.mxu0 0
      %5889 = vmatmul.mubr.bf16.gmra.mxu0 %v5665
      %v5890 = vpop.f32.mrf.mxu0
      %v5891 = vadd.f32 0.0, %v5890
      %v5892 = vpop.f32.mrf.mxu0
      %v5893 = vpop.f32.mrf.mxu0
      %v5894 = vadd.f32 0.0, %v5893
      %v5895 = vpop.f32.mrf.mxu0
      %5896 = vmatprep.mubr.bf16.mxu0 0
      %5897 = vmatmul.mubr.bf16.gmra.mxu0 %v5674
      %v5898 = vpop.f32.mrf.mxu0
      %v5899 = vadd.f32 0.0, %v5898
      %v5900 = vpop.f32.mrf.mxu0
      %v5901 = vpop.f32.mrf.mxu0
      %v5902 = vadd.f32 0.0, %v5901
      %v5903 = vpop.f32.mrf.mxu0
      %5904 = vmatprep.mubr.bf16.mxu0 0
      %5905 = vmatmul.mubr.bf16.gmra.mxu0 %v5683
      %v5906 = vpop.f32.mrf.mxu0
      %v5907 = vadd.f32 0.0, %v5906
      %v5908 = vpop.f32.mrf.mxu0
      %v5909 = vpop.f32.mrf.mxu0
      %v5910 = vadd.f32 0.0, %v5909
      %v5911 = vpop.f32.mrf.mxu0
      %5912 = vmatprep.mubr.bf16.mxu0 0
      %5913 = vmatmul.mubr.bf16.gmra.mxu0 %v5692
      %v5914 = vpop.f32.mrf.mxu0
      %v5915 = vadd.f32 0.0, %v5914
      %v5916 = vpop.f32.mrf.mxu0
      %v5917 = vpop.f32.mrf.mxu0
      %v5918 = vadd.f32 0.0, %v5917
      %v5919 = vpop.f32.mrf.mxu0
      %5920 = vmatprep.mubr.bf16.mxu0 0
      %5921 = vmatmul.mubr.bf16.gmra.mxu0 %v5701
      %v5922 = vpop.f32.mrf.mxu0
      %v5923 = vadd.f32 0.0, %v5922
      %v5924 = vpop.f32.mrf.mxu0
      %v5925 = vpop.f32.mrf.mxu0
      %v5926 = vadd.f32 0.0, %v5925
      %v5927 = vpop.f32.mrf.mxu0
      %5928 = vmatprep.mubr.bf16.mxu0 0
      %5929 = vmatmul.mubr.bf16.gmra.mxu0 %v5710
      %v5930 = vpop.f32.mrf.mxu0
      %v5931 = vadd.f32 0.0, %v5930
      %v5932 = vpop.f32.mrf.mxu0
      %v5933 = vpop.f32.mrf.mxu0
      %v5934 = vadd.f32 0.0, %v5933
      %v5935 = vpop.f32.mrf.mxu0
      %5936 = vmatprep.mubr.bf16.mxu0 0
      %5937 = vmatmul.mubr.bf16.gmra.mxu0 %v5719
      %v5938 = vpop.f32.mrf.mxu0
      %v5939 = vadd.f32 0.0, %v5938
      %v5940 = vpop.f32.mrf.mxu0
      %v5941 = vpop.f32.mrf.mxu0
      %v5942 = vadd.f32 0.0, %v5941
      %v5943 = vpop.f32.mrf.mxu0
      %5944 = vdwg.mxu0
      %v5945 = vld [vmem:[#allocation3] sm:$0xff]
      %v5946 = vld [vmem:[#allocation3 + $0x8] sm:$0xff]
      %v5947 = vld [vmem:[#allocation3 + $0x10] sm:$0xff]
      %v5948 = vld [vmem:[#allocation3 + $0x18] sm:$0xff]
      %v5949 = vld [vmem:[#allocation3 + $0x20] sm:$0xff]
      %v5950 = vld [vmem:[#allocation3 + $0x28] sm:$0xff]
      %v5951 = vld [vmem:[#allocation3 + $0x30] sm:$0xff]
      %v5952 = vld [vmem:[#allocation3 + $0x38] sm:$0xff]
      %v5953 = vld [vmem:[#allocation3 + $0x40] sm:$0xff]
      %v5954 = vld [vmem:[#allocation3 + $0x48] sm:$0xff]
      %v5955 = vld [vmem:[#allocation3 + $0x50] sm:$0xff]
      %v5956 = vld [vmem:[#allocation3 + $0x58] sm:$0xff]
      %v5957 = vld [vmem:[#allocation3 + $0x60] sm:$0xff]
      %v5958 = vld [vmem:[#allocation3 + $0x68] sm:$0xff]
      %v5959 = vld [vmem:[#allocation3 + $0x70] sm:$0xff]
      %v5960 = vld [vmem:[#allocation3 + $0x78] sm:$0xff]
      %v5961 = vld [vmem:[#allocation3 + $0x80] sm:$0xff]
      %v5962 = vld [vmem:[#allocation3 + $0x88] sm:$0xff]
      %v5963 = vld [vmem:[#allocation3 + $0x90] sm:$0xff]
      %v5964 = vld [vmem:[#allocation3 + $0x98] sm:$0xff]
      %v5965 = vld [vmem:[#allocation3 + $0xa0] sm:$0xff]
      %v5966 = vld [vmem:[#allocation3 + $0xa8] sm:$0xff]
      %v5967 = vld [vmem:[#allocation3 + $0xb0] sm:$0xff]
      %v5968 = vld [vmem:[#allocation3 + $0xb8] sm:$0xff]
      %v5969 = vld [vmem:[#allocation3 + $0xc0] sm:$0xff]
      %v5970 = vld [vmem:[#allocation3 + $0xc8] sm:$0xff]
      %v5971 = vld [vmem:[#allocation3 + $0xd0] sm:$0xff]
      %v5972 = vld [vmem:[#allocation3 + $0xd8] sm:$0xff]
      %v5973 = vld [vmem:[#allocation3 + $0xe0] sm:$0xff]
      %v5974 = vld [vmem:[#allocation3 + $0xe8] sm:$0xff]
      %v5975 = vld [vmem:[#allocation3 + $0xf0] sm:$0xff]
      %v5976 = vld [vmem:[#allocation3 + $0xf8] sm:$0xff]
      %v5977 = vadd.f32 %v5945, %v5819
      %v5978 = vadd.f32 %v5946, %v5822
      %v5979 = vadd.f32 %v5947, %v5827
      %v5980 = vadd.f32 %v5948, %v5830
      %v5981 = vadd.f32 %v5949, %v5835
      %v5982 = vadd.f32 %v5950, %v5838
      %v5983 = vadd.f32 %v5951, %v5843
      %v5984 = vadd.f32 %v5952, %v5846
      %v5985 = vadd.f32 %v5953, %v5851
      %v5986 = vadd.f32 %v5954, %v5854
      %v5987 = vadd.f32 %v5955, %v5859
      %v5988 = vadd.f32 %v5956, %v5862
      %v5989 = vadd.f32 %v5957, %v5867
      %v5990 = vadd.f32 %v5958, %v5870
      %v5991 = vadd.f32 %v5959, %v5875
      %v5992 = vadd.f32 %v5960, %v5878
      %v5993 = vadd.f32 %v5961, %v5883
      %v5994 = vadd.f32 %v5962, %v5886
      %v5995 = vadd.f32 %v5963, %v5891
      %v5996 = vadd.f32 %v5964, %v5894
      %v5997 = vadd.f32 %v5965, %v5899
      %v5998 = vadd.f32 %v5966, %v5902
      %v5999 = vadd.f32 %v5967, %v5907
      %v6000 = vadd.f32 %v5968, %v5910
      %v6001 = vadd.f32 %v5969, %v5915
      %v6002 = vadd.f32 %v5970, %v5918
      %v6003 = vadd.f32 %v5971, %v5923
      %v6004 = vadd.f32 %v5972, %v5926
      %v6005 = vadd.f32 %v5973, %v5931
      %v6006 = vadd.f32 %v5974, %v5934
      %v6007 = vadd.f32 %v5975, %v5939
      %v6008 = vadd.f32 %v5976, %v5942
      %6009 = vst [vmem:[#allocation3] sm:$0xff] %v5977
      %6010 = vst [vmem:[#allocation3 + $0x8] sm:$0xff] %v5978
      %6011 = vst [vmem:[#allocation3 + $0x10] sm:$0xff] %v5979
      %6012 = vst [vmem:[#allocation3 + $0x18] sm:$0xff] %v5980
      %6013 = vst [vmem:[#allocation3 + $0x20] sm:$0xff] %v5981
      %6014 = vst [vmem:[#allocation3 + $0x28] sm:$0xff] %v5982
      %6015 = vst [vmem:[#allocation3 + $0x30] sm:$0xff] %v5983
      %6016 = vst [vmem:[#allocation3 + $0x38] sm:$0xff] %v5984
      %6017 = vst [vmem:[#allocation3 + $0x40] sm:$0xff] %v5985
      %6018 = vst [vmem:[#allocation3 + $0x48] sm:$0xff] %v5986
      %6019 = vst [vmem:[#allocation3 + $0x50] sm:$0xff] %v5987
      %6020 = vst [vmem:[#allocation3 + $0x58] sm:$0xff] %v5988
      %6021 = vst [vmem:[#allocation3 + $0x60] sm:$0xff] %v5989
      %6022 = vst [vmem:[#allocation3 + $0x68] sm:$0xff] %v5990
      %6023 = vst [vmem:[#allocation3 + $0x70] sm:$0xff] %v5991
      %6024 = vst [vmem:[#allocation3 + $0x78] sm:$0xff] %v5992
      %6025 = vst [vmem:[#allocation3 + $0x80] sm:$0xff] %v5993
      %6026 = vst [vmem:[#allocation3 + $0x88] sm:$0xff] %v5994
      %6027 = vst [vmem:[#allocation3 + $0x90] sm:$0xff] %v5995
      %6028 = vst [vmem:[#allocation3 + $0x98] sm:$0xff] %v5996
      %6029 = vst [vmem:[#allocation3 + $0xa0] sm:$0xff] %v5997
      %6030 = vst [vmem:[#allocation3 + $0xa8] sm:$0xff] %v5998
      %6031 = vst [vmem:[#allocation3 + $0xb0] sm:$0xff] %v5999
      %6032 = vst [vmem:[#allocation3 + $0xb8] sm:$0xff] %v6000
      %6033 = vst [vmem:[#allocation3 + $0xc0] sm:$0xff] %v6001
      %6034 = vst [vmem:[#allocation3 + $0xc8] sm:$0xff] %v6002
      %6035 = vst [vmem:[#allocation3 + $0xd0] sm:$0xff] %v6003
      %6036 = vst [vmem:[#allocation3 + $0xd8] sm:$0xff] %v6004
      %6037 = vst [vmem:[#allocation3 + $0xe0] sm:$0xff] %v6005
      %6038 = vst [vmem:[#allocation3 + $0xe8] sm:$0xff] %v6006
      %6039 = vst [vmem:[#allocation3 + $0xf0] sm:$0xff] %v6007
      %6040 = vst [vmem:[#allocation3 + $0xf8] sm:$0xff] %v6008
      %v6041 = vld [vmem:[#allocation2 + $0x18] sm:$0xf]
      %v6042 = vld [vmem:[#allocation2 + $0x1c] sm:$0xf]
      %v6043 = vld [vmem:[#allocation2 + $0x20] sm:$0xf]
      %v6044 = vld [vmem:[#allocation2 + $0x24] sm:$0xf]
      %v6045 = vld [vmem:[#allocation2 + $0x28] sm:$0xf]
      %v6046 = vld [vmem:[#allocation2 + $0x2c] sm:$0xf]
      %v6047 = vld [vmem:[#allocation2 + $0x30] sm:$0xf]
      %v6048 = vld [vmem:[#allocation2 + $0x34] sm:$0xf]
      %v6049 = vld [vmem:[#allocation2 + $0x38] sm:$0xf]
      %v6050 = vld [vmem:[#allocation2 + $0x3c] sm:$0xf]
      %v6051 = vld [vmem:[#allocation2 + $0x40] sm:$0xf]
      %v6052 = vld [vmem:[#allocation2 + $0x44] sm:$0xf]
      %v6053 = vld [vmem:[#allocation2 + $0x48] sm:$0xf]
      %v6054 = vld [vmem:[#allocation2 + $0x4c] sm:$0xf]
      %v6055 = vld [vmem:[#allocation2 + $0x50] sm:$0xf]
      %v6056 = vld [vmem:[#allocation2 + $0x54] sm:$0xf]
      %v6057 = vld [vmem:[#allocation2 + $0x58] sm:$0xf]
      %v6058 = vld [vmem:[#allocation2 + $0x5c] sm:$0xf]
      %v6059 = vld [vmem:[#allocation2 + $0x60] sm:$0xf]
      %v6060 = vld [vmem:[#allocation2 + $0x64] sm:$0xf]
      %v6061 = vld [vmem:[#allocation2 + $0x68] sm:$0xf]
      %v6062 = vld [vmem:[#allocation2 + $0x6c] sm:$0xf]
      %v6063 = vld [vmem:[#allocation2 + $0x70] sm:$0xf]
      %v6064 = vld [vmem:[#allocation2 + $0x74] sm:$0xf]
      %v6065 = vld [vmem:[#allocation2 + $0x78] sm:$0xf]
      %v6066 = vld [vmem:[#allocation2 + $0x7c] sm:$0xf]
      %v6067 = vld [vmem:[#allocation2 + $0x80] sm:$0xf]
      %v6068 = vld [vmem:[#allocation2 + $0x84] sm:$0xf]
      %v6069 = vld [vmem:[#allocation2 + $0x88] sm:$0xf]
      %v6070 = vld [vmem:[#allocation2 + $0x8c] sm:$0xf]
      %v6071 = vld [vmem:[#allocation2 + $0x90] sm:$0xf]
      %v6072 = vld [vmem:[#allocation2 + $0x94] sm:$0xf]
      %s6073 = scalar_lea.vmem %s265, 448
      %v6074 = vld [vmem:[%s6073] sm:$0xf]
      %v6075 = vld [vmem:[%s6073 + $0x4] sm:$0xf]
      %v6076 = vld [vmem:[%s6073 + $0x8] sm:$0xf]
      %v6077 = vld [vmem:[%s6073 + $0xc] sm:$0xf]
      %v6078 = vld [vmem:[%s6073 + $0x10] sm:$0xf]
      %v6079 = vld [vmem:[%s6073 + $0x14] sm:$0xf]
      %v6080 = vld [vmem:[%s6073 + $0x18] sm:$0xf]
      %v6081 = vld [vmem:[%s6073 + $0x1c] sm:$0xf]
      %v6082 = vld [vmem:[%s6073 + $0x20] sm:$0xf]
      %v6083 = vld [vmem:[%s6073 + $0x24] sm:$0xf]
      %v6084 = vld [vmem:[%s6073 + $0x28] sm:$0xf]
      %v6085 = vld [vmem:[%s6073 + $0x2c] sm:$0xf]
      %v6086 = vld [vmem:[%s6073 + $0x30] sm:$0xf]
      %v6087 = vld [vmem:[%s6073 + $0x34] sm:$0xf]
      %v6088 = vld [vmem:[%s6073 + $0x38] sm:$0xf]
      %v6089 = vld [vmem:[%s6073 + $0x3c] sm:$0xf]
      %v6122 = vunpack.c.l.b16 %v6041
      %v6123 = vunpack.c.l.b16 %v6042
      %v6124 = vunpack.c.l.b16 %v6043
      %v6125 = vunpack.c.l.b16 %v6044
      %v6126 = vunpack.c.l.b16 %v6045
      %v6127 = vunpack.c.l.b16 %v6046
      %v6128 = vunpack.c.l.b16 %v6047
      %v6129 = vunpack.c.l.b16 %v6048
      %v6130 = vunpack.c.l.b16 %v6049
      %v6131 = vunpack.c.l.b16 %v6050
      %v6132 = vunpack.c.l.b16 %v6051
      %v6133 = vunpack.c.l.b16 %v6052
      %v6134 = vunpack.c.l.b16 %v6053
      %v6135 = vunpack.c.l.b16 %v6054
      %v6136 = vunpack.c.l.b16 %v6055
      %v6137 = vunpack.c.l.b16 %v6056
      %v6138 = vunpack.c.l.b16 %v6057
      %v6139 = vunpack.c.l.b16 %v6058
      %v6140 = vunpack.c.l.b16 %v6059
      %v6141 = vunpack.c.l.b16 %v6060
      %v6142 = vunpack.c.l.b16 %v6061
      %v6143 = vunpack.c.l.b16 %v6062
      %v6144 = vunpack.c.l.b16 %v6063
      %v6145 = vunpack.c.l.b16 %v6064
      %v6146 = vunpack.c.l.b16 %v6065
      %v6147 = vunpack.c.l.b16 %v6066
      %v6148 = vunpack.c.l.b16 %v6067
      %v6149 = vunpack.c.l.b16 %v6068
      %v6150 = vunpack.c.l.b16 %v6069
      %v6151 = vunpack.c.l.b16 %v6070
      %v6152 = vunpack.c.l.b16 %v6071
      %v6153 = vunpack.c.l.b16 %v6072
      %v6154 = vpack.c.b16 %v6123, %v6122
      %v6155 = vpack.c.b16 %v6125, %v6124
      %v6156 = vpack.c.b16 %v6127, %v6126
      %v6157 = vpack.c.b16 %v6129, %v6128
      %v6158 = vpack.c.b16 %v6131, %v6130
      %v6159 = vpack.c.b16 %v6133, %v6132
      %v6160 = vpack.c.b16 %v6135, %v6134
      %v6161 = vpack.c.b16 %v6137, %v6136
      %v6162 = vpack.c.b16 %v6139, %v6138
      %v6163 = vpack.c.b16 %v6141, %v6140
      %v6164 = vpack.c.b16 %v6143, %v6142
      %v6165 = vpack.c.b16 %v6145, %v6144
      %v6166 = vpack.c.b16 %v6147, %v6146
      %v6167 = vpack.c.b16 %v6149, %v6148
      %v6168 = vpack.c.b16 %v6151, %v6150
      %v6169 = vpack.c.b16 %v6153, %v6152
      %v6202 = vunpack.c.l.b16 %v6074
      %v6203 = vunpack.c.l.b16 %v6075
      %v6204 = vunpack.c.l.b16 %v6076
      %v6205 = vunpack.c.l.b16 %v6077
      %v6206 = vunpack.c.l.b16 %v6078
      %v6207 = vunpack.c.l.b16 %v6079
      %v6208 = vunpack.c.l.b16 %v6080
      %v6209 = vunpack.c.l.b16 %v6081
      %v6210 = vunpack.c.l.b16 %v6082
      %v6211 = vunpack.c.l.b16 %v6083
      %v6212 = vunpack.c.l.b16 %v6084
      %v6213 = vunpack.c.l.b16 %v6085
      %v6214 = vunpack.c.l.b16 %v6086
      %v6215 = vunpack.c.l.b16 %v6087
      %v6216 = vunpack.c.l.b16 %v6088
      %v6217 = vunpack.c.l.b16 %v6089
      %v6218 = vpack.c.b16 %v6203, %v6202
      %v6219 = vpack.c.b16 %v6205, %v6204
      %v6220 = vpack.c.b16 %v6207, %v6206
      %v6221 = vpack.c.b16 %v6209, %v6208
      %v6222 = vpack.c.b16 %v6211, %v6210
      %v6223 = vpack.c.b16 %v6213, %v6212
      %v6224 = vpack.c.b16 %v6215, %v6214
      %v6225 = vpack.c.b16 %v6217, %v6216
      %6234 = vmatprep.subr.bf16.mxu0 0
      %6235 = vmatpush1.bf16.msra.mxu0 %v6225
      %6236 = vmatprep.subr.bf16.mxu0 0
      %6237 = vmatpush1.bf16.msra.mxu0 %v6224
      %6238 = vmatprep.subr.bf16.mxu0 0
      %6239 = vmatpush1.bf16.msra.mxu0 %v6223
      %6240 = vmatprep.subr.bf16.mxu0 0
      %6241 = vmatpush1.bf16.msra.mxu0 %v6222
      %6242 = vmatprep.subr.bf16.mxu0 0
      %6243 = vmatpush1.bf16.msra.mxu0 %v6221
      %6244 = vmatprep.subr.bf16.mxu0 0
      %6245 = vmatpush1.bf16.msra.mxu0 %v6220
      %6246 = vmatprep.subr.bf16.mxu0 0
      %6247 = vmatpush1.bf16.msra.mxu0 %v6219
      %6248 = vmatprep.subr.bf16.mxu0 0
      %6249 = vmatpush1.bf16.msra.mxu0 %v6218
      %6250 = vmatprep.subr.bf16.mxu0 0
      %6251 = vmatpush2.bf16.msra.mxu0 0
      %6252 = vmatprep.subr.bf16.mxu0 0
      %6253 = vmatpush2.bf16.msra.mxu0 0
      %6254 = vmatprep.subr.bf16.mxu0 0
      %6255 = vmatpush2.bf16.msra.mxu0 0
      %6256 = vmatprep.subr.bf16.mxu0 0
      %6257 = vmatpush2.bf16.msra.mxu0 0
      %6258 = vmatprep.subr.bf16.mxu0 0
      %6259 = vmatpush2.bf16.msra.mxu0 0
      %6260 = vmatprep.subr.bf16.mxu0 0
      %6261 = vmatpush2.bf16.msra.mxu0 0
      %6262 = vmatprep.subr.bf16.mxu0 0
      %6263 = vmatpush2.bf16.msra.mxu0 0
      %6264 = vmatprep.subr.bf16.mxu0 0
      %6265 = vmatpush2.bf16.msra.mxu0 0
      %6266 = vmatprep.mubr.bf16.mxu0 0
      %6267 = vmatmul.mubr.bf16.gmra.mxu0 %v6154
      %v6268 = vpop.f32.mrf.mxu0
      %v6269 = vadd.f32 0.0, %v6268
      %v6270 = vpop.f32.mrf.mxu0
      %v6271 = vpop.f32.mrf.mxu0
      %v6272 = vadd.f32 0.0, %v6271
      %v6273 = vpop.f32.mrf.mxu0
      %6274 = vmatprep.mubr.bf16.mxu0 0
      %6275 = vmatmul.mubr.bf16.gmra.mxu0 %v6155
      %v6276 = vpop.f32.mrf.mxu0
      %v6277 = vadd.f32 0.0, %v6276
      %v6278 = vpop.f32.mrf.mxu0
      %v6279 = vpop.f32.mrf.mxu0
      %v6280 = vadd.f32 0.0, %v6279
      %v6281 = vpop.f32.mrf.mxu0
      %6282 = vmatprep.mubr.bf16.mxu0 0
      %6283 = vmatmul.mubr.bf16.gmra.mxu0 %v6156
      %v6284 = vpop.f32.mrf.mxu0
      %v6285 = vadd.f32 0.0, %v6284
      %v6286 = vpop.f32.mrf.mxu0
      %v6287 = vpop.f32.mrf.mxu0
      %v6288 = vadd.f32 0.0, %v6287
      %v6289 = vpop.f32.mrf.mxu0
      %6290 = vmatprep.mubr.bf16.mxu0 0
      %6291 = vmatmul.mubr.bf16.gmra.mxu0 %v6157
      %v6292 = vpop.f32.mrf.mxu0
      %v6293 = vadd.f32 0.0, %v6292
      %v6294 = vpop.f32.mrf.mxu0
      %v6295 = vpop.f32.mrf.mxu0
      %v6296 = vadd.f32 0.0, %v6295
      %v6297 = vpop.f32.mrf.mxu0
      %6298 = vmatprep.mubr.bf16.mxu0 0
      %6299 = vmatmul.mubr.bf16.gmra.mxu0 %v6158
      %v6300 = vpop.f32.mrf.mxu0
      %v6301 = vadd.f32 0.0, %v6300
      %v6302 = vpop.f32.mrf.mxu0
      %v6303 = vpop.f32.mrf.mxu0
      %v6304 = vadd.f32 0.0, %v6303
      %v6305 = vpop.f32.mrf.mxu0
      %6306 = vmatprep.mubr.bf16.mxu0 0
      %6307 = vmatmul.mubr.bf16.gmra.mxu0 %v6159
      %v6308 = vpop.f32.mrf.mxu0
      %v6309 = vadd.f32 0.0, %v6308
      %v6310 = vpop.f32.mrf.mxu0
      %v6311 = vpop.f32.mrf.mxu0
      %v6312 = vadd.f32 0.0, %v6311
      %v6313 = vpop.f32.mrf.mxu0
      %6314 = vmatprep.mubr.bf16.mxu0 0
      %6315 = vmatmul.mubr.bf16.gmra.mxu0 %v6160
      %v6316 = vpop.f32.mrf.mxu0
      %v6317 = vadd.f32 0.0, %v6316
      %v6318 = vpop.f32.mrf.mxu0
      %v6319 = vpop.f32.mrf.mxu0
      %v6320 = vadd.f32 0.0, %v6319
      %v6321 = vpop.f32.mrf.mxu0
      %6322 = vmatprep.mubr.bf16.mxu0 0
      %6323 = vmatmul.mubr.bf16.gmra.mxu0 %v6161
      %v6324 = vpop.f32.mrf.mxu0
      %v6325 = vadd.f32 0.0, %v6324
      %v6326 = vpop.f32.mrf.mxu0
      %v6327 = vpop.f32.mrf.mxu0
      %v6328 = vadd.f32 0.0, %v6327
      %v6329 = vpop.f32.mrf.mxu0
      %6330 = vmatprep.mubr.bf16.mxu0 0
      %6331 = vmatmul.mubr.bf16.gmra.mxu0 %v6162
      %v6332 = vpop.f32.mrf.mxu0
      %v6333 = vadd.f32 0.0, %v6332
      %v6334 = vpop.f32.mrf.mxu0
      %v6335 = vpop.f32.mrf.mxu0
      %v6336 = vadd.f32 0.0, %v6335
      %v6337 = vpop.f32.mrf.mxu0
      %6338 = vmatprep.mubr.bf16.mxu0 0
      %6339 = vmatmul.mubr.bf16.gmra.mxu0 %v6163
      %v6340 = vpop.f32.mrf.mxu0
      %v6341 = vadd.f32 0.0, %v6340
      %v6342 = vpop.f32.mrf.mxu0
      %v6343 = vpop.f32.mrf.mxu0
      %v6344 = vadd.f32 0.0, %v6343
      %v6345 = vpop.f32.mrf.mxu0
      %6346 = vmatprep.mubr.bf16.mxu0 0
      %6347 = vmatmul.mubr.bf16.gmra.mxu0 %v6164
      %v6348 = vpop.f32.mrf.mxu0
      %v6349 = vadd.f32 0.0, %v6348
      %v6350 = vpop.f32.mrf.mxu0
      %v6351 = vpop.f32.mrf.mxu0
      %v6352 = vadd.f32 0.0, %v6351
      %v6353 = vpop.f32.mrf.mxu0
      %6354 = vmatprep.mubr.bf16.mxu0 0
      %6355 = vmatmul.mubr.bf16.gmra.mxu0 %v6165
      %v6356 = vpop.f32.mrf.mxu0
      %v6357 = vadd.f32 0.0, %v6356
      %v6358 = vpop.f32.mrf.mxu0
      %v6359 = vpop.f32.mrf.mxu0
      %v6360 = vadd.f32 0.0, %v6359
      %v6361 = vpop.f32.mrf.mxu0
      %6362 = vmatprep.mubr.bf16.mxu0 0
      %6363 = vmatmul.mubr.bf16.gmra.mxu0 %v6166
      %v6364 = vpop.f32.mrf.mxu0
      %v6365 = vadd.f32 0.0, %v6364
      %v6366 = vpop.f32.mrf.mxu0
      %v6367 = vpop.f32.mrf.mxu0
      %v6368 = vadd.f32 0.0, %v6367
      %v6369 = vpop.f32.mrf.mxu0
      %6370 = vmatprep.mubr.bf16.mxu0 0
      %6371 = vmatmul.mubr.bf16.gmra.mxu0 %v6167
      %v6372 = vpop.f32.mrf.mxu0
      %v6373 = vadd.f32 0.0, %v6372
      %v6374 = vpop.f32.mrf.mxu0
      %v6375 = vpop.f32.mrf.mxu0
      %v6376 = vadd.f32 0.0, %v6375
      %v6377 = vpop.f32.mrf.mxu0
      %6378 = vmatprep.mubr.bf16.mxu0 0
      %6379 = vmatmul.mubr.bf16.gmra.mxu0 %v6168
      %v6380 = vpop.f32.mrf.mxu0
      %v6381 = vadd.f32 0.0, %v6380
      %v6382 = vpop.f32.mrf.mxu0
      %v6383 = vpop.f32.mrf.mxu0
      %v6384 = vadd.f32 0.0, %v6383
      %v6385 = vpop.f32.mrf.mxu0
      %6386 = vmatprep.mubr.bf16.mxu0 0
      %6387 = vmatmul.mubr.bf16.gmra.mxu0 %v6169
      %v6388 = vpop.f32.mrf.mxu0
      %v6389 = vadd.f32 0.0, %v6388
      %v6390 = vpop.f32.mrf.mxu0
      %v6391 = vpop.f32.mrf.mxu0
      %v6392 = vadd.f32 0.0, %v6391
      %v6393 = vpop.f32.mrf.mxu0
      %6394 = vdwg.mxu0
      %v6395 = vld [vmem:[#allocation3] sm:$0xff]
      %v6396 = vld [vmem:[#allocation3 + $0x8] sm:$0xff]
      %v6397 = vld [vmem:[#allocation3 + $0x10] sm:$0xff]
      %v6398 = vld [vmem:[#allocation3 + $0x18] sm:$0xff]
      %v6399 = vld [vmem:[#allocation3 + $0x20] sm:$0xff]
      %v6400 = vld [vmem:[#allocation3 + $0x28] sm:$0xff]
      %v6401 = vld [vmem:[#allocation3 + $0x30] sm:$0xff]
      %v6402 = vld [vmem:[#allocation3 + $0x38] sm:$0xff]
      %v6403 = vld [vmem:[#allocation3 + $0x40] sm:$0xff]
      %v6404 = vld [vmem:[#allocation3 + $0x48] sm:$0xff]
      %v6405 = vld [vmem:[#allocation3 + $0x50] sm:$0xff]
      %v6406 = vld [vmem:[#allocation3 + $0x58] sm:$0xff]
      %v6407 = vld [vmem:[#allocation3 + $0x60] sm:$0xff]
      %v6408 = vld [vmem:[#allocation3 + $0x68] sm:$0xff]
      %v6409 = vld [vmem:[#allocation3 + $0x70] sm:$0xff]
      %v6410 = vld [vmem:[#allocation3 + $0x78] sm:$0xff]
      %v6411 = vld [vmem:[#allocation3 + $0x80] sm:$0xff]
      %v6412 = vld [vmem:[#allocation3 + $0x88] sm:$0xff]
      %v6413 = vld [vmem:[#allocation3 + $0x90] sm:$0xff]
      %v6414 = vld [vmem:[#allocation3 + $0x98] sm:$0xff]
      %v6415 = vld [vmem:[#allocation3 + $0xa0] sm:$0xff]
      %v6416 = vld [vmem:[#allocation3 + $0xa8] sm:$0xff]
      %v6417 = vld [vmem:[#allocation3 + $0xb0] sm:$0xff]
      %v6418 = vld [vmem:[#allocation3 + $0xb8] sm:$0xff]
      %v6419 = vld [vmem:[#allocation3 + $0xc0] sm:$0xff]
      %v6420 = vld [vmem:[#allocation3 + $0xc8] sm:$0xff]
      %v6421 = vld [vmem:[#allocation3 + $0xd0] sm:$0xff]
      %v6422 = vld [vmem:[#allocation3 + $0xd8] sm:$0xff]
      %v6423 = vld [vmem:[#allocation3 + $0xe0] sm:$0xff]
      %v6424 = vld [vmem:[#allocation3 + $0xe8] sm:$0xff]
      %v6425 = vld [vmem:[#allocation3 + $0xf0] sm:$0xff]
      %v6426 = vld [vmem:[#allocation3 + $0xf8] sm:$0xff]
      %v6427 = vadd.f32 %v6395, %v6269
      %v6428 = vadd.f32 %v6396, %v6272
      %v6429 = vadd.f32 %v6397, %v6277
      %v6430 = vadd.f32 %v6398, %v6280
      %v6431 = vadd.f32 %v6399, %v6285
      %v6432 = vadd.f32 %v6400, %v6288
      %v6433 = vadd.f32 %v6401, %v6293
      %v6434 = vadd.f32 %v6402, %v6296
      %v6435 = vadd.f32 %v6403, %v6301
      %v6436 = vadd.f32 %v6404, %v6304
      %v6437 = vadd.f32 %v6405, %v6309
      %v6438 = vadd.f32 %v6406, %v6312
      %v6439 = vadd.f32 %v6407, %v6317
      %v6440 = vadd.f32 %v6408, %v6320
      %v6441 = vadd.f32 %v6409, %v6325
      %v6442 = vadd.f32 %v6410, %v6328
      %v6443 = vadd.f32 %v6411, %v6333
      %v6444 = vadd.f32 %v6412, %v6336
      %v6445 = vadd.f32 %v6413, %v6341
      %v6446 = vadd.f32 %v6414, %v6344
      %v6447 = vadd.f32 %v6415, %v6349
      %v6448 = vadd.f32 %v6416, %v6352
      %v6449 = vadd.f32 %v6417, %v6357
      %v6450 = vadd.f32 %v6418, %v6360
      %v6451 = vadd.f32 %v6419, %v6365
      %v6452 = vadd.f32 %v6420, %v6368
      %v6453 = vadd.f32 %v6421, %v6373
      %v6454 = vadd.f32 %v6422, %v6376
      %v6455 = vadd.f32 %v6423, %v6381
      %v6456 = vadd.f32 %v6424, %v6384
      %v6457 = vadd.f32 %v6425, %v6389
      %v6458 = vadd.f32 %v6426, %v6392
      %6459 = vst [vmem:[#allocation3] sm:$0xff] %v6427
      %6460 = vst [vmem:[#allocation3 + $0x8] sm:$0xff] %v6428
      %6461 = vst [vmem:[#allocation3 + $0x10] sm:$0xff] %v6429
      %6462 = vst [vmem:[#allocation3 + $0x18] sm:$0xff] %v6430
      %6463 = vst [vmem:[#allocation3 + $0x20] sm:$0xff] %v6431
      %6464 = vst [vmem:[#allocation3 + $0x28] sm:$0xff] %v6432
      %6465 = vst [vmem:[#allocation3 + $0x30] sm:$0xff] %v6433
      %6466 = vst [vmem:[#allocation3 + $0x38] sm:$0xff] %v6434
      %6467 = vst [vmem:[#allocation3 + $0x40] sm:$0xff] %v6435
      %6468 = vst [vmem:[#allocation3 + $0x48] sm:$0xff] %v6436
      %6469 = vst [vmem:[#allocation3 + $0x50] sm:$0xff] %v6437
      %6470 = vst [vmem:[#allocation3 + $0x58] sm:$0xff] %v6438
      %6471 = vst [vmem:[#allocation3 + $0x60] sm:$0xff] %v6439
      %6472 = vst [vmem:[#allocation3 + $0x68] sm:$0xff] %v6440
      %6473 = vst [vmem:[#allocation3 + $0x70] sm:$0xff] %v6441
      %6474 = vst [vmem:[#allocation3 + $0x78] sm:$0xff] %v6442
      %6475 = vst [vmem:[#allocation3 + $0x80] sm:$0xff] %v6443
      %6476 = vst [vmem:[#allocation3 + $0x88] sm:$0xff] %v6444
      %6477 = vst [vmem:[#allocation3 + $0x90] sm:$0xff] %v6445
      %6478 = vst [vmem:[#allocation3 + $0x98] sm:$0xff] %v6446
      %6479 = vst [vmem:[#allocation3 + $0xa0] sm:$0xff] %v6447
      %6480 = vst [vmem:[#allocation3 + $0xa8] sm:$0xff] %v6448
      %6481 = vst [vmem:[#allocation3 + $0xb0] sm:$0xff] %v6449
      %6482 = vst [vmem:[#allocation3 + $0xb8] sm:$0xff] %v6450
      %6483 = vst [vmem:[#allocation3 + $0xc0] sm:$0xff] %v6451
      %6484 = vst [vmem:[#allocation3 + $0xc8] sm:$0xff] %v6452
      %6485 = vst [vmem:[#allocation3 + $0xd0] sm:$0xff] %v6453
      %6486 = vst [vmem:[#allocation3 + $0xd8] sm:$0xff] %v6454
      %6487 = vst [vmem:[#allocation3 + $0xe0] sm:$0xff] %v6455
      %6488 = vst [vmem:[#allocation3 + $0xe8] sm:$0xff] %v6456
      %6489 = vst [vmem:[#allocation3 + $0xf0] sm:$0xff] %v6457
      %6490 = vst [vmem:[#allocation3 + $0xf8] sm:$0xff] %v6458
      %v6491 = vld [vmem:[#allocation2 + $0x18] sm:$0xf]
      %v6492 = vld [vmem:[#allocation2 + $0x1c] sm:$0xf]
      %v6493 = vld [vmem:[#allocation2 + $0x20] sm:$0xf]
      %v6494 = vld [vmem:[#allocation2 + $0x24] sm:$0xf]
      %v6495 = vld [vmem:[#allocation2 + $0x28] sm:$0xf]
      %v6496 = vld [vmem:[#allocation2 + $0x2c] sm:$0xf]
      %v6497 = vld [vmem:[#allocation2 + $0x30] sm:$0xf]
      %v6498 = vld [vmem:[#allocation2 + $0x34] sm:$0xf]
      %v6499 = vld [vmem:[#allocation2 + $0x38] sm:$0xf]
      %v6500 = vld [vmem:[#allocation2 + $0x3c] sm:$0xf]
      %v6501 = vld [vmem:[#allocation2 + $0x40] sm:$0xf]
      %v6502 = vld [vmem:[#allocation2 + $0x44] sm:$0xf]
      %v6503 = vld [vmem:[#allocation2 + $0x48] sm:$0xf]
      %v6504 = vld [vmem:[#allocation2 + $0x4c] sm:$0xf]
      %v6505 = vld [vmem:[#allocation2 + $0x50] sm:$0xf]
      %v6506 = vld [vmem:[#allocation2 + $0x54] sm:$0xf]
      %v6507 = vld [vmem:[#allocation2 + $0x58] sm:$0xf]
      %v6508 = vld [vmem:[#allocation2 + $0x5c] sm:$0xf]
      %v6509 = vld [vmem:[#allocation2 + $0x60] sm:$0xf]
      %v6510 = vld [vmem:[#allocation2 + $0x64] sm:$0xf]
      %v6511 = vld [vmem:[#allocation2 + $0x68] sm:$0xf]
      %v6512 = vld [vmem:[#allocation2 + $0x6c] sm:$0xf]
      %v6513 = vld [vmem:[#allocation2 + $0x70] sm:$0xf]
      %v6514 = vld [vmem:[#allocation2 + $0x74] sm:$0xf]
      %v6515 = vld [vmem:[#allocation2 + $0x78] sm:$0xf]
      %v6516 = vld [vmem:[#allocation2 + $0x7c] sm:$0xf]
      %v6517 = vld [vmem:[#allocation2 + $0x80] sm:$0xf]
      %v6518 = vld [vmem:[#allocation2 + $0x84] sm:$0xf]
      %v6519 = vld [vmem:[#allocation2 + $0x88] sm:$0xf]
      %v6520 = vld [vmem:[#allocation2 + $0x8c] sm:$0xf]
      %v6521 = vld [vmem:[#allocation2 + $0x90] sm:$0xf]
      %v6522 = vld [vmem:[#allocation2 + $0x94] sm:$0xf]
      %v6523 = vld [vmem:[#allocation2 + $0x98] sm:$0x1]
      %v6524 = vsel %vm3074, %v6491, 0
      %v6525 = vsel %vm3075, %v6492, 0
      %v6526 = vsel %vm3076, %v6493, 0
      %v6527 = vsel %vm3077, %v6494, 0
      %v6528 = vsel %vm3078, %v6495, 0
      %v6529 = vsel %vm3079, %v6496, 0
      %v6530 = vsel %vm3080, %v6497, 0
      %v6531 = vsel %vm3081, %v6498, 0
      %v6532 = vsel %vm3082, %v6499, 0
      %v6533 = vsel %vm3083, %v6500, 0
      %v6534 = vsel %vm3084, %v6501, 0
      %v6535 = vsel %vm3085, %v6502, 0
      %v6536 = vsel %vm3086, %v6503, 0
      %v6537 = vsel %vm3087, %v6504, 0
      %v6538 = vsel %vm3088, %v6505, 0
      %v6539 = vsel %vm3089, %v6506, 0
      %v6540 = vsel %vm3090, %v6507, 0
      %v6541 = vsel %vm3091, %v6508, 0
      %v6542 = vsel %vm3092, %v6509, 0
      %v6543 = vsel %vm3093, %v6510, 0
      %v6544 = vsel %vm3094, %v6511, 0
      %v6545 = vsel %vm3095, %v6512, 0
      %v6546 = vsel %vm3096, %v6513, 0
      %v6547 = vsel %vm3097, %v6514, 0
      %v6548 = vsel %vm3098, %v6515, 0
      %v6549 = vsel %vm3099, %v6516, 0
      %v6550 = vsel %vm3100, %v6517, 0
      %v6551 = vsel %vm3101, %v6518, 0
      %v6552 = vsel %vm3102, %v6519, 0
      %v6553 = vsel %vm3103, %v6520, 0
      %v6554 = vsel %vm3104, %v6521, 0
      %v6555 = vsel %vm3105, %v6522, 0
      %v6556 = vsel %vm3106, %v6523, 0
      %s6557 = scalar_lea.vmem %s265, 512
      %v6558 = vld [vmem:[%s6557] sm:$0xf]
      %v6559 = vld [vmem:[%s6557 + $0x4] sm:$0xf]
      %v6560 = vld [vmem:[%s6557 + $0x8] sm:$0xf]
      %v6561 = vld [vmem:[%s6557 + $0xc] sm:$0xf]
      %v6562 = vld [vmem:[%s6557 + $0x10] sm:$0xf]
      %v6563 = vld [vmem:[%s6557 + $0x14] sm:$0xf]
      %v6564 = vld [vmem:[%s6557 + $0x18] sm:$0xf]
      %v6565 = vld [vmem:[%s6557 + $0x1c] sm:$0xf]
      %v6566 = vld [vmem:[%s6557 + $0x20] sm:$0xf]
      %v6567 = vld [vmem:[%s6557 + $0x24] sm:$0xf]
      %v6568 = vld [vmem:[%s6557 + $0x28] sm:$0xf]
      %v6569 = vld [vmem:[%s6557 + $0x2c] sm:$0xf]
      %v6570 = vld [vmem:[%s6557 + $0x30] sm:$0xf]
      %v6571 = vld [vmem:[%s6557 + $0x34] sm:$0xf]
      %v6572 = vld [vmem:[%s6557 + $0x38] sm:$0xf]
      %v6573 = vld [vmem:[%s6557 + $0x3c] sm:$0xf]
      %v6607 = vunpack.c.l.b16 %v6524
      %v6608 = vunpack.c.l.b16 %v6525
      %v6609 = vunpack.c.l.b16 %v6526
      %v6610 = vunpack.c.l.b16 %v6527
      %v6611 = vunpack.c.l.b16 %v6528
      %v6612 = vunpack.c.l.b16 %v6529
      %v6613 = vunpack.c.l.b16 %v6530
      %v6614 = vunpack.c.l.b16 %v6531
      %v6615 = vunpack.c.l.b16 %v6532
      %v6616 = vunpack.c.l.b16 %v6533
      %v6617 = vunpack.c.l.b16 %v6534
      %v6618 = vunpack.c.l.b16 %v6535
      %v6619 = vunpack.c.l.b16 %v6536
      %v6620 = vunpack.c.l.b16 %v6537
      %v6621 = vunpack.c.l.b16 %v6538
      %v6622 = vunpack.c.l.b16 %v6539
      %v6623 = vunpack.c.l.b16 %v6540
      %v6624 = vunpack.c.l.b16 %v6541
      %v6625 = vunpack.c.l.b16 %v6542
      %v6626 = vunpack.c.l.b16 %v6543
      %v6627 = vunpack.c.l.b16 %v6544
      %v6628 = vunpack.c.l.b16 %v6545
      %v6629 = vunpack.c.l.b16 %v6546
      %v6630 = vunpack.c.l.b16 %v6547
      %v6631 = vunpack.c.l.b16 %v6548
      %v6632 = vunpack.c.l.b16 %v6549
      %v6633 = vunpack.c.l.b16 %v6550
      %v6634 = vunpack.c.l.b16 %v6551
      %v6635 = vunpack.c.l.b16 %v6552
      %v6636 = vunpack.c.l.b16 %v6553
      %v6637 = vunpack.c.l.b16 %v6554
      %v6638 = vunpack.c.l.b16 %v6555
      %v6639 = vunpack.c.l.b16 %v6556
      %v6640 = vpack.c.b16 %v6608, %v6607
      %v6641 = vpack.c.b16 %v6610, %v6609
      %v6642 = vpack.c.b16 %v6612, %v6611
      %v6643 = vpack.c.b16 %v6614, %v6613
      %v6644 = vpack.c.b16 %v6616, %v6615
      %v6645 = vpack.c.b16 %v6618, %v6617
      %v6646 = vpack.c.b16 %v6620, %v6619
      %v6647 = vpack.c.b16 %v6622, %v6621
      %v6648 = vpack.c.b16 %v6624, %v6623
      %v6649 = vpack.c.b16 %v6626, %v6625
      %v6650 = vpack.c.b16 %v6628, %v6627
      %v6651 = vpack.c.b16 %v6630, %v6629
      %v6652 = vpack.c.b16 %v6632, %v6631
      %v6653 = vpack.c.b16 %v6634, %v6633
      %v6654 = vpack.c.b16 %v6636, %v6635
      %v6655 = vpack.c.b16 %v6638, %v6637
      %v6656 = vpack.c.b16 %v6639, %v6639
      %v6658 = vshrl.u32 %v6640, 16
      %v6660 = vshll.u32 %v6640, 16
      %v6662 = vrot.slane %v6660, 1
      %v6663 = vor.u32 %v6658, %v6662
      %v6665 = vshll.u32 %v6641, 16
      %v6667 = vrot.slane %v6665, 1
      %v6668 = vsel %vm3240, %v6663, %v6667
      %v6669 = vshrl.u32 %v6641, 16
      %v6671 = vor.u32 %v6669, %v6667
      %v6673 = vshll.u32 %v6642, 16
      %v6675 = vrot.slane %v6673, 1
      %v6676 = vsel %vm3240, %v6671, %v6675
      %v6677 = vshrl.u32 %v6642, 16
      %v6679 = vor.u32 %v6677, %v6675
      %v6681 = vshll.u32 %v6643, 16
      %v6683 = vrot.slane %v6681, 1
      %v6684 = vsel %vm3240, %v6679, %v6683
      %v6685 = vshrl.u32 %v6643, 16
      %v6687 = vor.u32 %v6685, %v6683
      %v6689 = vshll.u32 %v6644, 16
      %v6691 = vrot.slane %v6689, 1
      %v6692 = vsel %vm3240, %v6687, %v6691
      %v6693 = vshrl.u32 %v6644, 16
      %v6695 = vor.u32 %v6693, %v6691
      %v6697 = vshll.u32 %v6645, 16
      %v6699 = vrot.slane %v6697, 1
      %v6700 = vsel %vm3240, %v6695, %v6699
      %v6701 = vshrl.u32 %v6645, 16
      %v6703 = vor.u32 %v6701, %v6699
      %v6705 = vshll.u32 %v6646, 16
      %v6707 = vrot.slane %v6705, 1
      %v6708 = vsel %vm3240, %v6703, %v6707
      %v6709 = vshrl.u32 %v6646, 16
      %v6711 = vor.u32 %v6709, %v6707
      %v6713 = vshll.u32 %v6647, 16
      %v6715 = vrot.slane %v6713, 1
      %v6716 = vsel %vm3240, %v6711, %v6715
      %v6717 = vshrl.u32 %v6647, 16
      %v6719 = vor.u32 %v6717, %v6715
      %v6721 = vshll.u32 %v6648, 16
      %v6723 = vrot.slane %v6721, 1
      %v6724 = vsel %vm3240, %v6719, %v6723
      %v6725 = vshrl.u32 %v6648, 16
      %v6727 = vor.u32 %v6725, %v6723
      %v6729 = vshll.u32 %v6649, 16
      %v6731 = vrot.slane %v6729, 1
      %v6732 = vsel %vm3240, %v6727, %v6731
      %v6733 = vshrl.u32 %v6649, 16
      %v6735 = vor.u32 %v6733, %v6731
      %v6737 = vshll.u32 %v6650, 16
      %v6739 = vrot.slane %v6737, 1
      %v6740 = vsel %vm3240, %v6735, %v6739
      %v6741 = vshrl.u32 %v6650, 16
      %v6743 = vor.u32 %v6741, %v6739
      %v6745 = vshll.u32 %v6651, 16
      %v6747 = vrot.slane %v6745, 1
      %v6748 = vsel %vm3240, %v6743, %v6747
      %v6749 = vshrl.u32 %v6651, 16
      %v6751 = vor.u32 %v6749, %v6747
      %v6753 = vshll.u32 %v6652, 16
      %v6755 = vrot.slane %v6753, 1
      %v6756 = vsel %vm3240, %v6751, %v6755
      %v6757 = vshrl.u32 %v6652, 16
      %v6759 = vor.u32 %v6757, %v6755
      %v6761 = vshll.u32 %v6653, 16
      %v6763 = vrot.slane %v6761, 1
      %v6764 = vsel %vm3240, %v6759, %v6763
      %v6765 = vshrl.u32 %v6653, 16
      %v6767 = vor.u32 %v6765, %v6763
      %v6769 = vshll.u32 %v6654, 16
      %v6771 = vrot.slane %v6769, 1
      %v6772 = vsel %vm3240, %v6767, %v6771
      %v6773 = vshrl.u32 %v6654, 16
      %v6775 = vor.u32 %v6773, %v6771
      %v6777 = vshll.u32 %v6655, 16
      %v6779 = vrot.slane %v6777, 1
      %v6780 = vsel %vm3240, %v6775, %v6779
      %v6781 = vshrl.u32 %v6655, 16
      %v6783 = vor.u32 %v6781, %v6779
      %v6785 = vshll.u32 %v6656, 16
      %v6787 = vrot.slane %v6785, 1
      %v6788 = vsel %vm3240, %v6783, %v6787
      %v6821 = vunpack.c.l.b16 %v6558
      %v6822 = vunpack.c.l.b16 %v6559
      %v6823 = vunpack.c.l.b16 %v6560
      %v6824 = vunpack.c.l.b16 %v6561
      %v6825 = vunpack.c.l.b16 %v6562
      %v6826 = vunpack.c.l.b16 %v6563
      %v6827 = vunpack.c.l.b16 %v6564
      %v6828 = vunpack.c.l.b16 %v6565
      %v6829 = vunpack.c.l.b16 %v6566
      %v6830 = vunpack.c.l.b16 %v6567
      %v6831 = vunpack.c.l.b16 %v6568
      %v6832 = vunpack.c.l.b16 %v6569
      %v6833 = vunpack.c.l.b16 %v6570
      %v6834 = vunpack.c.l.b16 %v6571
      %v6835 = vunpack.c.l.b16 %v6572
      %v6836 = vunpack.c.l.b16 %v6573
      %v6837 = vpack.c.b16 %v6822, %v6821
      %v6838 = vpack.c.b16 %v6824, %v6823
      %v6839 = vpack.c.b16 %v6826, %v6825
      %v6840 = vpack.c.b16 %v6828, %v6827
      %v6841 = vpack.c.b16 %v6830, %v6829
      %v6842 = vpack.c.b16 %v6832, %v6831
      %v6843 = vpack.c.b16 %v6834, %v6833
      %v6844 = vpack.c.b16 %v6836, %v6835
      %6853 = vmatprep.subr.bf16.mxu0 0
      %6854 = vmatpush1.bf16.msra.mxu0 %v6844
      %6855 = vmatprep.subr.bf16.mxu0 0
      %6856 = vmatpush1.bf16.msra.mxu0 %v6843
      %6857 = vmatprep.subr.bf16.mxu0 0
      %6858 = vmatpush1.bf16.msra.mxu0 %v6842
      %6859 = vmatprep.subr.bf16.mxu0 0
      %6860 = vmatpush1.bf16.msra.mxu0 %v6841
      %6861 = vmatprep.subr.bf16.mxu0 0
      %6862 = vmatpush1.bf16.msra.mxu0 %v6840
      %6863 = vmatprep.subr.bf16.mxu0 0
      %6864 = vmatpush1.bf16.msra.mxu0 %v6839
      %6865 = vmatprep.subr.bf16.mxu0 0
      %6866 = vmatpush1.bf16.msra.mxu0 %v6838
      %6867 = vmatprep.subr.bf16.mxu0 0
      %6868 = vmatpush1.bf16.msra.mxu0 %v6837
      %6869 = vmatprep.subr.bf16.mxu0 0
      %6870 = vmatpush2.bf16.msra.mxu0 0
      %6871 = vmatprep.subr.bf16.mxu0 0
      %6872 = vmatpush2.bf16.msra.mxu0 0
      %6873 = vmatprep.subr.bf16.mxu0 0
      %6874 = vmatpush2.bf16.msra.mxu0 0
      %6875 = vmatprep.subr.bf16.mxu0 0
      %6876 = vmatpush2.bf16.msra.mxu0 0
      %6877 = vmatprep.subr.bf16.mxu0 0
      %6878 = vmatpush2.bf16.msra.mxu0 0
      %6879 = vmatprep.subr.bf16.mxu0 0
      %6880 = vmatpush2.bf16.msra.mxu0 0
      %6881 = vmatprep.subr.bf16.mxu0 0
      %6882 = vmatpush2.bf16.msra.mxu0 0
      %6883 = vmatprep.subr.bf16.mxu0 0
      %6884 = vmatpush2.bf16.msra.mxu0 0
      %6885 = vmatprep.mubr.bf16.mxu0 0
      %6886 = vmatmul.mubr.bf16.gmra.mxu0 %v6668
      %v6887 = vpop.f32.mrf.mxu0
      %v6888 = vadd.f32 0.0, %v6887
      %v6889 = vpop.f32.mrf.mxu0
      %v6890 = vpop.f32.mrf.mxu0
      %v6891 = vadd.f32 0.0, %v6890
      %v6892 = vpop.f32.mrf.mxu0
      %6893 = vmatprep.mubr.bf16.mxu0 0
      %6894 = vmatmul.mubr.bf16.gmra.mxu0 %v6676
      %v6895 = vpop.f32.mrf.mxu0
      %v6896 = vadd.f32 0.0, %v6895
      %v6897 = vpop.f32.mrf.mxu0
      %v6898 = vpop.f32.mrf.mxu0
      %v6899 = vadd.f32 0.0, %v6898
      %v6900 = vpop.f32.mrf.mxu0
      %6901 = vmatprep.mubr.bf16.mxu0 0
      %6902 = vmatmul.mubr.bf16.gmra.mxu0 %v6684
      %v6903 = vpop.f32.mrf.mxu0
      %v6904 = vadd.f32 0.0, %v6903
      %v6905 = vpop.f32.mrf.mxu0
      %v6906 = vpop.f32.mrf.mxu0
      %v6907 = vadd.f32 0.0, %v6906
      %v6908 = vpop.f32.mrf.mxu0
      %6909 = vmatprep.mubr.bf16.mxu0 0
      %6910 = vmatmul.mubr.bf16.gmra.mxu0 %v6692
      %v6911 = vpop.f32.mrf.mxu0
      %v6912 = vadd.f32 0.0, %v6911
      %v6913 = vpop.f32.mrf.mxu0
      %v6914 = vpop.f32.mrf.mxu0
      %v6915 = vadd.f32 0.0, %v6914
      %v6916 = vpop.f32.mrf.mxu0
      %6917 = vmatprep.mubr.bf16.mxu0 0
      %6918 = vmatmul.mubr.bf16.gmra.mxu0 %v6700
      %v6919 = vpop.f32.mrf.mxu0
      %v6920 = vadd.f32 0.0, %v6919
      %v6921 = vpop.f32.mrf.mxu0
      %v6922 = vpop.f32.mrf.mxu0
      %v6923 = vadd.f32 0.0, %v6922
      %v6924 = vpop.f32.mrf.mxu0
      %6925 = vmatprep.mubr.bf16.mxu0 0
      %6926 = vmatmul.mubr.bf16.gmra.mxu0 %v6708
      %v6927 = vpop.f32.mrf.mxu0
      %v6928 = vadd.f32 0.0, %v6927
      %v6929 = vpop.f32.mrf.mxu0
      %v6930 = vpop.f32.mrf.mxu0
      %v6931 = vadd.f32 0.0, %v6930
      %v6932 = vpop.f32.mrf.mxu0
      %6933 = vmatprep.mubr.bf16.mxu0 0
      %6934 = vmatmul.mubr.bf16.gmra.mxu0 %v6716
      %v6935 = vpop.f32.mrf.mxu0
      %v6936 = vadd.f32 0.0, %v6935
      %v6937 = vpop.f32.mrf.mxu0
      %v6938 = vpop.f32.mrf.mxu0
      %v6939 = vadd.f32 0.0, %v6938
      %v6940 = vpop.f32.mrf.mxu0
      %6941 = vmatprep.mubr.bf16.mxu0 0
      %6942 = vmatmul.mubr.bf16.gmra.mxu0 %v6724
      %v6943 = vpop.f32.mrf.mxu0
      %v6944 = vadd.f32 0.0, %v6943
      %v6945 = vpop.f32.mrf.mxu0
      %v6946 = vpop.f32.mrf.mxu0
      %v6947 = vadd.f32 0.0, %v6946
      %v6948 = vpop.f32.mrf.mxu0
      %6949 = vmatprep.mubr.bf16.mxu0 0
      %6950 = vmatmul.mubr.bf16.gmra.mxu0 %v6732
      %v6951 = vpop.f32.mrf.mxu0
      %v6952 = vadd.f32 0.0, %v6951
      %v6953 = vpop.f32.mrf.mxu0
      %v6954 = vpop.f32.mrf.mxu0
      %v6955 = vadd.f32 0.0, %v6954
      %v6956 = vpop.f32.mrf.mxu0
      %6957 = vmatprep.mubr.bf16.mxu0 0
      %6958 = vmatmul.mubr.bf16.gmra.mxu0 %v6740
      %v6959 = vpop.f32.mrf.mxu0
      %v6960 = vadd.f32 0.0, %v6959
      %v6961 = vpop.f32.mrf.mxu0
      %v6962 = vpop.f32.mrf.mxu0
      %v6963 = vadd.f32 0.0, %v6962
      %v6964 = vpop.f32.mrf.mxu0
      %6965 = vmatprep.mubr.bf16.mxu0 0
      %6966 = vmatmul.mubr.bf16.gmra.mxu0 %v6748
      %v6967 = vpop.f32.mrf.mxu0
      %v6968 = vadd.f32 0.0, %v6967
      %v6969 = vpop.f32.mrf.mxu0
      %v6970 = vpop.f32.mrf.mxu0
      %v6971 = vadd.f32 0.0, %v6970
      %v6972 = vpop.f32.mrf.mxu0
      %6973 = vmatprep.mubr.bf16.mxu0 0
      %6974 = vmatmul.mubr.bf16.gmra.mxu0 %v6756
      %v6975 = vpop.f32.mrf.mxu0
      %v6976 = vadd.f32 0.0, %v6975
      %v6977 = vpop.f32.mrf.mxu0
      %v6978 = vpop.f32.mrf.mxu0
      %v6979 = vadd.f32 0.0, %v6978
      %v6980 = vpop.f32.mrf.mxu0
      %6981 = vmatprep.mubr.bf16.mxu0 0
      %6982 = vmatmul.mubr.bf16.gmra.mxu0 %v6764
      %v6983 = vpop.f32.mrf.mxu0
      %v6984 = vadd.f32 0.0, %v6983
      %v6985 = vpop.f32.mrf.mxu0
      %v6986 = vpop.f32.mrf.mxu0
      %v6987 = vadd.f32 0.0, %v6986
      %v6988 = vpop.f32.mrf.mxu0
      %6989 = vmatprep.mubr.bf16.mxu0 0
      %6990 = vmatmul.mubr.bf16.gmra.mxu0 %v6772
      %v6991 = vpop.f32.mrf.mxu0
      %v6992 = vadd.f32 0.0, %v6991
      %v6993 = vpop.f32.mrf.mxu0
      %v6994 = vpop.f32.mrf.mxu0
      %v6995 = vadd.f32 0.0, %v6994
      %v6996 = vpop.f32.mrf.mxu0
      %6997 = vmatprep.mubr.bf16.mxu0 0
      %6998 = vmatmul.mubr.bf16.gmra.mxu0 %v6780
      %v6999 = vpop.f32.mrf.mxu0
      %v7000 = vadd.f32 0.0, %v6999
      %v7001 = vpop.f32.mrf.mxu0
      %v7002 = vpop.f32.mrf.mxu0
      %v7003 = vadd.f32 0.0, %v7002
      %v7004 = vpop.f32.mrf.mxu0
      %7005 = vmatprep.mubr.bf16.mxu0 0
      %7006 = vmatmul.mubr.bf16.gmra.mxu0 %v6788
      %v7007 = vpop.f32.mrf.mxu0
      %v7008 = vadd.f32 0.0, %v7007
      %v7009 = vpop.f32.mrf.mxu0
      %v7010 = vpop.f32.mrf.mxu0
      %v7011 = vadd.f32 0.0, %v7010
      %v7012 = vpop.f32.mrf.mxu0
      %7013 = vdwg.mxu0
      %v7014 = vld [vmem:[#allocation3] sm:$0xff]
      %v7015 = vld [vmem:[#allocation3 + $0x8] sm:$0xff]
      %v7016 = vld [vmem:[#allocation3 + $0x10] sm:$0xff]
      %v7017 = vld [vmem:[#allocation3 + $0x18] sm:$0xff]
      %v7018 = vld [vmem:[#allocation3 + $0x20] sm:$0xff]
      %v7019 = vld [vmem:[#allocation3 + $0x28] sm:$0xff]
      %v7020 = vld [vmem:[#allocation3 + $0x30] sm:$0xff]
      %v7021 = vld [vmem:[#allocation3 + $0x38] sm:$0xff]
      %v7022 = vld [vmem:[#allocation3 + $0x40] sm:$0xff]
      %v7023 = vld [vmem:[#allocation3 + $0x48] sm:$0xff]
      %v7024 = vld [vmem:[#allocation3 + $0x50] sm:$0xff]
      %v7025 = vld [vmem:[#allocation3 + $0x58] sm:$0xff]
      %v7026 = vld [vmem:[#allocation3 + $0x60] sm:$0xff]
      %v7027 = vld [vmem:[#allocation3 + $0x68] sm:$0xff]
      %v7028 = vld [vmem:[#allocation3 + $0x70] sm:$0xff]
      %v7029 = vld [vmem:[#allocation3 + $0x78] sm:$0xff]
      %v7030 = vld [vmem:[#allocation3 + $0x80] sm:$0xff]
      %v7031 = vld [vmem:[#allocation3 + $0x88] sm:$0xff]
      %v7032 = vld [vmem:[#allocation3 + $0x90] sm:$0xff]
      %v7033 = vld [vmem:[#allocation3 + $0x98] sm:$0xff]
      %v7034 = vld [vmem:[#allocation3 + $0xa0] sm:$0xff]
      %v7035 = vld [vmem:[#allocation3 + $0xa8] sm:$0xff]
      %v7036 = vld [vmem:[#allocation3 + $0xb0] sm:$0xff]
      %v7037 = vld [vmem:[#allocation3 + $0xb8] sm:$0xff]
      %v7038 = vld [vmem:[#allocation3 + $0xc0] sm:$0xff]
      %v7039 = vld [vmem:[#allocation3 + $0xc8] sm:$0xff]
      %v7040 = vld [vmem:[#allocation3 + $0xd0] sm:$0xff]
      %v7041 = vld [vmem:[#allocation3 + $0xd8] sm:$0xff]
      %v7042 = vld [vmem:[#allocation3 + $0xe0] sm:$0xff]
      %v7043 = vld [vmem:[#allocation3 + $0xe8] sm:$0xff]
      %v7044 = vld [vmem:[#allocation3 + $0xf0] sm:$0xff]
      %v7045 = vld [vmem:[#allocation3 + $0xf8] sm:$0xff]
      %v7046 = vadd.f32 %v7014, %v6888
      %v7047 = vadd.f32 %v7015, %v6891
      %v7048 = vadd.f32 %v7016, %v6896
      %v7049 = vadd.f32 %v7017, %v6899
      %v7050 = vadd.f32 %v7018, %v6904
      %v7051 = vadd.f32 %v7019, %v6907
      %v7052 = vadd.f32 %v7020, %v6912
      %v7053 = vadd.f32 %v7021, %v6915
      %v7054 = vadd.f32 %v7022, %v6920
      %v7055 = vadd.f32 %v7023, %v6923
      %v7056 = vadd.f32 %v7024, %v6928
      %v7057 = vadd.f32 %v7025, %v6931
      %v7058 = vadd.f32 %v7026, %v6936
      %v7059 = vadd.f32 %v7027, %v6939
      %v7060 = vadd.f32 %v7028, %v6944
      %v7061 = vadd.f32 %v7029, %v6947
      %v7062 = vadd.f32 %v7030, %v6952
      %v7063 = vadd.f32 %v7031, %v6955
      %v7064 = vadd.f32 %v7032, %v6960
      %v7065 = vadd.f32 %v7033, %v6963
      %v7066 = vadd.f32 %v7034, %v6968
      %v7067 = vadd.f32 %v7035, %v6971
      %v7068 = vadd.f32 %v7036, %v6976
      %v7069 = vadd.f32 %v7037, %v6979
      %v7070 = vadd.f32 %v7038, %v6984
      %v7071 = vadd.f32 %v7039, %v6987
      %v7072 = vadd.f32 %v7040, %v6992
      %v7073 = vadd.f32 %v7041, %v6995
      %v7074 = vadd.f32 %v7042, %v7000
      %v7075 = vadd.f32 %v7043, %v7003
      %v7076 = vadd.f32 %v7044, %v7008
      %v7077 = vadd.f32 %v7045, %v7011
      %7078 = vst [vmem:[#allocation3] sm:$0xff] %v7046
      %7079 = vst [vmem:[#allocation3 + $0x8] sm:$0xff] %v7047
      %7080 = vst [vmem:[#allocation3 + $0x10] sm:$0xff] %v7048
      %7081 = vst [vmem:[#allocation3 + $0x18] sm:$0xff] %v7049
      %7082 = vst [vmem:[#allocation3 + $0x20] sm:$0xff] %v7050
      %7083 = vst [vmem:[#allocation3 + $0x28] sm:$0xff] %v7051
      %7084 = vst [vmem:[#allocation3 + $0x30] sm:$0xff] %v7052
      %7085 = vst [vmem:[#allocation3 + $0x38] sm:$0xff] %v7053
      %7086 = vst [vmem:[#allocation3 + $0x40] sm:$0xff] %v7054
      %7087 = vst [vmem:[#allocation3 + $0x48] sm:$0xff] %v7055
      %7088 = vst [vmem:[#allocation3 + $0x50] sm:$0xff] %v7056
      %7089 = vst [vmem:[#allocation3 + $0x58] sm:$0xff] %v7057
      %7090 = vst [vmem:[#allocation3 + $0x60] sm:$0xff] %v7058
      %7091 = vst [vmem:[#allocation3 + $0x68] sm:$0xff] %v7059
      %7092 = vst [vmem:[#allocation3 + $0x70] sm:$0xff] %v7060
      %7093 = vst [vmem:[#allocation3 + $0x78] sm:$0xff] %v7061
      %7094 = vst [vmem:[#allocation3 + $0x80] sm:$0xff] %v7062
      %7095 = vst [vmem:[#allocation3 + $0x88] sm:$0xff] %v7063
      %7096 = vst [vmem:[#allocation3 + $0x90] sm:$0xff] %v7064
      %7097 = vst [vmem:[#allocation3 + $0x98] sm:$0xff] %v7065
      %7098 = vst [vmem:[#allocation3 + $0xa0] sm:$0xff] %v7066
      %7099 = vst [vmem:[#allocation3 + $0xa8] sm:$0xff] %v7067
      %7100 = vst [vmem:[#allocation3 + $0xb0] sm:$0xff] %v7068
      %7101 = vst [vmem:[#allocation3 + $0xb8] sm:$0xff] %v7069
      %7102 = vst [vmem:[#allocation3 + $0xc0] sm:$0xff] %v7070
      %7103 = vst [vmem:[#allocation3 + $0xc8] sm:$0xff] %v7071
      %7104 = vst [vmem:[#allocation3 + $0xd0] sm:$0xff] %v7072
      %7105 = vst [vmem:[#allocation3 + $0xd8] sm:$0xff] %v7073
      %7106 = vst [vmem:[#allocation3 + $0xe0] sm:$0xff] %v7074
      %7107 = vst [vmem:[#allocation3 + $0xe8] sm:$0xff] %v7075
      %7108 = vst [vmem:[#allocation3 + $0xf0] sm:$0xff] %v7076
      %7109 = vst [vmem:[#allocation3 + $0xf8] sm:$0xff] %v7077
      %v7110 = vld [vmem:[#allocation3] sm:$0xff]
      %v7111 = vld [vmem:[#allocation3 + $0x8] sm:$0xff]
      %v7112 = vld [vmem:[#allocation3 + $0x10] sm:$0xff]
      %v7113 = vld [vmem:[#allocation3 + $0x18] sm:$0xff]
      %v7114 = vld [vmem:[#allocation3 + $0x20] sm:$0xff]
      %v7115 = vld [vmem:[#allocation3 + $0x28] sm:$0xff]
      %v7116 = vld [vmem:[#allocation3 + $0x30] sm:$0xff]
      %v7117 = vld [vmem:[#allocation3 + $0x38] sm:$0xff]
      %v7118 = vld [vmem:[#allocation3 + $0x40] sm:$0xff]
      %v7119 = vld [vmem:[#allocation3 + $0x48] sm:$0xff]
      %v7120 = vld [vmem:[#allocation3 + $0x50] sm:$0xff]
      %v7121 = vld [vmem:[#allocation3 + $0x58] sm:$0xff]
      %v7122 = vld [vmem:[#allocation3 + $0x60] sm:$0xff]
      %v7123 = vld [vmem:[#allocation3 + $0x68] sm:$0xff]
      %v7124 = vld [vmem:[#allocation3 + $0x70] sm:$0xff]
      %v7125 = vld [vmem:[#allocation3 + $0x78] sm:$0xff]
      %v7126 = vld [vmem:[#allocation3 + $0x80] sm:$0xff]
      %v7127 = vld [vmem:[#allocation3 + $0x88] sm:$0xff]
      %v7128 = vld [vmem:[#allocation3 + $0x90] sm:$0xff]
      %v7129 = vld [vmem:[#allocation3 + $0x98] sm:$0xff]
      %v7130 = vld [vmem:[#allocation3 + $0xa0] sm:$0xff]
      %v7131 = vld [vmem:[#allocation3 + $0xa8] sm:$0xff]
      %v7132 = vld [vmem:[#allocation3 + $0xb0] sm:$0xff]
      %v7133 = vld [vmem:[#allocation3 + $0xb8] sm:$0xff]
      %v7134 = vld [vmem:[#allocation3 + $0xc0] sm:$0xff]
      %v7135 = vld [vmem:[#allocation3 + $0xc8] sm:$0xff]
      %v7136 = vld [vmem:[#allocation3 + $0xd0] sm:$0xff]
      %v7137 = vld [vmem:[#allocation3 + $0xd8] sm:$0xff]
      %v7138 = vld [vmem:[#allocation3 + $0xe0] sm:$0xff]
      %v7139 = vld [vmem:[#allocation3 + $0xe8] sm:$0xff]
      %v7140 = vld [vmem:[#allocation3 + $0xf0] sm:$0xff]
      %v7141 = vld [vmem:[#allocation3 + $0xf8] sm:$0xff]
      %v7142 = vpack.c.bf16 %v7111, %v7110
      %v7143 = vpack.c.bf16 %v7113, %v7112
      %v7144 = vpack.c.bf16 %v7115, %v7114
      %v7145 = vpack.c.bf16 %v7117, %v7116
      %v7146 = vpack.c.bf16 %v7119, %v7118
      %v7147 = vpack.c.bf16 %v7121, %v7120
      %v7148 = vpack.c.bf16 %v7123, %v7122
      %v7149 = vpack.c.bf16 %v7125, %v7124
      %v7150 = vpack.c.bf16 %v7127, %v7126
      %v7151 = vpack.c.bf16 %v7129, %v7128
      %v7152 = vpack.c.bf16 %v7131, %v7130
      %v7153 = vpack.c.bf16 %v7133, %v7132
      %v7154 = vpack.c.bf16 %v7135, %v7134
      %v7155 = vpack.c.bf16 %v7137, %v7136
      %v7156 = vpack.c.bf16 %v7139, %v7138
      %v7157 = vpack.c.bf16 %v7141, %v7140
      %v7174 = vunpack.c.l.b16 %v7142
      %v7175 = vunpack.c.h.b16 %v7142
      %v7176 = vunpack.c.l.b16 %v7143
      %v7177 = vunpack.c.h.b16 %v7143
      %v7178 = vunpack.c.l.b16 %v7144
      %v7179 = vunpack.c.h.b16 %v7144
      %v7180 = vunpack.c.l.b16 %v7145
      %v7181 = vunpack.c.h.b16 %v7145
      %v7182 = vunpack.c.l.b16 %v7146
      %v7183 = vunpack.c.h.b16 %v7146
      %v7184 = vunpack.c.l.b16 %v7147
      %v7185 = vunpack.c.h.b16 %v7147
      %v7186 = vunpack.c.l.b16 %v7148
      %v7187 = vunpack.c.h.b16 %v7148
      %v7188 = vunpack.c.l.b16 %v7149
      %v7189 = vunpack.c.h.b16 %v7149
      %v7190 = vunpack.c.l.b16 %v7150
      %v7191 = vunpack.c.h.b16 %v7150
      %v7192 = vunpack.c.l.b16 %v7151
      %v7193 = vunpack.c.h.b16 %v7151
      %v7194 = vunpack.c.l.b16 %v7152
      %v7195 = vunpack.c.h.b16 %v7152
      %v7196 = vunpack.c.l.b16 %v7153
      %v7197 = vunpack.c.h.b16 %v7153
      %v7198 = vunpack.c.l.b16 %v7154
      %v7199 = vunpack.c.h.b16 %v7154
      %v7200 = vunpack.c.l.b16 %v7155
      %v7201 = vunpack.c.h.b16 %v7155
      %v7202 = vunpack.c.l.b16 %v7156
      %v7203 = vunpack.c.h.b16 %v7156
      %v7204 = vunpack.c.l.b16 %v7157
      %v7205 = vunpack.c.h.b16 %v7157
      %v7206 = vpack.c.b16 %v7174, %v7174
      %v7207 = vpack.c.b16 %v7175, %v7175
      %v7208 = vpack.c.b16 %v7176, %v7176
      %v7209 = vpack.c.b16 %v7177, %v7177
      %v7210 = vpack.c.b16 %v7178, %v7178
      %v7211 = vpack.c.b16 %v7179, %v7179
      %v7212 = vpack.c.b16 %v7180, %v7180
      %v7213 = vpack.c.b16 %v7181, %v7181
      %v7214 = vpack.c.b16 %v7182, %v7182
      %v7215 = vpack.c.b16 %v7183, %v7183
      %v7216 = vpack.c.b16 %v7184, %v7184
      %v7217 = vpack.c.b16 %v7185, %v7185
      %v7218 = vpack.c.b16 %v7186, %v7186
      %v7219 = vpack.c.b16 %v7187, %v7187
      %v7220 = vpack.c.b16 %v7188, %v7188
      %v7221 = vpack.c.b16 %v7189, %v7189
      %v7222 = vpack.c.b16 %v7190, %v7190
      %v7223 = vpack.c.b16 %v7191, %v7191
      %v7224 = vpack.c.b16 %v7192, %v7192
      %v7225 = vpack.c.b16 %v7193, %v7193
      %v7226 = vpack.c.b16 %v7194, %v7194
      %v7227 = vpack.c.b16 %v7195, %v7195
      %v7228 = vpack.c.b16 %v7196, %v7196
      %v7229 = vpack.c.b16 %v7197, %v7197
      %v7230 = vpack.c.b16 %v7198, %v7198
      %v7231 = vpack.c.b16 %v7199, %v7199
      %v7232 = vpack.c.b16 %v7200, %v7200
      %v7233 = vpack.c.b16 %v7201, %v7201
      %v7234 = vpack.c.b16 %v7202, %v7202
      %v7235 = vpack.c.b16 %v7203, %v7203
      %v7236 = vpack.c.b16 %v7204, %v7204
      %v7237 = vpack.c.b16 %v7205, %v7205
      %7270 = vst [vmem:[%s273] sm:$0xf] %v7206
      %7271 = vst [vmem:[%s273 + $0x4] sm:$0xf] %v7207
      %7272 = vst [vmem:[%s273 + $0x8] sm:$0xf] %v7208
      %7273 = vst [vmem:[%s273 + $0xc] sm:$0xf] %v7209
      %7274 = vst [vmem:[%s273 + $0x10] sm:$0xf] %v7210
      %7275 = vst [vmem:[%s273 + $0x14] sm:$0xf] %v7211
      %7276 = vst [vmem:[%s273 + $0x18] sm:$0xf] %v7212
      %7277 = vst [vmem:[%s273 + $0x1c] sm:$0xf] %v7213
      %7278 = vst [vmem:[%s273 + $0x20] sm:$0xf] %v7214
      %7279 = vst [vmem:[%s273 + $0x24] sm:$0xf] %v7215
      %7280 = vst [vmem:[%s273 + $0x28] sm:$0xf] %v7216
      %7281 = vst [vmem:[%s273 + $0x2c] sm:$0xf] %v7217
      %7282 = vst [vmem:[%s273 + $0x30] sm:$0xf] %v7218
      %7283 = vst [vmem:[%s273 + $0x34] sm:$0xf] %v7219
      %7284 = vst [vmem:[%s273 + $0x38] sm:$0xf] %v7220
      %7285 = vst [vmem:[%s273 + $0x3c] sm:$0xf] %v7221
      %7286 = vst [vmem:[%s273 + $0x40] sm:$0xf] %v7222
      %7287 = vst [vmem:[%s273 + $0x44] sm:$0xf] %v7223
      %7288 = vst [vmem:[%s273 + $0x48] sm:$0xf] %v7224
      %7289 = vst [vmem:[%s273 + $0x4c] sm:$0xf] %v7225
      %7290 = vst [vmem:[%s273 + $0x50] sm:$0xf] %v7226
      %7291 = vst [vmem:[%s273 + $0x54] sm:$0xf] %v7227
      %7292 = vst [vmem:[%s273 + $0x58] sm:$0xf] %v7228
      %7293 = vst [vmem:[%s273 + $0x5c] sm:$0xf] %v7229
      %7294 = vst [vmem:[%s273 + $0x60] sm:$0xf] %v7230
      %7295 = vst [vmem:[%s273 + $0x64] sm:$0xf] %v7231
      %7296 = vst [vmem:[%s273 + $0x68] sm:$0xf] %v7232
      %7297 = vst [vmem:[%s273 + $0x6c] sm:$0xf] %v7233
      %7298 = vst [vmem:[%s273 + $0x70] sm:$0xf] %v7234
      %7299 = vst [vmem:[%s273 + $0x74] sm:$0xf] %v7235
      %7300 = vst [vmem:[%s273 + $0x78] sm:$0xf] %v7236
      %7301 = vst [vmem:[%s273 + $0x7c] sm:$0xf] %v7237
      %v7302 = vunpack.c.l.bf16 %v7142
      %v7303 = vunpack.c.h.bf16 %v7142
      %v7304 = vunpack.c.l.bf16 %v7143
      %v7305 = vunpack.c.h.bf16 %v7143
      %v7306 = vunpack.c.l.bf16 %v7144
      %v7307 = vunpack.c.h.bf16 %v7144
      %v7308 = vunpack.c.l.bf16 %v7145
      %v7309 = vunpack.c.h.bf16 %v7145
      %v7310 = vunpack.c.l.bf16 %v7146
      %v7311 = vunpack.c.h.bf16 %v7146
      %v7312 = vunpack.c.l.bf16 %v7147
      %v7313 = vunpack.c.h.bf16 %v7147
      %v7314 = vunpack.c.l.bf16 %v7148
      %v7315 = vunpack.c.h.bf16 %v7148
      %v7316 = vunpack.c.l.bf16 %v7149
      %v7317 = vunpack.c.h.bf16 %v7149
      %v7318 = vunpack.c.l.bf16 %v7150
      %v7319 = vunpack.c.h.bf16 %v7150
      %v7320 = vunpack.c.l.bf16 %v7151
      %v7321 = vunpack.c.h.bf16 %v7151
      %v7322 = vunpack.c.l.bf16 %v7152
      %v7323 = vunpack.c.h.bf16 %v7152
      %v7324 = vunpack.c.l.bf16 %v7153
      %v7325 = vunpack.c.h.bf16 %v7153
      %v7326 = vunpack.c.l.bf16 %v7154
      %v7327 = vunpack.c.h.bf16 %v7154
      %v7328 = vunpack.c.l.bf16 %v7155
      %v7329 = vunpack.c.h.bf16 %v7155
      %v7330 = vunpack.c.l.bf16 %v7156
      %v7331 = vunpack.c.h.bf16 %v7156
      %v7332 = vunpack.c.l.bf16 %v7157
      %v7333 = vunpack.c.h.bf16 %v7157
      %v7334 = vadd.f32 %v7302, %v7303
      %v7335 = vadd.f32 %v7334, %v7304
      %v7336 = vadd.f32 %v7335, %v7305
      %v7337 = vadd.f32 %v7336, %v7306
      %v7338 = vadd.f32 %v7337, %v7307
      %v7339 = vadd.f32 %v7338, %v7308
      %v7340 = vadd.f32 %v7339, %v7309
      %v7341 = vadd.f32 %v7340, %v7310
      %v7342 = vadd.f32 %v7341, %v7311
      %v7343 = vadd.f32 %v7342, %v7312
      %v7344 = vadd.f32 %v7343, %v7313
      %v7345 = vadd.f32 %v7344, %v7314
      %v7346 = vadd.f32 %v7345, %v7315
      %v7347 = vadd.f32 %v7346, %v7316
      %v7348 = vadd.f32 %v7347, %v7317
      %v7349 = vadd.f32 %v7348, %v7318
      %v7350 = vadd.f32 %v7349, %v7319
      %v7351 = vadd.f32 %v7350, %v7320
      %v7352 = vadd.f32 %v7351, %v7321
      %v7353 = vadd.f32 %v7352, %v7322
      %v7354 = vadd.f32 %v7353, %v7323
      %v7355 = vadd.f32 %v7354, %v7324
      %v7356 = vadd.f32 %v7355, %v7325
      %v7357 = vadd.f32 %v7356, %v7326
      %v7358 = vadd.f32 %v7357, %v7327
      %v7359 = vadd.f32 %v7358, %v7328
      %v7360 = vadd.f32 %v7359, %v7329
      %v7361 = vadd.f32 %v7360, %v7330
      %v7362 = vadd.f32 %v7361, %v7331
      %v7363 = vadd.f32 %v7362, %v7332
      %v7364 = vadd.f32 %v7363, %v7333
      %v7365 = vrot.slane %v7364, 4
      %v7366 = vadd.f32 %v7364, %v7365
      %v7367 = vrot.slane %v7366, 2
      %v7368 = vadd.f32 %v7366, %v7367
      %v7369 = vrot.slane %v7368, 1
      %v7370 = vadd.f32 %v7368, %v7369
      %v7371 = vmul.f32 %v7302, %v7302
      %v7372 = vmul.f32 %v7303, %v7303
      %v7373 = vmul.f32 %v7304, %v7304
      %v7374 = vmul.f32 %v7305, %v7305
      %v7375 = vmul.f32 %v7306, %v7306
      %v7376 = vmul.f32 %v7307, %v7307
      %v7377 = vmul.f32 %v7308, %v7308
      %v7378 = vmul.f32 %v7309, %v7309
      %v7379 = vmul.f32 %v7310, %v7310
      %v7380 = vmul.f32 %v7311, %v7311
      %v7381 = vmul.f32 %v7312, %v7312
      %v7382 = vmul.f32 %v7313, %v7313
      %v7383 = vmul.f32 %v7314, %v7314
      %v7384 = vmul.f32 %v7315, %v7315
      %v7385 = vmul.f32 %v7316, %v7316
      %v7386 = vmul.f32 %v7317, %v7317
      %v7387 = vmul.f32 %v7318, %v7318
      %v7388 = vmul.f32 %v7319, %v7319
      %v7389 = vmul.f32 %v7320, %v7320
      %v7390 = vmul.f32 %v7321, %v7321
      %v7391 = vmul.f32 %v7322, %v7322
      %v7392 = vmul.f32 %v7323, %v7323
      %v7393 = vmul.f32 %v7324, %v7324
      %v7394 = vmul.f32 %v7325, %v7325
      %v7395 = vmul.f32 %v7326, %v7326
      %v7396 = vmul.f32 %v7327, %v7327
      %v7397 = vmul.f32 %v7328, %v7328
      %v7398 = vmul.f32 %v7329, %v7329
      %v7399 = vmul.f32 %v7330, %v7330
      %v7400 = vmul.f32 %v7331, %v7331
      %v7401 = vmul.f32 %v7332, %v7332
      %v7402 = vmul.f32 %v7333, %v7333
      %v7403 = vadd.f32 %v7371, %v7372
      %v7404 = vadd.f32 %v7403, %v7373
      %v7405 = vadd.f32 %v7404, %v7374
      %v7406 = vadd.f32 %v7405, %v7375
      %v7407 = vadd.f32 %v7406, %v7376
      %v7408 = vadd.f32 %v7407, %v7377
      %v7409 = vadd.f32 %v7408, %v7378
      %v7410 = vadd.f32 %v7409, %v7379
      %v7411 = vadd.f32 %v7410, %v7380
      %v7412 = vadd.f32 %v7411, %v7381
      %v7413 = vadd.f32 %v7412, %v7382
      %v7414 = vadd.f32 %v7413, %v7383
      %v7415 = vadd.f32 %v7414, %v7384
      %v7416 = vadd.f32 %v7415, %v7385
      %v7417 = vadd.f32 %v7416, %v7386
      %v7418 = vadd.f32 %v7417, %v7387
      %v7419 = vadd.f32 %v7418, %v7388
      %v7420 = vadd.f32 %v7419, %v7389
      %v7421 = vadd.f32 %v7420, %v7390
      %v7422 = vadd.f32 %v7421, %v7391
      %v7423 = vadd.f32 %v7422, %v7392
      %v7424 = vadd.f32 %v7423, %v7393
      %v7425 = vadd.f32 %v7424, %v7394
      %v7426 = vadd.f32 %v7425, %v7395
      %v7427 = vadd.f32 %v7426, %v7396
      %v7428 = vadd.f32 %v7427, %v7397
      %v7429 = vadd.f32 %v7428, %v7398
      %v7430 = vadd.f32 %v7429, %v7399
      %v7431 = vadd.f32 %v7430, %v7400
      %v7432 = vadd.f32 %v7431, %v7401
      %v7433 = vadd.f32 %v7432, %v7402
      %v7434 = vrot.slane %v7433, 4
      %v7435 = vadd.f32 %v7433, %v7434
      %v7436 = vrot.slane %v7435, 2
      %v7437 = vadd.f32 %v7435, %v7436
      %v7438 = vrot.slane %v7437, 1
      %v7439 = vadd.f32 %v7437, %v7438
      %vm7440 = vcmp.eq.s32.totalorder %v635, 0
      %vm7441 = vcmp.eq.s32.totalorder %v635, 1
      %v7442 = vsel %vm7441, %v7439, 0.0
      %v7443 = vsel %vm7440, %v7370, %v7442
      %7444 = vst [vmem:[%s280] sm:$0xff] %v7443
      %p7445 = scmp.lt.s32.totalorder %s21, 1
      %s7446 = scalar_select %p7445, %s21, 1
      %p7447 = scmp.lt.s32.totalorder %s22, 0
      %s7448 = scalar_select %p7447, %s22, 0
      %s7449 = smul.addr %s7446, 32
      %s7450 = sadd.s32 %s7448, %s7449
      %s7451 = smul.addr %s7450, 4
      %s7452 = scalar_lea.vmem %s4, %s7451
      %p7453 = scmp.lt.s32.totalorder %s21, 1
      %s7454 = scalar_select %p7453, %s21, 1
      %p7455 = scmp.lt.s32.totalorder %s22, 0
      %s7456 = scalar_select %p7455, %s22, 0
      %s7457 = sadd.s32 %s7456, %s7454
      %s7458 = smul.addr %s7457, 8
      %s7459 = scalar_lea.vmem %s5, %s7458
      // Predicated region
      $region41: #{bottleneck_forward.6} parent=35 // pred_check
        %p7460 = pneg %p143
      $region42: #{bottleneck_forward.6} parent=35 // pred_check_branch
        %7462 = sbr.rel (%p7460) target = $region44
      $region43: #{bottleneck_forward.6} parent=35 // pred_region
        _
      $region44: #{bottleneck_forward.6} parent=35 // pred_fallthru
        _
      // Predicated region
      $region45: #{bottleneck_forward.6} parent=35 // pred_check
        %p7463 = pneg %p171
      $region46: #{bottleneck_forward.6} parent=35 // pred_check_branch
        %7465 = sbr.rel (%p7463) target = $region48
      $region47: #{bottleneck_forward.6} parent=35 // pred_region
        _
      $region48: #{bottleneck_forward.6} parent=35 // pred_fallthru
        _
    $region36: #{bottleneck_forward.6} parent=5 // pred_fallthru
      _
    %p7466 = scmp.le.s32.totalorder 2, %s12
    // Predicated region
    $region49: #{bottleneck_forward.6} parent=5 // pred_check
      %p7467 = pneg %p7466
    $region50: #{bottleneck_forward.6} parent=5 // pred_check_branch
      %7469 = sbr.rel (%p7467) target = $region52
    $region51: #{bottleneck_forward.6} parent=5 // pred_region
      %s7470 = ssub.s32 %s12, 2
      // Predicated region
      $region53: #{bottleneck_forward.6} parent=51 // pred_check
        %p7471 = pneg %p149
      $region54: #{bottleneck_forward.6} parent=51 // pred_check_branch
        %7473 = sbr.rel (%p7471) target = $region56
      $region55: #{bottleneck_forward.6} parent=51 // pred_region
        %p7474 = scmp.lt.s32.totalorder %s23, 1
        %s7475 = scalar_select %p7474, %s23, 1
        %p7476 = scmp.lt.s32.totalorder %s24, 0
        %s7477 = scalar_select %p7476, %s24, 0
        %s7478 = smul.addr %s7475, 32
        %s7479 = sadd.s32 %s7477, %s7478
        %s7480 = smul.addr %s7479, 4
        %s7481 = scalar_lea.vmem %s4, %s7480
      $region56: #{bottleneck_forward.6} parent=51 // pred_fallthru
        _
      // Predicated region
      $region57: #{bottleneck_forward.6} parent=51 // pred_check
        %p7482 = pneg %p177
      $region58: #{bottleneck_forward.6} parent=51 // pred_check_branch
        %7484 = sbr.rel (%p7482) target = $region60
      $region59: #{bottleneck_forward.6} parent=51 // pred_region
        %p7485 = scmp.lt.s32.totalorder %s23, 1
        %s7486 = scalar_select %p7485, %s23, 1
        %p7487 = scmp.lt.s32.totalorder %s24, 0
        %s7488 = scalar_select %p7487, %s24, 0
        %s7489 = sadd.s32 %s7488, %s7486
        %s7490 = smul.addr %s7489, 8
        %s7491 = scalar_lea.vmem %s5, %s7490
      $region60: #{bottleneck_forward.6} parent=51 // pred_fallthru
        _
    $region52: #{bottleneck_forward.6} parent=5 // pred_fallthru
      _
  $region6: #{bottleneck_forward.6} parent=0 // loop_footer
    %s16 = sadd.s32 1, %s12
  $region7: #{bottleneck_forward.6} parent=0 // loop_footer_branch
    %11 = sbr.rel target = $region3
  $region8: #{bottleneck_forward.6} parent=0 // loop_exit
    _

</llo_original>
